<compile_context>
chip_gen: v5e
topology: v5e:2x2
jax: 0.10.0
libtpu: 0.0.40
codegen_flags: <defaults>
</compile_context>

<pallas_src>
import jax
import jax.numpy as jnp
from jax.experimental import pallas as pl
from jax.experimental.pallas import tpu as pltpu

# ---------------- configuration (small, consistent with the module) ----------------
DIM = 2                      # cfg.dim            (input coordinate dim)
OUT_DIM = 1                  # cfg.out_dim
HID = 32                     # cfg.hid_dim
NSUB = 2 ** DIM              # "Quad": 2^dim subbands (4 for dim=2)
GRP = HID // NSUB            # per-subband group width
L = 3                        # len(cfg.bws)       (number of stages)
NSO = NSUB * OUT_DIM         # per-layer subband output width
NFILT = 2 * L + 1            # number of sine filters (L+1 width fans + L lower fans)
INP_MULT = 0.5               # cfg.inp_mult_const
MAX_BW = 16.0                # cfg.max_bw
BW0 = (1.0 / 16.0) * MAX_BW
BWS = [(1.0 / 16.0 * MAX_BW, 0.0 * MAX_BW),
       (1.0 / 16.0 * MAX_BW, 1.0 / 8.0 * MAX_BW),
       (3.0 / 16.0 * MAX_BW, 1.0 / 8.0 * MAX_BW)]

TM = 256                     # point tile (lane axis; multiple of 128). For large point
                             # counts sweep 512/1024 -- VMEM is not the constraint here.


# ------------------------------- Pallas kernel -------------------------------------
def sbn_kernel(x_ref,                    # (DIM, TM)        coordinates, points on lanes
               wsin_ref, bsin_ref,       # (NFILT*HID, DIM), (NFILT*HID, 1)  fused sine filters
               mww_ref, mwb_ref,         # (L, HID, HID) [pre-transposed], (L, HID, 1)
               mlw_ref, mlb_ref,         # (L, HID, HID) [pre-transposed], (L, HID, 1)
               ow_ref, ob_ref,           # (L, NSO, HID) [pre-transposed], (L, NSO, 1)
               out_ref):                 # (L*NSO, TM)      per-layer subband outputs
    x = x_ref[...].astype(jnp.float32)                       # (DIM, TM); inp_mult folded in W

    # Fused sine filters: one projection + one sin pass for all 2L+1 filters.
    w = wsin_ref[...]                                        # (NFILT*HID, DIM)
    p = w[:, 0:1] * x[0:1, :]
    for d in range(1, DIM):
        p = p + w[:, d:d + 1] * x[d:d + 1, :]
    sines = jnp.sin(p + bsin_ref[...])                       # (NFILT*HID, TM)

    # z = xf = width_fans[0](x)
    z = sines[0:HID, :]                                      # (HID, TM)

    outs = []
    for l in range(L):                                       # unrolled: L is small & static
        # yf_w = width_fans[1+l](x)
        yf_w = sines[(l + 1) * HID:(l + 2) * HID, :]
        # z = mixs_width[l](z)   (grouped linear == block-diagonal matmul, W^T @ z)
        z = jnp.dot(mww_ref[l], z, preferred_element_type=jnp.float32) + mwb_ref[l]
        # z = mult_width[l](z, yf_w)
        z = z * yf_w
        # zl = mixs_lower[l](z)
        zl = jnp.dot(mlw_ref[l], z, preferred_element_type=jnp.float32) + mlb_ref[l]
        # yf_l = lower_fans[l](x); zl = mult_lower[l](zl, yf_l)
        yf_l = sines[(L + 1 + l) * HID:(L + 2 + l) * HID, :]
        zl = zl * yf_l
        # curr_out_all = outs[l](zl)   (per-subband heads; subband sum + acc done in XLA)
        out_all = jnp.dot(ow_ref[l], zl, preferred_element_type=jnp.float32) + ob_ref[l]
        outs.append(out_all)                                 # (NSO, TM)

    out_ref[...] = jnp.concatenate(outs, axis=0)             # (L*NSO, TM) lane-dense store


# ------------------------------- wrapper --------------------------------------------
def prepare_kernel_params(params):
    """Fuse/transpose the natural-layout params into the channels-first kernel layout."""
    (wfw, pbw, wfl, pbl, mww, mwb, mlw, mlb, ow, ob) = params
    w_all = jnp.concatenate([wfw, wfl], axis=0)                       # (NFILT, DIM, HID)
    wsin = jnp.transpose(w_all, (0, 2, 1)).reshape(NFILT * HID, DIM)  # (NFILT*HID, DIM)
    wsin = wsin * INP_MULT                                            # fold cfg.inp_mult_const
    bsin = jnp.concatenate([pbw, pbl], axis=0).reshape(NFILT * HID, 1)
    mww_t = jnp.transpose(mww, (0, 2, 1))                             # W^T  (Hout, Hin)
    mlw_t = jnp.transpose(mlw, (0, 2, 1))
    ow_t = jnp.transpose(ow, (0, 2, 1))                               # (L, NSO, HID)
    return (wsin, bsin,
            mww_t, mwb[:, :, None],
            mlw_t, mlb[:, :, None],
            ow_t, ob[:, :, None])


def subband_net_pallas(x_t, kparams):
    """x_t: (DIM, bn_pad) float32, bn_pad % TM == 0.  Returns (L*NSO, bn_pad)."""
    (wsin, bsin, mww_t, mwb_t, mlw_t, mlb_t, ow_t, ob_t) = kparams
    bn = x_t.shape[1]
    assert bn % TM == 0
    grid = (bn // TM,)

    def full_spec(shape):
        n = len(shape)
        return pl.BlockSpec(shape, lambda i, n=n: (0,) * n)

    in_specs = [
        pl.BlockSpec((DIM, TM), lambda i: (0, i)),
        full_spec(wsin.shape), full_spec(bsin.shape),
        full_spec(mww_t.shape), full_spec(mwb_t.shape),
        full_spec(mlw_t.shape), full_spec(mlb_t.shape),
        full_spec(ow_t.shape), full_spec(ob_t.shape),
    ]
    out_specs = pl.BlockSpec((L * NSO, TM), lambda i: (0, i))
    out_shape = jax.ShapeDtypeStruct((L * NSO, bn), jnp.float32)

    return pl.pallas_call(
        sbn_kernel,
        out_shape=out_shape,
        grid_spec=pltpu.PrefetchScalarGridSpec(
            num_scalar_prefetch=0,
            grid=grid,
            in_specs=in_specs,
            out_specs=out_specs),
        compiler_params=pltpu.CompilerParams(
            dimension_semantics=("parallel",)),
    )(x_t, wsin, bsin, mww_t, mwb_t, mlw_t, mlb_t, ow_t, ob_t)


def subband_net_forward(x, params):
    """Mirrors SubbandNet.forward (acc_method='sum', out_levels=None, fst_n=None, z ignored)."""
    if x.ndim == 2:
        x = x[None]                                   # xdim == 2 -> unsqueeze(0)
    bs, npts, _ = x.shape
    bn = bs * npts
    x_flat = x.reshape(bn, DIM)

    # pad point axis to a TM multiple and go channels-first (points on lanes)
    bn_pad = ((bn + TM - 1) // TM) * TM
    x_t = jnp.zeros((DIM, bn_pad), jnp.float32).at[:, :bn].set(x_flat.T)

    kparams = prepare_kernel_params(params)
    out_all_t = subband_net_pallas(x_t, kparams)                   # (L*NSO, bn_pad)
    out_all_t = out_all_t[:, :bn].reshape(L, NSO, bn)              # (L, NSO, bn)

    # subband sum and layer accumulation (acc_method == 'sum') are trivial -> do them in XLA
    out_t = out_all_t.reshape(L, NSUB, OUT_DIM, bn).sum(axis=1)    # (L, OUT_DIM, bn)
    acc_t = jnp.cumsum(out_t, axis=0)                              # (L, OUT_DIM, bn)

    out_all = jnp.transpose(out_all_t, (0, 2, 1)).reshape(L, bs, npts, NSO)
    out = jnp.transpose(out_t, (0, 2, 1)).reshape(L, bs, npts, OUT_DIM)
    acc = jnp.transpose(acc_t, (0, 2, 1)).reshape(L, bs, npts, OUT_DIM)

    out_all_lst = [out_all[l] for l in range(L)]
    out_lst = [out[l] for l in range(L)]
    acc_lst = [acc[l] for l in range(L)]

    # TODO(synk): intermediate activation lists (xf_lst, z_lst, zl_lst, zlm_lst, xfl_lst) stay
    # in VMEM/vregs inside the kernel and are not materialized back to HBM.
    return {
        'out_lst': acc_lst,            # out_levels is None -> out_acc_lst == acc_lst
        'all_out_lst': out_lst,
        'acc_lst': acc_lst,
        'all_acc_lst': acc_lst,
        'all_out_fan_lst': out_all_lst,
        'xf_lst': [], 'z_lst': [], 'zl_lst': [], 'zlm_lst': [], 'xfl_lst': [],
    }


# ------------------------------- parameter init --------------------------------------
def init_params(key):
    keys = iter(jax.random.split(key, 64))

    def sine_params(k, lo, hi):
        k1, k2, k3 = jax.random.split(k, 3)
        mag = jax.random.uniform(k1, (DIM, HID), jnp.float32, minval=lo, maxval=hi)
        sign = jnp.where(jax.random.bernoulli(k2, 0.5, (DIM, HID)), 1.0, -1.0)
        w = 2.0 * jnp.pi * mag * sign
        phase = jax.random.uniform(k3, (HID,), jnp.float32, minval=-jnp.pi, maxval=jnp.pi)
        return w, phase

    def mix_params(k):                       # grouped (block-diagonal) hidden->hidden
        k1, k2 = jax.random.split(k)
        blocks = jax.random.normal(k1, (NSUB, GRP, GRP), jnp.float32) / jnp.sqrt(GRP)
        w = jnp.zeros((HID, HID), jnp.float32)
        for s in range(NSUB):
            w = w.at[s * GRP:(s + 1) * GRP, s * GRP:(s + 1) * GRP].set(blocks[s])
        b = jax.random.normal(k2, (HID,), jnp.float32) * 0.01
        return w, b

    def out_params(k):                       # per-subband output heads
        k1, k2 = jax.random.split(k)
        blocks = jax.random.normal(k1, (NSUB, GRP, OUT_DIM), jnp.float32) / jnp.sqrt(GRP)
        w = jnp.zeros((HID, NSO), jnp.float32)
        for s in range(NSUB):
            w = w.at[s * GRP:(s + 1) * GRP, s * OUT_DIM:(s + 1) * OUT_DIM].set(blocks[s])
        b = jax.random.normal(k2, (NSO,), jnp.float32) * 0.01
        return w, b

    wfw, pbw = [], []
    w, p = sine_params(next(keys), 0.0, BW0)
    wfw.append(w); pbw.append(p)
    for lim_w, _ in BWS:
        w, p = sine_params(next(keys), 0.0, lim_w)
        wfw.append(w); pbw.append(p)

    wfl, pbl, mww, mwb, mlw, mlb, ow, ob = [], [], [], [], [], [], [], []
    for _, lim_l in BWS:
        w, p = sine_params(next(keys), lim_l, lim_l)   # lower fan: band [lim_l, lim_l]
        wfl.append(w); pbl.append(p)
        w, b = mix_params(next(keys)); mww.append(w); mwb.append(b)
        w, b = mix_params(next(keys)); mlw.append(w); mlb.append(b)
        w, b = out_params(next(keys)); ow.append(w); ob.append(b)

    return (jnp.stack(wfw), jnp.stack(pbw),
            jnp.stack(wfl), jnp.stack(pbl),
            jnp.stack(mww), jnp.stack(mwb),
            jnp.stack(mlw), jnp.stack(mlb),
            jnp.stack(ow), jnp.stack(ob))


# ------------------------------- pure-JAX reference ----------------------------------
def reference_forward(x_flat, params):
    (wfw, pbw, wfl, pbl, mww, mwb, mlw, mlb, ow, ob) = params
    xs = x_flat * INP_MULT
    z = jnp.sin(xs @ wfw[0] + pbw[0])
    acc = jnp.zeros((x_flat.shape[0], OUT_DIM), jnp.float32)
    out_all_lst, out_lst, acc_lst = [], [], []
    for l in range(L):
        yf_w = jnp.sin(xs @ wfw[l + 1] + pbw[l + 1])
        z = z @ mww[l] + mwb[l]
        z = z * yf_w
        zl = z @ mlw[l] + mlb[l]
        yf_l = jnp.sin(xs @ wfl[l] + pbl[l])
        zl = zl * yf_l
        out_all = zl @ ow[l] + ob[l]
        out = out_all.reshape(-1, NSUB, OUT_DIM).sum(axis=1)
        acc = acc + out
        out_all_lst.append(out_all); out_lst.append(out); acc_lst.append(acc)
    return jnp.stack(out_all_lst), jnp.stack(out_lst), jnp.stack(acc_lst)


# ------------------------------------ main --------------------------------------------
if __name__ == "__main__":
    key = jax.random.PRNGKey(0)
    k_x, k_p = jax.random.split(key)

    B, N = 2, 256
    x = jax.random.uniform(k_x, (B, N, DIM), jnp.float32, minval=-1.0, maxval=1.0)
    params = init_params(k_p)

    result = subband_net_forward(x, params)
    result = jax.block_until_ready(result)

    # light correctness check against a plain-JAX reference
    x_flat = x.reshape(B * N, DIM)
    ref_all, ref_out, ref_acc = reference_forward(x_flat, params)
    got_all = jnp.stack([a.reshape(B * N, NSO) for a in result['all_out_fan_lst']])
    got_out = jnp.stack([a.reshape(B * N, OUT_DIM) for a in result['all_out_lst']])
    got_acc = jnp.stack([a.reshape(B * N, OUT_DIM) for a in result['acc_lst']])
    for got, ref, name in ((got_all, ref_all, "all_out"),
                           (got_out, ref_out, "out"),
                           (got_acc, ref_acc, "acc")):
        if not jnp.allclose(got, ref, rtol=3e-2, atol=3e-3):
            raise AssertionError(f"mismatch in {name}: max abs err "
                                 f"{float(jnp.max(jnp.abs(got - ref)))}")

    print("KERNEL_OK")
</pallas_src>

<mosaic_0001>
module attributes {stable_mosaic.version = 11 : i64} {
  func.func @sbn_kernel(%arg0: i32, %arg1: memref<2x256xf32, #tpu.memory_space<vmem>>, %arg2: memref<224x2xf32, #tpu.memory_space<vmem>>, %arg3: memref<224x1xf32, #tpu.memory_space<vmem>>, %arg4: memref<3x32x32xf32, #tpu.memory_space<vmem>>, %arg5: memref<3x32x1xf32, #tpu.memory_space<vmem>>, %arg6: memref<3x32x32xf32, #tpu.memory_space<vmem>>, %arg7: memref<3x32x1xf32, #tpu.memory_space<vmem>>, %arg8: memref<3x4x32xf32, #tpu.memory_space<vmem>>, %arg9: memref<3x4x1xf32, #tpu.memory_space<vmem>>, %arg10: memref<12x256xf32, #tpu.memory_space<vmem>>) attributes {dimension_semantics = [#tpu.dimension_semantics<parallel>], iteration_bounds = array<i64: 2>, scalar_prefetch = 0 : i64, scratch_operands = 0 : i64, tpu.core_type = #tpu.core_type<tc>, window_params = [{transform_indices = @transform_0, window_bounds = array<i64: 2, 256>}, {pipeline_mode = #tpu.pipeline_mode<synchronous>, transform_indices = @transform_1, window_bounds = array<i64: 224, 2>}, {pipeline_mode = #tpu.pipeline_mode<synchronous>, transform_indices = @transform_2, window_bounds = array<i64: 224, 1>}, {pipeline_mode = #tpu.pipeline_mode<synchronous>, transform_indices = @transform_3, window_bounds = array<i64: 3, 32, 32>}, {pipeline_mode = #tpu.pipeline_mode<synchronous>, transform_indices = @transform_4, window_bounds = array<i64: 3, 32, 1>}, {pipeline_mode = #tpu.pipeline_mode<synchronous>, transform_indices = @transform_5, window_bounds = array<i64: 3, 32, 32>}, {pipeline_mode = #tpu.pipeline_mode<synchronous>, transform_indices = @transform_6, window_bounds = array<i64: 3, 32, 1>}, {pipeline_mode = #tpu.pipeline_mode<synchronous>, transform_indices = @transform_7, window_bounds = array<i64: 3, 4, 32>}, {pipeline_mode = #tpu.pipeline_mode<synchronous>, transform_indices = @transform_8, window_bounds = array<i64: 3, 4, 1>}, {transform_indices = @transform_9, window_bounds = array<i64: 12, 256>}]} {
    %c0 = arith.constant 0 : index
    %c0_0 = arith.constant 0 : index
    %0 = vector.load %arg1[%c0, %c0_0] : memref<2x256xf32, #tpu.memory_space<vmem>>, vector<2x256xf32>
    %c0_1 = arith.constant 0 : index
    %c0_2 = arith.constant 0 : index
    %1 = vector.load %arg2[%c0_1, %c0_2] : memref<224x2xf32, #tpu.memory_space<vmem>>, vector<224x2xf32>
    %2 = vector.extract_strided_slice %1 {offsets = [0, 0], sizes = [224, 1], strides = [1, 1]} : vector<224x2xf32> to vector<224x1xf32>
    %3 = vector.extract_strided_slice %0 {offsets = [0, 0], sizes = [1, 256], strides = [1, 1]} : vector<2x256xf32> to vector<1x256xf32>
    %4 = vector.broadcast %2 : vector<224x1xf32> to vector<224x256xf32>
    %5 = vector.broadcast %3 : vector<1x256xf32> to vector<224x256xf32>
    %6 = arith.mulf %4, %5 : vector<224x256xf32>
    %7 = vector.extract_strided_slice %1 {offsets = [0, 1], sizes = [224, 1], strides = [1, 1]} : vector<224x2xf32> to vector<224x1xf32>
    %8 = vector.extract_strided_slice %0 {offsets = [1, 0], sizes = [1, 256], strides = [1, 1]} : vector<2x256xf32> to vector<1x256xf32>
    %9 = vector.broadcast %7 : vector<224x1xf32> to vector<224x256xf32>
    %10 = vector.broadcast %8 : vector<1x256xf32> to vector<224x256xf32>
    %11 = arith.mulf %9, %10 : vector<224x256xf32>
    %12 = arith.addf %6, %11 : vector<224x256xf32>
    %c0_3 = arith.constant 0 : index
    %c0_4 = arith.constant 0 : index
    %13 = vector.load %arg3[%c0_3, %c0_4] : memref<224x1xf32, #tpu.memory_space<vmem>>, vector<224x1xf32>
    %14 = vector.broadcast %13 : vector<224x1xf32> to vector<224x256xf32>
    %15 = arith.addf %12, %14 : vector<224x256xf32>
    %16 = math.sin %15 : vector<224x256xf32>
    %17 = vector.extract_strided_slice %16 {offsets = [0, 0], sizes = [32, 256], strides = [1, 1]} : vector<224x256xf32> to vector<32x256xf32>
    %18 = vector.extract_strided_slice %16 {offsets = [32, 0], sizes = [32, 256], strides = [1, 1]} : vector<224x256xf32> to vector<32x256xf32>
    %c0_5 = arith.constant 0 : index
    %c0_6 = arith.constant 0 : index
    %c0_7 = arith.constant 0 : index
    %19 = vector.load %arg4[%c0_5, %c0_6, %c0_7] : memref<3x32x32xf32, #tpu.memory_space<vmem>>, vector<1x32x32xf32>
    %20 = vector.shape_cast %19 : vector<1x32x32xf32> to vector<32x32xf32>
    %cst = arith.constant dense<0.000000e+00> : vector<32x256xf32>
    %21 = tpu.matmul %20, %17, %cst {dimension_numbers = #tpu.dot_dimension_numbers<[1], [0], [0], [1], [0, 0, 1, 1], [], []>} : vector<32x32xf32>, vector<32x256xf32>, vector<32x256xf32> -> vector<32x256xf32>
    %c0_8 = arith.constant 0 : index
    %c0_9 = arith.constant 0 : index
    %c0_10 = arith.constant 0 : index
    %22 = vector.load %arg5[%c0_8, %c0_9, %c0_10] : memref<3x32x1xf32, #tpu.memory_space<vmem>>, vector<1x32x1xf32>
    %23 = vector.shape_cast %22 : vector<1x32x1xf32> to vector<32x1xf32>
    %24 = vector.broadcast %23 : vector<32x1xf32> to vector<32x256xf32>
    %25 = arith.addf %21, %24 : vector<32x256xf32>
    %26 = arith.mulf %25, %18 : vector<32x256xf32>
    %c0_11 = arith.constant 0 : index
    %c0_12 = arith.constant 0 : index
    %c0_13 = arith.constant 0 : index
    %27 = vector.load %arg6[%c0_11, %c0_12, %c0_13] : memref<3x32x32xf32, #tpu.memory_space<vmem>>, vector<1x32x32xf32>
    %28 = vector.shape_cast %27 : vector<1x32x32xf32> to vector<32x32xf32>
    %cst_14 = arith.constant dense<0.000000e+00> : vector<32x256xf32>
    %29 = tpu.matmul %28, %26, %cst_14 {dimension_numbers = #tpu.dot_dimension_numbers<[1], [0], [0], [1], [0, 0, 1, 1], [], []>} : vector<32x32xf32>, vector<32x256xf32>, vector<32x256xf32> -> vector<32x256xf32>
    %c0_15 = arith.constant 0 : index
    %c0_16 = arith.constant 0 : index
    %c0_17 = arith.constant 0 : index
    %30 = vector.load %arg7[%c0_15, %c0_16, %c0_17] : memref<3x32x1xf32, #tpu.memory_space<vmem>>, vector<1x32x1xf32>
    %31 = vector.shape_cast %30 : vector<1x32x1xf32> to vector<32x1xf32>
    %32 = vector.broadcast %31 : vector<32x1xf32> to vector<32x256xf32>
    %33 = arith.addf %29, %32 : vector<32x256xf32>
    %34 = vector.extract_strided_slice %16 {offsets = [128, 0], sizes = [32, 256], strides = [1, 1]} : vector<224x256xf32> to vector<32x256xf32>
    %35 = arith.mulf %33, %34 : vector<32x256xf32>
    %c0_18 = arith.constant 0 : index
    %c0_19 = arith.constant 0 : index
    %c0_20 = arith.constant 0 : index
    %36 = vector.load %arg8[%c0_18, %c0_19, %c0_20] : memref<3x4x32xf32, #tpu.memory_space<vmem>>, vector<1x4x32xf32>
    %37 = vector.shape_cast %36 : vector<1x4x32xf32> to vector<4x32xf32>
    %cst_21 = arith.constant dense<0.000000e+00> : vector<4x256xf32>
    %38 = tpu.matmul %37, %35, %cst_21 {dimension_numbers = #tpu.dot_dimension_numbers<[1], [0], [0], [1], [0, 0, 1, 1], [], []>} : vector<4x32xf32>, vector<32x256xf32>, vector<4x256xf32> -> vector<4x256xf32>
    %c0_22 = arith.constant 0 : index
    %c0_23 = arith.constant 0 : index
    %c0_24 = arith.constant 0 : index
    %39 = vector.load %arg9[%c0_22, %c0_23, %c0_24] : memref<3x4x1xf32, #tpu.memory_space<vmem>>, vector<1x4x1xf32>
    %40 = vector.shape_cast %39 : vector<1x4x1xf32> to vector<4x1xf32>
    %41 = vector.broadcast %40 : vector<4x1xf32> to vector<4x256xf32>
    %42 = arith.addf %38, %41 : vector<4x256xf32>
    %43 = vector.extract_strided_slice %16 {offsets = [64, 0], sizes = [32, 256], strides = [1, 1]} : vector<224x256xf32> to vector<32x256xf32>
    %c1 = arith.constant 1 : index
    %c0_25 = arith.constant 0 : index
    %c0_26 = arith.constant 0 : index
    %44 = vector.load %arg4[%c1, %c0_25, %c0_26] : memref<3x32x32xf32, #tpu.memory_space<vmem>>, vector<1x32x32xf32>
    %45 = vector.shape_cast %44 : vector<1x32x32xf32> to vector<32x32xf32>
    %cst_27 = arith.constant dense<0.000000e+00> : vector<32x256xf32>
    %46 = tpu.matmul %45, %26, %cst_27 {dimension_numbers = #tpu.dot_dimension_numbers<[1], [0], [0], [1], [0, 0, 1, 1], [], []>} : vector<32x32xf32>, vector<32x256xf32>, vector<32x256xf32> -> vector<32x256xf32>
    %c1_28 = arith.constant 1 : index
    %c0_29 = arith.constant 0 : index
    %c0_30 = arith.constant 0 : index
    %47 = vector.load %arg5[%c1_28, %c0_29, %c0_30] : memref<3x32x1xf32, #tpu.memory_space<vmem>>, vector<1x32x1xf32>
    %48 = vector.shape_cast %47 : vector<1x32x1xf32> to vector<32x1xf32>
    %49 = vector.broadcast %48 : vector<32x1xf32> to vector<32x256xf32>
    %50 = arith.addf %46, %49 : vector<32x256xf32>
    %51 = arith.mulf %50, %43 : vector<32x256xf32>
    %c1_31 = arith.constant 1 : index
    %c0_32 = arith.constant 0 : index
    %c0_33 = arith.constant 0 : index
    %52 = vector.load %arg6[%c1_31, %c0_32, %c0_33] : memref<3x32x32xf32, #tpu.memory_space<vmem>>, vector<1x32x32xf32>
    %53 = vector.shape_cast %52 : vector<1x32x32xf32> to vector<32x32xf32>
    %cst_34 = arith.constant dense<0.000000e+00> : vector<32x256xf32>
    %54 = tpu.matmul %53, %51, %cst_34 {dimension_numbers = #tpu.dot_dimension_numbers<[1], [0], [0], [1], [0, 0, 1, 1], [], []>} : vector<32x32xf32>, vector<32x256xf32>, vector<32x256xf32> -> vector<32x256xf32>
    %c1_35 = arith.constant 1 : index
    %c0_36 = arith.constant 0 : index
    %c0_37 = arith.constant 0 : index
    %55 = vector.load %arg7[%c1_35, %c0_36, %c0_37] : memref<3x32x1xf32, #tpu.memory_space<vmem>>, vector<1x32x1xf32>
    %56 = vector.shape_cast %55 : vector<1x32x1xf32> to vector<32x1xf32>
    %57 = vector.broadcast %56 : vector<32x1xf32> to vector<32x256xf32>
    %58 = arith.addf %54, %57 : vector<32x256xf32>
    %59 = vector.extract_strided_slice %16 {offsets = [160, 0], sizes = [32, 256], strides = [1, 1]} : vector<224x256xf32> to vector<32x256xf32>
    %60 = arith.mulf %58, %59 : vector<32x256xf32>
    %c1_38 = arith.constant 1 : index
    %c0_39 = arith.constant 0 : index
    %c0_40 = arith.constant 0 : index
    %61 = vector.load %arg8[%c1_38, %c0_39, %c0_40] : memref<3x4x32xf32, #tpu.memory_space<vmem>>, vector<1x4x32xf32>
    %62 = vector.shape_cast %61 : vector<1x4x32xf32> to vector<4x32xf32>
    %cst_41 = arith.constant dense<0.000000e+00> : vector<4x256xf32>
    %63 = tpu.matmul %62, %60, %cst_41 {dimension_numbers = #tpu.dot_dimension_numbers<[1], [0], [0], [1], [0, 0, 1, 1], [], []>} : vector<4x32xf32>, vector<32x256xf32>, vector<4x256xf32> -> vector<4x256xf32>
    %c1_42 = arith.constant 1 : index
    %c0_43 = arith.constant 0 : index
    %c0_44 = arith.constant 0 : index
    %64 = vector.load %arg9[%c1_42, %c0_43, %c0_44] : memref<3x4x1xf32, #tpu.memory_space<vmem>>, vector<1x4x1xf32>
    %65 = vector.shape_cast %64 : vector<1x4x1xf32> to vector<4x1xf32>
    %66 = vector.broadcast %65 : vector<4x1xf32> to vector<4x256xf32>
    %67 = arith.addf %63, %66 : vector<4x256xf32>
    %68 = vector.extract_strided_slice %16 {offsets = [96, 0], sizes = [32, 256], strides = [1, 1]} : vector<224x256xf32> to vector<32x256xf32>
    %c2 = arith.constant 2 : index
    %c0_45 = arith.constant 0 : index
    %c0_46 = arith.constant 0 : index
    %69 = vector.load %arg4[%c2, %c0_45, %c0_46] : memref<3x32x32xf32, #tpu.memory_space<vmem>>, vector<1x32x32xf32>
    %70 = vector.shape_cast %69 : vector<1x32x32xf32> to vector<32x32xf32>
    %cst_47 = arith.constant dense<0.000000e+00> : vector<32x256xf32>
    %71 = tpu.matmul %70, %51, %cst_47 {dimension_numbers = #tpu.dot_dimension_numbers<[1], [0], [0], [1], [0, 0, 1, 1], [], []>} : vector<32x32xf32>, vector<32x256xf32>, vector<32x256xf32> -> vector<32x256xf32>
    %c2_48 = arith.constant 2 : index
    %c0_49 = arith.constant 0 : index
    %c0_50 = arith.constant 0 : index
    %72 = vector.load %arg5[%c2_48, %c0_49, %c0_50] : memref<3x32x1xf32, #tpu.memory_space<vmem>>, vector<1x32x1xf32>
    %73 = vector.shape_cast %72 : vector<1x32x1xf32> to vector<32x1xf32>
    %74 = vector.broadcast %73 : vector<32x1xf32> to vector<32x256xf32>
    %75 = arith.addf %71, %74 : vector<32x256xf32>
    %76 = arith.mulf %75, %68 : vector<32x256xf32>
    %c2_51 = arith.constant 2 : index
    %c0_52 = arith.constant 0 : index
    %c0_53 = arith.constant 0 : index
    %77 = vector.load %arg6[%c2_51, %c0_52, %c0_53] : memref<3x32x32xf32, #tpu.memory_space<vmem>>, vector<1x32x32xf32>
    %78 = vector.shape_cast %77 : vector<1x32x32xf32> to vector<32x32xf32>
    %cst_54 = arith.constant dense<0.000000e+00> : vector<32x256xf32>
    %79 = tpu.matmul %78, %76, %cst_54 {dimension_numbers = #tpu.dot_dimension_numbers<[1], [0], [0], [1], [0, 0, 1, 1], [], []>} : vector<32x32xf32>, vector<32x256xf32>, vector<32x256xf32> -> vector<32x256xf32>
    %c2_55 = arith.constant 2 : index
    %c0_56 = arith.constant 0 : index
    %c0_57 = arith.constant 0 : index
    %80 = vector.load %arg7[%c2_55, %c0_56, %c0_57] : memref<3x32x1xf32, #tpu.memory_space<vmem>>, vector<1x32x1xf32>
    %81 = vector.shape_cast %80 : vector<1x32x1xf32> to vector<32x1xf32>
    %82 = vector.broadcast %81 : vector<32x1xf32> to vector<32x256xf32>
    %83 = arith.addf %79, %82 : vector<32x256xf32>
    %84 = vector.extract_strided_slice %16 {offsets = [192, 0], sizes = [32, 256], strides = [1, 1]} : vector<224x256xf32> to vector<32x256xf32>
    %85 = arith.mulf %83, %84 : vector<32x256xf32>
    %c2_58 = arith.constant 2 : index
    %c0_59 = arith.constant 0 : index
    %c0_60 = arith.constant 0 : index
    %86 = vector.load %arg8[%c2_58, %c0_59, %c0_60] : memref<3x4x32xf32, #tpu.memory_space<vmem>>, vector<1x4x32xf32>
    %87 = vector.shape_cast %86 : vector<1x4x32xf32> to vector<4x32xf32>
    %cst_61 = arith.constant dense<0.000000e+00> : vector<4x256xf32>
    %88 = tpu.matmul %87, %85, %cst_61 {dimension_numbers = #tpu.dot_dimension_numbers<[1], [0], [0], [1], [0, 0, 1, 1], [], []>} : vector<4x32xf32>, vector<32x256xf32>, vector<4x256xf32> -> vector<4x256xf32>
    %c2_62 = arith.constant 2 : index
    %c0_63 = arith.constant 0 : index
    %c0_64 = arith.constant 0 : index
    %89 = vector.load %arg9[%c2_62, %c0_63, %c0_64] : memref<3x4x1xf32, #tpu.memory_space<vmem>>, vector<1x4x1xf32>
    %90 = vector.shape_cast %89 : vector<1x4x1xf32> to vector<4x1xf32>
    %91 = vector.broadcast %90 : vector<4x1xf32> to vector<4x256xf32>
    %92 = arith.addf %88, %91 : vector<4x256xf32>
    %93 = tpu.concatenate %42, %67, %92 in 0 : vector<4x256xf32>, vector<4x256xf32>, vector<4x256xf32> -> vector<12x256xf32>
    %c0_65 = arith.constant 0 : index
    %c0_66 = arith.constant 0 : index
    %94 = vector.load %arg10[%c0_65, %c0_66] : memref<12x256xf32, #tpu.memory_space<vmem>>, vector<12x256xf32>
    tpu.vector_store %arg10[%c0_65, %c0_66], %93 {strides = array<i32>} : memref<12x256xf32, #tpu.memory_space<vmem>>, vector<12x256xf32>,
    return
  }
  func.func @transform_0(%arg0: i32) -> (i32, i32) {
    %c0_i32 = arith.constant 0 : i32
    %c0_i32_0 = arith.constant 0 : i32
    return %c0_i32, %arg0 : i32, i32
  }
  func.func @transform_1(%arg0: i32) -> (i32, i32) {
    %c0_i32 = arith.constant 0 : i32
    %c0_i32_0 = arith.constant 0 : i32
    %c0_i32_1 = arith.constant 0 : i32
    return %c0_i32, %c0_i32_0 : i32, i32
  }
  func.func @transform_2(%arg0: i32) -> (i32, i32) {
    %c0_i32 = arith.constant 0 : i32
    %c0_i32_0 = arith.constant 0 : i32
    %c0_i32_1 = arith.constant 0 : i32
    return %c0_i32, %c0_i32_0 : i32, i32
  }
  func.func @transform_3(%arg0: i32) -> (i32, i32, i32) {
    %c0_i32 = arith.constant 0 : i32
    %c0_i32_0 = arith.constant 0 : i32
    %c0_i32_1 = arith.constant 0 : i32
    %c0_i32_2 = arith.constant 0 : i32
    return %c0_i32, %c0_i32_0, %c0_i32_1 : i32, i32, i32
  }
  func.func @transform_4(%arg0: i32) -> (i32, i32, i32) {
    %c0_i32 = arith.constant 0 : i32
    %c0_i32_0 = arith.constant 0 : i32
    %c0_i32_1 = arith.constant 0 : i32
    %c0_i32_2 = arith.constant 0 : i32
    return %c0_i32, %c0_i32_0, %c0_i32_1 : i32, i32, i32
  }
  func.func @transform_5(%arg0: i32) -> (i32, i32, i32) {
    %c0_i32 = arith.constant 0 : i32
    %c0_i32_0 = arith.constant 0 : i32
    %c0_i32_1 = arith.constant 0 : i32
    %c0_i32_2 = arith.constant 0 : i32
    return %c0_i32, %c0_i32_0, %c0_i32_1 : i32, i32, i32
  }
  func.func @transform_6(%arg0: i32) -> (i32, i32, i32) {
    %c0_i32 = arith.constant 0 : i32
    %c0_i32_0 = arith.constant 0 : i32
    %c0_i32_1 = arith.constant 0 : i32
    %c0_i32_2 = arith.constant 0 : i32
    return %c0_i32, %c0_i32_0, %c0_i32_1 : i32, i32, i32
  }
  func.func @transform_7(%arg0: i32) -> (i32, i32, i32) {
    %c0_i32 = arith.constant 0 : i32
    %c0_i32_0 = arith.constant 0 : i32
    %c0_i32_1 = arith.constant 0 : i32
    %c0_i32_2 = arith.constant 0 : i32
    return %c0_i32, %c0_i32_0, %c0_i32_1 : i32, i32, i32
  }
  func.func @transform_8(%arg0: i32) -> (i32, i32, i32) {
    %c0_i32 = arith.constant 0 : i32
    %c0_i32_0 = arith.constant 0 : i32
    %c0_i32_1 = arith.constant 0 : i32
    %c0_i32_2 = arith.constant 0 : i32
    return %c0_i32, %c0_i32_0, %c0_i32_1 : i32, i32, i32
  }
  func.func @transform_9(%arg0: i32) -> (i32, i32) {
    %c0_i32 = arith.constant 0 : i32
    %c0_i32_0 = arith.constant 0 : i32
    return %c0_i32, %arg0 : i32, i32
  }
}

</mosaic_0001>

<llo_original>
// kernel: tpu_custom_call.1
$region0: #{tpu_custom_call.1}
  #allocation0 [shape = 'u32[]', space=smem, size = 0x4, offset = 0x4, fixed_abs, tag = 'smem constant byte address 0x4 - core index']
  #allocation1 [shape = 'u32[72,128]{1,0:T(1,128)}', space=vmem, size = 0x9000, scoped, tag = 'internal scratch']
  %s0 = inlined_call_operand.vmem [shape: f32[2,512], index: 0, kind: input, shape index: {}]
  %s1 = inlined_call_operand.vmem [shape: f32[224,2], index: 1, kind: input, shape index: {}]
  %s2 = inlined_call_operand.vmem [shape: f32[224,1], index: 2, kind: input, shape index: {}]
  %s3 = inlined_call_operand.vmem [shape: f32[3,32,32], index: 3, kind: input, shape index: {}]
  %s4 = inlined_call_operand.vmem [shape: f32[3,32,1], index: 4, kind: input, shape index: {}]
  %s5 = inlined_call_operand.vmem [shape: f32[3,32,32], index: 5, kind: input, shape index: {}]
  %s6 = inlined_call_operand.vmem [shape: f32[3,32,1], index: 6, kind: input, shape index: {}]
  %s7 = inlined_call_operand.vmem [shape: f32[3,4,32], index: 7, kind: input, shape index: {}]
  %s8 = inlined_call_operand.vmem [shape: f32[3,4,1], index: 8, kind: input, shape index: {}]
  %s9 = inlined_call_operand.hbm [shape: f32[12,512], index: 9, kind: output, shape index: {}]
  %s10 = sld [smem:[#allocation0]]
  $region69: #{tpu_custom_call.1} parent=0
    _
  %s12 = ssub.s32 1, %s10
  %s13 = scalar_select 0, %s12, %s10
  $region1: #{tpu_custom_call.1} parent=0
    #allocation2 [shape = 'u8[32768]{0}', space=vmem, size = 0x8000, scoped, tag = 'output window, operand 0']
    #allocation3 [shape = 's32[2]{0}', space=sflag, size = 0x8, scoped, tag = 'scoped memory for tpu_custom_call.1']
    %14 = vsyncpa [#allocation3], 0
    %s15 = scalar_lea.sflag [#allocation3], 1
    %16 = vsyncpa %s15, 0
    loop: start=0, step=1, limit=4
    $region2: #{tpu_custom_call.1} parent=1 // loop_pre_header
      _
    $region3: #{tpu_custom_call.1} parent=1 // loop_header
      %s18 = sphi 0, %s22
      %p19 = scmp.ge.s32.totalorder %s18, 4
      %s28 = sphi 0, %s30
      %s31 = sphi 0, %s28
      %s32 = sphi 0, %s31
      %s48 = sphi 0, %s32
      %s52 = sphi 0, %s52
      %s54 = sphi 0, %s52
      %s55 = sphi 0, %s54
      %s69 = sphi 0, %s55
      %s73 = sphi 0, %s73
      %s75 = sphi 0, %s73
      %s76 = sphi 0, %s75
      %s90 = sphi 0, %s76
      %s94 = sphi 0, %s94
      %s96 = sphi 0, %s94
      %s97 = sphi 0, %s96
      %s111 = sphi 0, %s97
      %s115 = sphi 0, %s115
      %s117 = sphi 0, %s115
      %s118 = sphi 0, %s117
      %s132 = sphi 0, %s118
      %s136 = sphi 0, %s136
      %s138 = sphi 0, %s136
      %s139 = sphi 0, %s138
      %s153 = sphi 0, %s139
      %s157 = sphi 0, %s157
      %s159 = sphi 0, %s157
      %s160 = sphi 0, %s159
      %s174 = sphi 0, %s160
      %s178 = sphi 0, %s178
      %s180 = sphi 0, %s178
      %s181 = sphi 0, %s180
      %s195 = sphi 0, %s181
      %s199 = sphi 0, %s199
      %s201 = sphi 0, %s199
      %s202 = sphi 0, %s201
      %s216 = sphi 0, %s202
      %s222 = sphi 0, %s224
      %s225 = sphi 0, %s222
      %s226 = sphi 0, %s225
      %s242 = sphi 0, %s226
    $region4: #{tpu_custom_call.1} parent=1 // loop_header_branch
      %21 = sbr.rel (%p19) target = $region8
    $region5: #{tpu_custom_call.1} parent=1 // loop_body
      %s23 = ssub.s32 %s18, 1
      %s24 = ssub.s32 %s18, 2
      %s25 = sadd.s32 %s18, 1
      %s26 = ssub.s32 %s18, %s25
      %p27 = scmp.eq.s32.totalorder %s26, 0
      %s29 = sadd.s32 %s28, 1
      %s30 = scalar_select %p27, %s28, %s29
      %p33 = pneg %p27
      %p34 = scmp.eq.s32.totalorder %s18, 1
      %p35 = por %p33, %p34
      %p36 = scmp.ne.s32.totalorder %s28, %s31
      %p37 = scmp.eq.s32.totalorder %s18, 0
      %p38 = por %p36, %p37
      %p39 = scmp.ne.s32.totalorder %s28, %s31
      %p40 = scmp.eq.s32.totalorder %s23, 1
      %p41 = por %p39, %p40
      %p42 = scmp.ne.s32.totalorder %s31, %s32
      %p43 = scmp.eq.s32.totalorder %s23, 0
      %p44 = por %p42, %p43
      %p45 = scmp.ne.s32.totalorder %s31, %s32
      %p46 = scmp.eq.s32.totalorder %s24, 1
      %p47 = por %p45, %p46
      %p49 = scmp.ne.s32.totalorder %s32, %s48
      %p50 = scmp.eq.s32.totalorder %s24, 0
      %p51 = por %p49, %p50
      %s53 = sadd.s32 %s52, 1
      %p56 = scmp.eq.s32.totalorder %s18, 1
      %p57 = scmp.ne.s32.totalorder %s52, %s54
      %p58 = scmp.eq.s32.totalorder %s18, 0
      %p59 = por %p57, %p58
      %p60 = scmp.ne.s32.totalorder %s52, %s54
      %p61 = scmp.eq.s32.totalorder %s23, 1
      %p62 = por %p60, %p61
      %p63 = scmp.ne.s32.totalorder %s54, %s55
      %p64 = scmp.eq.s32.totalorder %s23, 0
      %p65 = por %p63, %p64
      %p66 = scmp.ne.s32.totalorder %s54, %s55
      %p67 = scmp.eq.s32.totalorder %s24, 1
      %p68 = por %p66, %p67
      %p70 = scmp.ne.s32.totalorder %s55, %s69
      %p71 = scmp.eq.s32.totalorder %s24, 0
      %p72 = por %p70, %p71
      %s74 = sadd.s32 %s73, 1
      %p77 = scmp.eq.s32.totalorder %s18, 1
      %p78 = scmp.ne.s32.totalorder %s73, %s75
      %p79 = scmp.eq.s32.totalorder %s18, 0
      %p80 = por %p78, %p79
      %p81 = scmp.ne.s32.totalorder %s73, %s75
      %p82 = scmp.eq.s32.totalorder %s23, 1
      %p83 = por %p81, %p82
      %p84 = scmp.ne.s32.totalorder %s75, %s76
      %p85 = scmp.eq.s32.totalorder %s23, 0
      %p86 = por %p84, %p85
      %p87 = scmp.ne.s32.totalorder %s75, %s76
      %p88 = scmp.eq.s32.totalorder %s24, 1
      %p89 = por %p87, %p88
      %p91 = scmp.ne.s32.totalorder %s76, %s90
      %p92 = scmp.eq.s32.totalorder %s24, 0
      %p93 = por %p91, %p92
      %s95 = sadd.s32 %s94, 1
      %p98 = scmp.eq.s32.totalorder %s18, 1
      %p99 = scmp.ne.s32.totalorder %s94, %s96
      %p100 = scmp.eq.s32.totalorder %s18, 0
      %p101 = por %p99, %p100
      %p102 = scmp.ne.s32.totalorder %s94, %s96
      %p103 = scmp.eq.s32.totalorder %s23, 1
      %p104 = por %p102, %p103
      %p105 = scmp.ne.s32.totalorder %s96, %s97
      %p106 = scmp.eq.s32.totalorder %s23, 0
      %p107 = por %p105, %p106
      %p108 = scmp.ne.s32.totalorder %s96, %s97
      %p109 = scmp.eq.s32.totalorder %s24, 1
      %p110 = por %p108, %p109
      %p112 = scmp.ne.s32.totalorder %s97, %s111
      %p113 = scmp.eq.s32.totalorder %s24, 0
      %p114 = por %p112, %p113
      %s116 = sadd.s32 %s115, 1
      %p119 = scmp.eq.s32.totalorder %s18, 1
      %p120 = scmp.ne.s32.totalorder %s115, %s117
      %p121 = scmp.eq.s32.totalorder %s18, 0
      %p122 = por %p120, %p121
      %p123 = scmp.ne.s32.totalorder %s115, %s117
      %p124 = scmp.eq.s32.totalorder %s23, 1
      %p125 = por %p123, %p124
      %p126 = scmp.ne.s32.totalorder %s117, %s118
      %p127 = scmp.eq.s32.totalorder %s23, 0
      %p128 = por %p126, %p127
      %p129 = scmp.ne.s32.totalorder %s117, %s118
      %p130 = scmp.eq.s32.totalorder %s24, 1
      %p131 = por %p129, %p130
      %p133 = scmp.ne.s32.totalorder %s118, %s132
      %p134 = scmp.eq.s32.totalorder %s24, 0
      %p135 = por %p133, %p134
      %s137 = sadd.s32 %s136, 1
      %p140 = scmp.eq.s32.totalorder %s18, 1
      %p141 = scmp.ne.s32.totalorder %s136, %s138
      %p142 = scmp.eq.s32.totalorder %s18, 0
      %p143 = por %p141, %p142
      %p144 = scmp.ne.s32.totalorder %s136, %s138
      %p145 = scmp.eq.s32.totalorder %s23, 1
      %p146 = por %p144, %p145
      %p147 = scmp.ne.s32.totalorder %s138, %s139
      %p148 = scmp.eq.s32.totalorder %s23, 0
      %p149 = por %p147, %p148
      %p150 = scmp.ne.s32.totalorder %s138, %s139
      %p151 = scmp.eq.s32.totalorder %s24, 1
      %p152 = por %p150, %p151
      %p154 = scmp.ne.s32.totalorder %s139, %s153
      %p155 = scmp.eq.s32.totalorder %s24, 0
      %p156 = por %p154, %p155
      %s158 = sadd.s32 %s157, 1
      %p161 = scmp.eq.s32.totalorder %s18, 1
      %p162 = scmp.ne.s32.totalorder %s157, %s159
      %p163 = scmp.eq.s32.totalorder %s18, 0
      %p164 = por %p162, %p163
      %p165 = scmp.ne.s32.totalorder %s157, %s159
      %p166 = scmp.eq.s32.totalorder %s23, 1
      %p167 = por %p165, %p166
      %p168 = scmp.ne.s32.totalorder %s159, %s160
      %p169 = scmp.eq.s32.totalorder %s23, 0
      %p170 = por %p168, %p169
      %p171 = scmp.ne.s32.totalorder %s159, %s160
      %p172 = scmp.eq.s32.totalorder %s24, 1
      %p173 = por %p171, %p172
      %p175 = scmp.ne.s32.totalorder %s160, %s174
      %p176 = scmp.eq.s32.totalorder %s24, 0
      %p177 = por %p175, %p176
      %s179 = sadd.s32 %s178, 1
      %p182 = scmp.eq.s32.totalorder %s18, 1
      %p183 = scmp.ne.s32.totalorder %s178, %s180
      %p184 = scmp.eq.s32.totalorder %s18, 0
      %p185 = por %p183, %p184
      %p186 = scmp.ne.s32.totalorder %s178, %s180
      %p187 = scmp.eq.s32.totalorder %s23, 1
      %p188 = por %p186, %p187
      %p189 = scmp.ne.s32.totalorder %s180, %s181
      %p190 = scmp.eq.s32.totalorder %s23, 0
      %p191 = por %p189, %p190
      %p192 = scmp.ne.s32.totalorder %s180, %s181
      %p193 = scmp.eq.s32.totalorder %s24, 1
      %p194 = por %p192, %p193
      %p196 = scmp.ne.s32.totalorder %s181, %s195
      %p197 = scmp.eq.s32.totalorder %s24, 0
      %p198 = por %p196, %p197
      %s200 = sadd.s32 %s199, 1
      %p203 = scmp.eq.s32.totalorder %s18, 1
      %p204 = scmp.ne.s32.totalorder %s199, %s201
      %p205 = scmp.eq.s32.totalorder %s18, 0
      %p206 = por %p204, %p205
      %p207 = scmp.ne.s32.totalorder %s199, %s201
      %p208 = scmp.eq.s32.totalorder %s23, 1
      %p209 = por %p207, %p208
      %p210 = scmp.ne.s32.totalorder %s201, %s202
      %p211 = scmp.eq.s32.totalorder %s23, 0
      %p212 = por %p210, %p211
      %p213 = scmp.ne.s32.totalorder %s201, %s202
      %p214 = scmp.eq.s32.totalorder %s24, 1
      %p215 = por %p213, %p214
      %p217 = scmp.ne.s32.totalorder %s202, %s216
      %p218 = scmp.eq.s32.totalorder %s24, 0
      %p219 = por %p217, %p218
      %s220 = ssub.s32 %s18, %s25
      %p221 = scmp.eq.s32.totalorder %s220, 0
      %s223 = sadd.s32 %s222, 1
      %s224 = scalar_select %p221, %s222, %s223
      %p227 = pneg %p221
      %p228 = scmp.eq.s32.totalorder %s18, 1
      %p229 = por %p227, %p228
      %p230 = scmp.ne.s32.totalorder %s222, %s225
      %p231 = scmp.eq.s32.totalorder %s18, 0
      %p232 = por %p230, %p231
      %p233 = scmp.ne.s32.totalorder %s222, %s225
      %p234 = scmp.eq.s32.totalorder %s23, 1
      %p235 = por %p233, %p234
      %p236 = scmp.ne.s32.totalorder %s225, %s226
      %p237 = scmp.eq.s32.totalorder %s23, 0
      %p238 = por %p236, %p237
      %p239 = scmp.ne.s32.totalorder %s225, %s226
      %p240 = scmp.eq.s32.totalorder %s24, 1
      %p241 = por %p239, %p240
      %p243 = scmp.ne.s32.totalorder %s226, %s242
      %p244 = scmp.eq.s32.totalorder %s24, 0
      %p245 = por %p243, %p244
      %p246 = scmp.le.s32.totalorder 1, %s18
      %p247 = scmp.lt.s32.totalorder %s18, 3
      %p248 = pnand %p246, %p247
      %p249 = pneg %p248
      // Predicated region
      $region9: #{tpu_custom_call.1} parent=5 // pred_check
        _
      $region10: #{tpu_custom_call.1} parent=5 // pred_check_branch
        %251 = sbr.rel (%p248) target = $region12
      $region11: #{tpu_custom_call.1} parent=5 // pred_region
        %s252 = ssub.s32 %s18, 1
        // Predicated region
        $region13: #{tpu_custom_call.1} parent=11 // pred_check
          %p253 = pneg %p65
        $region14: #{tpu_custom_call.1} parent=11 // pred_check_branch
          %255 = sbr.rel (%p253) target = $region16
        $region15: #{tpu_custom_call.1} parent=11 // pred_region
          _
        $region16: #{tpu_custom_call.1} parent=11 // pred_fallthru
          _
        // Predicated region
        $region17: #{tpu_custom_call.1} parent=11 // pred_check
          %p256 = pneg %p86
        $region18: #{tpu_custom_call.1} parent=11 // pred_check_branch
          %258 = sbr.rel (%p256) target = $region20
        $region19: #{tpu_custom_call.1} parent=11 // pred_region
          _
        $region20: #{tpu_custom_call.1} parent=11 // pred_fallthru
          _
        // Predicated region
        $region21: #{tpu_custom_call.1} parent=11 // pred_check
          %p259 = pneg %p107
        $region22: #{tpu_custom_call.1} parent=11 // pred_check_branch
          %261 = sbr.rel (%p259) target = $region24
        $region23: #{tpu_custom_call.1} parent=11 // pred_region
          _
        $region24: #{tpu_custom_call.1} parent=11 // pred_fallthru
          _
        // Predicated region
        $region25: #{tpu_custom_call.1} parent=11 // pred_check
          %p262 = pneg %p128
        $region26: #{tpu_custom_call.1} parent=11 // pred_check_branch
          %264 = sbr.rel (%p262) target = $region28
        $region27: #{tpu_custom_call.1} parent=11 // pred_region
          _
        $region28: #{tpu_custom_call.1} parent=11 // pred_fallthru
          _
        // Predicated region
        $region29: #{tpu_custom_call.1} parent=11 // pred_check
          %p265 = pneg %p149
        $region30: #{tpu_custom_call.1} parent=11 // pred_check_branch
          %267 = sbr.rel (%p265) target = $region32
        $region31: #{tpu_custom_call.1} parent=11 // pred_region
          _
        $region32: #{tpu_custom_call.1} parent=11 // pred_fallthru
          _
        // Predicated region
        $region33: #{tpu_custom_call.1} parent=11 // pred_check
          %p268 = pneg %p170
        $region34: #{tpu_custom_call.1} parent=11 // pred_check_branch
          %270 = sbr.rel (%p268) target = $region36
        $region35: #{tpu_custom_call.1} parent=11 // pred_region
          _
        $region36: #{tpu_custom_call.1} parent=11 // pred_fallthru
          _
        // Predicated region
        $region37: #{tpu_custom_call.1} parent=11 // pred_check
          %p271 = pneg %p191
        $region38: #{tpu_custom_call.1} parent=11 // pred_check_branch
          %273 = sbr.rel (%p271) target = $region40
        $region39: #{tpu_custom_call.1} parent=11 // pred_region
          _
        $region40: #{tpu_custom_call.1} parent=11 // pred_fallthru
          _
        // Predicated region
        $region41: #{tpu_custom_call.1} parent=11 // pred_check
          %p274 = pneg %p212
        $region42: #{tpu_custom_call.1} parent=11 // pred_check_branch
          %276 = sbr.rel (%p274) target = $region44
        $region43: #{tpu_custom_call.1} parent=11 // pred_region
          _
        $region44: #{tpu_custom_call.1} parent=11 // pred_fallthru
          _
      $region12: #{tpu_custom_call.1} parent=5 // pred_fallthru
        _
      %p277 = scmp.lt.s32.totalorder %s18, 2
      // Predicated region
      $region45: #{tpu_custom_call.1} parent=5 // pred_check
        %p278 = pneg %p277
      $region46: #{tpu_custom_call.1} parent=5 // pred_check_branch
        %280 = sbr.rel (%p278) target = $region48
      $region47: #{tpu_custom_call.1} parent=5 // pred_region
        // Predicated region
        $region49: #{tpu_custom_call.1} parent=47 // pred_check
          %p281 = pneg %p38
        $region50: #{tpu_custom_call.1} parent=47 // pred_check_branch
          %283 = sbr.rel (%p281) target = $region52
        $region51: #{tpu_custom_call.1} parent=47 // pred_region
          %s284 = smul.u32 2, %s18
          %p285 = scmp.lt.s32.totalorder %s284, 3
          %s286 = scalar_select %p285, %s284, 3
          %s287 = smul.addr %s286, 2
          %s288 = scalar_lea.vmem %s0, %s287
          %s289 = smul.u32 2, %s18
        $region52: #{tpu_custom_call.1} parent=47 // pred_fallthru
          _
      $region48: #{tpu_custom_call.1} parent=5 // pred_fallthru
        _
      %p290 = scmp.le.s32.totalorder 1, %s18
      %p291 = scmp.lt.s32.totalorder %s18, 3
      %p292 = pnand %p290, %p291
      %p293 = pneg %p292
      // Predicated region
      $region53: #{tpu_custom_call.1} parent=5 // pred_check
        _
      $region54: #{tpu_custom_call.1} parent=5 // pred_check_branch
        %295 = sbr.rel (%p292) target = $region56
      $region55: #{tpu_custom_call.1} parent=5 // pred_region
        %s296 = ssub.s32 %s18, 1
        %s297 = smul.u32 2, %s23
        %p298 = scmp.lt.s32.totalorder %s297, 3
        %s299 = scalar_select %p298, %s297, 3
        %s300 = smul.addr %s299, 2
        %s301 = scalar_lea.vmem %s0, %s300
        %p302 = pneg %p44
        %p303 = pneg %p41
        %p304 = pneg %p65
        %p305 = pneg %p62
        %p306 = pneg %p86
        %p307 = pneg %p83
        %p308 = pneg %p107
        %p309 = pneg %p104
        %p310 = pneg %p128
        %p311 = pneg %p125
        %p312 = pneg %p149
        %p313 = pneg %p146
        %p314 = pneg %p170
        %p315 = pneg %p167
        %p316 = pneg %p191
        %p317 = pneg %p188
        %p318 = pneg %p212
        %p319 = pneg %p209
        %p320 = pneg %p238
        %p321 = pneg %p235
        %s322 = sand.u32 %s225, 1
        %s323 = scalar_lea.sflag [#allocation3], %s322
        %s324 = sand.u32 %s225, 1
        %s325 = smul.addr %s324, 32
        %s326 = scalar_lea.vmem [#allocation2], %s325
        %s327 = smul.u32 2, %s23
        %p328 = scmp.lt.s32.totalorder %s327, 3
        %s329 = scalar_select %p328, %s327, 3
        %s330 = smul.addr %s329, 2
        %s331 = scalar_lea.vmem %s0, %s330
        %s332 = smul.u32 2, %s23
        %s333 = smul.u32 2, %s23
        %v334 = vld [vmem:[%s331] sm:$0xf]
        %v335 = vld [vmem:[%s1] sm:$0xff]
        %v336 = vld [vmem:[%s1 + $0x8] sm:$0xff]
        %v337 = vld [vmem:[%s1 + $0x10] sm:$0xff]
        %v338 = vld [vmem:[%s1 + $0x18] sm:$0xff]
        %v339 = vld [vmem:[%s1 + $0x20] sm:$0xff]
        %v340 = vld [vmem:[%s1 + $0x28] sm:$0xff]
        %v341 = vld [vmem:[%s1 + $0x30] sm:$0xff]
        %v342 = vld [vmem:[%s1 + $0x38] sm:$0xff]
        %v343 = vld [vmem:[%s1 + $0x40] sm:$0xff]
        %v344 = vld [vmem:[%s1 + $0x48] sm:$0xff]
        %v345 = vld [vmem:[%s1 + $0x50] sm:$0xff]
        %v346 = vld [vmem:[%s1 + $0x58] sm:$0xff]
        %v347 = vld [vmem:[%s1 + $0x60] sm:$0xff]
        %v348 = vld [vmem:[%s1 + $0x68] sm:$0xff]
        %v349 = vld [vmem:[%s1 + $0x70] sm:$0xff]
        %v350 = vld [vmem:[%s1 + $0x78] sm:$0xff]
        %v351 = vld [vmem:[%s1 + $0x80] sm:$0xff]
        %v352 = vld [vmem:[%s1 + $0x88] sm:$0xff]
        %v353 = vld [vmem:[%s1 + $0x90] sm:$0xff]
        %v354 = vld [vmem:[%s1 + $0x98] sm:$0xff]
        %v355 = vld [vmem:[%s1 + $0xa0] sm:$0xff]
        %v356 = vld [vmem:[%s1 + $0xa8] sm:$0xff]
        %v357 = vld [vmem:[%s1 + $0xb0] sm:$0xff]
        %v358 = vld [vmem:[%s1 + $0xb8] sm:$0xff]
        %v359 = vld [vmem:[%s1 + $0xc0] sm:$0xff]
        %v360 = vld [vmem:[%s1 + $0xc8] sm:$0xff]
        %v361 = vld [vmem:[%s1 + $0xd0] sm:$0xff]
        %v362 = vld [vmem:[%s1 + $0xd8] sm:$0xff]
        %364 = vset.pattern.permute.xlu0 0
        %365 = vperm.xlu0 %364, %v335
        %v366 = vpop.permute.xlu0 %365
        %369 = vset.pattern.permute.xlu0 0
        %370 = vperm.xlu0 %369, %v336
        %v371 = vpop.permute.xlu0 %370
        %374 = vset.pattern.permute.xlu0 0
        %375 = vperm.xlu0 %374, %v337
        %v376 = vpop.permute.xlu0 %375
        %379 = vset.pattern.permute.xlu0 0
        %380 = vperm.xlu0 %379, %v338
        %v381 = vpop.permute.xlu0 %380
        %384 = vset.pattern.permute.xlu0 0
        %385 = vperm.xlu0 %384, %v339
        %v386 = vpop.permute.xlu0 %385
        %389 = vset.pattern.permute.xlu0 0
        %390 = vperm.xlu0 %389, %v340
        %v391 = vpop.permute.xlu0 %390
        %394 = vset.pattern.permute.xlu0 0
        %395 = vperm.xlu0 %394, %v341
        %v396 = vpop.permute.xlu0 %395
        %399 = vset.pattern.permute.xlu0 0
        %400 = vperm.xlu0 %399, %v342
        %v401 = vpop.permute.xlu0 %400
        %404 = vset.pattern.permute.xlu0 0
        %405 = vperm.xlu0 %404, %v343
        %v406 = vpop.permute.xlu0 %405
        %409 = vset.pattern.permute.xlu0 0
        %410 = vperm.xlu0 %409, %v344
        %v411 = vpop.permute.xlu0 %410
        %414 = vset.pattern.permute.xlu0 0
        %415 = vperm.xlu0 %414, %v345
        %v416 = vpop.permute.xlu0 %415
        %419 = vset.pattern.permute.xlu0 0
        %420 = vperm.xlu0 %419, %v346
        %v421 = vpop.permute.xlu0 %420
        %424 = vset.pattern.permute.xlu0 0
        %425 = vperm.xlu0 %424, %v347
        %v426 = vpop.permute.xlu0 %425
        %429 = vset.pattern.permute.xlu0 0
        %430 = vperm.xlu0 %429, %v348
        %v431 = vpop.permute.xlu0 %430
        %434 = vset.pattern.permute.xlu0 0
        %435 = vperm.xlu0 %434, %v349
        %v436 = vpop.permute.xlu0 %435
        %439 = vset.pattern.permute.xlu0 0
        %440 = vperm.xlu0 %439, %v350
        %v441 = vpop.permute.xlu0 %440
        %444 = vset.pattern.permute.xlu0 0
        %445 = vperm.xlu0 %444, %v351
        %v446 = vpop.permute.xlu0 %445
        %449 = vset.pattern.permute.xlu0 0
        %450 = vperm.xlu0 %449, %v352
        %v451 = vpop.permute.xlu0 %450
        %454 = vset.pattern.permute.xlu0 0
        %455 = vperm.xlu0 %454, %v353
        %v456 = vpop.permute.xlu0 %455
        %459 = vset.pattern.permute.xlu0 0
        %460 = vperm.xlu0 %459, %v354
        %v461 = vpop.permute.xlu0 %460
        %464 = vset.pattern.permute.xlu0 0
        %465 = vperm.xlu0 %464, %v355
        %v466 = vpop.permute.xlu0 %465
        %469 = vset.pattern.permute.xlu0 0
        %470 = vperm.xlu0 %469, %v356
        %v471 = vpop.permute.xlu0 %470
        %474 = vset.pattern.permute.xlu0 0
        %475 = vperm.xlu0 %474, %v357
        %v476 = vpop.permute.xlu0 %475
        %479 = vset.pattern.permute.xlu0 0
        %480 = vperm.xlu0 %479, %v358
        %v481 = vpop.permute.xlu0 %480
        %484 = vset.pattern.permute.xlu0 0
        %485 = vperm.xlu0 %484, %v359
        %v486 = vpop.permute.xlu0 %485
        %489 = vset.pattern.permute.xlu0 0
        %490 = vperm.xlu0 %489, %v360
        %v491 = vpop.permute.xlu0 %490
        %494 = vset.pattern.permute.xlu0 0
        %495 = vperm.xlu0 %494, %v361
        %v496 = vpop.permute.xlu0 %495
        %499 = vset.pattern.permute.xlu0 0
        %500 = vperm.xlu0 %499, %v362
        %v501 = vpop.permute.xlu0 %500
        %v504 = vperm.slane %v334, 0
        %v505 = vperm.slane %v334, 2
        %v508 = vperm.slane %v504, 0
        %v509 = vperm.slane %v505, 0
        %v510 = vmul.f32 %v366, %v508
        %v511 = vmul.f32 %v366, %v509
        %v512 = vmul.f32 %v371, %v508
        %v513 = vmul.f32 %v371, %v509
        %v514 = vmul.f32 %v376, %v508
        %v515 = vmul.f32 %v376, %v509
        %v516 = vmul.f32 %v381, %v508
        %v517 = vmul.f32 %v381, %v509
        %v518 = vmul.f32 %v386, %v508
        %v519 = vmul.f32 %v386, %v509
        %v520 = vmul.f32 %v391, %v508
        %v521 = vmul.f32 %v391, %v509
        %v522 = vmul.f32 %v396, %v508
        %v523 = vmul.f32 %v396, %v509
        %v524 = vmul.f32 %v401, %v508
        %v525 = vmul.f32 %v401, %v509
        %v526 = vmul.f32 %v406, %v508
        %v527 = vmul.f32 %v406, %v509
        %v528 = vmul.f32 %v411, %v508
        %v529 = vmul.f32 %v411, %v509
        %v530 = vmul.f32 %v416, %v508
        %v531 = vmul.f32 %v416, %v509
        %v532 = vmul.f32 %v421, %v508
        %v533 = vmul.f32 %v421, %v509
        %v534 = vmul.f32 %v426, %v508
        %v535 = vmul.f32 %v426, %v509
        %v536 = vmul.f32 %v431, %v508
        %v537 = vmul.f32 %v431, %v509
        %v538 = vmul.f32 %v436, %v508
        %v539 = vmul.f32 %v436, %v509
        %v540 = vmul.f32 %v441, %v508
        %v541 = vmul.f32 %v441, %v509
        %v542 = vmul.f32 %v446, %v508
        %v543 = vmul.f32 %v446, %v509
        %v544 = vmul.f32 %v451, %v508
        %v545 = vmul.f32 %v451, %v509
        %v546 = vmul.f32 %v456, %v508
        %v547 = vmul.f32 %v456, %v509
        %v548 = vmul.f32 %v461, %v508
        %v549 = vmul.f32 %v461, %v509
        %v550 = vmul.f32 %v466, %v508
        %v551 = vmul.f32 %v466, %v509
        %v552 = vmul.f32 %v471, %v508
        %v553 = vmul.f32 %v471, %v509
        %v554 = vmul.f32 %v476, %v508
        %v555 = vmul.f32 %v476, %v509
        %v556 = vmul.f32 %v481, %v508
        %v557 = vmul.f32 %v481, %v509
        %v558 = vmul.f32 %v486, %v508
        %v559 = vmul.f32 %v486, %v509
        %v560 = vmul.f32 %v491, %v508
        %v561 = vmul.f32 %v491, %v509
        %v562 = vmul.f32 %v496, %v508
        %v563 = vmul.f32 %v496, %v509
        %v564 = vmul.f32 %v501, %v508
        %v565 = vmul.f32 %v501, %v509
        %566 = vset.pattern.permute.xlu0 1
        %567 = vperm.xlu0 %566, %v335
        %v568 = vpop.permute.xlu0 %567
        %570 = vset.pattern.permute.xlu0 1
        %571 = vperm.xlu0 %570, %v336
        %v572 = vpop.permute.xlu0 %571
        %574 = vset.pattern.permute.xlu0 1
        %575 = vperm.xlu0 %574, %v337
        %v576 = vpop.permute.xlu0 %575
        %578 = vset.pattern.permute.xlu0 1
        %579 = vperm.xlu0 %578, %v338
        %v580 = vpop.permute.xlu0 %579
        %582 = vset.pattern.permute.xlu0 1
        %583 = vperm.xlu0 %582, %v339
        %v584 = vpop.permute.xlu0 %583
        %586 = vset.pattern.permute.xlu0 1
        %587 = vperm.xlu0 %586, %v340
        %v588 = vpop.permute.xlu0 %587
        %590 = vset.pattern.permute.xlu0 1
        %591 = vperm.xlu0 %590, %v341
        %v592 = vpop.permute.xlu0 %591
        %594 = vset.pattern.permute.xlu0 1
        %595 = vperm.xlu0 %594, %v342
        %v596 = vpop.permute.xlu0 %595
        %598 = vset.pattern.permute.xlu0 1
        %599 = vperm.xlu0 %598, %v343
        %v600 = vpop.permute.xlu0 %599
        %602 = vset.pattern.permute.xlu0 1
        %603 = vperm.xlu0 %602, %v344
        %v604 = vpop.permute.xlu0 %603
        %606 = vset.pattern.permute.xlu0 1
        %607 = vperm.xlu0 %606, %v345
        %v608 = vpop.permute.xlu0 %607
        %610 = vset.pattern.permute.xlu0 1
        %611 = vperm.xlu0 %610, %v346
        %v612 = vpop.permute.xlu0 %611
        %614 = vset.pattern.permute.xlu0 1
        %615 = vperm.xlu0 %614, %v347
        %v616 = vpop.permute.xlu0 %615
        %618 = vset.pattern.permute.xlu0 1
        %619 = vperm.xlu0 %618, %v348
        %v620 = vpop.permute.xlu0 %619
        %622 = vset.pattern.permute.xlu0 1
        %623 = vperm.xlu0 %622, %v349
        %v624 = vpop.permute.xlu0 %623
        %626 = vset.pattern.permute.xlu0 1
        %627 = vperm.xlu0 %626, %v350
        %v628 = vpop.permute.xlu0 %627
        %630 = vset.pattern.permute.xlu0 1
        %631 = vperm.xlu0 %630, %v351
        %v632 = vpop.permute.xlu0 %631
        %634 = vset.pattern.permute.xlu0 1
        %635 = vperm.xlu0 %634, %v352
        %v636 = vpop.permute.xlu0 %635
        %638 = vset.pattern.permute.xlu0 1
        %639 = vperm.xlu0 %638, %v353
        %v640 = vpop.permute.xlu0 %639
        %642 = vset.pattern.permute.xlu0 1
        %643 = vperm.xlu0 %642, %v354
        %v644 = vpop.permute.xlu0 %643
        %646 = vset.pattern.permute.xlu0 1
        %647 = vperm.xlu0 %646, %v355
        %v648 = vpop.permute.xlu0 %647
        %650 = vset.pattern.permute.xlu0 1
        %651 = vperm.xlu0 %650, %v356
        %v652 = vpop.permute.xlu0 %651
        %654 = vset.pattern.permute.xlu0 1
        %655 = vperm.xlu0 %654, %v357
        %v656 = vpop.permute.xlu0 %655
        %658 = vset.pattern.permute.xlu0 1
        %659 = vperm.xlu0 %658, %v358
        %v660 = vpop.permute.xlu0 %659
        %662 = vset.pattern.permute.xlu0 1
        %663 = vperm.xlu0 %662, %v359
        %v664 = vpop.permute.xlu0 %663
        %666 = vset.pattern.permute.xlu0 1
        %667 = vperm.xlu0 %666, %v360
        %v668 = vpop.permute.xlu0 %667
        %670 = vset.pattern.permute.xlu0 1
        %671 = vperm.xlu0 %670, %v361
        %v672 = vpop.permute.xlu0 %671
        %674 = vset.pattern.permute.xlu0 1
        %675 = vperm.xlu0 %674, %v362
        %v676 = vpop.permute.xlu0 %675
        %v678 = vperm.slane %v334, 1
        %v679 = vperm.slane %v334, 3
        %v682 = vperm.slane %v678, 1
        %v683 = vperm.slane %v679, 1
        %v684 = vmul.f32 %v568, %v682
        %v685 = vmul.f32 %v568, %v683
        %v686 = vmul.f32 %v572, %v682
        %v687 = vmul.f32 %v572, %v683
        %v688 = vmul.f32 %v576, %v682
        %v689 = vmul.f32 %v576, %v683
        %v690 = vmul.f32 %v580, %v682
        %v691 = vmul.f32 %v580, %v683
        %v692 = vmul.f32 %v584, %v682
        %v693 = vmul.f32 %v584, %v683
        %v694 = vmul.f32 %v588, %v682
        %v695 = vmul.f32 %v588, %v683
        %v696 = vmul.f32 %v592, %v682
        %v697 = vmul.f32 %v592, %v683
        %v698 = vmul.f32 %v596, %v682
        %v699 = vmul.f32 %v596, %v683
        %v700 = vmul.f32 %v600, %v682
        %v701 = vmul.f32 %v600, %v683
        %v702 = vmul.f32 %v604, %v682
        %v703 = vmul.f32 %v604, %v683
        %v704 = vmul.f32 %v608, %v682
        %v705 = vmul.f32 %v608, %v683
        %v706 = vmul.f32 %v612, %v682
        %v707 = vmul.f32 %v612, %v683
        %v708 = vmul.f32 %v616, %v682
        %v709 = vmul.f32 %v616, %v683
        %v710 = vmul.f32 %v620, %v682
        %v711 = vmul.f32 %v620, %v683
        %v712 = vmul.f32 %v624, %v682
        %v713 = vmul.f32 %v624, %v683
        %v714 = vmul.f32 %v628, %v682
        %v715 = vmul.f32 %v628, %v683
        %v716 = vmul.f32 %v632, %v682
        %v717 = vmul.f32 %v632, %v683
        %v718 = vmul.f32 %v636, %v682
        %v719 = vmul.f32 %v636, %v683
        %v720 = vmul.f32 %v640, %v682
        %v721 = vmul.f32 %v640, %v683
        %v722 = vmul.f32 %v644, %v682
        %v723 = vmul.f32 %v644, %v683
        %v724 = vmul.f32 %v648, %v682
        %v725 = vmul.f32 %v648, %v683
        %v726 = vmul.f32 %v652, %v682
        %v727 = vmul.f32 %v652, %v683
        %v728 = vmul.f32 %v656, %v682
        %v729 = vmul.f32 %v656, %v683
        %v730 = vmul.f32 %v660, %v682
        %v731 = vmul.f32 %v660, %v683
        %v732 = vmul.f32 %v664, %v682
        %v733 = vmul.f32 %v664, %v683
        %v734 = vmul.f32 %v668, %v682
        %v735 = vmul.f32 %v668, %v683
        %v736 = vmul.f32 %v672, %v682
        %v737 = vmul.f32 %v672, %v683
        %v738 = vmul.f32 %v676, %v682
        %v739 = vmul.f32 %v676, %v683
        %v740 = vadd.f32 %v510, %v684
        %v741 = vadd.f32 %v511, %v685
        %v742 = vadd.f32 %v512, %v686
        %v743 = vadd.f32 %v513, %v687
        %v744 = vadd.f32 %v514, %v688
        %v745 = vadd.f32 %v515, %v689
        %v746 = vadd.f32 %v516, %v690
        %v747 = vadd.f32 %v517, %v691
        %v748 = vadd.f32 %v518, %v692
        %v749 = vadd.f32 %v519, %v693
        %v750 = vadd.f32 %v520, %v694
        %v751 = vadd.f32 %v521, %v695
        %v752 = vadd.f32 %v522, %v696
        %v753 = vadd.f32 %v523, %v697
        %v754 = vadd.f32 %v524, %v698
        %v755 = vadd.f32 %v525, %v699
        %v756 = vadd.f32 %v526, %v700
        %v757 = vadd.f32 %v527, %v701
        %v758 = vadd.f32 %v528, %v702
        %v759 = vadd.f32 %v529, %v703
        %v760 = vadd.f32 %v530, %v704
        %v761 = vadd.f32 %v531, %v705
        %v762 = vadd.f32 %v532, %v706
        %v763 = vadd.f32 %v533, %v707
        %v764 = vadd.f32 %v534, %v708
        %v765 = vadd.f32 %v535, %v709
        %v766 = vadd.f32 %v536, %v710
        %v767 = vadd.f32 %v537, %v711
        %v768 = vadd.f32 %v538, %v712
        %v769 = vadd.f32 %v539, %v713
        %v770 = vadd.f32 %v540, %v714
        %v771 = vadd.f32 %v541, %v715
        %v772 = vadd.f32 %v542, %v716
        %v773 = vadd.f32 %v543, %v717
        %v774 = vadd.f32 %v544, %v718
        %v775 = vadd.f32 %v545, %v719
        %v776 = vadd.f32 %v546, %v720
        %v777 = vadd.f32 %v547, %v721
        %v778 = vadd.f32 %v548, %v722
        %v779 = vadd.f32 %v549, %v723
        %v780 = vadd.f32 %v550, %v724
        %v781 = vadd.f32 %v551, %v725
        %v782 = vadd.f32 %v552, %v726
        %v783 = vadd.f32 %v553, %v727
        %v784 = vadd.f32 %v554, %v728
        %v785 = vadd.f32 %v555, %v729
        %v786 = vadd.f32 %v556, %v730
        %v787 = vadd.f32 %v557, %v731
        %v788 = vadd.f32 %v558, %v732
        %v789 = vadd.f32 %v559, %v733
        %v790 = vadd.f32 %v560, %v734
        %v791 = vadd.f32 %v561, %v735
        %v792 = vadd.f32 %v562, %v736
        %v793 = vadd.f32 %v563, %v737
        %v794 = vadd.f32 %v564, %v738
        %v795 = vadd.f32 %v565, %v739
        %v796 = vld [vmem:[%s2] sm:$0xff]
        %v797 = vld [vmem:[%s2 + $0x8] sm:$0xff]
        %v798 = vld [vmem:[%s2 + $0x10] sm:$0xff]
        %v799 = vld [vmem:[%s2 + $0x18] sm:$0xff]
        %v800 = vld [vmem:[%s2 + $0x20] sm:$0xff]
        %v801 = vld [vmem:[%s2 + $0x28] sm:$0xff]
        %v802 = vld [vmem:[%s2 + $0x30] sm:$0xff]
        %v803 = vld [vmem:[%s2 + $0x38] sm:$0xff]
        %v804 = vld [vmem:[%s2 + $0x40] sm:$0xff]
        %v805 = vld [vmem:[%s2 + $0x48] sm:$0xff]
        %v806 = vld [vmem:[%s2 + $0x50] sm:$0xff]
        %v807 = vld [vmem:[%s2 + $0x58] sm:$0xff]
        %v808 = vld [vmem:[%s2 + $0x60] sm:$0xff]
        %v809 = vld [vmem:[%s2 + $0x68] sm:$0xff]
        %v810 = vld [vmem:[%s2 + $0x70] sm:$0xff]
        %v811 = vld [vmem:[%s2 + $0x78] sm:$0xff]
        %v812 = vld [vmem:[%s2 + $0x80] sm:$0xff]
        %v813 = vld [vmem:[%s2 + $0x88] sm:$0xff]
        %v814 = vld [vmem:[%s2 + $0x90] sm:$0xff]
        %v815 = vld [vmem:[%s2 + $0x98] sm:$0xff]
        %v816 = vld [vmem:[%s2 + $0xa0] sm:$0xff]
        %v817 = vld [vmem:[%s2 + $0xa8] sm:$0xff]
        %v818 = vld [vmem:[%s2 + $0xb0] sm:$0xff]
        %v819 = vld [vmem:[%s2 + $0xb8] sm:$0xff]
        %v820 = vld [vmem:[%s2 + $0xc0] sm:$0xff]
        %v821 = vld [vmem:[%s2 + $0xc8] sm:$0xff]
        %v822 = vld [vmem:[%s2 + $0xd0] sm:$0xff]
        %v823 = vld [vmem:[%s2 + $0xd8] sm:$0xff]
        %825 = vset.pattern.permute.xlu0 0
        %826 = vperm.xlu0 %825, %v796
        %v827 = vpop.permute.xlu0 %826
        %830 = vset.pattern.permute.xlu0 0
        %831 = vperm.xlu0 %830, %v797
        %v832 = vpop.permute.xlu0 %831
        %835 = vset.pattern.permute.xlu0 0
        %836 = vperm.xlu0 %835, %v798
        %v837 = vpop.permute.xlu0 %836
        %840 = vset.pattern.permute.xlu0 0
        %841 = vperm.xlu0 %840, %v799
        %v842 = vpop.permute.xlu0 %841
        %845 = vset.pattern.permute.xlu0 0
        %846 = vperm.xlu0 %845, %v800
        %v847 = vpop.permute.xlu0 %846
        %850 = vset.pattern.permute.xlu0 0
        %851 = vperm.xlu0 %850, %v801
        %v852 = vpop.permute.xlu0 %851
        %855 = vset.pattern.permute.xlu0 0
        %856 = vperm.xlu0 %855, %v802
        %v857 = vpop.permute.xlu0 %856
        %860 = vset.pattern.permute.xlu0 0
        %861 = vperm.xlu0 %860, %v803
        %v862 = vpop.permute.xlu0 %861
        %865 = vset.pattern.permute.xlu0 0
        %866 = vperm.xlu0 %865, %v804
        %v867 = vpop.permute.xlu0 %866
        %870 = vset.pattern.permute.xlu0 0
        %871 = vperm.xlu0 %870, %v805
        %v872 = vpop.permute.xlu0 %871
        %875 = vset.pattern.permute.xlu0 0
        %876 = vperm.xlu0 %875, %v806
        %v877 = vpop.permute.xlu0 %876
        %880 = vset.pattern.permute.xlu0 0
        %881 = vperm.xlu0 %880, %v807
        %v882 = vpop.permute.xlu0 %881
        %885 = vset.pattern.permute.xlu0 0
        %886 = vperm.xlu0 %885, %v808
        %v887 = vpop.permute.xlu0 %886
        %890 = vset.pattern.permute.xlu0 0
        %891 = vperm.xlu0 %890, %v809
        %v892 = vpop.permute.xlu0 %891
        %895 = vset.pattern.permute.xlu0 0
        %896 = vperm.xlu0 %895, %v810
        %v897 = vpop.permute.xlu0 %896
        %900 = vset.pattern.permute.xlu0 0
        %901 = vperm.xlu0 %900, %v811
        %v902 = vpop.permute.xlu0 %901
        %905 = vset.pattern.permute.xlu0 0
        %906 = vperm.xlu0 %905, %v812
        %v907 = vpop.permute.xlu0 %906
        %910 = vset.pattern.permute.xlu0 0
        %911 = vperm.xlu0 %910, %v813
        %v912 = vpop.permute.xlu0 %911
        %915 = vset.pattern.permute.xlu0 0
        %916 = vperm.xlu0 %915, %v814
        %v917 = vpop.permute.xlu0 %916
        %920 = vset.pattern.permute.xlu0 0
        %921 = vperm.xlu0 %920, %v815
        %v922 = vpop.permute.xlu0 %921
        %925 = vset.pattern.permute.xlu0 0
        %926 = vperm.xlu0 %925, %v816
        %v927 = vpop.permute.xlu0 %926
        %930 = vset.pattern.permute.xlu0 0
        %931 = vperm.xlu0 %930, %v817
        %v932 = vpop.permute.xlu0 %931
        %935 = vset.pattern.permute.xlu0 0
        %936 = vperm.xlu0 %935, %v818
        %v937 = vpop.permute.xlu0 %936
        %940 = vset.pattern.permute.xlu0 0
        %941 = vperm.xlu0 %940, %v819
        %v942 = vpop.permute.xlu0 %941
        %945 = vset.pattern.permute.xlu0 0
        %946 = vperm.xlu0 %945, %v820
        %v947 = vpop.permute.xlu0 %946
        %950 = vset.pattern.permute.xlu0 0
        %951 = vperm.xlu0 %950, %v821
        %v952 = vpop.permute.xlu0 %951
        %955 = vset.pattern.permute.xlu0 0
        %956 = vperm.xlu0 %955, %v822
        %v957 = vpop.permute.xlu0 %956
        %960 = vset.pattern.permute.xlu0 0
        %961 = vperm.xlu0 %960, %v823
        %v962 = vpop.permute.xlu0 %961
        %v964 = vadd.f32 %v740, %v827
        %v965 = vadd.f32 %v741, %v827
        %v966 = vadd.f32 %v742, %v832
        %v967 = vadd.f32 %v743, %v832
        %v968 = vadd.f32 %v744, %v837
        %v969 = vadd.f32 %v745, %v837
        %v970 = vadd.f32 %v746, %v842
        %v971 = vadd.f32 %v747, %v842
        %v972 = vadd.f32 %v748, %v847
        %v973 = vadd.f32 %v749, %v847
        %v974 = vadd.f32 %v750, %v852
        %v975 = vadd.f32 %v751, %v852
        %v976 = vadd.f32 %v752, %v857
        %v977 = vadd.f32 %v753, %v857
        %v978 = vadd.f32 %v754, %v862
        %v979 = vadd.f32 %v755, %v862
        %v980 = vadd.f32 %v756, %v867
        %v981 = vadd.f32 %v757, %v867
        %v982 = vadd.f32 %v758, %v872
        %v983 = vadd.f32 %v759, %v872
        %v984 = vadd.f32 %v760, %v877
        %v985 = vadd.f32 %v761, %v877
        %v986 = vadd.f32 %v762, %v882
        %v987 = vadd.f32 %v763, %v882
        %v988 = vadd.f32 %v764, %v887
        %v989 = vadd.f32 %v765, %v887
        %v990 = vadd.f32 %v766, %v892
        %v991 = vadd.f32 %v767, %v892
        %v992 = vadd.f32 %v768, %v897
        %v993 = vadd.f32 %v769, %v897
        %v994 = vadd.f32 %v770, %v902
        %v995 = vadd.f32 %v771, %v902
        %v996 = vadd.f32 %v772, %v907
        %v997 = vadd.f32 %v773, %v907
        %v998 = vadd.f32 %v774, %v912
        %v999 = vadd.f32 %v775, %v912
        %v1000 = vadd.f32 %v776, %v917
        %v1001 = vadd.f32 %v777, %v917
        %v1002 = vadd.f32 %v778, %v922
        %v1003 = vadd.f32 %v779, %v922
        %v1004 = vadd.f32 %v780, %v927
        %v1005 = vadd.f32 %v781, %v927
        %v1006 = vadd.f32 %v782, %v932
        %v1007 = vadd.f32 %v783, %v932
        %v1008 = vadd.f32 %v784, %v937
        %v1009 = vadd.f32 %v785, %v937
        %v1010 = vadd.f32 %v786, %v942
        %v1011 = vadd.f32 %v787, %v942
        %v1012 = vadd.f32 %v788, %v947
        %v1013 = vadd.f32 %v789, %v947
        %v1014 = vadd.f32 %v790, %v952
        %v1015 = vadd.f32 %v791, %v952
        %v1016 = vadd.f32 %v792, %v957
        %v1017 = vadd.f32 %v793, %v957
        %v1018 = vadd.f32 %v794, %v962
        %v1019 = vadd.f32 %v795, %v962
        %v1020 = vand.u32 2147483647, %v964
        %vm1021 = vcmp.le.f32.partialorder %v1020, 0.7853982
        %vm1022 = vcmp.lt.s32.totalorder %v964, 0
        %v1023 = vand.u32 %v964, 2139095040
        %v1024 = vshrl.u32 %v1023, 23
        %v1025 = vsub.s32 %v1024, 127
        %v1026 = vand.u32 2147483647, %v964
        %v1027 = vand.u32 %v1026, 8388607
        %v1028 = vor.u32 %v1027, 8388608
        %v1029 = vsub.s32 0, %v1028
        %v1030 = vadd.s32 %v1025, 1
        %vm1031 = vcmp.gt.s32.totalorder %v1030, 0
        %v1032 = vsel %vm1031, %v1030, 0
        %v1033 = vshrl.u32 %v1032, 5
        %v1034 = vand.u32 %v1032, 31
        %v1035 = vsub.s32 32, %v1034
        %v1036 = vshrl.u32 683565275, %v1035
        %v1037 = vshll.u32 683565275, %v1034
        %v1038 = vshrl.u32 2475754826, %v1035
        %v1039 = vor.u32 %v1037, %v1038
        %v1040 = vshll.u32 2475754826, %v1034
        %v1041 = vshrl.u32 2131351028, %v1035
        %v1042 = vor.u32 %v1040, %v1041
        %v1043 = vshll.u32 2131351028, %v1034
        %v1044 = vshrl.u32 2102212464, %v1035
        %v1045 = vor.u32 %v1043, %v1044
        %v1046 = vshll.u32 2102212464, %v1034
        %v1047 = vshrl.u32 920167782, %v1035
        %v1048 = vor.u32 %v1046, %v1047
        %v1049 = vshll.u32 920167782, %v1034
        %v1050 = vshrl.u32 1326507024, %v1035
        %v1051 = vor.u32 %v1049, %v1050
        %vm1052 = vcmp.lt.s32.totalorder %v1033, 1
        %vm1053 = vcmp.lt.s32.totalorder %v1033, 2
        %vm1054 = vcmp.lt.s32.totalorder %v1033, 3
        %vm1055 = vcmp.lt.s32.totalorder %v1033, 4
        %v1056 = vsel %vm1052, %v1036, %v1039
        %v1057 = vsel %vm1055, %v1045, 2102212464
        %v1058 = vsel %vm1054, %v1042, %v1057
        %v1059 = vsel %vm1053, %v1056, %v1058
        %v1060 = vsel %vm1052, %v1039, %v1042
        %v1061 = vsel %vm1055, %v1048, 920167782
        %v1062 = vsel %vm1054, %v1045, %v1061
        %v1063 = vsel %vm1053, %v1060, %v1062
        %v1064 = vsel %vm1052, %v1042, %v1045
        %v1065 = vsel %vm1055, %v1051, 1326507024
        %v1066 = vsel %vm1054, %v1048, %v1065
        %v1067 = vsel %vm1053, %v1064, %v1066
        %v1068 = vshll.u32 %v1028, 8
        %v1069 = vand.u32 %v1068, 65535
        %v1070 = vshrl.u32 %v1068, 16
        %v1071 = vand.u32 %v1067, 65535
        %v1072 = vshrl.u32 %v1067, 16
        %v1073 = vmul.u32 %v1069, %v1071
        %v1074 = vmul.u32 %v1069, %v1072
        %v1075 = vmul.u32 %v1070, %v1071
        %v1076 = vmul.u32 %v1070, %v1072
        %v1077 = vshll.u32 %v1074, 16
        %v1078 = vshrl.u32 %v1074, 16
        %v1079 = vshll.u32 %v1075, 16
        %v1080 = vshrl.u32 %v1075, 16
        %vm1081 = vc.u32 %v1073, %v1077
        %v1082 = vsel %vm1081, 1, 0
        %v1083 = vadd.s32 %v1073, %v1077
        %v1084 = vadd.s32 %v1076, %v1082
        %vm1085 = vc.u32 %v1083, %v1079
        %v1086 = vsel %vm1085, 1, 0
        %v1087 = vadd.s32 %v1083, %v1079
        %v1088 = vadd.s32 %v1084, %v1086
        %v1089 = vadd.s32 %v1088, %v1078
        %v1090 = vadd.s32 %v1089, %v1080
        %v1091 = vand.u32 %v1068, 65535
        %v1092 = vshrl.u32 %v1068, 16
        %v1093 = vand.u32 %v1063, 65535
        %v1094 = vshrl.u32 %v1063, 16
        %v1095 = vmul.u32 %v1091, %v1093
        %v1096 = vmul.u32 %v1091, %v1094
        %v1097 = vmul.u32 %v1092, %v1093
        %v1098 = vmul.u32 %v1092, %v1094
        %v1099 = vshll.u32 %v1096, 16
        %v1100 = vshrl.u32 %v1096, 16
        %v1101 = vshll.u32 %v1097, 16
        %v1102 = vshrl.u32 %v1097, 16
        %vm1103 = vc.u32 %v1095, %v1099
        %v1104 = vsel %vm1103, 1, 0
        %v1105 = vadd.s32 %v1095, %v1099
        %v1106 = vadd.s32 %v1098, %v1104
        %vm1107 = vc.u32 %v1105, %v1101
        %v1108 = vsel %vm1107, 1, 0
        %v1109 = vadd.s32 %v1105, %v1101
        %v1110 = vadd.s32 %v1106, %v1108
        %v1111 = vadd.s32 %v1110, %v1100
        %v1112 = vadd.s32 %v1111, %v1102
        %v1113 = vmul.u32 %v1068, %v1059
        %v1114 = vadd.s32 %v1090, %v1109
        %vm1115 = vc.u32 %v1090, %v1109
        %v1116 = vadd.s32 %v1112, 1
        %v1117 = vsel %vm1115, %v1116, %v1112
        %v1118 = vadd.s32 %v1113, %v1117
        %v1119 = vadd.s32 %v1118, 536870912
        %v1120 = vshrl.u32 %v1119, 30
        %v1121 = vshll.u32 %v1120, 30
        %v1122 = vsub.s32 %v1118, %v1121
        %vm1123 = vcmp.lt.s32.totalorder %v1122, 0
        %v1124 = vsub.s32 0, %v1122
        %v1125 = vsel %vm1123, %v1124, %v1122
        %v1126 = vclz %v1125
        %v1127 = vsub.s32 %v1126, 2
        %vm1128 = vcmp.gt.s32.totalorder 0, %v1127
        %v1129 = vsel %vm1128, 0, %v1127
        %v1130 = vsub.s32 32, %v1129
        %v1131 = vshll.u32 %v1122, %v1129
        %v1132 = vshrl.u32 %v1114, %v1130
        %v1133 = vor.u32 %v1131, %v1132
        %v1134 = vsub.s32 4294967266, %v1129
        %v1135 = vadd.s32 %v1134, 127
        %v1136 = vshll.u32 %v1135, 23
        %v1137 = vor.u32 4788187, %v1136
        %v1138 = vand.u32 2147483647, %v1137
        %v1140 = vcvt.s32.f32 %v1133
        %v1141 = vmul.f32 %v1140, %v1138
        %v1142 = vxor.u32 %v1141, 2147483648
        %v1143 = vsel %vm1022, %v1142, %v1141
        %v1144 = vsub.s32 4, %v1120
        %v1145 = vsel %vm1022, %v1144, %v1120
        %v1146 = vsel %vm1021, %v964, %v1143
        %v1147 = vsel %vm1021, 0, %v1145
        %v1148 = vmul.f32 %v1146, %v1146
        %v1149 = vmul.f32 %v1148, -0.001358992
        %v1150 = vadd.f32 %v1149, 0.041655596
        %v1151 = vmul.f32 %v1148, %v1150
        %v1152 = vadd.f32 %v1151, -0.4999988
        %v1153 = vmul.f32 %v1148, %v1152
        %v1154 = vadd.f32 1.0, %v1153
        %v1155 = vmul.f32 %v1146, %v1146
        %v1156 = vmul.f32 %v1155, -0.00019511016
        %v1157 = vadd.f32 %v1156, 0.008332121
        %v1158 = vmul.f32 %v1155, %v1157
        %v1159 = vadd.f32 %v1158, -0.16666654
        %v1160 = vmul.f32 %v1155, %v1159
        %v1161 = vadd.f32 %v1160, 1.0
        %v1162 = vmul.f32 %v1161, %v1146
        %vm1163 = vweird.f32 %v964
        %v1164 = vadd.s32 %v1147, 3
        %v1165 = vand.u32 %v1164, 3
        %vm1166 = vcmp.lt.s32.totalorder %v1165, 2
        %vm1167 = vcmp.eq.s32.totalorder %v1165, 0
        %v1168 = vxor.u32 %v1162, 2147483648
        %v1169 = vsel %vm1167, %v1154, %v1168
        %vm1170 = vcmp.eq.s32.totalorder %v1165, 2
        %v1171 = vxor.u32 %v1154, 2147483648
        %v1172 = vsel %vm1170, %v1171, %v1162
        %v1173 = vsel %vm1166, %v1169, %v1172
        %v1174 = vsel %vm1163, nan, %v1173
        %v1175 = vand.u32 2147483647, %v965
        %vm1176 = vcmp.le.f32.partialorder %v1175, 0.7853982
        %vm1177 = vcmp.lt.s32.totalorder %v965, 0
        %v1178 = vand.u32 %v965, 2139095040
        %v1179 = vshrl.u32 %v1178, 23
        %v1180 = vsub.s32 %v1179, 127
        %v1181 = vand.u32 2147483647, %v965
        %v1182 = vand.u32 %v1181, 8388607
        %v1183 = vor.u32 %v1182, 8388608
        %v1184 = vsub.s32 0, %v1183
        %v1185 = vadd.s32 %v1180, 1
        %vm1186 = vcmp.gt.s32.totalorder %v1185, 0
        %v1187 = vsel %vm1186, %v1185, 0
        %v1188 = vshrl.u32 %v1187, 5
        %v1189 = vand.u32 %v1187, 31
        %v1190 = vsub.s32 32, %v1189
        %v1191 = vshrl.u32 683565275, %v1190
        %v1192 = vshll.u32 683565275, %v1189
        %v1193 = vshrl.u32 2475754826, %v1190
        %v1194 = vor.u32 %v1192, %v1193
        %v1195 = vshll.u32 2475754826, %v1189
        %v1196 = vshrl.u32 2131351028, %v1190
        %v1197 = vor.u32 %v1195, %v1196
        %v1198 = vshll.u32 2131351028, %v1189
        %v1199 = vshrl.u32 2102212464, %v1190
        %v1200 = vor.u32 %v1198, %v1199
        %v1201 = vshll.u32 2102212464, %v1189
        %v1202 = vshrl.u32 920167782, %v1190
        %v1203 = vor.u32 %v1201, %v1202
        %v1204 = vshll.u32 920167782, %v1189
        %v1205 = vshrl.u32 1326507024, %v1190
        %v1206 = vor.u32 %v1204, %v1205
        %vm1207 = vcmp.lt.s32.totalorder %v1188, 1
        %vm1208 = vcmp.lt.s32.totalorder %v1188, 2
        %vm1209 = vcmp.lt.s32.totalorder %v1188, 3
        %vm1210 = vcmp.lt.s32.totalorder %v1188, 4
        %v1211 = vsel %vm1207, %v1191, %v1194
        %v1212 = vsel %vm1210, %v1200, 2102212464
        %v1213 = vsel %vm1209, %v1197, %v1212
        %v1214 = vsel %vm1208, %v1211, %v1213
        %v1215 = vsel %vm1207, %v1194, %v1197
        %v1216 = vsel %vm1210, %v1203, 920167782
        %v1217 = vsel %vm1209, %v1200, %v1216
        %v1218 = vsel %vm1208, %v1215, %v1217
        %v1219 = vsel %vm1207, %v1197, %v1200
        %v1220 = vsel %vm1210, %v1206, 1326507024
        %v1221 = vsel %vm1209, %v1203, %v1220
        %v1222 = vsel %vm1208, %v1219, %v1221
        %v1223 = vshll.u32 %v1183, 8
        %v1224 = vand.u32 %v1223, 65535
        %v1225 = vshrl.u32 %v1223, 16
        %v1226 = vand.u32 %v1222, 65535
        %v1227 = vshrl.u32 %v1222, 16
        %v1228 = vmul.u32 %v1224, %v1226
        %v1229 = vmul.u32 %v1224, %v1227
        %v1230 = vmul.u32 %v1225, %v1226
        %v1231 = vmul.u32 %v1225, %v1227
        %v1232 = vshll.u32 %v1229, 16
        %v1233 = vshrl.u32 %v1229, 16
        %v1234 = vshll.u32 %v1230, 16
        %v1235 = vshrl.u32 %v1230, 16
        %vm1236 = vc.u32 %v1228, %v1232
        %v1237 = vsel %vm1236, 1, 0
        %v1238 = vadd.s32 %v1228, %v1232
        %v1239 = vadd.s32 %v1231, %v1237
        %vm1240 = vc.u32 %v1238, %v1234
        %v1241 = vsel %vm1240, 1, 0
        %v1242 = vadd.s32 %v1238, %v1234
        %v1243 = vadd.s32 %v1239, %v1241
        %v1244 = vadd.s32 %v1243, %v1233
        %v1245 = vadd.s32 %v1244, %v1235
        %v1246 = vand.u32 %v1223, 65535
        %v1247 = vshrl.u32 %v1223, 16
        %v1248 = vand.u32 %v1218, 65535
        %v1249 = vshrl.u32 %v1218, 16
        %v1250 = vmul.u32 %v1246, %v1248
        %v1251 = vmul.u32 %v1246, %v1249
        %v1252 = vmul.u32 %v1247, %v1248
        %v1253 = vmul.u32 %v1247, %v1249
        %v1254 = vshll.u32 %v1251, 16
        %v1255 = vshrl.u32 %v1251, 16
        %v1256 = vshll.u32 %v1252, 16
        %v1257 = vshrl.u32 %v1252, 16
        %vm1258 = vc.u32 %v1250, %v1254
        %v1259 = vsel %vm1258, 1, 0
        %v1260 = vadd.s32 %v1250, %v1254
        %v1261 = vadd.s32 %v1253, %v1259
        %vm1262 = vc.u32 %v1260, %v1256
        %v1263 = vsel %vm1262, 1, 0
        %v1264 = vadd.s32 %v1260, %v1256
        %v1265 = vadd.s32 %v1261, %v1263
        %v1266 = vadd.s32 %v1265, %v1255
        %v1267 = vadd.s32 %v1266, %v1257
        %v1268 = vmul.u32 %v1223, %v1214
        %v1269 = vadd.s32 %v1245, %v1264
        %vm1270 = vc.u32 %v1245, %v1264
        %v1271 = vadd.s32 %v1267, 1
        %v1272 = vsel %vm1270, %v1271, %v1267
        %v1273 = vadd.s32 %v1268, %v1272
        %v1274 = vadd.s32 %v1273, 536870912
        %v1275 = vshrl.u32 %v1274, 30
        %v1276 = vshll.u32 %v1275, 30
        %v1277 = vsub.s32 %v1273, %v1276
        %vm1278 = vcmp.lt.s32.totalorder %v1277, 0
        %v1279 = vsub.s32 0, %v1277
        %v1280 = vsel %vm1278, %v1279, %v1277
        %v1281 = vclz %v1280
        %v1282 = vsub.s32 %v1281, 2
        %vm1283 = vcmp.gt.s32.totalorder 0, %v1282
        %v1284 = vsel %vm1283, 0, %v1282
        %v1285 = vsub.s32 32, %v1284
        %v1286 = vshll.u32 %v1277, %v1284
        %v1287 = vshrl.u32 %v1269, %v1285
        %v1288 = vor.u32 %v1286, %v1287
        %v1289 = vsub.s32 4294967266, %v1284
        %v1290 = vadd.s32 %v1289, 127
        %v1291 = vshll.u32 %v1290, 23
        %v1292 = vor.u32 4788187, %v1291
        %v1293 = vand.u32 2147483647, %v1292
        %v1295 = vcvt.s32.f32 %v1288
        %v1296 = vmul.f32 %v1295, %v1293
        %v1297 = vxor.u32 %v1296, 2147483648
        %v1298 = vsel %vm1177, %v1297, %v1296
        %v1299 = vsub.s32 4, %v1275
        %v1300 = vsel %vm1177, %v1299, %v1275
        %v1301 = vsel %vm1176, %v965, %v1298
        %v1302 = vsel %vm1176, 0, %v1300
        %v1303 = vmul.f32 %v1301, %v1301
        %v1304 = vmul.f32 %v1303, -0.001358992
        %v1305 = vadd.f32 %v1304, 0.041655596
        %v1306 = vmul.f32 %v1303, %v1305
        %v1307 = vadd.f32 %v1306, -0.4999988
        %v1308 = vmul.f32 %v1303, %v1307
        %v1309 = vadd.f32 1.0, %v1308
        %v1310 = vmul.f32 %v1301, %v1301
        %v1311 = vmul.f32 %v1310, -0.00019511016
        %v1312 = vadd.f32 %v1311, 0.008332121
        %v1313 = vmul.f32 %v1310, %v1312
        %v1314 = vadd.f32 %v1313, -0.16666654
        %v1315 = vmul.f32 %v1310, %v1314
        %v1316 = vadd.f32 %v1315, 1.0
        %v1317 = vmul.f32 %v1316, %v1301
        %vm1318 = vweird.f32 %v965
        %v1319 = vadd.s32 %v1302, 3
        %v1320 = vand.u32 %v1319, 3
        %vm1321 = vcmp.lt.s32.totalorder %v1320, 2
        %vm1322 = vcmp.eq.s32.totalorder %v1320, 0
        %v1323 = vxor.u32 %v1317, 2147483648
        %v1324 = vsel %vm1322, %v1309, %v1323
        %vm1325 = vcmp.eq.s32.totalorder %v1320, 2
        %v1326 = vxor.u32 %v1309, 2147483648
        %v1327 = vsel %vm1325, %v1326, %v1317
        %v1328 = vsel %vm1321, %v1324, %v1327
        %v1329 = vsel %vm1318, nan, %v1328
        %v1330 = vand.u32 2147483647, %v966
        %vm1331 = vcmp.le.f32.partialorder %v1330, 0.7853982
        %vm1332 = vcmp.lt.s32.totalorder %v966, 0
        %v1333 = vand.u32 %v966, 2139095040
        %v1334 = vshrl.u32 %v1333, 23
        %v1335 = vsub.s32 %v1334, 127
        %v1336 = vand.u32 2147483647, %v966
        %v1337 = vand.u32 %v1336, 8388607
        %v1338 = vor.u32 %v1337, 8388608
        %v1339 = vsub.s32 0, %v1338
        %v1340 = vadd.s32 %v1335, 1
        %vm1341 = vcmp.gt.s32.totalorder %v1340, 0
        %v1342 = vsel %vm1341, %v1340, 0
        %v1343 = vshrl.u32 %v1342, 5
        %v1344 = vand.u32 %v1342, 31
        %v1345 = vsub.s32 32, %v1344
        %v1346 = vshrl.u32 683565275, %v1345
        %v1347 = vshll.u32 683565275, %v1344
        %v1348 = vshrl.u32 2475754826, %v1345
        %v1349 = vor.u32 %v1347, %v1348
        %v1350 = vshll.u32 2475754826, %v1344
        %v1351 = vshrl.u32 2131351028, %v1345
        %v1352 = vor.u32 %v1350, %v1351
        %v1353 = vshll.u32 2131351028, %v1344
        %v1354 = vshrl.u32 2102212464, %v1345
        %v1355 = vor.u32 %v1353, %v1354
        %v1356 = vshll.u32 2102212464, %v1344
        %v1357 = vshrl.u32 920167782, %v1345
        %v1358 = vor.u32 %v1356, %v1357
        %v1359 = vshll.u32 920167782, %v1344
        %v1360 = vshrl.u32 1326507024, %v1345
        %v1361 = vor.u32 %v1359, %v1360
        %vm1362 = vcmp.lt.s32.totalorder %v1343, 1
        %vm1363 = vcmp.lt.s32.totalorder %v1343, 2
        %vm1364 = vcmp.lt.s32.totalorder %v1343, 3
        %vm1365 = vcmp.lt.s32.totalorder %v1343, 4
        %v1366 = vsel %vm1362, %v1346, %v1349
        %v1367 = vsel %vm1365, %v1355, 2102212464
        %v1368 = vsel %vm1364, %v1352, %v1367
        %v1369 = vsel %vm1363, %v1366, %v1368
        %v1370 = vsel %vm1362, %v1349, %v1352
        %v1371 = vsel %vm1365, %v1358, 920167782
        %v1372 = vsel %vm1364, %v1355, %v1371
        %v1373 = vsel %vm1363, %v1370, %v1372
        %v1374 = vsel %vm1362, %v1352, %v1355
        %v1375 = vsel %vm1365, %v1361, 1326507024
        %v1376 = vsel %vm1364, %v1358, %v1375
        %v1377 = vsel %vm1363, %v1374, %v1376
        %v1378 = vshll.u32 %v1338, 8
        %v1379 = vand.u32 %v1378, 65535
        %v1380 = vshrl.u32 %v1378, 16
        %v1381 = vand.u32 %v1377, 65535
        %v1382 = vshrl.u32 %v1377, 16
        %v1383 = vmul.u32 %v1379, %v1381
        %v1384 = vmul.u32 %v1379, %v1382
        %v1385 = vmul.u32 %v1380, %v1381
        %v1386 = vmul.u32 %v1380, %v1382
        %v1387 = vshll.u32 %v1384, 16
        %v1388 = vshrl.u32 %v1384, 16
        %v1389 = vshll.u32 %v1385, 16
        %v1390 = vshrl.u32 %v1385, 16
        %vm1391 = vc.u32 %v1383, %v1387
        %v1392 = vsel %vm1391, 1, 0
        %v1393 = vadd.s32 %v1383, %v1387
        %v1394 = vadd.s32 %v1386, %v1392
        %vm1395 = vc.u32 %v1393, %v1389
        %v1396 = vsel %vm1395, 1, 0
        %v1397 = vadd.s32 %v1393, %v1389
        %v1398 = vadd.s32 %v1394, %v1396
        %v1399 = vadd.s32 %v1398, %v1388
        %v1400 = vadd.s32 %v1399, %v1390
        %v1401 = vand.u32 %v1378, 65535
        %v1402 = vshrl.u32 %v1378, 16
        %v1403 = vand.u32 %v1373, 65535
        %v1404 = vshrl.u32 %v1373, 16
        %v1405 = vmul.u32 %v1401, %v1403
        %v1406 = vmul.u32 %v1401, %v1404
        %v1407 = vmul.u32 %v1402, %v1403
        %v1408 = vmul.u32 %v1402, %v1404
        %v1409 = vshll.u32 %v1406, 16
        %v1410 = vshrl.u32 %v1406, 16
        %v1411 = vshll.u32 %v1407, 16
        %v1412 = vshrl.u32 %v1407, 16
        %vm1413 = vc.u32 %v1405, %v1409
        %v1414 = vsel %vm1413, 1, 0
        %v1415 = vadd.s32 %v1405, %v1409
        %v1416 = vadd.s32 %v1408, %v1414
        %vm1417 = vc.u32 %v1415, %v1411
        %v1418 = vsel %vm1417, 1, 0
        %v1419 = vadd.s32 %v1415, %v1411
        %v1420 = vadd.s32 %v1416, %v1418
        %v1421 = vadd.s32 %v1420, %v1410
        %v1422 = vadd.s32 %v1421, %v1412
        %v1423 = vmul.u32 %v1378, %v1369
        %v1424 = vadd.s32 %v1400, %v1419
        %vm1425 = vc.u32 %v1400, %v1419
        %v1426 = vadd.s32 %v1422, 1
        %v1427 = vsel %vm1425, %v1426, %v1422
        %v1428 = vadd.s32 %v1423, %v1427
        %v1429 = vadd.s32 %v1428, 536870912
        %v1430 = vshrl.u32 %v1429, 30
        %v1431 = vshll.u32 %v1430, 30
        %v1432 = vsub.s32 %v1428, %v1431
        %vm1433 = vcmp.lt.s32.totalorder %v1432, 0
        %v1434 = vsub.s32 0, %v1432
        %v1435 = vsel %vm1433, %v1434, %v1432
        %v1436 = vclz %v1435
        %v1437 = vsub.s32 %v1436, 2
        %vm1438 = vcmp.gt.s32.totalorder 0, %v1437
        %v1439 = vsel %vm1438, 0, %v1437
        %v1440 = vsub.s32 32, %v1439
        %v1441 = vshll.u32 %v1432, %v1439
        %v1442 = vshrl.u32 %v1424, %v1440
        %v1443 = vor.u32 %v1441, %v1442
        %v1444 = vsub.s32 4294967266, %v1439
        %v1445 = vadd.s32 %v1444, 127
        %v1446 = vshll.u32 %v1445, 23
        %v1447 = vor.u32 4788187, %v1446
        %v1448 = vand.u32 2147483647, %v1447
        %v1450 = vcvt.s32.f32 %v1443
        %v1451 = vmul.f32 %v1450, %v1448
        %v1452 = vxor.u32 %v1451, 2147483648
        %v1453 = vsel %vm1332, %v1452, %v1451
        %v1454 = vsub.s32 4, %v1430
        %v1455 = vsel %vm1332, %v1454, %v1430
        %v1456 = vsel %vm1331, %v966, %v1453
        %v1457 = vsel %vm1331, 0, %v1455
        %v1458 = vmul.f32 %v1456, %v1456
        %v1459 = vmul.f32 %v1458, -0.001358992
        %v1460 = vadd.f32 %v1459, 0.041655596
        %v1461 = vmul.f32 %v1458, %v1460
        %v1462 = vadd.f32 %v1461, -0.4999988
        %v1463 = vmul.f32 %v1458, %v1462
        %v1464 = vadd.f32 1.0, %v1463
        %v1465 = vmul.f32 %v1456, %v1456
        %v1466 = vmul.f32 %v1465, -0.00019511016
        %v1467 = vadd.f32 %v1466, 0.008332121
        %v1468 = vmul.f32 %v1465, %v1467
        %v1469 = vadd.f32 %v1468, -0.16666654
        %v1470 = vmul.f32 %v1465, %v1469
        %v1471 = vadd.f32 %v1470, 1.0
        %v1472 = vmul.f32 %v1471, %v1456
        %vm1473 = vweird.f32 %v966
        %v1474 = vadd.s32 %v1457, 3
        %v1475 = vand.u32 %v1474, 3
        %vm1476 = vcmp.lt.s32.totalorder %v1475, 2
        %vm1477 = vcmp.eq.s32.totalorder %v1475, 0
        %v1478 = vxor.u32 %v1472, 2147483648
        %v1479 = vsel %vm1477, %v1464, %v1478
        %vm1480 = vcmp.eq.s32.totalorder %v1475, 2
        %v1481 = vxor.u32 %v1464, 2147483648
        %v1482 = vsel %vm1480, %v1481, %v1472
        %v1483 = vsel %vm1476, %v1479, %v1482
        %v1484 = vsel %vm1473, nan, %v1483
        %v1485 = vand.u32 2147483647, %v967
        %vm1486 = vcmp.le.f32.partialorder %v1485, 0.7853982
        %vm1487 = vcmp.lt.s32.totalorder %v967, 0
        %v1488 = vand.u32 %v967, 2139095040
        %v1489 = vshrl.u32 %v1488, 23
        %v1490 = vsub.s32 %v1489, 127
        %v1491 = vand.u32 2147483647, %v967
        %v1492 = vand.u32 %v1491, 8388607
        %v1493 = vor.u32 %v1492, 8388608
        %v1494 = vsub.s32 0, %v1493
        %v1495 = vadd.s32 %v1490, 1
        %vm1496 = vcmp.gt.s32.totalorder %v1495, 0
        %v1497 = vsel %vm1496, %v1495, 0
        %v1498 = vshrl.u32 %v1497, 5
        %v1499 = vand.u32 %v1497, 31
        %v1500 = vsub.s32 32, %v1499
        %v1501 = vshrl.u32 683565275, %v1500
        %v1502 = vshll.u32 683565275, %v1499
        %v1503 = vshrl.u32 2475754826, %v1500
        %v1504 = vor.u32 %v1502, %v1503
        %v1505 = vshll.u32 2475754826, %v1499
        %v1506 = vshrl.u32 2131351028, %v1500
        %v1507 = vor.u32 %v1505, %v1506
        %v1508 = vshll.u32 2131351028, %v1499
        %v1509 = vshrl.u32 2102212464, %v1500
        %v1510 = vor.u32 %v1508, %v1509
        %v1511 = vshll.u32 2102212464, %v1499
        %v1512 = vshrl.u32 920167782, %v1500
        %v1513 = vor.u32 %v1511, %v1512
        %v1514 = vshll.u32 920167782, %v1499
        %v1515 = vshrl.u32 1326507024, %v1500
        %v1516 = vor.u32 %v1514, %v1515
        %vm1517 = vcmp.lt.s32.totalorder %v1498, 1
        %vm1518 = vcmp.lt.s32.totalorder %v1498, 2
        %vm1519 = vcmp.lt.s32.totalorder %v1498, 3
        %vm1520 = vcmp.lt.s32.totalorder %v1498, 4
        %v1521 = vsel %vm1517, %v1501, %v1504
        %v1522 = vsel %vm1520, %v1510, 2102212464
        %v1523 = vsel %vm1519, %v1507, %v1522
        %v1524 = vsel %vm1518, %v1521, %v1523
        %v1525 = vsel %vm1517, %v1504, %v1507
        %v1526 = vsel %vm1520, %v1513, 920167782
        %v1527 = vsel %vm1519, %v1510, %v1526
        %v1528 = vsel %vm1518, %v1525, %v1527
        %v1529 = vsel %vm1517, %v1507, %v1510
        %v1530 = vsel %vm1520, %v1516, 1326507024
        %v1531 = vsel %vm1519, %v1513, %v1530
        %v1532 = vsel %vm1518, %v1529, %v1531
        %v1533 = vshll.u32 %v1493, 8
        %v1534 = vand.u32 %v1533, 65535
        %v1535 = vshrl.u32 %v1533, 16
        %v1536 = vand.u32 %v1532, 65535
        %v1537 = vshrl.u32 %v1532, 16
        %v1538 = vmul.u32 %v1534, %v1536
        %v1539 = vmul.u32 %v1534, %v1537
        %v1540 = vmul.u32 %v1535, %v1536
        %v1541 = vmul.u32 %v1535, %v1537
        %v1542 = vshll.u32 %v1539, 16
        %v1543 = vshrl.u32 %v1539, 16
        %v1544 = vshll.u32 %v1540, 16
        %v1545 = vshrl.u32 %v1540, 16
        %vm1546 = vc.u32 %v1538, %v1542
        %v1547 = vsel %vm1546, 1, 0
        %v1548 = vadd.s32 %v1538, %v1542
        %v1549 = vadd.s32 %v1541, %v1547
        %vm1550 = vc.u32 %v1548, %v1544
        %v1551 = vsel %vm1550, 1, 0
        %v1552 = vadd.s32 %v1548, %v1544
        %v1553 = vadd.s32 %v1549, %v1551
        %v1554 = vadd.s32 %v1553, %v1543
        %v1555 = vadd.s32 %v1554, %v1545
        %v1556 = vand.u32 %v1533, 65535
        %v1557 = vshrl.u32 %v1533, 16
        %v1558 = vand.u32 %v1528, 65535
        %v1559 = vshrl.u32 %v1528, 16
        %v1560 = vmul.u32 %v1556, %v1558
        %v1561 = vmul.u32 %v1556, %v1559
        %v1562 = vmul.u32 %v1557, %v1558
        %v1563 = vmul.u32 %v1557, %v1559
        %v1564 = vshll.u32 %v1561, 16
        %v1565 = vshrl.u32 %v1561, 16
        %v1566 = vshll.u32 %v1562, 16
        %v1567 = vshrl.u32 %v1562, 16
        %vm1568 = vc.u32 %v1560, %v1564
        %v1569 = vsel %vm1568, 1, 0
        %v1570 = vadd.s32 %v1560, %v1564
        %v1571 = vadd.s32 %v1563, %v1569
        %vm1572 = vc.u32 %v1570, %v1566
        %v1573 = vsel %vm1572, 1, 0
        %v1574 = vadd.s32 %v1570, %v1566
        %v1575 = vadd.s32 %v1571, %v1573
        %v1576 = vadd.s32 %v1575, %v1565
        %v1577 = vadd.s32 %v1576, %v1567
        %v1578 = vmul.u32 %v1533, %v1524
        %v1579 = vadd.s32 %v1555, %v1574
        %vm1580 = vc.u32 %v1555, %v1574
        %v1581 = vadd.s32 %v1577, 1
        %v1582 = vsel %vm1580, %v1581, %v1577
        %v1583 = vadd.s32 %v1578, %v1582
        %v1584 = vadd.s32 %v1583, 536870912
        %v1585 = vshrl.u32 %v1584, 30
        %v1586 = vshll.u32 %v1585, 30
        %v1587 = vsub.s32 %v1583, %v1586
        %vm1588 = vcmp.lt.s32.totalorder %v1587, 0
        %v1589 = vsub.s32 0, %v1587
        %v1590 = vsel %vm1588, %v1589, %v1587
        %v1591 = vclz %v1590
        %v1592 = vsub.s32 %v1591, 2
        %vm1593 = vcmp.gt.s32.totalorder 0, %v1592
        %v1594 = vsel %vm1593, 0, %v1592
        %v1595 = vsub.s32 32, %v1594
        %v1596 = vshll.u32 %v1587, %v1594
        %v1597 = vshrl.u32 %v1579, %v1595
        %v1598 = vor.u32 %v1596, %v1597
        %v1599 = vsub.s32 4294967266, %v1594
        %v1600 = vadd.s32 %v1599, 127
        %v1601 = vshll.u32 %v1600, 23
        %v1602 = vor.u32 4788187, %v1601
        %v1603 = vand.u32 2147483647, %v1602
        %v1605 = vcvt.s32.f32 %v1598
        %v1606 = vmul.f32 %v1605, %v1603
        %v1607 = vxor.u32 %v1606, 2147483648
        %v1608 = vsel %vm1487, %v1607, %v1606
        %v1609 = vsub.s32 4, %v1585
        %v1610 = vsel %vm1487, %v1609, %v1585
        %v1611 = vsel %vm1486, %v967, %v1608
        %v1612 = vsel %vm1486, 0, %v1610
        %v1613 = vmul.f32 %v1611, %v1611
        %v1614 = vmul.f32 %v1613, -0.001358992
        %v1615 = vadd.f32 %v1614, 0.041655596
        %v1616 = vmul.f32 %v1613, %v1615
        %v1617 = vadd.f32 %v1616, -0.4999988
        %v1618 = vmul.f32 %v1613, %v1617
        %v1619 = vadd.f32 1.0, %v1618
        %v1620 = vmul.f32 %v1611, %v1611
        %v1621 = vmul.f32 %v1620, -0.00019511016
        %v1622 = vadd.f32 %v1621, 0.008332121
        %v1623 = vmul.f32 %v1620, %v1622
        %v1624 = vadd.f32 %v1623, -0.16666654
        %v1625 = vmul.f32 %v1620, %v1624
        %v1626 = vadd.f32 %v1625, 1.0
        %v1627 = vmul.f32 %v1626, %v1611
        %vm1628 = vweird.f32 %v967
        %v1629 = vadd.s32 %v1612, 3
        %v1630 = vand.u32 %v1629, 3
        %vm1631 = vcmp.lt.s32.totalorder %v1630, 2
        %vm1632 = vcmp.eq.s32.totalorder %v1630, 0
        %v1633 = vxor.u32 %v1627, 2147483648
        %v1634 = vsel %vm1632, %v1619, %v1633
        %vm1635 = vcmp.eq.s32.totalorder %v1630, 2
        %v1636 = vxor.u32 %v1619, 2147483648
        %v1637 = vsel %vm1635, %v1636, %v1627
        %v1638 = vsel %vm1631, %v1634, %v1637
        %v1639 = vsel %vm1628, nan, %v1638
        %v1640 = vand.u32 2147483647, %v968
        %vm1641 = vcmp.le.f32.partialorder %v1640, 0.7853982
        %vm1642 = vcmp.lt.s32.totalorder %v968, 0
        %v1643 = vand.u32 %v968, 2139095040
        %v1644 = vshrl.u32 %v1643, 23
        %v1645 = vsub.s32 %v1644, 127
        %v1646 = vand.u32 2147483647, %v968
        %v1647 = vand.u32 %v1646, 8388607
        %v1648 = vor.u32 %v1647, 8388608
        %v1649 = vsub.s32 0, %v1648
        %v1650 = vadd.s32 %v1645, 1
        %vm1651 = vcmp.gt.s32.totalorder %v1650, 0
        %v1652 = vsel %vm1651, %v1650, 0
        %v1653 = vshrl.u32 %v1652, 5
        %v1654 = vand.u32 %v1652, 31
        %v1655 = vsub.s32 32, %v1654
        %v1656 = vshrl.u32 683565275, %v1655
        %v1657 = vshll.u32 683565275, %v1654
        %v1658 = vshrl.u32 2475754826, %v1655
        %v1659 = vor.u32 %v1657, %v1658
        %v1660 = vshll.u32 2475754826, %v1654
        %v1661 = vshrl.u32 2131351028, %v1655
        %v1662 = vor.u32 %v1660, %v1661
        %v1663 = vshll.u32 2131351028, %v1654
        %v1664 = vshrl.u32 2102212464, %v1655
        %v1665 = vor.u32 %v1663, %v1664
        %v1666 = vshll.u32 2102212464, %v1654
        %v1667 = vshrl.u32 920167782, %v1655
        %v1668 = vor.u32 %v1666, %v1667
        %v1669 = vshll.u32 920167782, %v1654
        %v1670 = vshrl.u32 1326507024, %v1655
        %v1671 = vor.u32 %v1669, %v1670
        %vm1672 = vcmp.lt.s32.totalorder %v1653, 1
        %vm1673 = vcmp.lt.s32.totalorder %v1653, 2
        %vm1674 = vcmp.lt.s32.totalorder %v1653, 3
        %vm1675 = vcmp.lt.s32.totalorder %v1653, 4
        %v1676 = vsel %vm1672, %v1656, %v1659
        %v1677 = vsel %vm1675, %v1665, 2102212464
        %v1678 = vsel %vm1674, %v1662, %v1677
        %v1679 = vsel %vm1673, %v1676, %v1678
        %v1680 = vsel %vm1672, %v1659, %v1662
        %v1681 = vsel %vm1675, %v1668, 920167782
        %v1682 = vsel %vm1674, %v1665, %v1681
        %v1683 = vsel %vm1673, %v1680, %v1682
        %v1684 = vsel %vm1672, %v1662, %v1665
        %v1685 = vsel %vm1675, %v1671, 1326507024
        %v1686 = vsel %vm1674, %v1668, %v1685
        %v1687 = vsel %vm1673, %v1684, %v1686
        %v1688 = vshll.u32 %v1648, 8
        %v1689 = vand.u32 %v1688, 65535
        %v1690 = vshrl.u32 %v1688, 16
        %v1691 = vand.u32 %v1687, 65535
        %v1692 = vshrl.u32 %v1687, 16
        %v1693 = vmul.u32 %v1689, %v1691
        %v1694 = vmul.u32 %v1689, %v1692
        %v1695 = vmul.u32 %v1690, %v1691
        %v1696 = vmul.u32 %v1690, %v1692
        %v1697 = vshll.u32 %v1694, 16
        %v1698 = vshrl.u32 %v1694, 16
        %v1699 = vshll.u32 %v1695, 16
        %v1700 = vshrl.u32 %v1695, 16
        %vm1701 = vc.u32 %v1693, %v1697
        %v1702 = vsel %vm1701, 1, 0
        %v1703 = vadd.s32 %v1693, %v1697
        %v1704 = vadd.s32 %v1696, %v1702
        %vm1705 = vc.u32 %v1703, %v1699
        %v1706 = vsel %vm1705, 1, 0
        %v1707 = vadd.s32 %v1703, %v1699
        %v1708 = vadd.s32 %v1704, %v1706
        %v1709 = vadd.s32 %v1708, %v1698
        %v1710 = vadd.s32 %v1709, %v1700
        %v1711 = vand.u32 %v1688, 65535
        %v1712 = vshrl.u32 %v1688, 16
        %v1713 = vand.u32 %v1683, 65535
        %v1714 = vshrl.u32 %v1683, 16
        %v1715 = vmul.u32 %v1711, %v1713
        %v1716 = vmul.u32 %v1711, %v1714
        %v1717 = vmul.u32 %v1712, %v1713
        %v1718 = vmul.u32 %v1712, %v1714
        %v1719 = vshll.u32 %v1716, 16
        %v1720 = vshrl.u32 %v1716, 16
        %v1721 = vshll.u32 %v1717, 16
        %v1722 = vshrl.u32 %v1717, 16
        %vm1723 = vc.u32 %v1715, %v1719
        %v1724 = vsel %vm1723, 1, 0
        %v1725 = vadd.s32 %v1715, %v1719
        %v1726 = vadd.s32 %v1718, %v1724
        %vm1727 = vc.u32 %v1725, %v1721
        %v1728 = vsel %vm1727, 1, 0
        %v1729 = vadd.s32 %v1725, %v1721
        %v1730 = vadd.s32 %v1726, %v1728
        %v1731 = vadd.s32 %v1730, %v1720
        %v1732 = vadd.s32 %v1731, %v1722
        %v1733 = vmul.u32 %v1688, %v1679
        %v1734 = vadd.s32 %v1710, %v1729
        %vm1735 = vc.u32 %v1710, %v1729
        %v1736 = vadd.s32 %v1732, 1
        %v1737 = vsel %vm1735, %v1736, %v1732
        %v1738 = vadd.s32 %v1733, %v1737
        %v1739 = vadd.s32 %v1738, 536870912
        %v1740 = vshrl.u32 %v1739, 30
        %v1741 = vshll.u32 %v1740, 30
        %v1742 = vsub.s32 %v1738, %v1741
        %vm1743 = vcmp.lt.s32.totalorder %v1742, 0
        %v1744 = vsub.s32 0, %v1742
        %v1745 = vsel %vm1743, %v1744, %v1742
        %v1746 = vclz %v1745
        %v1747 = vsub.s32 %v1746, 2
        %vm1748 = vcmp.gt.s32.totalorder 0, %v1747
        %v1749 = vsel %vm1748, 0, %v1747
        %v1750 = vsub.s32 32, %v1749
        %v1751 = vshll.u32 %v1742, %v1749
        %v1752 = vshrl.u32 %v1734, %v1750
        %v1753 = vor.u32 %v1751, %v1752
        %v1754 = vsub.s32 4294967266, %v1749
        %v1755 = vadd.s32 %v1754, 127
        %v1756 = vshll.u32 %v1755, 23
        %v1757 = vor.u32 4788187, %v1756
        %v1758 = vand.u32 2147483647, %v1757
        %v1760 = vcvt.s32.f32 %v1753
        %v1761 = vmul.f32 %v1760, %v1758
        %v1762 = vxor.u32 %v1761, 2147483648
        %v1763 = vsel %vm1642, %v1762, %v1761
        %v1764 = vsub.s32 4, %v1740
        %v1765 = vsel %vm1642, %v1764, %v1740
        %v1766 = vsel %vm1641, %v968, %v1763
        %v1767 = vsel %vm1641, 0, %v1765
        %v1768 = vmul.f32 %v1766, %v1766
        %v1769 = vmul.f32 %v1768, -0.001358992
        %v1770 = vadd.f32 %v1769, 0.041655596
        %v1771 = vmul.f32 %v1768, %v1770
        %v1772 = vadd.f32 %v1771, -0.4999988
        %v1773 = vmul.f32 %v1768, %v1772
        %v1774 = vadd.f32 1.0, %v1773
        %v1775 = vmul.f32 %v1766, %v1766
        %v1776 = vmul.f32 %v1775, -0.00019511016
        %v1777 = vadd.f32 %v1776, 0.008332121
        %v1778 = vmul.f32 %v1775, %v1777
        %v1779 = vadd.f32 %v1778, -0.16666654
        %v1780 = vmul.f32 %v1775, %v1779
        %v1781 = vadd.f32 %v1780, 1.0
        %v1782 = vmul.f32 %v1781, %v1766
        %vm1783 = vweird.f32 %v968
        %v1784 = vadd.s32 %v1767, 3
        %v1785 = vand.u32 %v1784, 3
        %vm1786 = vcmp.lt.s32.totalorder %v1785, 2
        %vm1787 = vcmp.eq.s32.totalorder %v1785, 0
        %v1788 = vxor.u32 %v1782, 2147483648
        %v1789 = vsel %vm1787, %v1774, %v1788
        %vm1790 = vcmp.eq.s32.totalorder %v1785, 2
        %v1791 = vxor.u32 %v1774, 2147483648
        %v1792 = vsel %vm1790, %v1791, %v1782
        %v1793 = vsel %vm1786, %v1789, %v1792
        %v1794 = vsel %vm1783, nan, %v1793
        %v1795 = vand.u32 2147483647, %v969
        %vm1796 = vcmp.le.f32.partialorder %v1795, 0.7853982
        %vm1797 = vcmp.lt.s32.totalorder %v969, 0
        %v1798 = vand.u32 %v969, 2139095040
        %v1799 = vshrl.u32 %v1798, 23
        %v1800 = vsub.s32 %v1799, 127
        %v1801 = vand.u32 2147483647, %v969
        %v1802 = vand.u32 %v1801, 8388607
        %v1803 = vor.u32 %v1802, 8388608
        %v1804 = vsub.s32 0, %v1803
        %v1805 = vadd.s32 %v1800, 1
        %vm1806 = vcmp.gt.s32.totalorder %v1805, 0
        %v1807 = vsel %vm1806, %v1805, 0
        %v1808 = vshrl.u32 %v1807, 5
        %v1809 = vand.u32 %v1807, 31
        %v1810 = vsub.s32 32, %v1809
        %v1811 = vshrl.u32 683565275, %v1810
        %v1812 = vshll.u32 683565275, %v1809
        %v1813 = vshrl.u32 2475754826, %v1810
        %v1814 = vor.u32 %v1812, %v1813
        %v1815 = vshll.u32 2475754826, %v1809
        %v1816 = vshrl.u32 2131351028, %v1810
        %v1817 = vor.u32 %v1815, %v1816
        %v1818 = vshll.u32 2131351028, %v1809
        %v1819 = vshrl.u32 2102212464, %v1810
        %v1820 = vor.u32 %v1818, %v1819
        %v1821 = vshll.u32 2102212464, %v1809
        %v1822 = vshrl.u32 920167782, %v1810
        %v1823 = vor.u32 %v1821, %v1822
        %v1824 = vshll.u32 920167782, %v1809
        %v1825 = vshrl.u32 1326507024, %v1810
        %v1826 = vor.u32 %v1824, %v1825
        %vm1827 = vcmp.lt.s32.totalorder %v1808, 1
        %vm1828 = vcmp.lt.s32.totalorder %v1808, 2
        %vm1829 = vcmp.lt.s32.totalorder %v1808, 3
        %vm1830 = vcmp.lt.s32.totalorder %v1808, 4
        %v1831 = vsel %vm1827, %v1811, %v1814
        %v1832 = vsel %vm1830, %v1820, 2102212464
        %v1833 = vsel %vm1829, %v1817, %v1832
        %v1834 = vsel %vm1828, %v1831, %v1833
        %v1835 = vsel %vm1827, %v1814, %v1817
        %v1836 = vsel %vm1830, %v1823, 920167782
        %v1837 = vsel %vm1829, %v1820, %v1836
        %v1838 = vsel %vm1828, %v1835, %v1837
        %v1839 = vsel %vm1827, %v1817, %v1820
        %v1840 = vsel %vm1830, %v1826, 1326507024
        %v1841 = vsel %vm1829, %v1823, %v1840
        %v1842 = vsel %vm1828, %v1839, %v1841
        %v1843 = vshll.u32 %v1803, 8
        %v1844 = vand.u32 %v1843, 65535
        %v1845 = vshrl.u32 %v1843, 16
        %v1846 = vand.u32 %v1842, 65535
        %v1847 = vshrl.u32 %v1842, 16
        %v1848 = vmul.u32 %v1844, %v1846
        %v1849 = vmul.u32 %v1844, %v1847
        %v1850 = vmul.u32 %v1845, %v1846
        %v1851 = vmul.u32 %v1845, %v1847
        %v1852 = vshll.u32 %v1849, 16
        %v1853 = vshrl.u32 %v1849, 16
        %v1854 = vshll.u32 %v1850, 16
        %v1855 = vshrl.u32 %v1850, 16
        %vm1856 = vc.u32 %v1848, %v1852
        %v1857 = vsel %vm1856, 1, 0
        %v1858 = vadd.s32 %v1848, %v1852
        %v1859 = vadd.s32 %v1851, %v1857
        %vm1860 = vc.u32 %v1858, %v1854
        %v1861 = vsel %vm1860, 1, 0
        %v1862 = vadd.s32 %v1858, %v1854
        %v1863 = vadd.s32 %v1859, %v1861
        %v1864 = vadd.s32 %v1863, %v1853
        %v1865 = vadd.s32 %v1864, %v1855
        %v1866 = vand.u32 %v1843, 65535
        %v1867 = vshrl.u32 %v1843, 16
        %v1868 = vand.u32 %v1838, 65535
        %v1869 = vshrl.u32 %v1838, 16
        %v1870 = vmul.u32 %v1866, %v1868
        %v1871 = vmul.u32 %v1866, %v1869
        %v1872 = vmul.u32 %v1867, %v1868
        %v1873 = vmul.u32 %v1867, %v1869
        %v1874 = vshll.u32 %v1871, 16
        %v1875 = vshrl.u32 %v1871, 16
        %v1876 = vshll.u32 %v1872, 16
        %v1877 = vshrl.u32 %v1872, 16
        %vm1878 = vc.u32 %v1870, %v1874
        %v1879 = vsel %vm1878, 1, 0
        %v1880 = vadd.s32 %v1870, %v1874
        %v1881 = vadd.s32 %v1873, %v1879
        %vm1882 = vc.u32 %v1880, %v1876
        %v1883 = vsel %vm1882, 1, 0
        %v1884 = vadd.s32 %v1880, %v1876
        %v1885 = vadd.s32 %v1881, %v1883
        %v1886 = vadd.s32 %v1885, %v1875
        %v1887 = vadd.s32 %v1886, %v1877
        %v1888 = vmul.u32 %v1843, %v1834
        %v1889 = vadd.s32 %v1865, %v1884
        %vm1890 = vc.u32 %v1865, %v1884
        %v1891 = vadd.s32 %v1887, 1
        %v1892 = vsel %vm1890, %v1891, %v1887
        %v1893 = vadd.s32 %v1888, %v1892
        %v1894 = vadd.s32 %v1893, 536870912
        %v1895 = vshrl.u32 %v1894, 30
        %v1896 = vshll.u32 %v1895, 30
        %v1897 = vsub.s32 %v1893, %v1896
        %vm1898 = vcmp.lt.s32.totalorder %v1897, 0
        %v1899 = vsub.s32 0, %v1897
        %v1900 = vsel %vm1898, %v1899, %v1897
        %v1901 = vclz %v1900
        %v1902 = vsub.s32 %v1901, 2
        %vm1903 = vcmp.gt.s32.totalorder 0, %v1902
        %v1904 = vsel %vm1903, 0, %v1902
        %v1905 = vsub.s32 32, %v1904
        %v1906 = vshll.u32 %v1897, %v1904
        %v1907 = vshrl.u32 %v1889, %v1905
        %v1908 = vor.u32 %v1906, %v1907
        %v1909 = vsub.s32 4294967266, %v1904
        %v1910 = vadd.s32 %v1909, 127
        %v1911 = vshll.u32 %v1910, 23
        %v1912 = vor.u32 4788187, %v1911
        %v1913 = vand.u32 2147483647, %v1912
        %v1915 = vcvt.s32.f32 %v1908
        %v1916 = vmul.f32 %v1915, %v1913
        %v1917 = vxor.u32 %v1916, 2147483648
        %v1918 = vsel %vm1797, %v1917, %v1916
        %v1919 = vsub.s32 4, %v1895
        %v1920 = vsel %vm1797, %v1919, %v1895
        %v1921 = vsel %vm1796, %v969, %v1918
        %v1922 = vsel %vm1796, 0, %v1920
        %v1923 = vmul.f32 %v1921, %v1921
        %v1924 = vmul.f32 %v1923, -0.001358992
        %v1925 = vadd.f32 %v1924, 0.041655596
        %v1926 = vmul.f32 %v1923, %v1925
        %v1927 = vadd.f32 %v1926, -0.4999988
        %v1928 = vmul.f32 %v1923, %v1927
        %v1929 = vadd.f32 1.0, %v1928
        %v1930 = vmul.f32 %v1921, %v1921
        %v1931 = vmul.f32 %v1930, -0.00019511016
        %v1932 = vadd.f32 %v1931, 0.008332121
        %v1933 = vmul.f32 %v1930, %v1932
        %v1934 = vadd.f32 %v1933, -0.16666654
        %v1935 = vmul.f32 %v1930, %v1934
        %v1936 = vadd.f32 %v1935, 1.0
        %v1937 = vmul.f32 %v1936, %v1921
        %vm1938 = vweird.f32 %v969
        %v1939 = vadd.s32 %v1922, 3
        %v1940 = vand.u32 %v1939, 3
        %vm1941 = vcmp.lt.s32.totalorder %v1940, 2
        %vm1942 = vcmp.eq.s32.totalorder %v1940, 0
        %v1943 = vxor.u32 %v1937, 2147483648
        %v1944 = vsel %vm1942, %v1929, %v1943
        %vm1945 = vcmp.eq.s32.totalorder %v1940, 2
        %v1946 = vxor.u32 %v1929, 2147483648
        %v1947 = vsel %vm1945, %v1946, %v1937
        %v1948 = vsel %vm1941, %v1944, %v1947
        %v1949 = vsel %vm1938, nan, %v1948
        %v1950 = vand.u32 2147483647, %v970
        %vm1951 = vcmp.le.f32.partialorder %v1950, 0.7853982
        %vm1952 = vcmp.lt.s32.totalorder %v970, 0
        %v1953 = vand.u32 %v970, 2139095040
        %v1954 = vshrl.u32 %v1953, 23
        %v1955 = vsub.s32 %v1954, 127
        %v1956 = vand.u32 2147483647, %v970
        %v1957 = vand.u32 %v1956, 8388607
        %v1958 = vor.u32 %v1957, 8388608
        %v1959 = vsub.s32 0, %v1958
        %v1960 = vadd.s32 %v1955, 1
        %vm1961 = vcmp.gt.s32.totalorder %v1960, 0
        %v1962 = vsel %vm1961, %v1960, 0
        %v1963 = vshrl.u32 %v1962, 5
        %v1964 = vand.u32 %v1962, 31
        %v1965 = vsub.s32 32, %v1964
        %v1966 = vshrl.u32 683565275, %v1965
        %v1967 = vshll.u32 683565275, %v1964
        %v1968 = vshrl.u32 2475754826, %v1965
        %v1969 = vor.u32 %v1967, %v1968
        %v1970 = vshll.u32 2475754826, %v1964
        %v1971 = vshrl.u32 2131351028, %v1965
        %v1972 = vor.u32 %v1970, %v1971
        %v1973 = vshll.u32 2131351028, %v1964
        %v1974 = vshrl.u32 2102212464, %v1965
        %v1975 = vor.u32 %v1973, %v1974
        %v1976 = vshll.u32 2102212464, %v1964
        %v1977 = vshrl.u32 920167782, %v1965
        %v1978 = vor.u32 %v1976, %v1977
        %v1979 = vshll.u32 920167782, %v1964
        %v1980 = vshrl.u32 1326507024, %v1965
        %v1981 = vor.u32 %v1979, %v1980
        %vm1982 = vcmp.lt.s32.totalorder %v1963, 1
        %vm1983 = vcmp.lt.s32.totalorder %v1963, 2
        %vm1984 = vcmp.lt.s32.totalorder %v1963, 3
        %vm1985 = vcmp.lt.s32.totalorder %v1963, 4
        %v1986 = vsel %vm1982, %v1966, %v1969
        %v1987 = vsel %vm1985, %v1975, 2102212464
        %v1988 = vsel %vm1984, %v1972, %v1987
        %v1989 = vsel %vm1983, %v1986, %v1988
        %v1990 = vsel %vm1982, %v1969, %v1972
        %v1991 = vsel %vm1985, %v1978, 920167782
        %v1992 = vsel %vm1984, %v1975, %v1991
        %v1993 = vsel %vm1983, %v1990, %v1992
        %v1994 = vsel %vm1982, %v1972, %v1975
        %v1995 = vsel %vm1985, %v1981, 1326507024
        %v1996 = vsel %vm1984, %v1978, %v1995
        %v1997 = vsel %vm1983, %v1994, %v1996
        %v1998 = vshll.u32 %v1958, 8
        %v1999 = vand.u32 %v1998, 65535
        %v2000 = vshrl.u32 %v1998, 16
        %v2001 = vand.u32 %v1997, 65535
        %v2002 = vshrl.u32 %v1997, 16
        %v2003 = vmul.u32 %v1999, %v2001
        %v2004 = vmul.u32 %v1999, %v2002
        %v2005 = vmul.u32 %v2000, %v2001
        %v2006 = vmul.u32 %v2000, %v2002
        %v2007 = vshll.u32 %v2004, 16
        %v2008 = vshrl.u32 %v2004, 16
        %v2009 = vshll.u32 %v2005, 16
        %v2010 = vshrl.u32 %v2005, 16
        %vm2011 = vc.u32 %v2003, %v2007
        %v2012 = vsel %vm2011, 1, 0
        %v2013 = vadd.s32 %v2003, %v2007
        %v2014 = vadd.s32 %v2006, %v2012
        %vm2015 = vc.u32 %v2013, %v2009
        %v2016 = vsel %vm2015, 1, 0
        %v2017 = vadd.s32 %v2013, %v2009
        %v2018 = vadd.s32 %v2014, %v2016
        %v2019 = vadd.s32 %v2018, %v2008
        %v2020 = vadd.s32 %v2019, %v2010
        %v2021 = vand.u32 %v1998, 65535
        %v2022 = vshrl.u32 %v1998, 16
        %v2023 = vand.u32 %v1993, 65535
        %v2024 = vshrl.u32 %v1993, 16
        %v2025 = vmul.u32 %v2021, %v2023
        %v2026 = vmul.u32 %v2021, %v2024
        %v2027 = vmul.u32 %v2022, %v2023
        %v2028 = vmul.u32 %v2022, %v2024
        %v2029 = vshll.u32 %v2026, 16
        %v2030 = vshrl.u32 %v2026, 16
        %v2031 = vshll.u32 %v2027, 16
        %v2032 = vshrl.u32 %v2027, 16
        %vm2033 = vc.u32 %v2025, %v2029
        %v2034 = vsel %vm2033, 1, 0
        %v2035 = vadd.s32 %v2025, %v2029
        %v2036 = vadd.s32 %v2028, %v2034
        %vm2037 = vc.u32 %v2035, %v2031
        %v2038 = vsel %vm2037, 1, 0
        %v2039 = vadd.s32 %v2035, %v2031
        %v2040 = vadd.s32 %v2036, %v2038
        %v2041 = vadd.s32 %v2040, %v2030
        %v2042 = vadd.s32 %v2041, %v2032
        %v2043 = vmul.u32 %v1998, %v1989
        %v2044 = vadd.s32 %v2020, %v2039
        %vm2045 = vc.u32 %v2020, %v2039
        %v2046 = vadd.s32 %v2042, 1
        %v2047 = vsel %vm2045, %v2046, %v2042
        %v2048 = vadd.s32 %v2043, %v2047
        %v2049 = vadd.s32 %v2048, 536870912
        %v2050 = vshrl.u32 %v2049, 30
        %v2051 = vshll.u32 %v2050, 30
        %v2052 = vsub.s32 %v2048, %v2051
        %vm2053 = vcmp.lt.s32.totalorder %v2052, 0
        %v2054 = vsub.s32 0, %v2052
        %v2055 = vsel %vm2053, %v2054, %v2052
        %v2056 = vclz %v2055
        %v2057 = vsub.s32 %v2056, 2
        %vm2058 = vcmp.gt.s32.totalorder 0, %v2057
        %v2059 = vsel %vm2058, 0, %v2057
        %v2060 = vsub.s32 32, %v2059
        %v2061 = vshll.u32 %v2052, %v2059
        %v2062 = vshrl.u32 %v2044, %v2060
        %v2063 = vor.u32 %v2061, %v2062
        %v2064 = vsub.s32 4294967266, %v2059
        %v2065 = vadd.s32 %v2064, 127
        %v2066 = vshll.u32 %v2065, 23
        %v2067 = vor.u32 4788187, %v2066
        %v2068 = vand.u32 2147483647, %v2067
        %v2070 = vcvt.s32.f32 %v2063
        %v2071 = vmul.f32 %v2070, %v2068
        %v2072 = vxor.u32 %v2071, 2147483648
        %v2073 = vsel %vm1952, %v2072, %v2071
        %v2074 = vsub.s32 4, %v2050
        %v2075 = vsel %vm1952, %v2074, %v2050
        %v2076 = vsel %vm1951, %v970, %v2073
        %v2077 = vsel %vm1951, 0, %v2075
        %v2078 = vmul.f32 %v2076, %v2076
        %v2079 = vmul.f32 %v2078, -0.001358992
        %v2080 = vadd.f32 %v2079, 0.041655596
        %v2081 = vmul.f32 %v2078, %v2080
        %v2082 = vadd.f32 %v2081, -0.4999988
        %v2083 = vmul.f32 %v2078, %v2082
        %v2084 = vadd.f32 1.0, %v2083
        %v2085 = vmul.f32 %v2076, %v2076
        %v2086 = vmul.f32 %v2085, -0.00019511016
        %v2087 = vadd.f32 %v2086, 0.008332121
        %v2088 = vmul.f32 %v2085, %v2087
        %v2089 = vadd.f32 %v2088, -0.16666654
        %v2090 = vmul.f32 %v2085, %v2089
        %v2091 = vadd.f32 %v2090, 1.0
        %v2092 = vmul.f32 %v2091, %v2076
        %vm2093 = vweird.f32 %v970
        %v2094 = vadd.s32 %v2077, 3
        %v2095 = vand.u32 %v2094, 3
        %vm2096 = vcmp.lt.s32.totalorder %v2095, 2
        %vm2097 = vcmp.eq.s32.totalorder %v2095, 0
        %v2098 = vxor.u32 %v2092, 2147483648
        %v2099 = vsel %vm2097, %v2084, %v2098
        %vm2100 = vcmp.eq.s32.totalorder %v2095, 2
        %v2101 = vxor.u32 %v2084, 2147483648
        %v2102 = vsel %vm2100, %v2101, %v2092
        %v2103 = vsel %vm2096, %v2099, %v2102
        %v2104 = vsel %vm2093, nan, %v2103
        %v2105 = vand.u32 2147483647, %v971
        %vm2106 = vcmp.le.f32.partialorder %v2105, 0.7853982
        %vm2107 = vcmp.lt.s32.totalorder %v971, 0
        %v2108 = vand.u32 %v971, 2139095040
        %v2109 = vshrl.u32 %v2108, 23
        %v2110 = vsub.s32 %v2109, 127
        %v2111 = vand.u32 2147483647, %v971
        %v2112 = vand.u32 %v2111, 8388607
        %v2113 = vor.u32 %v2112, 8388608
        %v2114 = vsub.s32 0, %v2113
        %v2115 = vadd.s32 %v2110, 1
        %vm2116 = vcmp.gt.s32.totalorder %v2115, 0
        %v2117 = vsel %vm2116, %v2115, 0
        %v2118 = vshrl.u32 %v2117, 5
        %v2119 = vand.u32 %v2117, 31
        %v2120 = vsub.s32 32, %v2119
        %v2121 = vshrl.u32 683565275, %v2120
        %v2122 = vshll.u32 683565275, %v2119
        %v2123 = vshrl.u32 2475754826, %v2120
        %v2124 = vor.u32 %v2122, %v2123
        %v2125 = vshll.u32 2475754826, %v2119
        %v2126 = vshrl.u32 2131351028, %v2120
        %v2127 = vor.u32 %v2125, %v2126
        %v2128 = vshll.u32 2131351028, %v2119
        %v2129 = vshrl.u32 2102212464, %v2120
        %v2130 = vor.u32 %v2128, %v2129
        %v2131 = vshll.u32 2102212464, %v2119
        %v2132 = vshrl.u32 920167782, %v2120
        %v2133 = vor.u32 %v2131, %v2132
        %v2134 = vshll.u32 920167782, %v2119
        %v2135 = vshrl.u32 1326507024, %v2120
        %v2136 = vor.u32 %v2134, %v2135
        %vm2137 = vcmp.lt.s32.totalorder %v2118, 1
        %vm2138 = vcmp.lt.s32.totalorder %v2118, 2
        %vm2139 = vcmp.lt.s32.totalorder %v2118, 3
        %vm2140 = vcmp.lt.s32.totalorder %v2118, 4
        %v2141 = vsel %vm2137, %v2121, %v2124
        %v2142 = vsel %vm2140, %v2130, 2102212464
        %v2143 = vsel %vm2139, %v2127, %v2142
        %v2144 = vsel %vm2138, %v2141, %v2143
        %v2145 = vsel %vm2137, %v2124, %v2127
        %v2146 = vsel %vm2140, %v2133, 920167782
        %v2147 = vsel %vm2139, %v2130, %v2146
        %v2148 = vsel %vm2138, %v2145, %v2147
        %v2149 = vsel %vm2137, %v2127, %v2130
        %v2150 = vsel %vm2140, %v2136, 1326507024
        %v2151 = vsel %vm2139, %v2133, %v2150
        %v2152 = vsel %vm2138, %v2149, %v2151
        %v2153 = vshll.u32 %v2113, 8
        %v2154 = vand.u32 %v2153, 65535
        %v2155 = vshrl.u32 %v2153, 16
        %v2156 = vand.u32 %v2152, 65535
        %v2157 = vshrl.u32 %v2152, 16
        %v2158 = vmul.u32 %v2154, %v2156
        %v2159 = vmul.u32 %v2154, %v2157
        %v2160 = vmul.u32 %v2155, %v2156
        %v2161 = vmul.u32 %v2155, %v2157
        %v2162 = vshll.u32 %v2159, 16
        %v2163 = vshrl.u32 %v2159, 16
        %v2164 = vshll.u32 %v2160, 16
        %v2165 = vshrl.u32 %v2160, 16
        %vm2166 = vc.u32 %v2158, %v2162
        %v2167 = vsel %vm2166, 1, 0
        %v2168 = vadd.s32 %v2158, %v2162
        %v2169 = vadd.s32 %v2161, %v2167
        %vm2170 = vc.u32 %v2168, %v2164
        %v2171 = vsel %vm2170, 1, 0
        %v2172 = vadd.s32 %v2168, %v2164
        %v2173 = vadd.s32 %v2169, %v2171
        %v2174 = vadd.s32 %v2173, %v2163
        %v2175 = vadd.s32 %v2174, %v2165
        %v2176 = vand.u32 %v2153, 65535
        %v2177 = vshrl.u32 %v2153, 16
        %v2178 = vand.u32 %v2148, 65535
        %v2179 = vshrl.u32 %v2148, 16
        %v2180 = vmul.u32 %v2176, %v2178
        %v2181 = vmul.u32 %v2176, %v2179
        %v2182 = vmul.u32 %v2177, %v2178
        %v2183 = vmul.u32 %v2177, %v2179
        %v2184 = vshll.u32 %v2181, 16
        %v2185 = vshrl.u32 %v2181, 16
        %v2186 = vshll.u32 %v2182, 16
        %v2187 = vshrl.u32 %v2182, 16
        %vm2188 = vc.u32 %v2180, %v2184
        %v2189 = vsel %vm2188, 1, 0
        %v2190 = vadd.s32 %v2180, %v2184
        %v2191 = vadd.s32 %v2183, %v2189
        %vm2192 = vc.u32 %v2190, %v2186
        %v2193 = vsel %vm2192, 1, 0
        %v2194 = vadd.s32 %v2190, %v2186
        %v2195 = vadd.s32 %v2191, %v2193
        %v2196 = vadd.s32 %v2195, %v2185
        %v2197 = vadd.s32 %v2196, %v2187
        %v2198 = vmul.u32 %v2153, %v2144
        %v2199 = vadd.s32 %v2175, %v2194
        %vm2200 = vc.u32 %v2175, %v2194
        %v2201 = vadd.s32 %v2197, 1
        %v2202 = vsel %vm2200, %v2201, %v2197
        %v2203 = vadd.s32 %v2198, %v2202
        %v2204 = vadd.s32 %v2203, 536870912
        %v2205 = vshrl.u32 %v2204, 30
        %v2206 = vshll.u32 %v2205, 30
        %v2207 = vsub.s32 %v2203, %v2206
        %vm2208 = vcmp.lt.s32.totalorder %v2207, 0
        %v2209 = vsub.s32 0, %v2207
        %v2210 = vsel %vm2208, %v2209, %v2207
        %v2211 = vclz %v2210
        %v2212 = vsub.s32 %v2211, 2
        %vm2213 = vcmp.gt.s32.totalorder 0, %v2212
        %v2214 = vsel %vm2213, 0, %v2212
        %v2215 = vsub.s32 32, %v2214
        %v2216 = vshll.u32 %v2207, %v2214
        %v2217 = vshrl.u32 %v2199, %v2215
        %v2218 = vor.u32 %v2216, %v2217
        %v2219 = vsub.s32 4294967266, %v2214
        %v2220 = vadd.s32 %v2219, 127
        %v2221 = vshll.u32 %v2220, 23
        %v2222 = vor.u32 4788187, %v2221
        %v2223 = vand.u32 2147483647, %v2222
        %v2225 = vcvt.s32.f32 %v2218
        %v2226 = vmul.f32 %v2225, %v2223
        %v2227 = vxor.u32 %v2226, 2147483648
        %v2228 = vsel %vm2107, %v2227, %v2226
        %v2229 = vsub.s32 4, %v2205
        %v2230 = vsel %vm2107, %v2229, %v2205
        %v2231 = vsel %vm2106, %v971, %v2228
        %v2232 = vsel %vm2106, 0, %v2230
        %v2233 = vmul.f32 %v2231, %v2231
        %v2234 = vmul.f32 %v2233, -0.001358992
        %v2235 = vadd.f32 %v2234, 0.041655596
        %v2236 = vmul.f32 %v2233, %v2235
        %v2237 = vadd.f32 %v2236, -0.4999988
        %v2238 = vmul.f32 %v2233, %v2237
        %v2239 = vadd.f32 1.0, %v2238
        %v2240 = vmul.f32 %v2231, %v2231
        %v2241 = vmul.f32 %v2240, -0.00019511016
        %v2242 = vadd.f32 %v2241, 0.008332121
        %v2243 = vmul.f32 %v2240, %v2242
        %v2244 = vadd.f32 %v2243, -0.16666654
        %v2245 = vmul.f32 %v2240, %v2244
        %v2246 = vadd.f32 %v2245, 1.0
        %v2247 = vmul.f32 %v2246, %v2231
        %vm2248 = vweird.f32 %v971
        %v2249 = vadd.s32 %v2232, 3
        %v2250 = vand.u32 %v2249, 3
        %vm2251 = vcmp.lt.s32.totalorder %v2250, 2
        %vm2252 = vcmp.eq.s32.totalorder %v2250, 0
        %v2253 = vxor.u32 %v2247, 2147483648
        %v2254 = vsel %vm2252, %v2239, %v2253
        %vm2255 = vcmp.eq.s32.totalorder %v2250, 2
        %v2256 = vxor.u32 %v2239, 2147483648
        %v2257 = vsel %vm2255, %v2256, %v2247
        %v2258 = vsel %vm2251, %v2254, %v2257
        %v2259 = vsel %vm2248, nan, %v2258
        %v2260 = vand.u32 2147483647, %v972
        %vm2261 = vcmp.le.f32.partialorder %v2260, 0.7853982
        %vm2262 = vcmp.lt.s32.totalorder %v972, 0
        %v2263 = vand.u32 %v972, 2139095040
        %v2264 = vshrl.u32 %v2263, 23
        %v2265 = vsub.s32 %v2264, 127
        %v2266 = vand.u32 2147483647, %v972
        %v2267 = vand.u32 %v2266, 8388607
        %v2268 = vor.u32 %v2267, 8388608
        %v2269 = vsub.s32 0, %v2268
        %v2270 = vadd.s32 %v2265, 1
        %vm2271 = vcmp.gt.s32.totalorder %v2270, 0
        %v2272 = vsel %vm2271, %v2270, 0
        %v2273 = vshrl.u32 %v2272, 5
        %v2274 = vand.u32 %v2272, 31
        %v2275 = vsub.s32 32, %v2274
        %v2276 = vshrl.u32 683565275, %v2275
        %v2277 = vshll.u32 683565275, %v2274
        %v2278 = vshrl.u32 2475754826, %v2275
        %v2279 = vor.u32 %v2277, %v2278
        %v2280 = vshll.u32 2475754826, %v2274
        %v2281 = vshrl.u32 2131351028, %v2275
        %v2282 = vor.u32 %v2280, %v2281
        %v2283 = vshll.u32 2131351028, %v2274
        %v2284 = vshrl.u32 2102212464, %v2275
        %v2285 = vor.u32 %v2283, %v2284
        %v2286 = vshll.u32 2102212464, %v2274
        %v2287 = vshrl.u32 920167782, %v2275
        %v2288 = vor.u32 %v2286, %v2287
        %v2289 = vshll.u32 920167782, %v2274
        %v2290 = vshrl.u32 1326507024, %v2275
        %v2291 = vor.u32 %v2289, %v2290
        %vm2292 = vcmp.lt.s32.totalorder %v2273, 1
        %vm2293 = vcmp.lt.s32.totalorder %v2273, 2
        %vm2294 = vcmp.lt.s32.totalorder %v2273, 3
        %vm2295 = vcmp.lt.s32.totalorder %v2273, 4
        %v2296 = vsel %vm2292, %v2276, %v2279
        %v2297 = vsel %vm2295, %v2285, 2102212464
        %v2298 = vsel %vm2294, %v2282, %v2297
        %v2299 = vsel %vm2293, %v2296, %v2298
        %v2300 = vsel %vm2292, %v2279, %v2282
        %v2301 = vsel %vm2295, %v2288, 920167782
        %v2302 = vsel %vm2294, %v2285, %v2301
        %v2303 = vsel %vm2293, %v2300, %v2302
        %v2304 = vsel %vm2292, %v2282, %v2285
        %v2305 = vsel %vm2295, %v2291, 1326507024
        %v2306 = vsel %vm2294, %v2288, %v2305
        %v2307 = vsel %vm2293, %v2304, %v2306
        %v2308 = vshll.u32 %v2268, 8
        %v2309 = vand.u32 %v2308, 65535
        %v2310 = vshrl.u32 %v2308, 16
        %v2311 = vand.u32 %v2307, 65535
        %v2312 = vshrl.u32 %v2307, 16
        %v2313 = vmul.u32 %v2309, %v2311
        %v2314 = vmul.u32 %v2309, %v2312
        %v2315 = vmul.u32 %v2310, %v2311
        %v2316 = vmul.u32 %v2310, %v2312
        %v2317 = vshll.u32 %v2314, 16
        %v2318 = vshrl.u32 %v2314, 16
        %v2319 = vshll.u32 %v2315, 16
        %v2320 = vshrl.u32 %v2315, 16
        %vm2321 = vc.u32 %v2313, %v2317
        %v2322 = vsel %vm2321, 1, 0
        %v2323 = vadd.s32 %v2313, %v2317
        %v2324 = vadd.s32 %v2316, %v2322
        %vm2325 = vc.u32 %v2323, %v2319
        %v2326 = vsel %vm2325, 1, 0
        %v2327 = vadd.s32 %v2323, %v2319
        %v2328 = vadd.s32 %v2324, %v2326
        %v2329 = vadd.s32 %v2328, %v2318
        %v2330 = vadd.s32 %v2329, %v2320
        %v2331 = vand.u32 %v2308, 65535
        %v2332 = vshrl.u32 %v2308, 16
        %v2333 = vand.u32 %v2303, 65535
        %v2334 = vshrl.u32 %v2303, 16
        %v2335 = vmul.u32 %v2331, %v2333
        %v2336 = vmul.u32 %v2331, %v2334
        %v2337 = vmul.u32 %v2332, %v2333
        %v2338 = vmul.u32 %v2332, %v2334
        %v2339 = vshll.u32 %v2336, 16
        %v2340 = vshrl.u32 %v2336, 16
        %v2341 = vshll.u32 %v2337, 16
        %v2342 = vshrl.u32 %v2337, 16
        %vm2343 = vc.u32 %v2335, %v2339
        %v2344 = vsel %vm2343, 1, 0
        %v2345 = vadd.s32 %v2335, %v2339
        %v2346 = vadd.s32 %v2338, %v2344
        %vm2347 = vc.u32 %v2345, %v2341
        %v2348 = vsel %vm2347, 1, 0
        %v2349 = vadd.s32 %v2345, %v2341
        %v2350 = vadd.s32 %v2346, %v2348
        %v2351 = vadd.s32 %v2350, %v2340
        %v2352 = vadd.s32 %v2351, %v2342
        %v2353 = vmul.u32 %v2308, %v2299
        %v2354 = vadd.s32 %v2330, %v2349
        %vm2355 = vc.u32 %v2330, %v2349
        %v2356 = vadd.s32 %v2352, 1
        %v2357 = vsel %vm2355, %v2356, %v2352
        %v2358 = vadd.s32 %v2353, %v2357
        %v2359 = vadd.s32 %v2358, 536870912
        %v2360 = vshrl.u32 %v2359, 30
        %v2361 = vshll.u32 %v2360, 30
        %v2362 = vsub.s32 %v2358, %v2361
        %vm2363 = vcmp.lt.s32.totalorder %v2362, 0
        %v2364 = vsub.s32 0, %v2362
        %v2365 = vsel %vm2363, %v2364, %v2362
        %v2366 = vclz %v2365
        %v2367 = vsub.s32 %v2366, 2
        %vm2368 = vcmp.gt.s32.totalorder 0, %v2367
        %v2369 = vsel %vm2368, 0, %v2367
        %v2370 = vsub.s32 32, %v2369
        %v2371 = vshll.u32 %v2362, %v2369
        %v2372 = vshrl.u32 %v2354, %v2370
        %v2373 = vor.u32 %v2371, %v2372
        %v2374 = vsub.s32 4294967266, %v2369
        %v2375 = vadd.s32 %v2374, 127
        %v2376 = vshll.u32 %v2375, 23
        %v2377 = vor.u32 4788187, %v2376
        %v2378 = vand.u32 2147483647, %v2377
        %v2380 = vcvt.s32.f32 %v2373
        %v2381 = vmul.f32 %v2380, %v2378
        %v2382 = vxor.u32 %v2381, 2147483648
        %v2383 = vsel %vm2262, %v2382, %v2381
        %v2384 = vsub.s32 4, %v2360
        %v2385 = vsel %vm2262, %v2384, %v2360
        %v2386 = vsel %vm2261, %v972, %v2383
        %v2387 = vsel %vm2261, 0, %v2385
        %v2388 = vmul.f32 %v2386, %v2386
        %v2389 = vmul.f32 %v2388, -0.001358992
        %v2390 = vadd.f32 %v2389, 0.041655596
        %v2391 = vmul.f32 %v2388, %v2390
        %v2392 = vadd.f32 %v2391, -0.4999988
        %v2393 = vmul.f32 %v2388, %v2392
        %v2394 = vadd.f32 1.0, %v2393
        %v2395 = vmul.f32 %v2386, %v2386
        %v2396 = vmul.f32 %v2395, -0.00019511016
        %v2397 = vadd.f32 %v2396, 0.008332121
        %v2398 = vmul.f32 %v2395, %v2397
        %v2399 = vadd.f32 %v2398, -0.16666654
        %v2400 = vmul.f32 %v2395, %v2399
        %v2401 = vadd.f32 %v2400, 1.0
        %v2402 = vmul.f32 %v2401, %v2386
        %vm2403 = vweird.f32 %v972
        %v2404 = vadd.s32 %v2387, 3
        %v2405 = vand.u32 %v2404, 3
        %vm2406 = vcmp.lt.s32.totalorder %v2405, 2
        %vm2407 = vcmp.eq.s32.totalorder %v2405, 0
        %v2408 = vxor.u32 %v2402, 2147483648
        %v2409 = vsel %vm2407, %v2394, %v2408
        %vm2410 = vcmp.eq.s32.totalorder %v2405, 2
        %v2411 = vxor.u32 %v2394, 2147483648
        %v2412 = vsel %vm2410, %v2411, %v2402
        %v2413 = vsel %vm2406, %v2409, %v2412
        %v2414 = vsel %vm2403, nan, %v2413
        %v2415 = vand.u32 2147483647, %v973
        %vm2416 = vcmp.le.f32.partialorder %v2415, 0.7853982
        %vm2417 = vcmp.lt.s32.totalorder %v973, 0
        %v2418 = vand.u32 %v973, 2139095040
        %v2419 = vshrl.u32 %v2418, 23
        %v2420 = vsub.s32 %v2419, 127
        %v2421 = vand.u32 2147483647, %v973
        %v2422 = vand.u32 %v2421, 8388607
        %v2423 = vor.u32 %v2422, 8388608
        %v2424 = vsub.s32 0, %v2423
        %v2425 = vadd.s32 %v2420, 1
        %vm2426 = vcmp.gt.s32.totalorder %v2425, 0
        %v2427 = vsel %vm2426, %v2425, 0
        %v2428 = vshrl.u32 %v2427, 5
        %v2429 = vand.u32 %v2427, 31
        %v2430 = vsub.s32 32, %v2429
        %v2431 = vshrl.u32 683565275, %v2430
        %v2432 = vshll.u32 683565275, %v2429
        %v2433 = vshrl.u32 2475754826, %v2430
        %v2434 = vor.u32 %v2432, %v2433
        %v2435 = vshll.u32 2475754826, %v2429
        %v2436 = vshrl.u32 2131351028, %v2430
        %v2437 = vor.u32 %v2435, %v2436
        %v2438 = vshll.u32 2131351028, %v2429
        %v2439 = vshrl.u32 2102212464, %v2430
        %v2440 = vor.u32 %v2438, %v2439
        %v2441 = vshll.u32 2102212464, %v2429
        %v2442 = vshrl.u32 920167782, %v2430
        %v2443 = vor.u32 %v2441, %v2442
        %v2444 = vshll.u32 920167782, %v2429
        %v2445 = vshrl.u32 1326507024, %v2430
        %v2446 = vor.u32 %v2444, %v2445
        %vm2447 = vcmp.lt.s32.totalorder %v2428, 1
        %vm2448 = vcmp.lt.s32.totalorder %v2428, 2
        %vm2449 = vcmp.lt.s32.totalorder %v2428, 3
        %vm2450 = vcmp.lt.s32.totalorder %v2428, 4
        %v2451 = vsel %vm2447, %v2431, %v2434
        %v2452 = vsel %vm2450, %v2440, 2102212464
        %v2453 = vsel %vm2449, %v2437, %v2452
        %v2454 = vsel %vm2448, %v2451, %v2453
        %v2455 = vsel %vm2447, %v2434, %v2437
        %v2456 = vsel %vm2450, %v2443, 920167782
        %v2457 = vsel %vm2449, %v2440, %v2456
        %v2458 = vsel %vm2448, %v2455, %v2457
        %v2459 = vsel %vm2447, %v2437, %v2440
        %v2460 = vsel %vm2450, %v2446, 1326507024
        %v2461 = vsel %vm2449, %v2443, %v2460
        %v2462 = vsel %vm2448, %v2459, %v2461
        %v2463 = vshll.u32 %v2423, 8
        %v2464 = vand.u32 %v2463, 65535
        %v2465 = vshrl.u32 %v2463, 16
        %v2466 = vand.u32 %v2462, 65535
        %v2467 = vshrl.u32 %v2462, 16
        %v2468 = vmul.u32 %v2464, %v2466
        %v2469 = vmul.u32 %v2464, %v2467
        %v2470 = vmul.u32 %v2465, %v2466
        %v2471 = vmul.u32 %v2465, %v2467
        %v2472 = vshll.u32 %v2469, 16
        %v2473 = vshrl.u32 %v2469, 16
        %v2474 = vshll.u32 %v2470, 16
        %v2475 = vshrl.u32 %v2470, 16
        %vm2476 = vc.u32 %v2468, %v2472
        %v2477 = vsel %vm2476, 1, 0
        %v2478 = vadd.s32 %v2468, %v2472
        %v2479 = vadd.s32 %v2471, %v2477
        %vm2480 = vc.u32 %v2478, %v2474
        %v2481 = vsel %vm2480, 1, 0
        %v2482 = vadd.s32 %v2478, %v2474
        %v2483 = vadd.s32 %v2479, %v2481
        %v2484 = vadd.s32 %v2483, %v2473
        %v2485 = vadd.s32 %v2484, %v2475
        %v2486 = vand.u32 %v2463, 65535
        %v2487 = vshrl.u32 %v2463, 16
        %v2488 = vand.u32 %v2458, 65535
        %v2489 = vshrl.u32 %v2458, 16
        %v2490 = vmul.u32 %v2486, %v2488
        %v2491 = vmul.u32 %v2486, %v2489
        %v2492 = vmul.u32 %v2487, %v2488
        %v2493 = vmul.u32 %v2487, %v2489
        %v2494 = vshll.u32 %v2491, 16
        %v2495 = vshrl.u32 %v2491, 16
        %v2496 = vshll.u32 %v2492, 16
        %v2497 = vshrl.u32 %v2492, 16
        %vm2498 = vc.u32 %v2490, %v2494
        %v2499 = vsel %vm2498, 1, 0
        %v2500 = vadd.s32 %v2490, %v2494
        %v2501 = vadd.s32 %v2493, %v2499
        %vm2502 = vc.u32 %v2500, %v2496
        %v2503 = vsel %vm2502, 1, 0
        %v2504 = vadd.s32 %v2500, %v2496
        %v2505 = vadd.s32 %v2501, %v2503
        %v2506 = vadd.s32 %v2505, %v2495
        %v2507 = vadd.s32 %v2506, %v2497
        %v2508 = vmul.u32 %v2463, %v2454
        %v2509 = vadd.s32 %v2485, %v2504
        %vm2510 = vc.u32 %v2485, %v2504
        %v2511 = vadd.s32 %v2507, 1
        %v2512 = vsel %vm2510, %v2511, %v2507
        %v2513 = vadd.s32 %v2508, %v2512
        %v2514 = vadd.s32 %v2513, 536870912
        %v2515 = vshrl.u32 %v2514, 30
        %v2516 = vshll.u32 %v2515, 30
        %v2517 = vsub.s32 %v2513, %v2516
        %vm2518 = vcmp.lt.s32.totalorder %v2517, 0
        %v2519 = vsub.s32 0, %v2517
        %v2520 = vsel %vm2518, %v2519, %v2517
        %v2521 = vclz %v2520
        %v2522 = vsub.s32 %v2521, 2
        %vm2523 = vcmp.gt.s32.totalorder 0, %v2522
        %v2524 = vsel %vm2523, 0, %v2522
        %v2525 = vsub.s32 32, %v2524
        %v2526 = vshll.u32 %v2517, %v2524
        %v2527 = vshrl.u32 %v2509, %v2525
        %v2528 = vor.u32 %v2526, %v2527
        %v2529 = vsub.s32 4294967266, %v2524
        %v2530 = vadd.s32 %v2529, 127
        %v2531 = vshll.u32 %v2530, 23
        %v2532 = vor.u32 4788187, %v2531
        %v2533 = vand.u32 2147483647, %v2532
        %v2535 = vcvt.s32.f32 %v2528
        %v2536 = vmul.f32 %v2535, %v2533
        %v2537 = vxor.u32 %v2536, 2147483648
        %v2538 = vsel %vm2417, %v2537, %v2536
        %v2539 = vsub.s32 4, %v2515
        %v2540 = vsel %vm2417, %v2539, %v2515
        %v2541 = vsel %vm2416, %v973, %v2538
        %v2542 = vsel %vm2416, 0, %v2540
        %v2543 = vmul.f32 %v2541, %v2541
        %v2544 = vmul.f32 %v2543, -0.001358992
        %v2545 = vadd.f32 %v2544, 0.041655596
        %v2546 = vmul.f32 %v2543, %v2545
        %v2547 = vadd.f32 %v2546, -0.4999988
        %v2548 = vmul.f32 %v2543, %v2547
        %v2549 = vadd.f32 1.0, %v2548
        %v2550 = vmul.f32 %v2541, %v2541
        %v2551 = vmul.f32 %v2550, -0.00019511016
        %v2552 = vadd.f32 %v2551, 0.008332121
        %v2553 = vmul.f32 %v2550, %v2552
        %v2554 = vadd.f32 %v2553, -0.16666654
        %v2555 = vmul.f32 %v2550, %v2554
        %v2556 = vadd.f32 %v2555, 1.0
        %v2557 = vmul.f32 %v2556, %v2541
        %vm2558 = vweird.f32 %v973
        %v2559 = vadd.s32 %v2542, 3
        %v2560 = vand.u32 %v2559, 3
        %vm2561 = vcmp.lt.s32.totalorder %v2560, 2
        %vm2562 = vcmp.eq.s32.totalorder %v2560, 0
        %v2563 = vxor.u32 %v2557, 2147483648
        %v2564 = vsel %vm2562, %v2549, %v2563
        %vm2565 = vcmp.eq.s32.totalorder %v2560, 2
        %v2566 = vxor.u32 %v2549, 2147483648
        %v2567 = vsel %vm2565, %v2566, %v2557
        %v2568 = vsel %vm2561, %v2564, %v2567
        %v2569 = vsel %vm2558, nan, %v2568
        %v2570 = vand.u32 2147483647, %v974
        %vm2571 = vcmp.le.f32.partialorder %v2570, 0.7853982
        %vm2572 = vcmp.lt.s32.totalorder %v974, 0
        %v2573 = vand.u32 %v974, 2139095040
        %v2574 = vshrl.u32 %v2573, 23
        %v2575 = vsub.s32 %v2574, 127
        %v2576 = vand.u32 2147483647, %v974
        %v2577 = vand.u32 %v2576, 8388607
        %v2578 = vor.u32 %v2577, 8388608
        %v2579 = vsub.s32 0, %v2578
        %v2580 = vadd.s32 %v2575, 1
        %vm2581 = vcmp.gt.s32.totalorder %v2580, 0
        %v2582 = vsel %vm2581, %v2580, 0
        %v2583 = vshrl.u32 %v2582, 5
        %v2584 = vand.u32 %v2582, 31
        %v2585 = vsub.s32 32, %v2584
        %v2586 = vshrl.u32 683565275, %v2585
        %v2587 = vshll.u32 683565275, %v2584
        %v2588 = vshrl.u32 2475754826, %v2585
        %v2589 = vor.u32 %v2587, %v2588
        %v2590 = vshll.u32 2475754826, %v2584
        %v2591 = vshrl.u32 2131351028, %v2585
        %v2592 = vor.u32 %v2590, %v2591
        %v2593 = vshll.u32 2131351028, %v2584
        %v2594 = vshrl.u32 2102212464, %v2585
        %v2595 = vor.u32 %v2593, %v2594
        %v2596 = vshll.u32 2102212464, %v2584
        %v2597 = vshrl.u32 920167782, %v2585
        %v2598 = vor.u32 %v2596, %v2597
        %v2599 = vshll.u32 920167782, %v2584
        %v2600 = vshrl.u32 1326507024, %v2585
        %v2601 = vor.u32 %v2599, %v2600
        %vm2602 = vcmp.lt.s32.totalorder %v2583, 1
        %vm2603 = vcmp.lt.s32.totalorder %v2583, 2
        %vm2604 = vcmp.lt.s32.totalorder %v2583, 3
        %vm2605 = vcmp.lt.s32.totalorder %v2583, 4
        %v2606 = vsel %vm2602, %v2586, %v2589
        %v2607 = vsel %vm2605, %v2595, 2102212464
        %v2608 = vsel %vm2604, %v2592, %v2607
        %v2609 = vsel %vm2603, %v2606, %v2608
        %v2610 = vsel %vm2602, %v2589, %v2592
        %v2611 = vsel %vm2605, %v2598, 920167782
        %v2612 = vsel %vm2604, %v2595, %v2611
        %v2613 = vsel %vm2603, %v2610, %v2612
        %v2614 = vsel %vm2602, %v2592, %v2595
        %v2615 = vsel %vm2605, %v2601, 1326507024
        %v2616 = vsel %vm2604, %v2598, %v2615
        %v2617 = vsel %vm2603, %v2614, %v2616
        %v2618 = vshll.u32 %v2578, 8
        %v2619 = vand.u32 %v2618, 65535
        %v2620 = vshrl.u32 %v2618, 16
        %v2621 = vand.u32 %v2617, 65535
        %v2622 = vshrl.u32 %v2617, 16
        %v2623 = vmul.u32 %v2619, %v2621
        %v2624 = vmul.u32 %v2619, %v2622
        %v2625 = vmul.u32 %v2620, %v2621
        %v2626 = vmul.u32 %v2620, %v2622
        %v2627 = vshll.u32 %v2624, 16
        %v2628 = vshrl.u32 %v2624, 16
        %v2629 = vshll.u32 %v2625, 16
        %v2630 = vshrl.u32 %v2625, 16
        %vm2631 = vc.u32 %v2623, %v2627
        %v2632 = vsel %vm2631, 1, 0
        %v2633 = vadd.s32 %v2623, %v2627
        %v2634 = vadd.s32 %v2626, %v2632
        %vm2635 = vc.u32 %v2633, %v2629
        %v2636 = vsel %vm2635, 1, 0
        %v2637 = vadd.s32 %v2633, %v2629
        %v2638 = vadd.s32 %v2634, %v2636
        %v2639 = vadd.s32 %v2638, %v2628
        %v2640 = vadd.s32 %v2639, %v2630
        %v2641 = vand.u32 %v2618, 65535
        %v2642 = vshrl.u32 %v2618, 16
        %v2643 = vand.u32 %v2613, 65535
        %v2644 = vshrl.u32 %v2613, 16
        %v2645 = vmul.u32 %v2641, %v2643
        %v2646 = vmul.u32 %v2641, %v2644
        %v2647 = vmul.u32 %v2642, %v2643
        %v2648 = vmul.u32 %v2642, %v2644
        %v2649 = vshll.u32 %v2646, 16
        %v2650 = vshrl.u32 %v2646, 16
        %v2651 = vshll.u32 %v2647, 16
        %v2652 = vshrl.u32 %v2647, 16
        %vm2653 = vc.u32 %v2645, %v2649
        %v2654 = vsel %vm2653, 1, 0
        %v2655 = vadd.s32 %v2645, %v2649
        %v2656 = vadd.s32 %v2648, %v2654
        %vm2657 = vc.u32 %v2655, %v2651
        %v2658 = vsel %vm2657, 1, 0
        %v2659 = vadd.s32 %v2655, %v2651
        %v2660 = vadd.s32 %v2656, %v2658
        %v2661 = vadd.s32 %v2660, %v2650
        %v2662 = vadd.s32 %v2661, %v2652
        %v2663 = vmul.u32 %v2618, %v2609
        %v2664 = vadd.s32 %v2640, %v2659
        %vm2665 = vc.u32 %v2640, %v2659
        %v2666 = vadd.s32 %v2662, 1
        %v2667 = vsel %vm2665, %v2666, %v2662
        %v2668 = vadd.s32 %v2663, %v2667
        %v2669 = vadd.s32 %v2668, 536870912
        %v2670 = vshrl.u32 %v2669, 30
        %v2671 = vshll.u32 %v2670, 30
        %v2672 = vsub.s32 %v2668, %v2671
        %vm2673 = vcmp.lt.s32.totalorder %v2672, 0
        %v2674 = vsub.s32 0, %v2672
        %v2675 = vsel %vm2673, %v2674, %v2672
        %v2676 = vclz %v2675
        %v2677 = vsub.s32 %v2676, 2
        %vm2678 = vcmp.gt.s32.totalorder 0, %v2677
        %v2679 = vsel %vm2678, 0, %v2677
        %v2680 = vsub.s32 32, %v2679
        %v2681 = vshll.u32 %v2672, %v2679
        %v2682 = vshrl.u32 %v2664, %v2680
        %v2683 = vor.u32 %v2681, %v2682
        %v2684 = vsub.s32 4294967266, %v2679
        %v2685 = vadd.s32 %v2684, 127
        %v2686 = vshll.u32 %v2685, 23
        %v2687 = vor.u32 4788187, %v2686
        %v2688 = vand.u32 2147483647, %v2687
        %v2690 = vcvt.s32.f32 %v2683
        %v2691 = vmul.f32 %v2690, %v2688
        %v2692 = vxor.u32 %v2691, 2147483648
        %v2693 = vsel %vm2572, %v2692, %v2691
        %v2694 = vsub.s32 4, %v2670
        %v2695 = vsel %vm2572, %v2694, %v2670
        %v2696 = vsel %vm2571, %v974, %v2693
        %v2697 = vsel %vm2571, 0, %v2695
        %v2698 = vmul.f32 %v2696, %v2696
        %v2699 = vmul.f32 %v2698, -0.001358992
        %v2700 = vadd.f32 %v2699, 0.041655596
        %v2701 = vmul.f32 %v2698, %v2700
        %v2702 = vadd.f32 %v2701, -0.4999988
        %v2703 = vmul.f32 %v2698, %v2702
        %v2704 = vadd.f32 1.0, %v2703
        %v2705 = vmul.f32 %v2696, %v2696
        %v2706 = vmul.f32 %v2705, -0.00019511016
        %v2707 = vadd.f32 %v2706, 0.008332121
        %v2708 = vmul.f32 %v2705, %v2707
        %v2709 = vadd.f32 %v2708, -0.16666654
        %v2710 = vmul.f32 %v2705, %v2709
        %v2711 = vadd.f32 %v2710, 1.0
        %v2712 = vmul.f32 %v2711, %v2696
        %vm2713 = vweird.f32 %v974
        %v2714 = vadd.s32 %v2697, 3
        %v2715 = vand.u32 %v2714, 3
        %vm2716 = vcmp.lt.s32.totalorder %v2715, 2
        %vm2717 = vcmp.eq.s32.totalorder %v2715, 0
        %v2718 = vxor.u32 %v2712, 2147483648
        %v2719 = vsel %vm2717, %v2704, %v2718
        %vm2720 = vcmp.eq.s32.totalorder %v2715, 2
        %v2721 = vxor.u32 %v2704, 2147483648
        %v2722 = vsel %vm2720, %v2721, %v2712
        %v2723 = vsel %vm2716, %v2719, %v2722
        %v2724 = vsel %vm2713, nan, %v2723
        %v2725 = vand.u32 2147483647, %v975
        %vm2726 = vcmp.le.f32.partialorder %v2725, 0.7853982
        %vm2727 = vcmp.lt.s32.totalorder %v975, 0
        %v2728 = vand.u32 %v975, 2139095040
        %v2729 = vshrl.u32 %v2728, 23
        %v2730 = vsub.s32 %v2729, 127
        %v2731 = vand.u32 2147483647, %v975
        %v2732 = vand.u32 %v2731, 8388607
        %v2733 = vor.u32 %v2732, 8388608
        %v2734 = vsub.s32 0, %v2733
        %v2735 = vadd.s32 %v2730, 1
        %vm2736 = vcmp.gt.s32.totalorder %v2735, 0
        %v2737 = vsel %vm2736, %v2735, 0
        %v2738 = vshrl.u32 %v2737, 5
        %v2739 = vand.u32 %v2737, 31
        %v2740 = vsub.s32 32, %v2739
        %v2741 = vshrl.u32 683565275, %v2740
        %v2742 = vshll.u32 683565275, %v2739
        %v2743 = vshrl.u32 2475754826, %v2740
        %v2744 = vor.u32 %v2742, %v2743
        %v2745 = vshll.u32 2475754826, %v2739
        %v2746 = vshrl.u32 2131351028, %v2740
        %v2747 = vor.u32 %v2745, %v2746
        %v2748 = vshll.u32 2131351028, %v2739
        %v2749 = vshrl.u32 2102212464, %v2740
        %v2750 = vor.u32 %v2748, %v2749
        %v2751 = vshll.u32 2102212464, %v2739
        %v2752 = vshrl.u32 920167782, %v2740
        %v2753 = vor.u32 %v2751, %v2752
        %v2754 = vshll.u32 920167782, %v2739
        %v2755 = vshrl.u32 1326507024, %v2740
        %v2756 = vor.u32 %v2754, %v2755
        %vm2757 = vcmp.lt.s32.totalorder %v2738, 1
        %vm2758 = vcmp.lt.s32.totalorder %v2738, 2
        %vm2759 = vcmp.lt.s32.totalorder %v2738, 3
        %vm2760 = vcmp.lt.s32.totalorder %v2738, 4
        %v2761 = vsel %vm2757, %v2741, %v2744
        %v2762 = vsel %vm2760, %v2750, 2102212464
        %v2763 = vsel %vm2759, %v2747, %v2762
        %v2764 = vsel %vm2758, %v2761, %v2763
        %v2765 = vsel %vm2757, %v2744, %v2747
        %v2766 = vsel %vm2760, %v2753, 920167782
        %v2767 = vsel %vm2759, %v2750, %v2766
        %v2768 = vsel %vm2758, %v2765, %v2767
        %v2769 = vsel %vm2757, %v2747, %v2750
        %v2770 = vsel %vm2760, %v2756, 1326507024
        %v2771 = vsel %vm2759, %v2753, %v2770
        %v2772 = vsel %vm2758, %v2769, %v2771
        %v2773 = vshll.u32 %v2733, 8
        %v2774 = vand.u32 %v2773, 65535
        %v2775 = vshrl.u32 %v2773, 16
        %v2776 = vand.u32 %v2772, 65535
        %v2777 = vshrl.u32 %v2772, 16
        %v2778 = vmul.u32 %v2774, %v2776
        %v2779 = vmul.u32 %v2774, %v2777
        %v2780 = vmul.u32 %v2775, %v2776
        %v2781 = vmul.u32 %v2775, %v2777
        %v2782 = vshll.u32 %v2779, 16
        %v2783 = vshrl.u32 %v2779, 16
        %v2784 = vshll.u32 %v2780, 16
        %v2785 = vshrl.u32 %v2780, 16
        %vm2786 = vc.u32 %v2778, %v2782
        %v2787 = vsel %vm2786, 1, 0
        %v2788 = vadd.s32 %v2778, %v2782
        %v2789 = vadd.s32 %v2781, %v2787
        %vm2790 = vc.u32 %v2788, %v2784
        %v2791 = vsel %vm2790, 1, 0
        %v2792 = vadd.s32 %v2788, %v2784
        %v2793 = vadd.s32 %v2789, %v2791
        %v2794 = vadd.s32 %v2793, %v2783
        %v2795 = vadd.s32 %v2794, %v2785
        %v2796 = vand.u32 %v2773, 65535
        %v2797 = vshrl.u32 %v2773, 16
        %v2798 = vand.u32 %v2768, 65535
        %v2799 = vshrl.u32 %v2768, 16
        %v2800 = vmul.u32 %v2796, %v2798
        %v2801 = vmul.u32 %v2796, %v2799
        %v2802 = vmul.u32 %v2797, %v2798
        %v2803 = vmul.u32 %v2797, %v2799
        %v2804 = vshll.u32 %v2801, 16
        %v2805 = vshrl.u32 %v2801, 16
        %v2806 = vshll.u32 %v2802, 16
        %v2807 = vshrl.u32 %v2802, 16
        %vm2808 = vc.u32 %v2800, %v2804
        %v2809 = vsel %vm2808, 1, 0
        %v2810 = vadd.s32 %v2800, %v2804
        %v2811 = vadd.s32 %v2803, %v2809
        %vm2812 = vc.u32 %v2810, %v2806
        %v2813 = vsel %vm2812, 1, 0
        %v2814 = vadd.s32 %v2810, %v2806
        %v2815 = vadd.s32 %v2811, %v2813
        %v2816 = vadd.s32 %v2815, %v2805
        %v2817 = vadd.s32 %v2816, %v2807
        %v2818 = vmul.u32 %v2773, %v2764
        %v2819 = vadd.s32 %v2795, %v2814
        %vm2820 = vc.u32 %v2795, %v2814
        %v2821 = vadd.s32 %v2817, 1
        %v2822 = vsel %vm2820, %v2821, %v2817
        %v2823 = vadd.s32 %v2818, %v2822
        %v2824 = vadd.s32 %v2823, 536870912
        %v2825 = vshrl.u32 %v2824, 30
        %v2826 = vshll.u32 %v2825, 30
        %v2827 = vsub.s32 %v2823, %v2826
        %vm2828 = vcmp.lt.s32.totalorder %v2827, 0
        %v2829 = vsub.s32 0, %v2827
        %v2830 = vsel %vm2828, %v2829, %v2827
        %v2831 = vclz %v2830
        %v2832 = vsub.s32 %v2831, 2
        %vm2833 = vcmp.gt.s32.totalorder 0, %v2832
        %v2834 = vsel %vm2833, 0, %v2832
        %v2835 = vsub.s32 32, %v2834
        %v2836 = vshll.u32 %v2827, %v2834
        %v2837 = vshrl.u32 %v2819, %v2835
        %v2838 = vor.u32 %v2836, %v2837
        %v2839 = vsub.s32 4294967266, %v2834
        %v2840 = vadd.s32 %v2839, 127
        %v2841 = vshll.u32 %v2840, 23
        %v2842 = vor.u32 4788187, %v2841
        %v2843 = vand.u32 2147483647, %v2842
        %v2845 = vcvt.s32.f32 %v2838
        %v2846 = vmul.f32 %v2845, %v2843
        %v2847 = vxor.u32 %v2846, 2147483648
        %v2848 = vsel %vm2727, %v2847, %v2846
        %v2849 = vsub.s32 4, %v2825
        %v2850 = vsel %vm2727, %v2849, %v2825
        %v2851 = vsel %vm2726, %v975, %v2848
        %v2852 = vsel %vm2726, 0, %v2850
        %v2853 = vmul.f32 %v2851, %v2851
        %v2854 = vmul.f32 %v2853, -0.001358992
        %v2855 = vadd.f32 %v2854, 0.041655596
        %v2856 = vmul.f32 %v2853, %v2855
        %v2857 = vadd.f32 %v2856, -0.4999988
        %v2858 = vmul.f32 %v2853, %v2857
        %v2859 = vadd.f32 1.0, %v2858
        %v2860 = vmul.f32 %v2851, %v2851
        %v2861 = vmul.f32 %v2860, -0.00019511016
        %v2862 = vadd.f32 %v2861, 0.008332121
        %v2863 = vmul.f32 %v2860, %v2862
        %v2864 = vadd.f32 %v2863, -0.16666654
        %v2865 = vmul.f32 %v2860, %v2864
        %v2866 = vadd.f32 %v2865, 1.0
        %v2867 = vmul.f32 %v2866, %v2851
        %vm2868 = vweird.f32 %v975
        %v2869 = vadd.s32 %v2852, 3
        %v2870 = vand.u32 %v2869, 3
        %vm2871 = vcmp.lt.s32.totalorder %v2870, 2
        %vm2872 = vcmp.eq.s32.totalorder %v2870, 0
        %v2873 = vxor.u32 %v2867, 2147483648
        %v2874 = vsel %vm2872, %v2859, %v2873
        %vm2875 = vcmp.eq.s32.totalorder %v2870, 2
        %v2876 = vxor.u32 %v2859, 2147483648
        %v2877 = vsel %vm2875, %v2876, %v2867
        %v2878 = vsel %vm2871, %v2874, %v2877
        %v2879 = vsel %vm2868, nan, %v2878
        %v2880 = vand.u32 2147483647, %v976
        %vm2881 = vcmp.le.f32.partialorder %v2880, 0.7853982
        %vm2882 = vcmp.lt.s32.totalorder %v976, 0
        %v2883 = vand.u32 %v976, 2139095040
        %v2884 = vshrl.u32 %v2883, 23
        %v2885 = vsub.s32 %v2884, 127
        %v2886 = vand.u32 2147483647, %v976
        %v2887 = vand.u32 %v2886, 8388607
        %v2888 = vor.u32 %v2887, 8388608
        %v2889 = vsub.s32 0, %v2888
        %v2890 = vadd.s32 %v2885, 1
        %vm2891 = vcmp.gt.s32.totalorder %v2890, 0
        %v2892 = vsel %vm2891, %v2890, 0
        %v2893 = vshrl.u32 %v2892, 5
        %v2894 = vand.u32 %v2892, 31
        %v2895 = vsub.s32 32, %v2894
        %v2896 = vshrl.u32 683565275, %v2895
        %v2897 = vshll.u32 683565275, %v2894
        %v2898 = vshrl.u32 2475754826, %v2895
        %v2899 = vor.u32 %v2897, %v2898
        %v2900 = vshll.u32 2475754826, %v2894
        %v2901 = vshrl.u32 2131351028, %v2895
        %v2902 = vor.u32 %v2900, %v2901
        %v2903 = vshll.u32 2131351028, %v2894
        %v2904 = vshrl.u32 2102212464, %v2895
        %v2905 = vor.u32 %v2903, %v2904
        %v2906 = vshll.u32 2102212464, %v2894
        %v2907 = vshrl.u32 920167782, %v2895
        %v2908 = vor.u32 %v2906, %v2907
        %v2909 = vshll.u32 920167782, %v2894
        %v2910 = vshrl.u32 1326507024, %v2895
        %v2911 = vor.u32 %v2909, %v2910
        %vm2912 = vcmp.lt.s32.totalorder %v2893, 1
        %vm2913 = vcmp.lt.s32.totalorder %v2893, 2
        %vm2914 = vcmp.lt.s32.totalorder %v2893, 3
        %vm2915 = vcmp.lt.s32.totalorder %v2893, 4
        %v2916 = vsel %vm2912, %v2896, %v2899
        %v2917 = vsel %vm2915, %v2905, 2102212464
        %v2918 = vsel %vm2914, %v2902, %v2917
        %v2919 = vsel %vm2913, %v2916, %v2918
        %v2920 = vsel %vm2912, %v2899, %v2902
        %v2921 = vsel %vm2915, %v2908, 920167782
        %v2922 = vsel %vm2914, %v2905, %v2921
        %v2923 = vsel %vm2913, %v2920, %v2922
        %v2924 = vsel %vm2912, %v2902, %v2905
        %v2925 = vsel %vm2915, %v2911, 1326507024
        %v2926 = vsel %vm2914, %v2908, %v2925
        %v2927 = vsel %vm2913, %v2924, %v2926
        %v2928 = vshll.u32 %v2888, 8
        %v2929 = vand.u32 %v2928, 65535
        %v2930 = vshrl.u32 %v2928, 16
        %v2931 = vand.u32 %v2927, 65535
        %v2932 = vshrl.u32 %v2927, 16
        %v2933 = vmul.u32 %v2929, %v2931
        %v2934 = vmul.u32 %v2929, %v2932
        %v2935 = vmul.u32 %v2930, %v2931
        %v2936 = vmul.u32 %v2930, %v2932
        %v2937 = vshll.u32 %v2934, 16
        %v2938 = vshrl.u32 %v2934, 16
        %v2939 = vshll.u32 %v2935, 16
        %v2940 = vshrl.u32 %v2935, 16
        %vm2941 = vc.u32 %v2933, %v2937
        %v2942 = vsel %vm2941, 1, 0
        %v2943 = vadd.s32 %v2933, %v2937
        %v2944 = vadd.s32 %v2936, %v2942
        %vm2945 = vc.u32 %v2943, %v2939
        %v2946 = vsel %vm2945, 1, 0
        %v2947 = vadd.s32 %v2943, %v2939
        %v2948 = vadd.s32 %v2944, %v2946
        %v2949 = vadd.s32 %v2948, %v2938
        %v2950 = vadd.s32 %v2949, %v2940
        %v2951 = vand.u32 %v2928, 65535
        %v2952 = vshrl.u32 %v2928, 16
        %v2953 = vand.u32 %v2923, 65535
        %v2954 = vshrl.u32 %v2923, 16
        %v2955 = vmul.u32 %v2951, %v2953
        %v2956 = vmul.u32 %v2951, %v2954
        %v2957 = vmul.u32 %v2952, %v2953
        %v2958 = vmul.u32 %v2952, %v2954
        %v2959 = vshll.u32 %v2956, 16
        %v2960 = vshrl.u32 %v2956, 16
        %v2961 = vshll.u32 %v2957, 16
        %v2962 = vshrl.u32 %v2957, 16
        %vm2963 = vc.u32 %v2955, %v2959
        %v2964 = vsel %vm2963, 1, 0
        %v2965 = vadd.s32 %v2955, %v2959
        %v2966 = vadd.s32 %v2958, %v2964
        %vm2967 = vc.u32 %v2965, %v2961
        %v2968 = vsel %vm2967, 1, 0
        %v2969 = vadd.s32 %v2965, %v2961
        %v2970 = vadd.s32 %v2966, %v2968
        %v2971 = vadd.s32 %v2970, %v2960
        %v2972 = vadd.s32 %v2971, %v2962
        %v2973 = vmul.u32 %v2928, %v2919
        %v2974 = vadd.s32 %v2950, %v2969
        %vm2975 = vc.u32 %v2950, %v2969
        %v2976 = vadd.s32 %v2972, 1
        %v2977 = vsel %vm2975, %v2976, %v2972
        %v2978 = vadd.s32 %v2973, %v2977
        %v2979 = vadd.s32 %v2978, 536870912
        %v2980 = vshrl.u32 %v2979, 30
        %v2981 = vshll.u32 %v2980, 30
        %v2982 = vsub.s32 %v2978, %v2981
        %vm2983 = vcmp.lt.s32.totalorder %v2982, 0
        %v2984 = vsub.s32 0, %v2982
        %v2985 = vsel %vm2983, %v2984, %v2982
        %v2986 = vclz %v2985
        %v2987 = vsub.s32 %v2986, 2
        %vm2988 = vcmp.gt.s32.totalorder 0, %v2987
        %v2989 = vsel %vm2988, 0, %v2987
        %v2990 = vsub.s32 32, %v2989
        %v2991 = vshll.u32 %v2982, %v2989
        %v2992 = vshrl.u32 %v2974, %v2990
        %v2993 = vor.u32 %v2991, %v2992
        %v2994 = vsub.s32 4294967266, %v2989
        %v2995 = vadd.s32 %v2994, 127
        %v2996 = vshll.u32 %v2995, 23
        %v2997 = vor.u32 4788187, %v2996
        %v2998 = vand.u32 2147483647, %v2997
        %v3000 = vcvt.s32.f32 %v2993
        %v3001 = vmul.f32 %v3000, %v2998
        %v3002 = vxor.u32 %v3001, 2147483648
        %v3003 = vsel %vm2882, %v3002, %v3001
        %v3004 = vsub.s32 4, %v2980
        %v3005 = vsel %vm2882, %v3004, %v2980
        %v3006 = vsel %vm2881, %v976, %v3003
        %v3007 = vsel %vm2881, 0, %v3005
        %v3008 = vmul.f32 %v3006, %v3006
        %v3009 = vmul.f32 %v3008, -0.001358992
        %v3010 = vadd.f32 %v3009, 0.041655596
        %v3011 = vmul.f32 %v3008, %v3010
        %v3012 = vadd.f32 %v3011, -0.4999988
        %v3013 = vmul.f32 %v3008, %v3012
        %v3014 = vadd.f32 1.0, %v3013
        %v3015 = vmul.f32 %v3006, %v3006
        %v3016 = vmul.f32 %v3015, -0.00019511016
        %v3017 = vadd.f32 %v3016, 0.008332121
        %v3018 = vmul.f32 %v3015, %v3017
        %v3019 = vadd.f32 %v3018, -0.16666654
        %v3020 = vmul.f32 %v3015, %v3019
        %v3021 = vadd.f32 %v3020, 1.0
        %v3022 = vmul.f32 %v3021, %v3006
        %vm3023 = vweird.f32 %v976
        %v3024 = vadd.s32 %v3007, 3
        %v3025 = vand.u32 %v3024, 3
        %vm3026 = vcmp.lt.s32.totalorder %v3025, 2
        %vm3027 = vcmp.eq.s32.totalorder %v3025, 0
        %v3028 = vxor.u32 %v3022, 2147483648
        %v3029 = vsel %vm3027, %v3014, %v3028
        %vm3030 = vcmp.eq.s32.totalorder %v3025, 2
        %v3031 = vxor.u32 %v3014, 2147483648
        %v3032 = vsel %vm3030, %v3031, %v3022
        %v3033 = vsel %vm3026, %v3029, %v3032
        %v3034 = vsel %vm3023, nan, %v3033
        %v3035 = vand.u32 2147483647, %v977
        %vm3036 = vcmp.le.f32.partialorder %v3035, 0.7853982
        %vm3037 = vcmp.lt.s32.totalorder %v977, 0
        %v3038 = vand.u32 %v977, 2139095040
        %v3039 = vshrl.u32 %v3038, 23
        %v3040 = vsub.s32 %v3039, 127
        %v3041 = vand.u32 2147483647, %v977
        %v3042 = vand.u32 %v3041, 8388607
        %v3043 = vor.u32 %v3042, 8388608
        %v3044 = vsub.s32 0, %v3043
        %v3045 = vadd.s32 %v3040, 1
        %vm3046 = vcmp.gt.s32.totalorder %v3045, 0
        %v3047 = vsel %vm3046, %v3045, 0
        %v3048 = vshrl.u32 %v3047, 5
        %v3049 = vand.u32 %v3047, 31
        %v3050 = vsub.s32 32, %v3049
        %v3051 = vshrl.u32 683565275, %v3050
        %v3052 = vshll.u32 683565275, %v3049
        %v3053 = vshrl.u32 2475754826, %v3050
        %v3054 = vor.u32 %v3052, %v3053
        %v3055 = vshll.u32 2475754826, %v3049
        %v3056 = vshrl.u32 2131351028, %v3050
        %v3057 = vor.u32 %v3055, %v3056
        %v3058 = vshll.u32 2131351028, %v3049
        %v3059 = vshrl.u32 2102212464, %v3050
        %v3060 = vor.u32 %v3058, %v3059
        %v3061 = vshll.u32 2102212464, %v3049
        %v3062 = vshrl.u32 920167782, %v3050
        %v3063 = vor.u32 %v3061, %v3062
        %v3064 = vshll.u32 920167782, %v3049
        %v3065 = vshrl.u32 1326507024, %v3050
        %v3066 = vor.u32 %v3064, %v3065
        %vm3067 = vcmp.lt.s32.totalorder %v3048, 1
        %vm3068 = vcmp.lt.s32.totalorder %v3048, 2
        %vm3069 = vcmp.lt.s32.totalorder %v3048, 3
        %vm3070 = vcmp.lt.s32.totalorder %v3048, 4
        %v3071 = vsel %vm3067, %v3051, %v3054
        %v3072 = vsel %vm3070, %v3060, 2102212464
        %v3073 = vsel %vm3069, %v3057, %v3072
        %v3074 = vsel %vm3068, %v3071, %v3073
        %v3075 = vsel %vm3067, %v3054, %v3057
        %v3076 = vsel %vm3070, %v3063, 920167782
        %v3077 = vsel %vm3069, %v3060, %v3076
        %v3078 = vsel %vm3068, %v3075, %v3077
        %v3079 = vsel %vm3067, %v3057, %v3060
        %v3080 = vsel %vm3070, %v3066, 1326507024
        %v3081 = vsel %vm3069, %v3063, %v3080
        %v3082 = vsel %vm3068, %v3079, %v3081
        %v3083 = vshll.u32 %v3043, 8
        %v3084 = vand.u32 %v3083, 65535
        %v3085 = vshrl.u32 %v3083, 16
        %v3086 = vand.u32 %v3082, 65535
        %v3087 = vshrl.u32 %v3082, 16
        %v3088 = vmul.u32 %v3084, %v3086
        %v3089 = vmul.u32 %v3084, %v3087
        %v3090 = vmul.u32 %v3085, %v3086
        %v3091 = vmul.u32 %v3085, %v3087
        %v3092 = vshll.u32 %v3089, 16
        %v3093 = vshrl.u32 %v3089, 16
        %v3094 = vshll.u32 %v3090, 16
        %v3095 = vshrl.u32 %v3090, 16
        %vm3096 = vc.u32 %v3088, %v3092
        %v3097 = vsel %vm3096, 1, 0
        %v3098 = vadd.s32 %v3088, %v3092
        %v3099 = vadd.s32 %v3091, %v3097
        %vm3100 = vc.u32 %v3098, %v3094
        %v3101 = vsel %vm3100, 1, 0
        %v3102 = vadd.s32 %v3098, %v3094
        %v3103 = vadd.s32 %v3099, %v3101
        %v3104 = vadd.s32 %v3103, %v3093
        %v3105 = vadd.s32 %v3104, %v3095
        %v3106 = vand.u32 %v3083, 65535
        %v3107 = vshrl.u32 %v3083, 16
        %v3108 = vand.u32 %v3078, 65535
        %v3109 = vshrl.u32 %v3078, 16
        %v3110 = vmul.u32 %v3106, %v3108
        %v3111 = vmul.u32 %v3106, %v3109
        %v3112 = vmul.u32 %v3107, %v3108
        %v3113 = vmul.u32 %v3107, %v3109
        %v3114 = vshll.u32 %v3111, 16
        %v3115 = vshrl.u32 %v3111, 16
        %v3116 = vshll.u32 %v3112, 16
        %v3117 = vshrl.u32 %v3112, 16
        %vm3118 = vc.u32 %v3110, %v3114
        %v3119 = vsel %vm3118, 1, 0
        %v3120 = vadd.s32 %v3110, %v3114
        %v3121 = vadd.s32 %v3113, %v3119
        %vm3122 = vc.u32 %v3120, %v3116
        %v3123 = vsel %vm3122, 1, 0
        %v3124 = vadd.s32 %v3120, %v3116
        %v3125 = vadd.s32 %v3121, %v3123
        %v3126 = vadd.s32 %v3125, %v3115
        %v3127 = vadd.s32 %v3126, %v3117
        %v3128 = vmul.u32 %v3083, %v3074
        %v3129 = vadd.s32 %v3105, %v3124
        %vm3130 = vc.u32 %v3105, %v3124
        %v3131 = vadd.s32 %v3127, 1
        %v3132 = vsel %vm3130, %v3131, %v3127
        %v3133 = vadd.s32 %v3128, %v3132
        %v3134 = vadd.s32 %v3133, 536870912
        %v3135 = vshrl.u32 %v3134, 30
        %v3136 = vshll.u32 %v3135, 30
        %v3137 = vsub.s32 %v3133, %v3136
        %vm3138 = vcmp.lt.s32.totalorder %v3137, 0
        %v3139 = vsub.s32 0, %v3137
        %v3140 = vsel %vm3138, %v3139, %v3137
        %v3141 = vclz %v3140
        %v3142 = vsub.s32 %v3141, 2
        %vm3143 = vcmp.gt.s32.totalorder 0, %v3142
        %v3144 = vsel %vm3143, 0, %v3142
        %v3145 = vsub.s32 32, %v3144
        %v3146 = vshll.u32 %v3137, %v3144
        %v3147 = vshrl.u32 %v3129, %v3145
        %v3148 = vor.u32 %v3146, %v3147
        %v3149 = vsub.s32 4294967266, %v3144
        %v3150 = vadd.s32 %v3149, 127
        %v3151 = vshll.u32 %v3150, 23
        %v3152 = vor.u32 4788187, %v3151
        %v3153 = vand.u32 2147483647, %v3152
        %v3155 = vcvt.s32.f32 %v3148
        %v3156 = vmul.f32 %v3155, %v3153
        %v3157 = vxor.u32 %v3156, 2147483648
        %v3158 = vsel %vm3037, %v3157, %v3156
        %v3159 = vsub.s32 4, %v3135
        %v3160 = vsel %vm3037, %v3159, %v3135
        %v3161 = vsel %vm3036, %v977, %v3158
        %v3162 = vsel %vm3036, 0, %v3160
        %v3163 = vmul.f32 %v3161, %v3161
        %v3164 = vmul.f32 %v3163, -0.001358992
        %v3165 = vadd.f32 %v3164, 0.041655596
        %v3166 = vmul.f32 %v3163, %v3165
        %v3167 = vadd.f32 %v3166, -0.4999988
        %v3168 = vmul.f32 %v3163, %v3167
        %v3169 = vadd.f32 1.0, %v3168
        %v3170 = vmul.f32 %v3161, %v3161
        %v3171 = vmul.f32 %v3170, -0.00019511016
        %v3172 = vadd.f32 %v3171, 0.008332121
        %v3173 = vmul.f32 %v3170, %v3172
        %v3174 = vadd.f32 %v3173, -0.16666654
        %v3175 = vmul.f32 %v3170, %v3174
        %v3176 = vadd.f32 %v3175, 1.0
        %v3177 = vmul.f32 %v3176, %v3161
        %vm3178 = vweird.f32 %v977
        %v3179 = vadd.s32 %v3162, 3
        %v3180 = vand.u32 %v3179, 3
        %vm3181 = vcmp.lt.s32.totalorder %v3180, 2
        %vm3182 = vcmp.eq.s32.totalorder %v3180, 0
        %v3183 = vxor.u32 %v3177, 2147483648
        %v3184 = vsel %vm3182, %v3169, %v3183
        %vm3185 = vcmp.eq.s32.totalorder %v3180, 2
        %v3186 = vxor.u32 %v3169, 2147483648
        %v3187 = vsel %vm3185, %v3186, %v3177
        %v3188 = vsel %vm3181, %v3184, %v3187
        %v3189 = vsel %vm3178, nan, %v3188
        %v3190 = vand.u32 2147483647, %v978
        %vm3191 = vcmp.le.f32.partialorder %v3190, 0.7853982
        %vm3192 = vcmp.lt.s32.totalorder %v978, 0
        %v3193 = vand.u32 %v978, 2139095040
        %v3194 = vshrl.u32 %v3193, 23
        %v3195 = vsub.s32 %v3194, 127
        %v3196 = vand.u32 2147483647, %v978
        %v3197 = vand.u32 %v3196, 8388607
        %v3198 = vor.u32 %v3197, 8388608
        %v3199 = vsub.s32 0, %v3198
        %v3200 = vadd.s32 %v3195, 1
        %vm3201 = vcmp.gt.s32.totalorder %v3200, 0
        %v3202 = vsel %vm3201, %v3200, 0
        %v3203 = vshrl.u32 %v3202, 5
        %v3204 = vand.u32 %v3202, 31
        %v3205 = vsub.s32 32, %v3204
        %v3206 = vshrl.u32 683565275, %v3205
        %v3207 = vshll.u32 683565275, %v3204
        %v3208 = vshrl.u32 2475754826, %v3205
        %v3209 = vor.u32 %v3207, %v3208
        %v3210 = vshll.u32 2475754826, %v3204
        %v3211 = vshrl.u32 2131351028, %v3205
        %v3212 = vor.u32 %v3210, %v3211
        %v3213 = vshll.u32 2131351028, %v3204
        %v3214 = vshrl.u32 2102212464, %v3205
        %v3215 = vor.u32 %v3213, %v3214
        %v3216 = vshll.u32 2102212464, %v3204
        %v3217 = vshrl.u32 920167782, %v3205
        %v3218 = vor.u32 %v3216, %v3217
        %v3219 = vshll.u32 920167782, %v3204
        %v3220 = vshrl.u32 1326507024, %v3205
        %v3221 = vor.u32 %v3219, %v3220
        %vm3222 = vcmp.lt.s32.totalorder %v3203, 1
        %vm3223 = vcmp.lt.s32.totalorder %v3203, 2
        %vm3224 = vcmp.lt.s32.totalorder %v3203, 3
        %vm3225 = vcmp.lt.s32.totalorder %v3203, 4
        %v3226 = vsel %vm3222, %v3206, %v3209
        %v3227 = vsel %vm3225, %v3215, 2102212464
        %v3228 = vsel %vm3224, %v3212, %v3227
        %v3229 = vsel %vm3223, %v3226, %v3228
        %v3230 = vsel %vm3222, %v3209, %v3212
        %v3231 = vsel %vm3225, %v3218, 920167782
        %v3232 = vsel %vm3224, %v3215, %v3231
        %v3233 = vsel %vm3223, %v3230, %v3232
        %v3234 = vsel %vm3222, %v3212, %v3215
        %v3235 = vsel %vm3225, %v3221, 1326507024
        %v3236 = vsel %vm3224, %v3218, %v3235
        %v3237 = vsel %vm3223, %v3234, %v3236
        %v3238 = vshll.u32 %v3198, 8
        %v3239 = vand.u32 %v3238, 65535
        %v3240 = vshrl.u32 %v3238, 16
        %v3241 = vand.u32 %v3237, 65535
        %v3242 = vshrl.u32 %v3237, 16
        %v3243 = vmul.u32 %v3239, %v3241
        %v3244 = vmul.u32 %v3239, %v3242
        %v3245 = vmul.u32 %v3240, %v3241
        %v3246 = vmul.u32 %v3240, %v3242
        %v3247 = vshll.u32 %v3244, 16
        %v3248 = vshrl.u32 %v3244, 16
        %v3249 = vshll.u32 %v3245, 16
        %v3250 = vshrl.u32 %v3245, 16
        %vm3251 = vc.u32 %v3243, %v3247
        %v3252 = vsel %vm3251, 1, 0
        %v3253 = vadd.s32 %v3243, %v3247
        %v3254 = vadd.s32 %v3246, %v3252
        %vm3255 = vc.u32 %v3253, %v3249
        %v3256 = vsel %vm3255, 1, 0
        %v3257 = vadd.s32 %v3253, %v3249
        %v3258 = vadd.s32 %v3254, %v3256
        %v3259 = vadd.s32 %v3258, %v3248
        %v3260 = vadd.s32 %v3259, %v3250
        %v3261 = vand.u32 %v3238, 65535
        %v3262 = vshrl.u32 %v3238, 16
        %v3263 = vand.u32 %v3233, 65535
        %v3264 = vshrl.u32 %v3233, 16
        %v3265 = vmul.u32 %v3261, %v3263
        %v3266 = vmul.u32 %v3261, %v3264
        %v3267 = vmul.u32 %v3262, %v3263
        %v3268 = vmul.u32 %v3262, %v3264
        %v3269 = vshll.u32 %v3266, 16
        %v3270 = vshrl.u32 %v3266, 16
        %v3271 = vshll.u32 %v3267, 16
        %v3272 = vshrl.u32 %v3267, 16
        %vm3273 = vc.u32 %v3265, %v3269
        %v3274 = vsel %vm3273, 1, 0
        %v3275 = vadd.s32 %v3265, %v3269
        %v3276 = vadd.s32 %v3268, %v3274
        %vm3277 = vc.u32 %v3275, %v3271
        %v3278 = vsel %vm3277, 1, 0
        %v3279 = vadd.s32 %v3275, %v3271
        %v3280 = vadd.s32 %v3276, %v3278
        %v3281 = vadd.s32 %v3280, %v3270
        %v3282 = vadd.s32 %v3281, %v3272
        %v3283 = vmul.u32 %v3238, %v3229
        %v3284 = vadd.s32 %v3260, %v3279
        %vm3285 = vc.u32 %v3260, %v3279
        %v3286 = vadd.s32 %v3282, 1
        %v3287 = vsel %vm3285, %v3286, %v3282
        %v3288 = vadd.s32 %v3283, %v3287
        %v3289 = vadd.s32 %v3288, 536870912
        %v3290 = vshrl.u32 %v3289, 30
        %v3291 = vshll.u32 %v3290, 30
        %v3292 = vsub.s32 %v3288, %v3291
        %vm3293 = vcmp.lt.s32.totalorder %v3292, 0
        %v3294 = vsub.s32 0, %v3292
        %v3295 = vsel %vm3293, %v3294, %v3292
        %v3296 = vclz %v3295
        %v3297 = vsub.s32 %v3296, 2
        %vm3298 = vcmp.gt.s32.totalorder 0, %v3297
        %v3299 = vsel %vm3298, 0, %v3297
        %v3300 = vsub.s32 32, %v3299
        %v3301 = vshll.u32 %v3292, %v3299
        %v3302 = vshrl.u32 %v3284, %v3300
        %v3303 = vor.u32 %v3301, %v3302
        %v3304 = vsub.s32 4294967266, %v3299
        %v3305 = vadd.s32 %v3304, 127
        %v3306 = vshll.u32 %v3305, 23
        %v3307 = vor.u32 4788187, %v3306
        %v3308 = vand.u32 2147483647, %v3307
        %v3310 = vcvt.s32.f32 %v3303
        %v3311 = vmul.f32 %v3310, %v3308
        %v3312 = vxor.u32 %v3311, 2147483648
        %v3313 = vsel %vm3192, %v3312, %v3311
        %v3314 = vsub.s32 4, %v3290
        %v3315 = vsel %vm3192, %v3314, %v3290
        %v3316 = vsel %vm3191, %v978, %v3313
        %v3317 = vsel %vm3191, 0, %v3315
        %v3318 = vmul.f32 %v3316, %v3316
        %v3319 = vmul.f32 %v3318, -0.001358992
        %v3320 = vadd.f32 %v3319, 0.041655596
        %v3321 = vmul.f32 %v3318, %v3320
        %v3322 = vadd.f32 %v3321, -0.4999988
        %v3323 = vmul.f32 %v3318, %v3322
        %v3324 = vadd.f32 1.0, %v3323
        %v3325 = vmul.f32 %v3316, %v3316
        %v3326 = vmul.f32 %v3325, -0.00019511016
        %v3327 = vadd.f32 %v3326, 0.008332121
        %v3328 = vmul.f32 %v3325, %v3327
        %v3329 = vadd.f32 %v3328, -0.16666654
        %v3330 = vmul.f32 %v3325, %v3329
        %v3331 = vadd.f32 %v3330, 1.0
        %v3332 = vmul.f32 %v3331, %v3316
        %vm3333 = vweird.f32 %v978
        %v3334 = vadd.s32 %v3317, 3
        %v3335 = vand.u32 %v3334, 3
        %vm3336 = vcmp.lt.s32.totalorder %v3335, 2
        %vm3337 = vcmp.eq.s32.totalorder %v3335, 0
        %v3338 = vxor.u32 %v3332, 2147483648
        %v3339 = vsel %vm3337, %v3324, %v3338
        %vm3340 = vcmp.eq.s32.totalorder %v3335, 2
        %v3341 = vxor.u32 %v3324, 2147483648
        %v3342 = vsel %vm3340, %v3341, %v3332
        %v3343 = vsel %vm3336, %v3339, %v3342
        %v3344 = vsel %vm3333, nan, %v3343
        %v3345 = vand.u32 2147483647, %v979
        %vm3346 = vcmp.le.f32.partialorder %v3345, 0.7853982
        %vm3347 = vcmp.lt.s32.totalorder %v979, 0
        %v3348 = vand.u32 %v979, 2139095040
        %v3349 = vshrl.u32 %v3348, 23
        %v3350 = vsub.s32 %v3349, 127
        %v3351 = vand.u32 2147483647, %v979
        %v3352 = vand.u32 %v3351, 8388607
        %v3353 = vor.u32 %v3352, 8388608
        %v3354 = vsub.s32 0, %v3353
        %v3355 = vadd.s32 %v3350, 1
        %vm3356 = vcmp.gt.s32.totalorder %v3355, 0
        %v3357 = vsel %vm3356, %v3355, 0
        %v3358 = vshrl.u32 %v3357, 5
        %v3359 = vand.u32 %v3357, 31
        %v3360 = vsub.s32 32, %v3359
        %v3361 = vshrl.u32 683565275, %v3360
        %v3362 = vshll.u32 683565275, %v3359
        %v3363 = vshrl.u32 2475754826, %v3360
        %v3364 = vor.u32 %v3362, %v3363
        %v3365 = vshll.u32 2475754826, %v3359
        %v3366 = vshrl.u32 2131351028, %v3360
        %v3367 = vor.u32 %v3365, %v3366
        %v3368 = vshll.u32 2131351028, %v3359
        %v3369 = vshrl.u32 2102212464, %v3360
        %v3370 = vor.u32 %v3368, %v3369
        %v3371 = vshll.u32 2102212464, %v3359
        %v3372 = vshrl.u32 920167782, %v3360
        %v3373 = vor.u32 %v3371, %v3372
        %v3374 = vshll.u32 920167782, %v3359
        %v3375 = vshrl.u32 1326507024, %v3360
        %v3376 = vor.u32 %v3374, %v3375
        %vm3377 = vcmp.lt.s32.totalorder %v3358, 1
        %vm3378 = vcmp.lt.s32.totalorder %v3358, 2
        %vm3379 = vcmp.lt.s32.totalorder %v3358, 3
        %vm3380 = vcmp.lt.s32.totalorder %v3358, 4
        %v3381 = vsel %vm3377, %v3361, %v3364
        %v3382 = vsel %vm3380, %v3370, 2102212464
        %v3383 = vsel %vm3379, %v3367, %v3382
        %v3384 = vsel %vm3378, %v3381, %v3383
        %v3385 = vsel %vm3377, %v3364, %v3367
        %v3386 = vsel %vm3380, %v3373, 920167782
        %v3387 = vsel %vm3379, %v3370, %v3386
        %v3388 = vsel %vm3378, %v3385, %v3387
        %v3389 = vsel %vm3377, %v3367, %v3370
        %v3390 = vsel %vm3380, %v3376, 1326507024
        %v3391 = vsel %vm3379, %v3373, %v3390
        %v3392 = vsel %vm3378, %v3389, %v3391
        %v3393 = vshll.u32 %v3353, 8
        %v3394 = vand.u32 %v3393, 65535
        %v3395 = vshrl.u32 %v3393, 16
        %v3396 = vand.u32 %v3392, 65535
        %v3397 = vshrl.u32 %v3392, 16
        %v3398 = vmul.u32 %v3394, %v3396
        %v3399 = vmul.u32 %v3394, %v3397
        %v3400 = vmul.u32 %v3395, %v3396
        %v3401 = vmul.u32 %v3395, %v3397
        %v3402 = vshll.u32 %v3399, 16
        %v3403 = vshrl.u32 %v3399, 16
        %v3404 = vshll.u32 %v3400, 16
        %v3405 = vshrl.u32 %v3400, 16
        %vm3406 = vc.u32 %v3398, %v3402
        %v3407 = vsel %vm3406, 1, 0
        %v3408 = vadd.s32 %v3398, %v3402
        %v3409 = vadd.s32 %v3401, %v3407
        %vm3410 = vc.u32 %v3408, %v3404
        %v3411 = vsel %vm3410, 1, 0
        %v3412 = vadd.s32 %v3408, %v3404
        %v3413 = vadd.s32 %v3409, %v3411
        %v3414 = vadd.s32 %v3413, %v3403
        %v3415 = vadd.s32 %v3414, %v3405
        %v3416 = vand.u32 %v3393, 65535
        %v3417 = vshrl.u32 %v3393, 16
        %v3418 = vand.u32 %v3388, 65535
        %v3419 = vshrl.u32 %v3388, 16
        %v3420 = vmul.u32 %v3416, %v3418
        %v3421 = vmul.u32 %v3416, %v3419
        %v3422 = vmul.u32 %v3417, %v3418
        %v3423 = vmul.u32 %v3417, %v3419
        %v3424 = vshll.u32 %v3421, 16
        %v3425 = vshrl.u32 %v3421, 16
        %v3426 = vshll.u32 %v3422, 16
        %v3427 = vshrl.u32 %v3422, 16
        %vm3428 = vc.u32 %v3420, %v3424
        %v3429 = vsel %vm3428, 1, 0
        %v3430 = vadd.s32 %v3420, %v3424
        %v3431 = vadd.s32 %v3423, %v3429
        %vm3432 = vc.u32 %v3430, %v3426
        %v3433 = vsel %vm3432, 1, 0
        %v3434 = vadd.s32 %v3430, %v3426
        %v3435 = vadd.s32 %v3431, %v3433
        %v3436 = vadd.s32 %v3435, %v3425
        %v3437 = vadd.s32 %v3436, %v3427
        %v3438 = vmul.u32 %v3393, %v3384
        %v3439 = vadd.s32 %v3415, %v3434
        %vm3440 = vc.u32 %v3415, %v3434
        %v3441 = vadd.s32 %v3437, 1
        %v3442 = vsel %vm3440, %v3441, %v3437
        %v3443 = vadd.s32 %v3438, %v3442
        %v3444 = vadd.s32 %v3443, 536870912
        %v3445 = vshrl.u32 %v3444, 30
        %v3446 = vshll.u32 %v3445, 30
        %v3447 = vsub.s32 %v3443, %v3446
        %vm3448 = vcmp.lt.s32.totalorder %v3447, 0
        %v3449 = vsub.s32 0, %v3447
        %v3450 = vsel %vm3448, %v3449, %v3447
        %v3451 = vclz %v3450
        %v3452 = vsub.s32 %v3451, 2
        %vm3453 = vcmp.gt.s32.totalorder 0, %v3452
        %v3454 = vsel %vm3453, 0, %v3452
        %v3455 = vsub.s32 32, %v3454
        %v3456 = vshll.u32 %v3447, %v3454
        %v3457 = vshrl.u32 %v3439, %v3455
        %v3458 = vor.u32 %v3456, %v3457
        %v3459 = vsub.s32 4294967266, %v3454
        %v3460 = vadd.s32 %v3459, 127
        %v3461 = vshll.u32 %v3460, 23
        %v3462 = vor.u32 4788187, %v3461
        %v3463 = vand.u32 2147483647, %v3462
        %v3465 = vcvt.s32.f32 %v3458
        %v3466 = vmul.f32 %v3465, %v3463
        %v3467 = vxor.u32 %v3466, 2147483648
        %v3468 = vsel %vm3347, %v3467, %v3466
        %v3469 = vsub.s32 4, %v3445
        %v3470 = vsel %vm3347, %v3469, %v3445
        %v3471 = vsel %vm3346, %v979, %v3468
        %v3472 = vsel %vm3346, 0, %v3470
        %v3473 = vmul.f32 %v3471, %v3471
        %v3474 = vmul.f32 %v3473, -0.001358992
        %v3475 = vadd.f32 %v3474, 0.041655596
        %v3476 = vmul.f32 %v3473, %v3475
        %v3477 = vadd.f32 %v3476, -0.4999988
        %v3478 = vmul.f32 %v3473, %v3477
        %v3479 = vadd.f32 1.0, %v3478
        %v3480 = vmul.f32 %v3471, %v3471
        %v3481 = vmul.f32 %v3480, -0.00019511016
        %v3482 = vadd.f32 %v3481, 0.008332121
        %v3483 = vmul.f32 %v3480, %v3482
        %v3484 = vadd.f32 %v3483, -0.16666654
        %v3485 = vmul.f32 %v3480, %v3484
        %v3486 = vadd.f32 %v3485, 1.0
        %v3487 = vmul.f32 %v3486, %v3471
        %vm3488 = vweird.f32 %v979
        %v3489 = vadd.s32 %v3472, 3
        %v3490 = vand.u32 %v3489, 3
        %vm3491 = vcmp.lt.s32.totalorder %v3490, 2
        %vm3492 = vcmp.eq.s32.totalorder %v3490, 0
        %v3493 = vxor.u32 %v3487, 2147483648
        %v3494 = vsel %vm3492, %v3479, %v3493
        %vm3495 = vcmp.eq.s32.totalorder %v3490, 2
        %v3496 = vxor.u32 %v3479, 2147483648
        %v3497 = vsel %vm3495, %v3496, %v3487
        %v3498 = vsel %vm3491, %v3494, %v3497
        %v3499 = vsel %vm3488, nan, %v3498
        %v3500 = vand.u32 2147483647, %v980
        %vm3501 = vcmp.le.f32.partialorder %v3500, 0.7853982
        %vm3502 = vcmp.lt.s32.totalorder %v980, 0
        %v3503 = vand.u32 %v980, 2139095040
        %v3504 = vshrl.u32 %v3503, 23
        %v3505 = vsub.s32 %v3504, 127
        %v3506 = vand.u32 2147483647, %v980
        %v3507 = vand.u32 %v3506, 8388607
        %v3508 = vor.u32 %v3507, 8388608
        %v3509 = vsub.s32 0, %v3508
        %v3510 = vadd.s32 %v3505, 1
        %vm3511 = vcmp.gt.s32.totalorder %v3510, 0
        %v3512 = vsel %vm3511, %v3510, 0
        %v3513 = vshrl.u32 %v3512, 5
        %v3514 = vand.u32 %v3512, 31
        %v3515 = vsub.s32 32, %v3514
        %v3516 = vshrl.u32 683565275, %v3515
        %v3517 = vshll.u32 683565275, %v3514
        %v3518 = vshrl.u32 2475754826, %v3515
        %v3519 = vor.u32 %v3517, %v3518
        %v3520 = vshll.u32 2475754826, %v3514
        %v3521 = vshrl.u32 2131351028, %v3515
        %v3522 = vor.u32 %v3520, %v3521
        %v3523 = vshll.u32 2131351028, %v3514
        %v3524 = vshrl.u32 2102212464, %v3515
        %v3525 = vor.u32 %v3523, %v3524
        %v3526 = vshll.u32 2102212464, %v3514
        %v3527 = vshrl.u32 920167782, %v3515
        %v3528 = vor.u32 %v3526, %v3527
        %v3529 = vshll.u32 920167782, %v3514
        %v3530 = vshrl.u32 1326507024, %v3515
        %v3531 = vor.u32 %v3529, %v3530
        %vm3532 = vcmp.lt.s32.totalorder %v3513, 1
        %vm3533 = vcmp.lt.s32.totalorder %v3513, 2
        %vm3534 = vcmp.lt.s32.totalorder %v3513, 3
        %vm3535 = vcmp.lt.s32.totalorder %v3513, 4
        %v3536 = vsel %vm3532, %v3516, %v3519
        %v3537 = vsel %vm3535, %v3525, 2102212464
        %v3538 = vsel %vm3534, %v3522, %v3537
        %v3539 = vsel %vm3533, %v3536, %v3538
        %v3540 = vsel %vm3532, %v3519, %v3522
        %v3541 = vsel %vm3535, %v3528, 920167782
        %v3542 = vsel %vm3534, %v3525, %v3541
        %v3543 = vsel %vm3533, %v3540, %v3542
        %v3544 = vsel %vm3532, %v3522, %v3525
        %v3545 = vsel %vm3535, %v3531, 1326507024
        %v3546 = vsel %vm3534, %v3528, %v3545
        %v3547 = vsel %vm3533, %v3544, %v3546
        %v3548 = vshll.u32 %v3508, 8
        %v3549 = vand.u32 %v3548, 65535
        %v3550 = vshrl.u32 %v3548, 16
        %v3551 = vand.u32 %v3547, 65535
        %v3552 = vshrl.u32 %v3547, 16
        %v3553 = vmul.u32 %v3549, %v3551
        %v3554 = vmul.u32 %v3549, %v3552
        %v3555 = vmul.u32 %v3550, %v3551
        %v3556 = vmul.u32 %v3550, %v3552
        %v3557 = vshll.u32 %v3554, 16
        %v3558 = vshrl.u32 %v3554, 16
        %v3559 = vshll.u32 %v3555, 16
        %v3560 = vshrl.u32 %v3555, 16
        %vm3561 = vc.u32 %v3553, %v3557
        %v3562 = vsel %vm3561, 1, 0
        %v3563 = vadd.s32 %v3553, %v3557
        %v3564 = vadd.s32 %v3556, %v3562
        %vm3565 = vc.u32 %v3563, %v3559
        %v3566 = vsel %vm3565, 1, 0
        %v3567 = vadd.s32 %v3563, %v3559
        %v3568 = vadd.s32 %v3564, %v3566
        %v3569 = vadd.s32 %v3568, %v3558
        %v3570 = vadd.s32 %v3569, %v3560
        %v3571 = vand.u32 %v3548, 65535
        %v3572 = vshrl.u32 %v3548, 16
        %v3573 = vand.u32 %v3543, 65535
        %v3574 = vshrl.u32 %v3543, 16
        %v3575 = vmul.u32 %v3571, %v3573
        %v3576 = vmul.u32 %v3571, %v3574
        %v3577 = vmul.u32 %v3572, %v3573
        %v3578 = vmul.u32 %v3572, %v3574
        %v3579 = vshll.u32 %v3576, 16
        %v3580 = vshrl.u32 %v3576, 16
        %v3581 = vshll.u32 %v3577, 16
        %v3582 = vshrl.u32 %v3577, 16
        %vm3583 = vc.u32 %v3575, %v3579
        %v3584 = vsel %vm3583, 1, 0
        %v3585 = vadd.s32 %v3575, %v3579
        %v3586 = vadd.s32 %v3578, %v3584
        %vm3587 = vc.u32 %v3585, %v3581
        %v3588 = vsel %vm3587, 1, 0
        %v3589 = vadd.s32 %v3585, %v3581
        %v3590 = vadd.s32 %v3586, %v3588
        %v3591 = vadd.s32 %v3590, %v3580
        %v3592 = vadd.s32 %v3591, %v3582
        %v3593 = vmul.u32 %v3548, %v3539
        %v3594 = vadd.s32 %v3570, %v3589
        %vm3595 = vc.u32 %v3570, %v3589
        %v3596 = vadd.s32 %v3592, 1
        %v3597 = vsel %vm3595, %v3596, %v3592
        %v3598 = vadd.s32 %v3593, %v3597
        %v3599 = vadd.s32 %v3598, 536870912
        %v3600 = vshrl.u32 %v3599, 30
        %v3601 = vshll.u32 %v3600, 30
        %v3602 = vsub.s32 %v3598, %v3601
        %vm3603 = vcmp.lt.s32.totalorder %v3602, 0
        %v3604 = vsub.s32 0, %v3602
        %v3605 = vsel %vm3603, %v3604, %v3602
        %v3606 = vclz %v3605
        %v3607 = vsub.s32 %v3606, 2
        %vm3608 = vcmp.gt.s32.totalorder 0, %v3607
        %v3609 = vsel %vm3608, 0, %v3607
        %v3610 = vsub.s32 32, %v3609
        %v3611 = vshll.u32 %v3602, %v3609
        %v3612 = vshrl.u32 %v3594, %v3610
        %v3613 = vor.u32 %v3611, %v3612
        %v3614 = vsub.s32 4294967266, %v3609
        %v3615 = vadd.s32 %v3614, 127
        %v3616 = vshll.u32 %v3615, 23
        %v3617 = vor.u32 4788187, %v3616
        %v3618 = vand.u32 2147483647, %v3617
        %v3620 = vcvt.s32.f32 %v3613
        %v3621 = vmul.f32 %v3620, %v3618
        %v3622 = vxor.u32 %v3621, 2147483648
        %v3623 = vsel %vm3502, %v3622, %v3621
        %v3624 = vsub.s32 4, %v3600
        %v3625 = vsel %vm3502, %v3624, %v3600
        %v3626 = vsel %vm3501, %v980, %v3623
        %v3627 = vsel %vm3501, 0, %v3625
        %v3628 = vmul.f32 %v3626, %v3626
        %v3629 = vmul.f32 %v3628, -0.001358992
        %v3630 = vadd.f32 %v3629, 0.041655596
        %v3631 = vmul.f32 %v3628, %v3630
        %v3632 = vadd.f32 %v3631, -0.4999988
        %v3633 = vmul.f32 %v3628, %v3632
        %v3634 = vadd.f32 1.0, %v3633
        %v3635 = vmul.f32 %v3626, %v3626
        %v3636 = vmul.f32 %v3635, -0.00019511016
        %v3637 = vadd.f32 %v3636, 0.008332121
        %v3638 = vmul.f32 %v3635, %v3637
        %v3639 = vadd.f32 %v3638, -0.16666654
        %v3640 = vmul.f32 %v3635, %v3639
        %v3641 = vadd.f32 %v3640, 1.0
        %v3642 = vmul.f32 %v3641, %v3626
        %vm3643 = vweird.f32 %v980
        %v3644 = vadd.s32 %v3627, 3
        %v3645 = vand.u32 %v3644, 3
        %vm3646 = vcmp.lt.s32.totalorder %v3645, 2
        %vm3647 = vcmp.eq.s32.totalorder %v3645, 0
        %v3648 = vxor.u32 %v3642, 2147483648
        %v3649 = vsel %vm3647, %v3634, %v3648
        %vm3650 = vcmp.eq.s32.totalorder %v3645, 2
        %v3651 = vxor.u32 %v3634, 2147483648
        %v3652 = vsel %vm3650, %v3651, %v3642
        %v3653 = vsel %vm3646, %v3649, %v3652
        %v3654 = vsel %vm3643, nan, %v3653
        %v3655 = vand.u32 2147483647, %v981
        %vm3656 = vcmp.le.f32.partialorder %v3655, 0.7853982
        %vm3657 = vcmp.lt.s32.totalorder %v981, 0
        %v3658 = vand.u32 %v981, 2139095040
        %v3659 = vshrl.u32 %v3658, 23
        %v3660 = vsub.s32 %v3659, 127
        %v3661 = vand.u32 2147483647, %v981
        %v3662 = vand.u32 %v3661, 8388607
        %v3663 = vor.u32 %v3662, 8388608
        %v3664 = vsub.s32 0, %v3663
        %v3665 = vadd.s32 %v3660, 1
        %vm3666 = vcmp.gt.s32.totalorder %v3665, 0
        %v3667 = vsel %vm3666, %v3665, 0
        %v3668 = vshrl.u32 %v3667, 5
        %v3669 = vand.u32 %v3667, 31
        %v3670 = vsub.s32 32, %v3669
        %v3671 = vshrl.u32 683565275, %v3670
        %v3672 = vshll.u32 683565275, %v3669
        %v3673 = vshrl.u32 2475754826, %v3670
        %v3674 = vor.u32 %v3672, %v3673
        %v3675 = vshll.u32 2475754826, %v3669
        %v3676 = vshrl.u32 2131351028, %v3670
        %v3677 = vor.u32 %v3675, %v3676
        %v3678 = vshll.u32 2131351028, %v3669
        %v3679 = vshrl.u32 2102212464, %v3670
        %v3680 = vor.u32 %v3678, %v3679
        %v3681 = vshll.u32 2102212464, %v3669
        %v3682 = vshrl.u32 920167782, %v3670
        %v3683 = vor.u32 %v3681, %v3682
        %v3684 = vshll.u32 920167782, %v3669
        %v3685 = vshrl.u32 1326507024, %v3670
        %v3686 = vor.u32 %v3684, %v3685
        %vm3687 = vcmp.lt.s32.totalorder %v3668, 1
        %vm3688 = vcmp.lt.s32.totalorder %v3668, 2
        %vm3689 = vcmp.lt.s32.totalorder %v3668, 3
        %vm3690 = vcmp.lt.s32.totalorder %v3668, 4
        %v3691 = vsel %vm3687, %v3671, %v3674
        %v3692 = vsel %vm3690, %v3680, 2102212464
        %v3693 = vsel %vm3689, %v3677, %v3692
        %v3694 = vsel %vm3688, %v3691, %v3693
        %v3695 = vsel %vm3687, %v3674, %v3677
        %v3696 = vsel %vm3690, %v3683, 920167782
        %v3697 = vsel %vm3689, %v3680, %v3696
        %v3698 = vsel %vm3688, %v3695, %v3697
        %v3699 = vsel %vm3687, %v3677, %v3680
        %v3700 = vsel %vm3690, %v3686, 1326507024
        %v3701 = vsel %vm3689, %v3683, %v3700
        %v3702 = vsel %vm3688, %v3699, %v3701
        %v3703 = vshll.u32 %v3663, 8
        %v3704 = vand.u32 %v3703, 65535
        %v3705 = vshrl.u32 %v3703, 16
        %v3706 = vand.u32 %v3702, 65535
        %v3707 = vshrl.u32 %v3702, 16
        %v3708 = vmul.u32 %v3704, %v3706
        %v3709 = vmul.u32 %v3704, %v3707
        %v3710 = vmul.u32 %v3705, %v3706
        %v3711 = vmul.u32 %v3705, %v3707
        %v3712 = vshll.u32 %v3709, 16
        %v3713 = vshrl.u32 %v3709, 16
        %v3714 = vshll.u32 %v3710, 16
        %v3715 = vshrl.u32 %v3710, 16
        %vm3716 = vc.u32 %v3708, %v3712
        %v3717 = vsel %vm3716, 1, 0
        %v3718 = vadd.s32 %v3708, %v3712
        %v3719 = vadd.s32 %v3711, %v3717
        %vm3720 = vc.u32 %v3718, %v3714
        %v3721 = vsel %vm3720, 1, 0
        %v3722 = vadd.s32 %v3718, %v3714
        %v3723 = vadd.s32 %v3719, %v3721
        %v3724 = vadd.s32 %v3723, %v3713
        %v3725 = vadd.s32 %v3724, %v3715
        %v3726 = vand.u32 %v3703, 65535
        %v3727 = vshrl.u32 %v3703, 16
        %v3728 = vand.u32 %v3698, 65535
        %v3729 = vshrl.u32 %v3698, 16
        %v3730 = vmul.u32 %v3726, %v3728
        %v3731 = vmul.u32 %v3726, %v3729
        %v3732 = vmul.u32 %v3727, %v3728
        %v3733 = vmul.u32 %v3727, %v3729
        %v3734 = vshll.u32 %v3731, 16
        %v3735 = vshrl.u32 %v3731, 16
        %v3736 = vshll.u32 %v3732, 16
        %v3737 = vshrl.u32 %v3732, 16
        %vm3738 = vc.u32 %v3730, %v3734
        %v3739 = vsel %vm3738, 1, 0
        %v3740 = vadd.s32 %v3730, %v3734
        %v3741 = vadd.s32 %v3733, %v3739
        %vm3742 = vc.u32 %v3740, %v3736
        %v3743 = vsel %vm3742, 1, 0
        %v3744 = vadd.s32 %v3740, %v3736
        %v3745 = vadd.s32 %v3741, %v3743
        %v3746 = vadd.s32 %v3745, %v3735
        %v3747 = vadd.s32 %v3746, %v3737
        %v3748 = vmul.u32 %v3703, %v3694
        %v3749 = vadd.s32 %v3725, %v3744
        %vm3750 = vc.u32 %v3725, %v3744
        %v3751 = vadd.s32 %v3747, 1
        %v3752 = vsel %vm3750, %v3751, %v3747
        %v3753 = vadd.s32 %v3748, %v3752
        %v3754 = vadd.s32 %v3753, 536870912
        %v3755 = vshrl.u32 %v3754, 30
        %v3756 = vshll.u32 %v3755, 30
        %v3757 = vsub.s32 %v3753, %v3756
        %vm3758 = vcmp.lt.s32.totalorder %v3757, 0
        %v3759 = vsub.s32 0, %v3757
        %v3760 = vsel %vm3758, %v3759, %v3757
        %v3761 = vclz %v3760
        %v3762 = vsub.s32 %v3761, 2
        %vm3763 = vcmp.gt.s32.totalorder 0, %v3762
        %v3764 = vsel %vm3763, 0, %v3762
        %v3765 = vsub.s32 32, %v3764
        %v3766 = vshll.u32 %v3757, %v3764
        %v3767 = vshrl.u32 %v3749, %v3765
        %v3768 = vor.u32 %v3766, %v3767
        %v3769 = vsub.s32 4294967266, %v3764
        %v3770 = vadd.s32 %v3769, 127
        %v3771 = vshll.u32 %v3770, 23
        %v3772 = vor.u32 4788187, %v3771
        %v3773 = vand.u32 2147483647, %v3772
        %v3775 = vcvt.s32.f32 %v3768
        %v3776 = vmul.f32 %v3775, %v3773
        %v3777 = vxor.u32 %v3776, 2147483648
        %v3778 = vsel %vm3657, %v3777, %v3776
        %v3779 = vsub.s32 4, %v3755
        %v3780 = vsel %vm3657, %v3779, %v3755
        %v3781 = vsel %vm3656, %v981, %v3778
        %v3782 = vsel %vm3656, 0, %v3780
        %v3783 = vmul.f32 %v3781, %v3781
        %v3784 = vmul.f32 %v3783, -0.001358992
        %v3785 = vadd.f32 %v3784, 0.041655596
        %v3786 = vmul.f32 %v3783, %v3785
        %v3787 = vadd.f32 %v3786, -0.4999988
        %v3788 = vmul.f32 %v3783, %v3787
        %v3789 = vadd.f32 1.0, %v3788
        %v3790 = vmul.f32 %v3781, %v3781
        %v3791 = vmul.f32 %v3790, -0.00019511016
        %v3792 = vadd.f32 %v3791, 0.008332121
        %v3793 = vmul.f32 %v3790, %v3792
        %v3794 = vadd.f32 %v3793, -0.16666654
        %v3795 = vmul.f32 %v3790, %v3794
        %v3796 = vadd.f32 %v3795, 1.0
        %v3797 = vmul.f32 %v3796, %v3781
        %vm3798 = vweird.f32 %v981
        %v3799 = vadd.s32 %v3782, 3
        %v3800 = vand.u32 %v3799, 3
        %vm3801 = vcmp.lt.s32.totalorder %v3800, 2
        %vm3802 = vcmp.eq.s32.totalorder %v3800, 0
        %v3803 = vxor.u32 %v3797, 2147483648
        %v3804 = vsel %vm3802, %v3789, %v3803
        %vm3805 = vcmp.eq.s32.totalorder %v3800, 2
        %v3806 = vxor.u32 %v3789, 2147483648
        %v3807 = vsel %vm3805, %v3806, %v3797
        %v3808 = vsel %vm3801, %v3804, %v3807
        %v3809 = vsel %vm3798, nan, %v3808
        %v3810 = vand.u32 2147483647, %v982
        %vm3811 = vcmp.le.f32.partialorder %v3810, 0.7853982
        %vm3812 = vcmp.lt.s32.totalorder %v982, 0
        %v3813 = vand.u32 %v982, 2139095040
        %v3814 = vshrl.u32 %v3813, 23
        %v3815 = vsub.s32 %v3814, 127
        %v3816 = vand.u32 2147483647, %v982
        %v3817 = vand.u32 %v3816, 8388607
        %v3818 = vor.u32 %v3817, 8388608
        %v3819 = vsub.s32 0, %v3818
        %v3820 = vadd.s32 %v3815, 1
        %vm3821 = vcmp.gt.s32.totalorder %v3820, 0
        %v3822 = vsel %vm3821, %v3820, 0
        %v3823 = vshrl.u32 %v3822, 5
        %v3824 = vand.u32 %v3822, 31
        %v3825 = vsub.s32 32, %v3824
        %v3826 = vshrl.u32 683565275, %v3825
        %v3827 = vshll.u32 683565275, %v3824
        %v3828 = vshrl.u32 2475754826, %v3825
        %v3829 = vor.u32 %v3827, %v3828
        %v3830 = vshll.u32 2475754826, %v3824
        %v3831 = vshrl.u32 2131351028, %v3825
        %v3832 = vor.u32 %v3830, %v3831
        %v3833 = vshll.u32 2131351028, %v3824
        %v3834 = vshrl.u32 2102212464, %v3825
        %v3835 = vor.u32 %v3833, %v3834
        %v3836 = vshll.u32 2102212464, %v3824
        %v3837 = vshrl.u32 920167782, %v3825
        %v3838 = vor.u32 %v3836, %v3837
        %v3839 = vshll.u32 920167782, %v3824
        %v3840 = vshrl.u32 1326507024, %v3825
        %v3841 = vor.u32 %v3839, %v3840
        %vm3842 = vcmp.lt.s32.totalorder %v3823, 1
        %vm3843 = vcmp.lt.s32.totalorder %v3823, 2
        %vm3844 = vcmp.lt.s32.totalorder %v3823, 3
        %vm3845 = vcmp.lt.s32.totalorder %v3823, 4
        %v3846 = vsel %vm3842, %v3826, %v3829
        %v3847 = vsel %vm3845, %v3835, 2102212464
        %v3848 = vsel %vm3844, %v3832, %v3847
        %v3849 = vsel %vm3843, %v3846, %v3848
        %v3850 = vsel %vm3842, %v3829, %v3832
        %v3851 = vsel %vm3845, %v3838, 920167782
        %v3852 = vsel %vm3844, %v3835, %v3851
        %v3853 = vsel %vm3843, %v3850, %v3852
        %v3854 = vsel %vm3842, %v3832, %v3835
        %v3855 = vsel %vm3845, %v3841, 1326507024
        %v3856 = vsel %vm3844, %v3838, %v3855
        %v3857 = vsel %vm3843, %v3854, %v3856
        %v3858 = vshll.u32 %v3818, 8
        %v3859 = vand.u32 %v3858, 65535
        %v3860 = vshrl.u32 %v3858, 16
        %v3861 = vand.u32 %v3857, 65535
        %v3862 = vshrl.u32 %v3857, 16
        %v3863 = vmul.u32 %v3859, %v3861
        %v3864 = vmul.u32 %v3859, %v3862
        %v3865 = vmul.u32 %v3860, %v3861
        %v3866 = vmul.u32 %v3860, %v3862
        %v3867 = vshll.u32 %v3864, 16
        %v3868 = vshrl.u32 %v3864, 16
        %v3869 = vshll.u32 %v3865, 16
        %v3870 = vshrl.u32 %v3865, 16
        %vm3871 = vc.u32 %v3863, %v3867
        %v3872 = vsel %vm3871, 1, 0
        %v3873 = vadd.s32 %v3863, %v3867
        %v3874 = vadd.s32 %v3866, %v3872
        %vm3875 = vc.u32 %v3873, %v3869
        %v3876 = vsel %vm3875, 1, 0
        %v3877 = vadd.s32 %v3873, %v3869
        %v3878 = vadd.s32 %v3874, %v3876
        %v3879 = vadd.s32 %v3878, %v3868
        %v3880 = vadd.s32 %v3879, %v3870
        %v3881 = vand.u32 %v3858, 65535
        %v3882 = vshrl.u32 %v3858, 16
        %v3883 = vand.u32 %v3853, 65535
        %v3884 = vshrl.u32 %v3853, 16
        %v3885 = vmul.u32 %v3881, %v3883
        %v3886 = vmul.u32 %v3881, %v3884
        %v3887 = vmul.u32 %v3882, %v3883
        %v3888 = vmul.u32 %v3882, %v3884
        %v3889 = vshll.u32 %v3886, 16
        %v3890 = vshrl.u32 %v3886, 16
        %v3891 = vshll.u32 %v3887, 16
        %v3892 = vshrl.u32 %v3887, 16
        %vm3893 = vc.u32 %v3885, %v3889
        %v3894 = vsel %vm3893, 1, 0
        %v3895 = vadd.s32 %v3885, %v3889
        %v3896 = vadd.s32 %v3888, %v3894
        %vm3897 = vc.u32 %v3895, %v3891
        %v3898 = vsel %vm3897, 1, 0
        %v3899 = vadd.s32 %v3895, %v3891
        %v3900 = vadd.s32 %v3896, %v3898
        %v3901 = vadd.s32 %v3900, %v3890
        %v3902 = vadd.s32 %v3901, %v3892
        %v3903 = vmul.u32 %v3858, %v3849
        %v3904 = vadd.s32 %v3880, %v3899
        %vm3905 = vc.u32 %v3880, %v3899
        %v3906 = vadd.s32 %v3902, 1
        %v3907 = vsel %vm3905, %v3906, %v3902
        %v3908 = vadd.s32 %v3903, %v3907
        %v3909 = vadd.s32 %v3908, 536870912
        %v3910 = vshrl.u32 %v3909, 30
        %v3911 = vshll.u32 %v3910, 30
        %v3912 = vsub.s32 %v3908, %v3911
        %vm3913 = vcmp.lt.s32.totalorder %v3912, 0
        %v3914 = vsub.s32 0, %v3912
        %v3915 = vsel %vm3913, %v3914, %v3912
        %v3916 = vclz %v3915
        %v3917 = vsub.s32 %v3916, 2
        %vm3918 = vcmp.gt.s32.totalorder 0, %v3917
        %v3919 = vsel %vm3918, 0, %v3917
        %v3920 = vsub.s32 32, %v3919
        %v3921 = vshll.u32 %v3912, %v3919
        %v3922 = vshrl.u32 %v3904, %v3920
        %v3923 = vor.u32 %v3921, %v3922
        %v3924 = vsub.s32 4294967266, %v3919
        %v3925 = vadd.s32 %v3924, 127
        %v3926 = vshll.u32 %v3925, 23
        %v3927 = vor.u32 4788187, %v3926
        %v3928 = vand.u32 2147483647, %v3927
        %v3930 = vcvt.s32.f32 %v3923
        %v3931 = vmul.f32 %v3930, %v3928
        %v3932 = vxor.u32 %v3931, 2147483648
        %v3933 = vsel %vm3812, %v3932, %v3931
        %v3934 = vsub.s32 4, %v3910
        %v3935 = vsel %vm3812, %v3934, %v3910
        %v3936 = vsel %vm3811, %v982, %v3933
        %v3937 = vsel %vm3811, 0, %v3935
        %v3938 = vmul.f32 %v3936, %v3936
        %v3939 = vmul.f32 %v3938, -0.001358992
        %v3940 = vadd.f32 %v3939, 0.041655596
        %v3941 = vmul.f32 %v3938, %v3940
        %v3942 = vadd.f32 %v3941, -0.4999988
        %v3943 = vmul.f32 %v3938, %v3942
        %v3944 = vadd.f32 1.0, %v3943
        %v3945 = vmul.f32 %v3936, %v3936
        %v3946 = vmul.f32 %v3945, -0.00019511016
        %v3947 = vadd.f32 %v3946, 0.008332121
        %v3948 = vmul.f32 %v3945, %v3947
        %v3949 = vadd.f32 %v3948, -0.16666654
        %v3950 = vmul.f32 %v3945, %v3949
        %v3951 = vadd.f32 %v3950, 1.0
        %v3952 = vmul.f32 %v3951, %v3936
        %vm3953 = vweird.f32 %v982
        %v3954 = vadd.s32 %v3937, 3
        %v3955 = vand.u32 %v3954, 3
        %vm3956 = vcmp.lt.s32.totalorder %v3955, 2
        %vm3957 = vcmp.eq.s32.totalorder %v3955, 0
        %v3958 = vxor.u32 %v3952, 2147483648
        %v3959 = vsel %vm3957, %v3944, %v3958
        %vm3960 = vcmp.eq.s32.totalorder %v3955, 2
        %v3961 = vxor.u32 %v3944, 2147483648
        %v3962 = vsel %vm3960, %v3961, %v3952
        %v3963 = vsel %vm3956, %v3959, %v3962
        %v3964 = vsel %vm3953, nan, %v3963
        %v3965 = vand.u32 2147483647, %v983
        %vm3966 = vcmp.le.f32.partialorder %v3965, 0.7853982
        %vm3967 = vcmp.lt.s32.totalorder %v983, 0
        %v3968 = vand.u32 %v983, 2139095040
        %v3969 = vshrl.u32 %v3968, 23
        %v3970 = vsub.s32 %v3969, 127
        %v3971 = vand.u32 2147483647, %v983
        %v3972 = vand.u32 %v3971, 8388607
        %v3973 = vor.u32 %v3972, 8388608
        %v3974 = vsub.s32 0, %v3973
        %v3975 = vadd.s32 %v3970, 1
        %vm3976 = vcmp.gt.s32.totalorder %v3975, 0
        %v3977 = vsel %vm3976, %v3975, 0
        %v3978 = vshrl.u32 %v3977, 5
        %v3979 = vand.u32 %v3977, 31
        %v3980 = vsub.s32 32, %v3979
        %v3981 = vshrl.u32 683565275, %v3980
        %v3982 = vshll.u32 683565275, %v3979
        %v3983 = vshrl.u32 2475754826, %v3980
        %v3984 = vor.u32 %v3982, %v3983
        %v3985 = vshll.u32 2475754826, %v3979
        %v3986 = vshrl.u32 2131351028, %v3980
        %v3987 = vor.u32 %v3985, %v3986
        %v3988 = vshll.u32 2131351028, %v3979
        %v3989 = vshrl.u32 2102212464, %v3980
        %v3990 = vor.u32 %v3988, %v3989
        %v3991 = vshll.u32 2102212464, %v3979
        %v3992 = vshrl.u32 920167782, %v3980
        %v3993 = vor.u32 %v3991, %v3992
        %v3994 = vshll.u32 920167782, %v3979
        %v3995 = vshrl.u32 1326507024, %v3980
        %v3996 = vor.u32 %v3994, %v3995
        %vm3997 = vcmp.lt.s32.totalorder %v3978, 1
        %vm3998 = vcmp.lt.s32.totalorder %v3978, 2
        %vm3999 = vcmp.lt.s32.totalorder %v3978, 3
        %vm4000 = vcmp.lt.s32.totalorder %v3978, 4
        %v4001 = vsel %vm3997, %v3981, %v3984
        %v4002 = vsel %vm4000, %v3990, 2102212464
        %v4003 = vsel %vm3999, %v3987, %v4002
        %v4004 = vsel %vm3998, %v4001, %v4003
        %v4005 = vsel %vm3997, %v3984, %v3987
        %v4006 = vsel %vm4000, %v3993, 920167782
        %v4007 = vsel %vm3999, %v3990, %v4006
        %v4008 = vsel %vm3998, %v4005, %v4007
        %v4009 = vsel %vm3997, %v3987, %v3990
        %v4010 = vsel %vm4000, %v3996, 1326507024
        %v4011 = vsel %vm3999, %v3993, %v4010
        %v4012 = vsel %vm3998, %v4009, %v4011
        %v4013 = vshll.u32 %v3973, 8
        %v4014 = vand.u32 %v4013, 65535
        %v4015 = vshrl.u32 %v4013, 16
        %v4016 = vand.u32 %v4012, 65535
        %v4017 = vshrl.u32 %v4012, 16
        %v4018 = vmul.u32 %v4014, %v4016
        %v4019 = vmul.u32 %v4014, %v4017
        %v4020 = vmul.u32 %v4015, %v4016
        %v4021 = vmul.u32 %v4015, %v4017
        %v4022 = vshll.u32 %v4019, 16
        %v4023 = vshrl.u32 %v4019, 16
        %v4024 = vshll.u32 %v4020, 16
        %v4025 = vshrl.u32 %v4020, 16
        %vm4026 = vc.u32 %v4018, %v4022
        %v4027 = vsel %vm4026, 1, 0
        %v4028 = vadd.s32 %v4018, %v4022
        %v4029 = vadd.s32 %v4021, %v4027
        %vm4030 = vc.u32 %v4028, %v4024
        %v4031 = vsel %vm4030, 1, 0
        %v4032 = vadd.s32 %v4028, %v4024
        %v4033 = vadd.s32 %v4029, %v4031
        %v4034 = vadd.s32 %v4033, %v4023
        %v4035 = vadd.s32 %v4034, %v4025
        %v4036 = vand.u32 %v4013, 65535
        %v4037 = vshrl.u32 %v4013, 16
        %v4038 = vand.u32 %v4008, 65535
        %v4039 = vshrl.u32 %v4008, 16
        %v4040 = vmul.u32 %v4036, %v4038
        %v4041 = vmul.u32 %v4036, %v4039
        %v4042 = vmul.u32 %v4037, %v4038
        %v4043 = vmul.u32 %v4037, %v4039
        %v4044 = vshll.u32 %v4041, 16
        %v4045 = vshrl.u32 %v4041, 16
        %v4046 = vshll.u32 %v4042, 16
        %v4047 = vshrl.u32 %v4042, 16
        %vm4048 = vc.u32 %v4040, %v4044
        %v4049 = vsel %vm4048, 1, 0
        %v4050 = vadd.s32 %v4040, %v4044
        %v4051 = vadd.s32 %v4043, %v4049
        %vm4052 = vc.u32 %v4050, %v4046
        %v4053 = vsel %vm4052, 1, 0
        %v4054 = vadd.s32 %v4050, %v4046
        %v4055 = vadd.s32 %v4051, %v4053
        %v4056 = vadd.s32 %v4055, %v4045
        %v4057 = vadd.s32 %v4056, %v4047
        %v4058 = vmul.u32 %v4013, %v4004
        %v4059 = vadd.s32 %v4035, %v4054
        %vm4060 = vc.u32 %v4035, %v4054
        %v4061 = vadd.s32 %v4057, 1
        %v4062 = vsel %vm4060, %v4061, %v4057
        %v4063 = vadd.s32 %v4058, %v4062
        %v4064 = vadd.s32 %v4063, 536870912
        %v4065 = vshrl.u32 %v4064, 30
        %v4066 = vshll.u32 %v4065, 30
        %v4067 = vsub.s32 %v4063, %v4066
        %vm4068 = vcmp.lt.s32.totalorder %v4067, 0
        %v4069 = vsub.s32 0, %v4067
        %v4070 = vsel %vm4068, %v4069, %v4067
        %v4071 = vclz %v4070
        %v4072 = vsub.s32 %v4071, 2
        %vm4073 = vcmp.gt.s32.totalorder 0, %v4072
        %v4074 = vsel %vm4073, 0, %v4072
        %v4075 = vsub.s32 32, %v4074
        %v4076 = vshll.u32 %v4067, %v4074
        %v4077 = vshrl.u32 %v4059, %v4075
        %v4078 = vor.u32 %v4076, %v4077
        %v4079 = vsub.s32 4294967266, %v4074
        %v4080 = vadd.s32 %v4079, 127
        %v4081 = vshll.u32 %v4080, 23
        %v4082 = vor.u32 4788187, %v4081
        %v4083 = vand.u32 2147483647, %v4082
        %v4085 = vcvt.s32.f32 %v4078
        %v4086 = vmul.f32 %v4085, %v4083
        %v4087 = vxor.u32 %v4086, 2147483648
        %v4088 = vsel %vm3967, %v4087, %v4086
        %v4089 = vsub.s32 4, %v4065
        %v4090 = vsel %vm3967, %v4089, %v4065
        %v4091 = vsel %vm3966, %v983, %v4088
        %v4092 = vsel %vm3966, 0, %v4090
        %v4093 = vmul.f32 %v4091, %v4091
        %v4094 = vmul.f32 %v4093, -0.001358992
        %v4095 = vadd.f32 %v4094, 0.041655596
        %v4096 = vmul.f32 %v4093, %v4095
        %v4097 = vadd.f32 %v4096, -0.4999988
        %v4098 = vmul.f32 %v4093, %v4097
        %v4099 = vadd.f32 1.0, %v4098
        %v4100 = vmul.f32 %v4091, %v4091
        %v4101 = vmul.f32 %v4100, -0.00019511016
        %v4102 = vadd.f32 %v4101, 0.008332121
        %v4103 = vmul.f32 %v4100, %v4102
        %v4104 = vadd.f32 %v4103, -0.16666654
        %v4105 = vmul.f32 %v4100, %v4104
        %v4106 = vadd.f32 %v4105, 1.0
        %v4107 = vmul.f32 %v4106, %v4091
        %vm4108 = vweird.f32 %v983
        %v4109 = vadd.s32 %v4092, 3
        %v4110 = vand.u32 %v4109, 3
        %vm4111 = vcmp.lt.s32.totalorder %v4110, 2
        %vm4112 = vcmp.eq.s32.totalorder %v4110, 0
        %v4113 = vxor.u32 %v4107, 2147483648
        %v4114 = vsel %vm4112, %v4099, %v4113
        %vm4115 = vcmp.eq.s32.totalorder %v4110, 2
        %v4116 = vxor.u32 %v4099, 2147483648
        %v4117 = vsel %vm4115, %v4116, %v4107
        %v4118 = vsel %vm4111, %v4114, %v4117
        %v4119 = vsel %vm4108, nan, %v4118
        %v4120 = vand.u32 2147483647, %v984
        %vm4121 = vcmp.le.f32.partialorder %v4120, 0.7853982
        %vm4122 = vcmp.lt.s32.totalorder %v984, 0
        %v4123 = vand.u32 %v984, 2139095040
        %v4124 = vshrl.u32 %v4123, 23
        %v4125 = vsub.s32 %v4124, 127
        %v4126 = vand.u32 2147483647, %v984
        %v4127 = vand.u32 %v4126, 8388607
        %v4128 = vor.u32 %v4127, 8388608
        %v4129 = vsub.s32 0, %v4128
        %v4130 = vadd.s32 %v4125, 1
        %vm4131 = vcmp.gt.s32.totalorder %v4130, 0
        %v4132 = vsel %vm4131, %v4130, 0
        %v4133 = vshrl.u32 %v4132, 5
        %v4134 = vand.u32 %v4132, 31
        %v4135 = vsub.s32 32, %v4134
        %v4136 = vshrl.u32 683565275, %v4135
        %v4137 = vshll.u32 683565275, %v4134
        %v4138 = vshrl.u32 2475754826, %v4135
        %v4139 = vor.u32 %v4137, %v4138
        %v4140 = vshll.u32 2475754826, %v4134
        %v4141 = vshrl.u32 2131351028, %v4135
        %v4142 = vor.u32 %v4140, %v4141
        %v4143 = vshll.u32 2131351028, %v4134
        %v4144 = vshrl.u32 2102212464, %v4135
        %v4145 = vor.u32 %v4143, %v4144
        %v4146 = vshll.u32 2102212464, %v4134
        %v4147 = vshrl.u32 920167782, %v4135
        %v4148 = vor.u32 %v4146, %v4147
        %v4149 = vshll.u32 920167782, %v4134
        %v4150 = vshrl.u32 1326507024, %v4135
        %v4151 = vor.u32 %v4149, %v4150
        %vm4152 = vcmp.lt.s32.totalorder %v4133, 1
        %vm4153 = vcmp.lt.s32.totalorder %v4133, 2
        %vm4154 = vcmp.lt.s32.totalorder %v4133, 3
        %vm4155 = vcmp.lt.s32.totalorder %v4133, 4
        %v4156 = vsel %vm4152, %v4136, %v4139
        %v4157 = vsel %vm4155, %v4145, 2102212464
        %v4158 = vsel %vm4154, %v4142, %v4157
        %v4159 = vsel %vm4153, %v4156, %v4158
        %v4160 = vsel %vm4152, %v4139, %v4142
        %v4161 = vsel %vm4155, %v4148, 920167782
        %v4162 = vsel %vm4154, %v4145, %v4161
        %v4163 = vsel %vm4153, %v4160, %v4162
        %v4164 = vsel %vm4152, %v4142, %v4145
        %v4165 = vsel %vm4155, %v4151, 1326507024
        %v4166 = vsel %vm4154, %v4148, %v4165
        %v4167 = vsel %vm4153, %v4164, %v4166
        %v4168 = vshll.u32 %v4128, 8
        %v4169 = vand.u32 %v4168, 65535
        %v4170 = vshrl.u32 %v4168, 16
        %v4171 = vand.u32 %v4167, 65535
        %v4172 = vshrl.u32 %v4167, 16
        %v4173 = vmul.u32 %v4169, %v4171
        %v4174 = vmul.u32 %v4169, %v4172
        %v4175 = vmul.u32 %v4170, %v4171
        %v4176 = vmul.u32 %v4170, %v4172
        %v4177 = vshll.u32 %v4174, 16
        %v4178 = vshrl.u32 %v4174, 16
        %v4179 = vshll.u32 %v4175, 16
        %v4180 = vshrl.u32 %v4175, 16
        %vm4181 = vc.u32 %v4173, %v4177
        %v4182 = vsel %vm4181, 1, 0
        %v4183 = vadd.s32 %v4173, %v4177
        %v4184 = vadd.s32 %v4176, %v4182
        %vm4185 = vc.u32 %v4183, %v4179
        %v4186 = vsel %vm4185, 1, 0
        %v4187 = vadd.s32 %v4183, %v4179
        %v4188 = vadd.s32 %v4184, %v4186
        %v4189 = vadd.s32 %v4188, %v4178
        %v4190 = vadd.s32 %v4189, %v4180
        %v4191 = vand.u32 %v4168, 65535
        %v4192 = vshrl.u32 %v4168, 16
        %v4193 = vand.u32 %v4163, 65535
        %v4194 = vshrl.u32 %v4163, 16
        %v4195 = vmul.u32 %v4191, %v4193
        %v4196 = vmul.u32 %v4191, %v4194
        %v4197 = vmul.u32 %v4192, %v4193
        %v4198 = vmul.u32 %v4192, %v4194
        %v4199 = vshll.u32 %v4196, 16
        %v4200 = vshrl.u32 %v4196, 16
        %v4201 = vshll.u32 %v4197, 16
        %v4202 = vshrl.u32 %v4197, 16
        %vm4203 = vc.u32 %v4195, %v4199
        %v4204 = vsel %vm4203, 1, 0
        %v4205 = vadd.s32 %v4195, %v4199
        %v4206 = vadd.s32 %v4198, %v4204
        %vm4207 = vc.u32 %v4205, %v4201
        %v4208 = vsel %vm4207, 1, 0
        %v4209 = vadd.s32 %v4205, %v4201
        %v4210 = vadd.s32 %v4206, %v4208
        %v4211 = vadd.s32 %v4210, %v4200
        %v4212 = vadd.s32 %v4211, %v4202
        %v4213 = vmul.u32 %v4168, %v4159
        %v4214 = vadd.s32 %v4190, %v4209
        %vm4215 = vc.u32 %v4190, %v4209
        %v4216 = vadd.s32 %v4212, 1
        %v4217 = vsel %vm4215, %v4216, %v4212
        %v4218 = vadd.s32 %v4213, %v4217
        %v4219 = vadd.s32 %v4218, 536870912
        %v4220 = vshrl.u32 %v4219, 30
        %v4221 = vshll.u32 %v4220, 30
        %v4222 = vsub.s32 %v4218, %v4221
        %vm4223 = vcmp.lt.s32.totalorder %v4222, 0
        %v4224 = vsub.s32 0, %v4222
        %v4225 = vsel %vm4223, %v4224, %v4222
        %v4226 = vclz %v4225
        %v4227 = vsub.s32 %v4226, 2
        %vm4228 = vcmp.gt.s32.totalorder 0, %v4227
        %v4229 = vsel %vm4228, 0, %v4227
        %v4230 = vsub.s32 32, %v4229
        %v4231 = vshll.u32 %v4222, %v4229
        %v4232 = vshrl.u32 %v4214, %v4230
        %v4233 = vor.u32 %v4231, %v4232
        %v4234 = vsub.s32 4294967266, %v4229
        %v4235 = vadd.s32 %v4234, 127
        %v4236 = vshll.u32 %v4235, 23
        %v4237 = vor.u32 4788187, %v4236
        %v4238 = vand.u32 2147483647, %v4237
        %v4240 = vcvt.s32.f32 %v4233
        %v4241 = vmul.f32 %v4240, %v4238
        %v4242 = vxor.u32 %v4241, 2147483648
        %v4243 = vsel %vm4122, %v4242, %v4241
        %v4244 = vsub.s32 4, %v4220
        %v4245 = vsel %vm4122, %v4244, %v4220
        %v4246 = vsel %vm4121, %v984, %v4243
        %v4247 = vsel %vm4121, 0, %v4245
        %v4248 = vmul.f32 %v4246, %v4246
        %v4249 = vmul.f32 %v4248, -0.001358992
        %v4250 = vadd.f32 %v4249, 0.041655596
        %v4251 = vmul.f32 %v4248, %v4250
        %v4252 = vadd.f32 %v4251, -0.4999988
        %v4253 = vmul.f32 %v4248, %v4252
        %v4254 = vadd.f32 1.0, %v4253
        %v4255 = vmul.f32 %v4246, %v4246
        %v4256 = vmul.f32 %v4255, -0.00019511016
        %v4257 = vadd.f32 %v4256, 0.008332121
        %v4258 = vmul.f32 %v4255, %v4257
        %v4259 = vadd.f32 %v4258, -0.16666654
        %v4260 = vmul.f32 %v4255, %v4259
        %v4261 = vadd.f32 %v4260, 1.0
        %v4262 = vmul.f32 %v4261, %v4246
        %vm4263 = vweird.f32 %v984
        %v4264 = vadd.s32 %v4247, 3
        %v4265 = vand.u32 %v4264, 3
        %vm4266 = vcmp.lt.s32.totalorder %v4265, 2
        %vm4267 = vcmp.eq.s32.totalorder %v4265, 0
        %v4268 = vxor.u32 %v4262, 2147483648
        %v4269 = vsel %vm4267, %v4254, %v4268
        %vm4270 = vcmp.eq.s32.totalorder %v4265, 2
        %v4271 = vxor.u32 %v4254, 2147483648
        %v4272 = vsel %vm4270, %v4271, %v4262
        %v4273 = vsel %vm4266, %v4269, %v4272
        %v4274 = vsel %vm4263, nan, %v4273
        %v4275 = vand.u32 2147483647, %v985
        %vm4276 = vcmp.le.f32.partialorder %v4275, 0.7853982
        %vm4277 = vcmp.lt.s32.totalorder %v985, 0
        %v4278 = vand.u32 %v985, 2139095040
        %v4279 = vshrl.u32 %v4278, 23
        %v4280 = vsub.s32 %v4279, 127
        %v4281 = vand.u32 2147483647, %v985
        %v4282 = vand.u32 %v4281, 8388607
        %v4283 = vor.u32 %v4282, 8388608
        %v4284 = vsub.s32 0, %v4283
        %v4285 = vadd.s32 %v4280, 1
        %vm4286 = vcmp.gt.s32.totalorder %v4285, 0
        %v4287 = vsel %vm4286, %v4285, 0
        %v4288 = vshrl.u32 %v4287, 5
        %v4289 = vand.u32 %v4287, 31
        %v4290 = vsub.s32 32, %v4289
        %v4291 = vshrl.u32 683565275, %v4290
        %v4292 = vshll.u32 683565275, %v4289
        %v4293 = vshrl.u32 2475754826, %v4290
        %v4294 = vor.u32 %v4292, %v4293
        %v4295 = vshll.u32 2475754826, %v4289
        %v4296 = vshrl.u32 2131351028, %v4290
        %v4297 = vor.u32 %v4295, %v4296
        %v4298 = vshll.u32 2131351028, %v4289
        %v4299 = vshrl.u32 2102212464, %v4290
        %v4300 = vor.u32 %v4298, %v4299
        %v4301 = vshll.u32 2102212464, %v4289
        %v4302 = vshrl.u32 920167782, %v4290
        %v4303 = vor.u32 %v4301, %v4302
        %v4304 = vshll.u32 920167782, %v4289
        %v4305 = vshrl.u32 1326507024, %v4290
        %v4306 = vor.u32 %v4304, %v4305
        %vm4307 = vcmp.lt.s32.totalorder %v4288, 1
        %vm4308 = vcmp.lt.s32.totalorder %v4288, 2
        %vm4309 = vcmp.lt.s32.totalorder %v4288, 3
        %vm4310 = vcmp.lt.s32.totalorder %v4288, 4
        %v4311 = vsel %vm4307, %v4291, %v4294
        %v4312 = vsel %vm4310, %v4300, 2102212464
        %v4313 = vsel %vm4309, %v4297, %v4312
        %v4314 = vsel %vm4308, %v4311, %v4313
        %v4315 = vsel %vm4307, %v4294, %v4297
        %v4316 = vsel %vm4310, %v4303, 920167782
        %v4317 = vsel %vm4309, %v4300, %v4316
        %v4318 = vsel %vm4308, %v4315, %v4317
        %v4319 = vsel %vm4307, %v4297, %v4300
        %v4320 = vsel %vm4310, %v4306, 1326507024
        %v4321 = vsel %vm4309, %v4303, %v4320
        %v4322 = vsel %vm4308, %v4319, %v4321
        %v4323 = vshll.u32 %v4283, 8
        %v4324 = vand.u32 %v4323, 65535
        %v4325 = vshrl.u32 %v4323, 16
        %v4326 = vand.u32 %v4322, 65535
        %v4327 = vshrl.u32 %v4322, 16
        %v4328 = vmul.u32 %v4324, %v4326
        %v4329 = vmul.u32 %v4324, %v4327
        %v4330 = vmul.u32 %v4325, %v4326
        %v4331 = vmul.u32 %v4325, %v4327
        %v4332 = vshll.u32 %v4329, 16
        %v4333 = vshrl.u32 %v4329, 16
        %v4334 = vshll.u32 %v4330, 16
        %v4335 = vshrl.u32 %v4330, 16
        %vm4336 = vc.u32 %v4328, %v4332
        %v4337 = vsel %vm4336, 1, 0
        %v4338 = vadd.s32 %v4328, %v4332
        %v4339 = vadd.s32 %v4331, %v4337
        %vm4340 = vc.u32 %v4338, %v4334
        %v4341 = vsel %vm4340, 1, 0
        %v4342 = vadd.s32 %v4338, %v4334
        %v4343 = vadd.s32 %v4339, %v4341
        %v4344 = vadd.s32 %v4343, %v4333
        %v4345 = vadd.s32 %v4344, %v4335
        %v4346 = vand.u32 %v4323, 65535
        %v4347 = vshrl.u32 %v4323, 16
        %v4348 = vand.u32 %v4318, 65535
        %v4349 = vshrl.u32 %v4318, 16
        %v4350 = vmul.u32 %v4346, %v4348
        %v4351 = vmul.u32 %v4346, %v4349
        %v4352 = vmul.u32 %v4347, %v4348
        %v4353 = vmul.u32 %v4347, %v4349
        %v4354 = vshll.u32 %v4351, 16
        %v4355 = vshrl.u32 %v4351, 16
        %v4356 = vshll.u32 %v4352, 16
        %v4357 = vshrl.u32 %v4352, 16
        %vm4358 = vc.u32 %v4350, %v4354
        %v4359 = vsel %vm4358, 1, 0
        %v4360 = vadd.s32 %v4350, %v4354
        %v4361 = vadd.s32 %v4353, %v4359
        %vm4362 = vc.u32 %v4360, %v4356
        %v4363 = vsel %vm4362, 1, 0
        %v4364 = vadd.s32 %v4360, %v4356
        %v4365 = vadd.s32 %v4361, %v4363
        %v4366 = vadd.s32 %v4365, %v4355
        %v4367 = vadd.s32 %v4366, %v4357
        %v4368 = vmul.u32 %v4323, %v4314
        %v4369 = vadd.s32 %v4345, %v4364
        %vm4370 = vc.u32 %v4345, %v4364
        %v4371 = vadd.s32 %v4367, 1
        %v4372 = vsel %vm4370, %v4371, %v4367
        %v4373 = vadd.s32 %v4368, %v4372
        %v4374 = vadd.s32 %v4373, 536870912
        %v4375 = vshrl.u32 %v4374, 30
        %v4376 = vshll.u32 %v4375, 30
        %v4377 = vsub.s32 %v4373, %v4376
        %vm4378 = vcmp.lt.s32.totalorder %v4377, 0
        %v4379 = vsub.s32 0, %v4377
        %v4380 = vsel %vm4378, %v4379, %v4377
        %v4381 = vclz %v4380
        %v4382 = vsub.s32 %v4381, 2
        %vm4383 = vcmp.gt.s32.totalorder 0, %v4382
        %v4384 = vsel %vm4383, 0, %v4382
        %v4385 = vsub.s32 32, %v4384
        %v4386 = vshll.u32 %v4377, %v4384
        %v4387 = vshrl.u32 %v4369, %v4385
        %v4388 = vor.u32 %v4386, %v4387
        %v4389 = vsub.s32 4294967266, %v4384
        %v4390 = vadd.s32 %v4389, 127
        %v4391 = vshll.u32 %v4390, 23
        %v4392 = vor.u32 4788187, %v4391
        %v4393 = vand.u32 2147483647, %v4392
        %v4395 = vcvt.s32.f32 %v4388
        %v4396 = vmul.f32 %v4395, %v4393
        %v4397 = vxor.u32 %v4396, 2147483648
        %v4398 = vsel %vm4277, %v4397, %v4396
        %v4399 = vsub.s32 4, %v4375
        %v4400 = vsel %vm4277, %v4399, %v4375
        %v4401 = vsel %vm4276, %v985, %v4398
        %v4402 = vsel %vm4276, 0, %v4400
        %v4403 = vmul.f32 %v4401, %v4401
        %v4404 = vmul.f32 %v4403, -0.001358992
        %v4405 = vadd.f32 %v4404, 0.041655596
        %v4406 = vmul.f32 %v4403, %v4405
        %v4407 = vadd.f32 %v4406, -0.4999988
        %v4408 = vmul.f32 %v4403, %v4407
        %v4409 = vadd.f32 1.0, %v4408
        %v4410 = vmul.f32 %v4401, %v4401
        %v4411 = vmul.f32 %v4410, -0.00019511016
        %v4412 = vadd.f32 %v4411, 0.008332121
        %v4413 = vmul.f32 %v4410, %v4412
        %v4414 = vadd.f32 %v4413, -0.16666654
        %v4415 = vmul.f32 %v4410, %v4414
        %v4416 = vadd.f32 %v4415, 1.0
        %v4417 = vmul.f32 %v4416, %v4401
        %vm4418 = vweird.f32 %v985
        %v4419 = vadd.s32 %v4402, 3
        %v4420 = vand.u32 %v4419, 3
        %vm4421 = vcmp.lt.s32.totalorder %v4420, 2
        %vm4422 = vcmp.eq.s32.totalorder %v4420, 0
        %v4423 = vxor.u32 %v4417, 2147483648
        %v4424 = vsel %vm4422, %v4409, %v4423
        %vm4425 = vcmp.eq.s32.totalorder %v4420, 2
        %v4426 = vxor.u32 %v4409, 2147483648
        %v4427 = vsel %vm4425, %v4426, %v4417
        %v4428 = vsel %vm4421, %v4424, %v4427
        %v4429 = vsel %vm4418, nan, %v4428
        %v4430 = vand.u32 2147483647, %v986
        %vm4431 = vcmp.le.f32.partialorder %v4430, 0.7853982
        %vm4432 = vcmp.lt.s32.totalorder %v986, 0
        %v4433 = vand.u32 %v986, 2139095040
        %v4434 = vshrl.u32 %v4433, 23
        %v4435 = vsub.s32 %v4434, 127
        %v4436 = vand.u32 2147483647, %v986
        %v4437 = vand.u32 %v4436, 8388607
        %v4438 = vor.u32 %v4437, 8388608
        %v4439 = vsub.s32 0, %v4438
        %v4440 = vadd.s32 %v4435, 1
        %vm4441 = vcmp.gt.s32.totalorder %v4440, 0
        %v4442 = vsel %vm4441, %v4440, 0
        %v4443 = vshrl.u32 %v4442, 5
        %v4444 = vand.u32 %v4442, 31
        %v4445 = vsub.s32 32, %v4444
        %v4446 = vshrl.u32 683565275, %v4445
        %v4447 = vshll.u32 683565275, %v4444
        %v4448 = vshrl.u32 2475754826, %v4445
        %v4449 = vor.u32 %v4447, %v4448
        %v4450 = vshll.u32 2475754826, %v4444
        %v4451 = vshrl.u32 2131351028, %v4445
        %v4452 = vor.u32 %v4450, %v4451
        %v4453 = vshll.u32 2131351028, %v4444
        %v4454 = vshrl.u32 2102212464, %v4445
        %v4455 = vor.u32 %v4453, %v4454
        %v4456 = vshll.u32 2102212464, %v4444
        %v4457 = vshrl.u32 920167782, %v4445
        %v4458 = vor.u32 %v4456, %v4457
        %v4459 = vshll.u32 920167782, %v4444
        %v4460 = vshrl.u32 1326507024, %v4445
        %v4461 = vor.u32 %v4459, %v4460
        %vm4462 = vcmp.lt.s32.totalorder %v4443, 1
        %vm4463 = vcmp.lt.s32.totalorder %v4443, 2
        %vm4464 = vcmp.lt.s32.totalorder %v4443, 3
        %vm4465 = vcmp.lt.s32.totalorder %v4443, 4
        %v4466 = vsel %vm4462, %v4446, %v4449
        %v4467 = vsel %vm4465, %v4455, 2102212464
        %v4468 = vsel %vm4464, %v4452, %v4467
        %v4469 = vsel %vm4463, %v4466, %v4468
        %v4470 = vsel %vm4462, %v4449, %v4452
        %v4471 = vsel %vm4465, %v4458, 920167782
        %v4472 = vsel %vm4464, %v4455, %v4471
        %v4473 = vsel %vm4463, %v4470, %v4472
        %v4474 = vsel %vm4462, %v4452, %v4455
        %v4475 = vsel %vm4465, %v4461, 1326507024
        %v4476 = vsel %vm4464, %v4458, %v4475
        %v4477 = vsel %vm4463, %v4474, %v4476
        %v4478 = vshll.u32 %v4438, 8
        %v4479 = vand.u32 %v4478, 65535
        %v4480 = vshrl.u32 %v4478, 16
        %v4481 = vand.u32 %v4477, 65535
        %v4482 = vshrl.u32 %v4477, 16
        %v4483 = vmul.u32 %v4479, %v4481
        %v4484 = vmul.u32 %v4479, %v4482
        %v4485 = vmul.u32 %v4480, %v4481
        %v4486 = vmul.u32 %v4480, %v4482
        %v4487 = vshll.u32 %v4484, 16
        %v4488 = vshrl.u32 %v4484, 16
        %v4489 = vshll.u32 %v4485, 16
        %v4490 = vshrl.u32 %v4485, 16
        %vm4491 = vc.u32 %v4483, %v4487
        %v4492 = vsel %vm4491, 1, 0
        %v4493 = vadd.s32 %v4483, %v4487
        %v4494 = vadd.s32 %v4486, %v4492
        %vm4495 = vc.u32 %v4493, %v4489
        %v4496 = vsel %vm4495, 1, 0
        %v4497 = vadd.s32 %v4493, %v4489
        %v4498 = vadd.s32 %v4494, %v4496
        %v4499 = vadd.s32 %v4498, %v4488
        %v4500 = vadd.s32 %v4499, %v4490
        %v4501 = vand.u32 %v4478, 65535
        %v4502 = vshrl.u32 %v4478, 16
        %v4503 = vand.u32 %v4473, 65535
        %v4504 = vshrl.u32 %v4473, 16
        %v4505 = vmul.u32 %v4501, %v4503
        %v4506 = vmul.u32 %v4501, %v4504
        %v4507 = vmul.u32 %v4502, %v4503
        %v4508 = vmul.u32 %v4502, %v4504
        %v4509 = vshll.u32 %v4506, 16
        %v4510 = vshrl.u32 %v4506, 16
        %v4511 = vshll.u32 %v4507, 16
        %v4512 = vshrl.u32 %v4507, 16
        %vm4513 = vc.u32 %v4505, %v4509
        %v4514 = vsel %vm4513, 1, 0
        %v4515 = vadd.s32 %v4505, %v4509
        %v4516 = vadd.s32 %v4508, %v4514
        %vm4517 = vc.u32 %v4515, %v4511
        %v4518 = vsel %vm4517, 1, 0
        %v4519 = vadd.s32 %v4515, %v4511
        %v4520 = vadd.s32 %v4516, %v4518
        %v4521 = vadd.s32 %v4520, %v4510
        %v4522 = vadd.s32 %v4521, %v4512
        %v4523 = vmul.u32 %v4478, %v4469
        %v4524 = vadd.s32 %v4500, %v4519
        %vm4525 = vc.u32 %v4500, %v4519
        %v4526 = vadd.s32 %v4522, 1
        %v4527 = vsel %vm4525, %v4526, %v4522
        %v4528 = vadd.s32 %v4523, %v4527
        %v4529 = vadd.s32 %v4528, 536870912
        %v4530 = vshrl.u32 %v4529, 30
        %v4531 = vshll.u32 %v4530, 30
        %v4532 = vsub.s32 %v4528, %v4531
        %vm4533 = vcmp.lt.s32.totalorder %v4532, 0
        %v4534 = vsub.s32 0, %v4532
        %v4535 = vsel %vm4533, %v4534, %v4532
        %v4536 = vclz %v4535
        %v4537 = vsub.s32 %v4536, 2
        %vm4538 = vcmp.gt.s32.totalorder 0, %v4537
        %v4539 = vsel %vm4538, 0, %v4537
        %v4540 = vsub.s32 32, %v4539
        %v4541 = vshll.u32 %v4532, %v4539
        %v4542 = vshrl.u32 %v4524, %v4540
        %v4543 = vor.u32 %v4541, %v4542
        %v4544 = vsub.s32 4294967266, %v4539
        %v4545 = vadd.s32 %v4544, 127
        %v4546 = vshll.u32 %v4545, 23
        %v4547 = vor.u32 4788187, %v4546
        %v4548 = vand.u32 2147483647, %v4547
        %v4550 = vcvt.s32.f32 %v4543
        %v4551 = vmul.f32 %v4550, %v4548
        %v4552 = vxor.u32 %v4551, 2147483648
        %v4553 = vsel %vm4432, %v4552, %v4551
        %v4554 = vsub.s32 4, %v4530
        %v4555 = vsel %vm4432, %v4554, %v4530
        %v4556 = vsel %vm4431, %v986, %v4553
        %v4557 = vsel %vm4431, 0, %v4555
        %v4558 = vmul.f32 %v4556, %v4556
        %v4559 = vmul.f32 %v4558, -0.001358992
        %v4560 = vadd.f32 %v4559, 0.041655596
        %v4561 = vmul.f32 %v4558, %v4560
        %v4562 = vadd.f32 %v4561, -0.4999988
        %v4563 = vmul.f32 %v4558, %v4562
        %v4564 = vadd.f32 1.0, %v4563
        %v4565 = vmul.f32 %v4556, %v4556
        %v4566 = vmul.f32 %v4565, -0.00019511016
        %v4567 = vadd.f32 %v4566, 0.008332121
        %v4568 = vmul.f32 %v4565, %v4567
        %v4569 = vadd.f32 %v4568, -0.16666654
        %v4570 = vmul.f32 %v4565, %v4569
        %v4571 = vadd.f32 %v4570, 1.0
        %v4572 = vmul.f32 %v4571, %v4556
        %vm4573 = vweird.f32 %v986
        %v4574 = vadd.s32 %v4557, 3
        %v4575 = vand.u32 %v4574, 3
        %vm4576 = vcmp.lt.s32.totalorder %v4575, 2
        %vm4577 = vcmp.eq.s32.totalorder %v4575, 0
        %v4578 = vxor.u32 %v4572, 2147483648
        %v4579 = vsel %vm4577, %v4564, %v4578
        %vm4580 = vcmp.eq.s32.totalorder %v4575, 2
        %v4581 = vxor.u32 %v4564, 2147483648
        %v4582 = vsel %vm4580, %v4581, %v4572
        %v4583 = vsel %vm4576, %v4579, %v4582
        %v4584 = vsel %vm4573, nan, %v4583
        %v4585 = vand.u32 2147483647, %v987
        %vm4586 = vcmp.le.f32.partialorder %v4585, 0.7853982
        %vm4587 = vcmp.lt.s32.totalorder %v987, 0
        %v4588 = vand.u32 %v987, 2139095040
        %v4589 = vshrl.u32 %v4588, 23
        %v4590 = vsub.s32 %v4589, 127
        %v4591 = vand.u32 2147483647, %v987
        %v4592 = vand.u32 %v4591, 8388607
        %v4593 = vor.u32 %v4592, 8388608
        %v4594 = vsub.s32 0, %v4593
        %v4595 = vadd.s32 %v4590, 1
        %vm4596 = vcmp.gt.s32.totalorder %v4595, 0
        %v4597 = vsel %vm4596, %v4595, 0
        %v4598 = vshrl.u32 %v4597, 5
        %v4599 = vand.u32 %v4597, 31
        %v4600 = vsub.s32 32, %v4599
        %v4601 = vshrl.u32 683565275, %v4600
        %v4602 = vshll.u32 683565275, %v4599
        %v4603 = vshrl.u32 2475754826, %v4600
        %v4604 = vor.u32 %v4602, %v4603
        %v4605 = vshll.u32 2475754826, %v4599
        %v4606 = vshrl.u32 2131351028, %v4600
        %v4607 = vor.u32 %v4605, %v4606
        %v4608 = vshll.u32 2131351028, %v4599
        %v4609 = vshrl.u32 2102212464, %v4600
        %v4610 = vor.u32 %v4608, %v4609
        %v4611 = vshll.u32 2102212464, %v4599
        %v4612 = vshrl.u32 920167782, %v4600
        %v4613 = vor.u32 %v4611, %v4612
        %v4614 = vshll.u32 920167782, %v4599
        %v4615 = vshrl.u32 1326507024, %v4600
        %v4616 = vor.u32 %v4614, %v4615
        %vm4617 = vcmp.lt.s32.totalorder %v4598, 1
        %vm4618 = vcmp.lt.s32.totalorder %v4598, 2
        %vm4619 = vcmp.lt.s32.totalorder %v4598, 3
        %vm4620 = vcmp.lt.s32.totalorder %v4598, 4
        %v4621 = vsel %vm4617, %v4601, %v4604
        %v4622 = vsel %vm4620, %v4610, 2102212464
        %v4623 = vsel %vm4619, %v4607, %v4622
        %v4624 = vsel %vm4618, %v4621, %v4623
        %v4625 = vsel %vm4617, %v4604, %v4607
        %v4626 = vsel %vm4620, %v4613, 920167782
        %v4627 = vsel %vm4619, %v4610, %v4626
        %v4628 = vsel %vm4618, %v4625, %v4627
        %v4629 = vsel %vm4617, %v4607, %v4610
        %v4630 = vsel %vm4620, %v4616, 1326507024
        %v4631 = vsel %vm4619, %v4613, %v4630
        %v4632 = vsel %vm4618, %v4629, %v4631
        %v4633 = vshll.u32 %v4593, 8
        %v4634 = vand.u32 %v4633, 65535
        %v4635 = vshrl.u32 %v4633, 16
        %v4636 = vand.u32 %v4632, 65535
        %v4637 = vshrl.u32 %v4632, 16
        %v4638 = vmul.u32 %v4634, %v4636
        %v4639 = vmul.u32 %v4634, %v4637
        %v4640 = vmul.u32 %v4635, %v4636
        %v4641 = vmul.u32 %v4635, %v4637
        %v4642 = vshll.u32 %v4639, 16
        %v4643 = vshrl.u32 %v4639, 16
        %v4644 = vshll.u32 %v4640, 16
        %v4645 = vshrl.u32 %v4640, 16
        %vm4646 = vc.u32 %v4638, %v4642
        %v4647 = vsel %vm4646, 1, 0
        %v4648 = vadd.s32 %v4638, %v4642
        %v4649 = vadd.s32 %v4641, %v4647
        %vm4650 = vc.u32 %v4648, %v4644
        %v4651 = vsel %vm4650, 1, 0
        %v4652 = vadd.s32 %v4648, %v4644
        %v4653 = vadd.s32 %v4649, %v4651
        %v4654 = vadd.s32 %v4653, %v4643
        %v4655 = vadd.s32 %v4654, %v4645
        %v4656 = vand.u32 %v4633, 65535
        %v4657 = vshrl.u32 %v4633, 16
        %v4658 = vand.u32 %v4628, 65535
        %v4659 = vshrl.u32 %v4628, 16
        %v4660 = vmul.u32 %v4656, %v4658
        %v4661 = vmul.u32 %v4656, %v4659
        %v4662 = vmul.u32 %v4657, %v4658
        %v4663 = vmul.u32 %v4657, %v4659
        %v4664 = vshll.u32 %v4661, 16
        %v4665 = vshrl.u32 %v4661, 16
        %v4666 = vshll.u32 %v4662, 16
        %v4667 = vshrl.u32 %v4662, 16
        %vm4668 = vc.u32 %v4660, %v4664
        %v4669 = vsel %vm4668, 1, 0
        %v4670 = vadd.s32 %v4660, %v4664
        %v4671 = vadd.s32 %v4663, %v4669
        %vm4672 = vc.u32 %v4670, %v4666
        %v4673 = vsel %vm4672, 1, 0
        %v4674 = vadd.s32 %v4670, %v4666
        %v4675 = vadd.s32 %v4671, %v4673
        %v4676 = vadd.s32 %v4675, %v4665
        %v4677 = vadd.s32 %v4676, %v4667
        %v4678 = vmul.u32 %v4633, %v4624
        %v4679 = vadd.s32 %v4655, %v4674
        %vm4680 = vc.u32 %v4655, %v4674
        %v4681 = vadd.s32 %v4677, 1
        %v4682 = vsel %vm4680, %v4681, %v4677
        %v4683 = vadd.s32 %v4678, %v4682
        %v4684 = vadd.s32 %v4683, 536870912
        %v4685 = vshrl.u32 %v4684, 30
        %v4686 = vshll.u32 %v4685, 30
        %v4687 = vsub.s32 %v4683, %v4686
        %vm4688 = vcmp.lt.s32.totalorder %v4687, 0
        %v4689 = vsub.s32 0, %v4687
        %v4690 = vsel %vm4688, %v4689, %v4687
        %v4691 = vclz %v4690
        %v4692 = vsub.s32 %v4691, 2
        %vm4693 = vcmp.gt.s32.totalorder 0, %v4692
        %v4694 = vsel %vm4693, 0, %v4692
        %v4695 = vsub.s32 32, %v4694
        %v4696 = vshll.u32 %v4687, %v4694
        %v4697 = vshrl.u32 %v4679, %v4695
        %v4698 = vor.u32 %v4696, %v4697
        %v4699 = vsub.s32 4294967266, %v4694
        %v4700 = vadd.s32 %v4699, 127
        %v4701 = vshll.u32 %v4700, 23
        %v4702 = vor.u32 4788187, %v4701
        %v4703 = vand.u32 2147483647, %v4702
        %v4705 = vcvt.s32.f32 %v4698
        %v4706 = vmul.f32 %v4705, %v4703
        %v4707 = vxor.u32 %v4706, 2147483648
        %v4708 = vsel %vm4587, %v4707, %v4706
        %v4709 = vsub.s32 4, %v4685
        %v4710 = vsel %vm4587, %v4709, %v4685
        %v4711 = vsel %vm4586, %v987, %v4708
        %v4712 = vsel %vm4586, 0, %v4710
        %v4713 = vmul.f32 %v4711, %v4711
        %v4714 = vmul.f32 %v4713, -0.001358992
        %v4715 = vadd.f32 %v4714, 0.041655596
        %v4716 = vmul.f32 %v4713, %v4715
        %v4717 = vadd.f32 %v4716, -0.4999988
        %v4718 = vmul.f32 %v4713, %v4717
        %v4719 = vadd.f32 1.0, %v4718
        %v4720 = vmul.f32 %v4711, %v4711
        %v4721 = vmul.f32 %v4720, -0.00019511016
        %v4722 = vadd.f32 %v4721, 0.008332121
        %v4723 = vmul.f32 %v4720, %v4722
        %v4724 = vadd.f32 %v4723, -0.16666654
        %v4725 = vmul.f32 %v4720, %v4724
        %v4726 = vadd.f32 %v4725, 1.0
        %v4727 = vmul.f32 %v4726, %v4711
        %vm4728 = vweird.f32 %v987
        %v4729 = vadd.s32 %v4712, 3
        %v4730 = vand.u32 %v4729, 3
        %vm4731 = vcmp.lt.s32.totalorder %v4730, 2
        %vm4732 = vcmp.eq.s32.totalorder %v4730, 0
        %v4733 = vxor.u32 %v4727, 2147483648
        %v4734 = vsel %vm4732, %v4719, %v4733
        %vm4735 = vcmp.eq.s32.totalorder %v4730, 2
        %v4736 = vxor.u32 %v4719, 2147483648
        %v4737 = vsel %vm4735, %v4736, %v4727
        %v4738 = vsel %vm4731, %v4734, %v4737
        %v4739 = vsel %vm4728, nan, %v4738
        %v4740 = vand.u32 2147483647, %v988
        %vm4741 = vcmp.le.f32.partialorder %v4740, 0.7853982
        %vm4742 = vcmp.lt.s32.totalorder %v988, 0
        %v4743 = vand.u32 %v988, 2139095040
        %v4744 = vshrl.u32 %v4743, 23
        %v4745 = vsub.s32 %v4744, 127
        %v4746 = vand.u32 2147483647, %v988
        %v4747 = vand.u32 %v4746, 8388607
        %v4748 = vor.u32 %v4747, 8388608
        %v4749 = vsub.s32 0, %v4748
        %v4750 = vadd.s32 %v4745, 1
        %vm4751 = vcmp.gt.s32.totalorder %v4750, 0
        %v4752 = vsel %vm4751, %v4750, 0
        %v4753 = vshrl.u32 %v4752, 5
        %v4754 = vand.u32 %v4752, 31
        %v4755 = vsub.s32 32, %v4754
        %v4756 = vshrl.u32 683565275, %v4755
        %v4757 = vshll.u32 683565275, %v4754
        %v4758 = vshrl.u32 2475754826, %v4755
        %v4759 = vor.u32 %v4757, %v4758
        %v4760 = vshll.u32 2475754826, %v4754
        %v4761 = vshrl.u32 2131351028, %v4755
        %v4762 = vor.u32 %v4760, %v4761
        %v4763 = vshll.u32 2131351028, %v4754
        %v4764 = vshrl.u32 2102212464, %v4755
        %v4765 = vor.u32 %v4763, %v4764
        %v4766 = vshll.u32 2102212464, %v4754
        %v4767 = vshrl.u32 920167782, %v4755
        %v4768 = vor.u32 %v4766, %v4767
        %v4769 = vshll.u32 920167782, %v4754
        %v4770 = vshrl.u32 1326507024, %v4755
        %v4771 = vor.u32 %v4769, %v4770
        %vm4772 = vcmp.lt.s32.totalorder %v4753, 1
        %vm4773 = vcmp.lt.s32.totalorder %v4753, 2
        %vm4774 = vcmp.lt.s32.totalorder %v4753, 3
        %vm4775 = vcmp.lt.s32.totalorder %v4753, 4
        %v4776 = vsel %vm4772, %v4756, %v4759
        %v4777 = vsel %vm4775, %v4765, 2102212464
        %v4778 = vsel %vm4774, %v4762, %v4777
        %v4779 = vsel %vm4773, %v4776, %v4778
        %v4780 = vsel %vm4772, %v4759, %v4762
        %v4781 = vsel %vm4775, %v4768, 920167782
        %v4782 = vsel %vm4774, %v4765, %v4781
        %v4783 = vsel %vm4773, %v4780, %v4782
        %v4784 = vsel %vm4772, %v4762, %v4765
        %v4785 = vsel %vm4775, %v4771, 1326507024
        %v4786 = vsel %vm4774, %v4768, %v4785
        %v4787 = vsel %vm4773, %v4784, %v4786
        %v4788 = vshll.u32 %v4748, 8
        %v4789 = vand.u32 %v4788, 65535
        %v4790 = vshrl.u32 %v4788, 16
        %v4791 = vand.u32 %v4787, 65535
        %v4792 = vshrl.u32 %v4787, 16
        %v4793 = vmul.u32 %v4789, %v4791
        %v4794 = vmul.u32 %v4789, %v4792
        %v4795 = vmul.u32 %v4790, %v4791
        %v4796 = vmul.u32 %v4790, %v4792
        %v4797 = vshll.u32 %v4794, 16
        %v4798 = vshrl.u32 %v4794, 16
        %v4799 = vshll.u32 %v4795, 16
        %v4800 = vshrl.u32 %v4795, 16
        %vm4801 = vc.u32 %v4793, %v4797
        %v4802 = vsel %vm4801, 1, 0
        %v4803 = vadd.s32 %v4793, %v4797
        %v4804 = vadd.s32 %v4796, %v4802
        %vm4805 = vc.u32 %v4803, %v4799
        %v4806 = vsel %vm4805, 1, 0
        %v4807 = vadd.s32 %v4803, %v4799
        %v4808 = vadd.s32 %v4804, %v4806
        %v4809 = vadd.s32 %v4808, %v4798
        %v4810 = vadd.s32 %v4809, %v4800
        %v4811 = vand.u32 %v4788, 65535
        %v4812 = vshrl.u32 %v4788, 16
        %v4813 = vand.u32 %v4783, 65535
        %v4814 = vshrl.u32 %v4783, 16
        %v4815 = vmul.u32 %v4811, %v4813
        %v4816 = vmul.u32 %v4811, %v4814
        %v4817 = vmul.u32 %v4812, %v4813
        %v4818 = vmul.u32 %v4812, %v4814
        %v4819 = vshll.u32 %v4816, 16
        %v4820 = vshrl.u32 %v4816, 16
        %v4821 = vshll.u32 %v4817, 16
        %v4822 = vshrl.u32 %v4817, 16
        %vm4823 = vc.u32 %v4815, %v4819
        %v4824 = vsel %vm4823, 1, 0
        %v4825 = vadd.s32 %v4815, %v4819
        %v4826 = vadd.s32 %v4818, %v4824
        %vm4827 = vc.u32 %v4825, %v4821
        %v4828 = vsel %vm4827, 1, 0
        %v4829 = vadd.s32 %v4825, %v4821
        %v4830 = vadd.s32 %v4826, %v4828
        %v4831 = vadd.s32 %v4830, %v4820
        %v4832 = vadd.s32 %v4831, %v4822
        %v4833 = vmul.u32 %v4788, %v4779
        %v4834 = vadd.s32 %v4810, %v4829
        %vm4835 = vc.u32 %v4810, %v4829
        %v4836 = vadd.s32 %v4832, 1
        %v4837 = vsel %vm4835, %v4836, %v4832
        %v4838 = vadd.s32 %v4833, %v4837
        %v4839 = vadd.s32 %v4838, 536870912
        %v4840 = vshrl.u32 %v4839, 30
        %v4841 = vshll.u32 %v4840, 30
        %v4842 = vsub.s32 %v4838, %v4841
        %vm4843 = vcmp.lt.s32.totalorder %v4842, 0
        %v4844 = vsub.s32 0, %v4842
        %v4845 = vsel %vm4843, %v4844, %v4842
        %v4846 = vclz %v4845
        %v4847 = vsub.s32 %v4846, 2
        %vm4848 = vcmp.gt.s32.totalorder 0, %v4847
        %v4849 = vsel %vm4848, 0, %v4847
        %v4850 = vsub.s32 32, %v4849
        %v4851 = vshll.u32 %v4842, %v4849
        %v4852 = vshrl.u32 %v4834, %v4850
        %v4853 = vor.u32 %v4851, %v4852
        %v4854 = vsub.s32 4294967266, %v4849
        %v4855 = vadd.s32 %v4854, 127
        %v4856 = vshll.u32 %v4855, 23
        %v4857 = vor.u32 4788187, %v4856
        %v4858 = vand.u32 2147483647, %v4857
        %v4860 = vcvt.s32.f32 %v4853
        %v4861 = vmul.f32 %v4860, %v4858
        %v4862 = vxor.u32 %v4861, 2147483648
        %v4863 = vsel %vm4742, %v4862, %v4861
        %v4864 = vsub.s32 4, %v4840
        %v4865 = vsel %vm4742, %v4864, %v4840
        %v4866 = vsel %vm4741, %v988, %v4863
        %v4867 = vsel %vm4741, 0, %v4865
        %v4868 = vmul.f32 %v4866, %v4866
        %v4869 = vmul.f32 %v4868, -0.001358992
        %v4870 = vadd.f32 %v4869, 0.041655596
        %v4871 = vmul.f32 %v4868, %v4870
        %v4872 = vadd.f32 %v4871, -0.4999988
        %v4873 = vmul.f32 %v4868, %v4872
        %v4874 = vadd.f32 1.0, %v4873
        %v4875 = vmul.f32 %v4866, %v4866
        %v4876 = vmul.f32 %v4875, -0.00019511016
        %v4877 = vadd.f32 %v4876, 0.008332121
        %v4878 = vmul.f32 %v4875, %v4877
        %v4879 = vadd.f32 %v4878, -0.16666654
        %v4880 = vmul.f32 %v4875, %v4879
        %v4881 = vadd.f32 %v4880, 1.0
        %v4882 = vmul.f32 %v4881, %v4866
        %vm4883 = vweird.f32 %v988
        %v4884 = vadd.s32 %v4867, 3
        %v4885 = vand.u32 %v4884, 3
        %vm4886 = vcmp.lt.s32.totalorder %v4885, 2
        %vm4887 = vcmp.eq.s32.totalorder %v4885, 0
        %v4888 = vxor.u32 %v4882, 2147483648
        %v4889 = vsel %vm4887, %v4874, %v4888
        %vm4890 = vcmp.eq.s32.totalorder %v4885, 2
        %v4891 = vxor.u32 %v4874, 2147483648
        %v4892 = vsel %vm4890, %v4891, %v4882
        %v4893 = vsel %vm4886, %v4889, %v4892
        %v4894 = vsel %vm4883, nan, %v4893
        %v4895 = vand.u32 2147483647, %v989
        %vm4896 = vcmp.le.f32.partialorder %v4895, 0.7853982
        %vm4897 = vcmp.lt.s32.totalorder %v989, 0
        %v4898 = vand.u32 %v989, 2139095040
        %v4899 = vshrl.u32 %v4898, 23
        %v4900 = vsub.s32 %v4899, 127
        %v4901 = vand.u32 2147483647, %v989
        %v4902 = vand.u32 %v4901, 8388607
        %v4903 = vor.u32 %v4902, 8388608
        %v4904 = vsub.s32 0, %v4903
        %v4905 = vadd.s32 %v4900, 1
        %vm4906 = vcmp.gt.s32.totalorder %v4905, 0
        %v4907 = vsel %vm4906, %v4905, 0
        %v4908 = vshrl.u32 %v4907, 5
        %v4909 = vand.u32 %v4907, 31
        %v4910 = vsub.s32 32, %v4909
        %v4911 = vshrl.u32 683565275, %v4910
        %v4912 = vshll.u32 683565275, %v4909
        %v4913 = vshrl.u32 2475754826, %v4910
        %v4914 = vor.u32 %v4912, %v4913
        %v4915 = vshll.u32 2475754826, %v4909
        %v4916 = vshrl.u32 2131351028, %v4910
        %v4917 = vor.u32 %v4915, %v4916
        %v4918 = vshll.u32 2131351028, %v4909
        %v4919 = vshrl.u32 2102212464, %v4910
        %v4920 = vor.u32 %v4918, %v4919
        %v4921 = vshll.u32 2102212464, %v4909
        %v4922 = vshrl.u32 920167782, %v4910
        %v4923 = vor.u32 %v4921, %v4922
        %v4924 = vshll.u32 920167782, %v4909
        %v4925 = vshrl.u32 1326507024, %v4910
        %v4926 = vor.u32 %v4924, %v4925
        %vm4927 = vcmp.lt.s32.totalorder %v4908, 1
        %vm4928 = vcmp.lt.s32.totalorder %v4908, 2
        %vm4929 = vcmp.lt.s32.totalorder %v4908, 3
        %vm4930 = vcmp.lt.s32.totalorder %v4908, 4
        %v4931 = vsel %vm4927, %v4911, %v4914
        %v4932 = vsel %vm4930, %v4920, 2102212464
        %v4933 = vsel %vm4929, %v4917, %v4932
        %v4934 = vsel %vm4928, %v4931, %v4933
        %v4935 = vsel %vm4927, %v4914, %v4917
        %v4936 = vsel %vm4930, %v4923, 920167782
        %v4937 = vsel %vm4929, %v4920, %v4936
        %v4938 = vsel %vm4928, %v4935, %v4937
        %v4939 = vsel %vm4927, %v4917, %v4920
        %v4940 = vsel %vm4930, %v4926, 1326507024
        %v4941 = vsel %vm4929, %v4923, %v4940
        %v4942 = vsel %vm4928, %v4939, %v4941
        %v4943 = vshll.u32 %v4903, 8
        %v4944 = vand.u32 %v4943, 65535
        %v4945 = vshrl.u32 %v4943, 16
        %v4946 = vand.u32 %v4942, 65535
        %v4947 = vshrl.u32 %v4942, 16
        %v4948 = vmul.u32 %v4944, %v4946
        %v4949 = vmul.u32 %v4944, %v4947
        %v4950 = vmul.u32 %v4945, %v4946
        %v4951 = vmul.u32 %v4945, %v4947
        %v4952 = vshll.u32 %v4949, 16
        %v4953 = vshrl.u32 %v4949, 16
        %v4954 = vshll.u32 %v4950, 16
        %v4955 = vshrl.u32 %v4950, 16
        %vm4956 = vc.u32 %v4948, %v4952
        %v4957 = vsel %vm4956, 1, 0
        %v4958 = vadd.s32 %v4948, %v4952
        %v4959 = vadd.s32 %v4951, %v4957
        %vm4960 = vc.u32 %v4958, %v4954
        %v4961 = vsel %vm4960, 1, 0
        %v4962 = vadd.s32 %v4958, %v4954
        %v4963 = vadd.s32 %v4959, %v4961
        %v4964 = vadd.s32 %v4963, %v4953
        %v4965 = vadd.s32 %v4964, %v4955
        %v4966 = vand.u32 %v4943, 65535
        %v4967 = vshrl.u32 %v4943, 16
        %v4968 = vand.u32 %v4938, 65535
        %v4969 = vshrl.u32 %v4938, 16
        %v4970 = vmul.u32 %v4966, %v4968
        %v4971 = vmul.u32 %v4966, %v4969
        %v4972 = vmul.u32 %v4967, %v4968
        %v4973 = vmul.u32 %v4967, %v4969
        %v4974 = vshll.u32 %v4971, 16
        %v4975 = vshrl.u32 %v4971, 16
        %v4976 = vshll.u32 %v4972, 16
        %v4977 = vshrl.u32 %v4972, 16
        %vm4978 = vc.u32 %v4970, %v4974
        %v4979 = vsel %vm4978, 1, 0
        %v4980 = vadd.s32 %v4970, %v4974
        %v4981 = vadd.s32 %v4973, %v4979
        %vm4982 = vc.u32 %v4980, %v4976
        %v4983 = vsel %vm4982, 1, 0
        %v4984 = vadd.s32 %v4980, %v4976
        %v4985 = vadd.s32 %v4981, %v4983
        %v4986 = vadd.s32 %v4985, %v4975
        %v4987 = vadd.s32 %v4986, %v4977
        %v4988 = vmul.u32 %v4943, %v4934
        %v4989 = vadd.s32 %v4965, %v4984
        %vm4990 = vc.u32 %v4965, %v4984
        %v4991 = vadd.s32 %v4987, 1
        %v4992 = vsel %vm4990, %v4991, %v4987
        %v4993 = vadd.s32 %v4988, %v4992
        %v4994 = vadd.s32 %v4993, 536870912
        %v4995 = vshrl.u32 %v4994, 30
        %v4996 = vshll.u32 %v4995, 30
        %v4997 = vsub.s32 %v4993, %v4996
        %vm4998 = vcmp.lt.s32.totalorder %v4997, 0
        %v4999 = vsub.s32 0, %v4997
        %v5000 = vsel %vm4998, %v4999, %v4997
        %v5001 = vclz %v5000
        %v5002 = vsub.s32 %v5001, 2
        %vm5003 = vcmp.gt.s32.totalorder 0, %v5002
        %v5004 = vsel %vm5003, 0, %v5002
        %v5005 = vsub.s32 32, %v5004
        %v5006 = vshll.u32 %v4997, %v5004
        %v5007 = vshrl.u32 %v4989, %v5005
        %v5008 = vor.u32 %v5006, %v5007
        %v5009 = vsub.s32 4294967266, %v5004
        %v5010 = vadd.s32 %v5009, 127
        %v5011 = vshll.u32 %v5010, 23
        %v5012 = vor.u32 4788187, %v5011
        %v5013 = vand.u32 2147483647, %v5012
        %v5015 = vcvt.s32.f32 %v5008
        %v5016 = vmul.f32 %v5015, %v5013
        %v5017 = vxor.u32 %v5016, 2147483648
        %v5018 = vsel %vm4897, %v5017, %v5016
        %v5019 = vsub.s32 4, %v4995
        %v5020 = vsel %vm4897, %v5019, %v4995
        %v5021 = vsel %vm4896, %v989, %v5018
        %v5022 = vsel %vm4896, 0, %v5020
        %v5023 = vmul.f32 %v5021, %v5021
        %v5024 = vmul.f32 %v5023, -0.001358992
        %v5025 = vadd.f32 %v5024, 0.041655596
        %v5026 = vmul.f32 %v5023, %v5025
        %v5027 = vadd.f32 %v5026, -0.4999988
        %v5028 = vmul.f32 %v5023, %v5027
        %v5029 = vadd.f32 1.0, %v5028
        %v5030 = vmul.f32 %v5021, %v5021
        %v5031 = vmul.f32 %v5030, -0.00019511016
        %v5032 = vadd.f32 %v5031, 0.008332121
        %v5033 = vmul.f32 %v5030, %v5032
        %v5034 = vadd.f32 %v5033, -0.16666654
        %v5035 = vmul.f32 %v5030, %v5034
        %v5036 = vadd.f32 %v5035, 1.0
        %v5037 = vmul.f32 %v5036, %v5021
        %vm5038 = vweird.f32 %v989
        %v5039 = vadd.s32 %v5022, 3
        %v5040 = vand.u32 %v5039, 3
        %vm5041 = vcmp.lt.s32.totalorder %v5040, 2
        %vm5042 = vcmp.eq.s32.totalorder %v5040, 0
        %v5043 = vxor.u32 %v5037, 2147483648
        %v5044 = vsel %vm5042, %v5029, %v5043
        %vm5045 = vcmp.eq.s32.totalorder %v5040, 2
        %v5046 = vxor.u32 %v5029, 2147483648
        %v5047 = vsel %vm5045, %v5046, %v5037
        %v5048 = vsel %vm5041, %v5044, %v5047
        %v5049 = vsel %vm5038, nan, %v5048
        %v5050 = vand.u32 2147483647, %v990
        %vm5051 = vcmp.le.f32.partialorder %v5050, 0.7853982
        %vm5052 = vcmp.lt.s32.totalorder %v990, 0
        %v5053 = vand.u32 %v990, 2139095040
        %v5054 = vshrl.u32 %v5053, 23
        %v5055 = vsub.s32 %v5054, 127
        %v5056 = vand.u32 2147483647, %v990
        %v5057 = vand.u32 %v5056, 8388607
        %v5058 = vor.u32 %v5057, 8388608
        %v5059 = vsub.s32 0, %v5058
        %v5060 = vadd.s32 %v5055, 1
        %vm5061 = vcmp.gt.s32.totalorder %v5060, 0
        %v5062 = vsel %vm5061, %v5060, 0
        %v5063 = vshrl.u32 %v5062, 5
        %v5064 = vand.u32 %v5062, 31
        %v5065 = vsub.s32 32, %v5064
        %v5066 = vshrl.u32 683565275, %v5065
        %v5067 = vshll.u32 683565275, %v5064
        %v5068 = vshrl.u32 2475754826, %v5065
        %v5069 = vor.u32 %v5067, %v5068
        %v5070 = vshll.u32 2475754826, %v5064
        %v5071 = vshrl.u32 2131351028, %v5065
        %v5072 = vor.u32 %v5070, %v5071
        %v5073 = vshll.u32 2131351028, %v5064
        %v5074 = vshrl.u32 2102212464, %v5065
        %v5075 = vor.u32 %v5073, %v5074
        %v5076 = vshll.u32 2102212464, %v5064
        %v5077 = vshrl.u32 920167782, %v5065
        %v5078 = vor.u32 %v5076, %v5077
        %v5079 = vshll.u32 920167782, %v5064
        %v5080 = vshrl.u32 1326507024, %v5065
        %v5081 = vor.u32 %v5079, %v5080
        %vm5082 = vcmp.lt.s32.totalorder %v5063, 1
        %vm5083 = vcmp.lt.s32.totalorder %v5063, 2
        %vm5084 = vcmp.lt.s32.totalorder %v5063, 3
        %vm5085 = vcmp.lt.s32.totalorder %v5063, 4
        %v5086 = vsel %vm5082, %v5066, %v5069
        %v5087 = vsel %vm5085, %v5075, 2102212464
        %v5088 = vsel %vm5084, %v5072, %v5087
        %v5089 = vsel %vm5083, %v5086, %v5088
        %v5090 = vsel %vm5082, %v5069, %v5072
        %v5091 = vsel %vm5085, %v5078, 920167782
        %v5092 = vsel %vm5084, %v5075, %v5091
        %v5093 = vsel %vm5083, %v5090, %v5092
        %v5094 = vsel %vm5082, %v5072, %v5075
        %v5095 = vsel %vm5085, %v5081, 1326507024
        %v5096 = vsel %vm5084, %v5078, %v5095
        %v5097 = vsel %vm5083, %v5094, %v5096
        %v5098 = vshll.u32 %v5058, 8
        %v5099 = vand.u32 %v5098, 65535
        %v5100 = vshrl.u32 %v5098, 16
        %v5101 = vand.u32 %v5097, 65535
        %v5102 = vshrl.u32 %v5097, 16
        %v5103 = vmul.u32 %v5099, %v5101
        %v5104 = vmul.u32 %v5099, %v5102
        %v5105 = vmul.u32 %v5100, %v5101
        %v5106 = vmul.u32 %v5100, %v5102
        %v5107 = vshll.u32 %v5104, 16
        %v5108 = vshrl.u32 %v5104, 16
        %v5109 = vshll.u32 %v5105, 16
        %v5110 = vshrl.u32 %v5105, 16
        %vm5111 = vc.u32 %v5103, %v5107
        %v5112 = vsel %vm5111, 1, 0
        %v5113 = vadd.s32 %v5103, %v5107
        %v5114 = vadd.s32 %v5106, %v5112
        %vm5115 = vc.u32 %v5113, %v5109
        %v5116 = vsel %vm5115, 1, 0
        %v5117 = vadd.s32 %v5113, %v5109
        %v5118 = vadd.s32 %v5114, %v5116
        %v5119 = vadd.s32 %v5118, %v5108
        %v5120 = vadd.s32 %v5119, %v5110
        %v5121 = vand.u32 %v5098, 65535
        %v5122 = vshrl.u32 %v5098, 16
        %v5123 = vand.u32 %v5093, 65535
        %v5124 = vshrl.u32 %v5093, 16
        %v5125 = vmul.u32 %v5121, %v5123
        %v5126 = vmul.u32 %v5121, %v5124
        %v5127 = vmul.u32 %v5122, %v5123
        %v5128 = vmul.u32 %v5122, %v5124
        %v5129 = vshll.u32 %v5126, 16
        %v5130 = vshrl.u32 %v5126, 16
        %v5131 = vshll.u32 %v5127, 16
        %v5132 = vshrl.u32 %v5127, 16
        %vm5133 = vc.u32 %v5125, %v5129
        %v5134 = vsel %vm5133, 1, 0
        %v5135 = vadd.s32 %v5125, %v5129
        %v5136 = vadd.s32 %v5128, %v5134
        %vm5137 = vc.u32 %v5135, %v5131
        %v5138 = vsel %vm5137, 1, 0
        %v5139 = vadd.s32 %v5135, %v5131
        %v5140 = vadd.s32 %v5136, %v5138
        %v5141 = vadd.s32 %v5140, %v5130
        %v5142 = vadd.s32 %v5141, %v5132
        %v5143 = vmul.u32 %v5098, %v5089
        %v5144 = vadd.s32 %v5120, %v5139
        %vm5145 = vc.u32 %v5120, %v5139
        %v5146 = vadd.s32 %v5142, 1
        %v5147 = vsel %vm5145, %v5146, %v5142
        %v5148 = vadd.s32 %v5143, %v5147
        %v5149 = vadd.s32 %v5148, 536870912
        %v5150 = vshrl.u32 %v5149, 30
        %v5151 = vshll.u32 %v5150, 30
        %v5152 = vsub.s32 %v5148, %v5151
        %vm5153 = vcmp.lt.s32.totalorder %v5152, 0
        %v5154 = vsub.s32 0, %v5152
        %v5155 = vsel %vm5153, %v5154, %v5152
        %v5156 = vclz %v5155
        %v5157 = vsub.s32 %v5156, 2
        %vm5158 = vcmp.gt.s32.totalorder 0, %v5157
        %v5159 = vsel %vm5158, 0, %v5157
        %v5160 = vsub.s32 32, %v5159
        %v5161 = vshll.u32 %v5152, %v5159
        %v5162 = vshrl.u32 %v5144, %v5160
        %v5163 = vor.u32 %v5161, %v5162
        %v5164 = vsub.s32 4294967266, %v5159
        %v5165 = vadd.s32 %v5164, 127
        %v5166 = vshll.u32 %v5165, 23
        %v5167 = vor.u32 4788187, %v5166
        %v5168 = vand.u32 2147483647, %v5167
        %v5170 = vcvt.s32.f32 %v5163
        %v5171 = vmul.f32 %v5170, %v5168
        %v5172 = vxor.u32 %v5171, 2147483648
        %v5173 = vsel %vm5052, %v5172, %v5171
        %v5174 = vsub.s32 4, %v5150
        %v5175 = vsel %vm5052, %v5174, %v5150
        %v5176 = vsel %vm5051, %v990, %v5173
        %v5177 = vsel %vm5051, 0, %v5175
        %v5178 = vmul.f32 %v5176, %v5176
        %v5179 = vmul.f32 %v5178, -0.001358992
        %v5180 = vadd.f32 %v5179, 0.041655596
        %v5181 = vmul.f32 %v5178, %v5180
        %v5182 = vadd.f32 %v5181, -0.4999988
        %v5183 = vmul.f32 %v5178, %v5182
        %v5184 = vadd.f32 1.0, %v5183
        %v5185 = vmul.f32 %v5176, %v5176
        %v5186 = vmul.f32 %v5185, -0.00019511016
        %v5187 = vadd.f32 %v5186, 0.008332121
        %v5188 = vmul.f32 %v5185, %v5187
        %v5189 = vadd.f32 %v5188, -0.16666654
        %v5190 = vmul.f32 %v5185, %v5189
        %v5191 = vadd.f32 %v5190, 1.0
        %v5192 = vmul.f32 %v5191, %v5176
        %vm5193 = vweird.f32 %v990
        %v5194 = vadd.s32 %v5177, 3
        %v5195 = vand.u32 %v5194, 3
        %vm5196 = vcmp.lt.s32.totalorder %v5195, 2
        %vm5197 = vcmp.eq.s32.totalorder %v5195, 0
        %v5198 = vxor.u32 %v5192, 2147483648
        %v5199 = vsel %vm5197, %v5184, %v5198
        %vm5200 = vcmp.eq.s32.totalorder %v5195, 2
        %v5201 = vxor.u32 %v5184, 2147483648
        %v5202 = vsel %vm5200, %v5201, %v5192
        %v5203 = vsel %vm5196, %v5199, %v5202
        %v5204 = vsel %vm5193, nan, %v5203
        %v5205 = vand.u32 2147483647, %v991
        %vm5206 = vcmp.le.f32.partialorder %v5205, 0.7853982
        %vm5207 = vcmp.lt.s32.totalorder %v991, 0
        %v5208 = vand.u32 %v991, 2139095040
        %v5209 = vshrl.u32 %v5208, 23
        %v5210 = vsub.s32 %v5209, 127
        %v5211 = vand.u32 2147483647, %v991
        %v5212 = vand.u32 %v5211, 8388607
        %v5213 = vor.u32 %v5212, 8388608
        %v5214 = vsub.s32 0, %v5213
        %v5215 = vadd.s32 %v5210, 1
        %vm5216 = vcmp.gt.s32.totalorder %v5215, 0
        %v5217 = vsel %vm5216, %v5215, 0
        %v5218 = vshrl.u32 %v5217, 5
        %v5219 = vand.u32 %v5217, 31
        %v5220 = vsub.s32 32, %v5219
        %v5221 = vshrl.u32 683565275, %v5220
        %v5222 = vshll.u32 683565275, %v5219
        %v5223 = vshrl.u32 2475754826, %v5220
        %v5224 = vor.u32 %v5222, %v5223
        %v5225 = vshll.u32 2475754826, %v5219
        %v5226 = vshrl.u32 2131351028, %v5220
        %v5227 = vor.u32 %v5225, %v5226
        %v5228 = vshll.u32 2131351028, %v5219
        %v5229 = vshrl.u32 2102212464, %v5220
        %v5230 = vor.u32 %v5228, %v5229
        %v5231 = vshll.u32 2102212464, %v5219
        %v5232 = vshrl.u32 920167782, %v5220
        %v5233 = vor.u32 %v5231, %v5232
        %v5234 = vshll.u32 920167782, %v5219
        %v5235 = vshrl.u32 1326507024, %v5220
        %v5236 = vor.u32 %v5234, %v5235
        %vm5237 = vcmp.lt.s32.totalorder %v5218, 1
        %vm5238 = vcmp.lt.s32.totalorder %v5218, 2
        %vm5239 = vcmp.lt.s32.totalorder %v5218, 3
        %vm5240 = vcmp.lt.s32.totalorder %v5218, 4
        %v5241 = vsel %vm5237, %v5221, %v5224
        %v5242 = vsel %vm5240, %v5230, 2102212464
        %v5243 = vsel %vm5239, %v5227, %v5242
        %v5244 = vsel %vm5238, %v5241, %v5243
        %v5245 = vsel %vm5237, %v5224, %v5227
        %v5246 = vsel %vm5240, %v5233, 920167782
        %v5247 = vsel %vm5239, %v5230, %v5246
        %v5248 = vsel %vm5238, %v5245, %v5247
        %v5249 = vsel %vm5237, %v5227, %v5230
        %v5250 = vsel %vm5240, %v5236, 1326507024
        %v5251 = vsel %vm5239, %v5233, %v5250
        %v5252 = vsel %vm5238, %v5249, %v5251
        %v5253 = vshll.u32 %v5213, 8
        %v5254 = vand.u32 %v5253, 65535
        %v5255 = vshrl.u32 %v5253, 16
        %v5256 = vand.u32 %v5252, 65535
        %v5257 = vshrl.u32 %v5252, 16
        %v5258 = vmul.u32 %v5254, %v5256
        %v5259 = vmul.u32 %v5254, %v5257
        %v5260 = vmul.u32 %v5255, %v5256
        %v5261 = vmul.u32 %v5255, %v5257
        %v5262 = vshll.u32 %v5259, 16
        %v5263 = vshrl.u32 %v5259, 16
        %v5264 = vshll.u32 %v5260, 16
        %v5265 = vshrl.u32 %v5260, 16
        %vm5266 = vc.u32 %v5258, %v5262
        %v5267 = vsel %vm5266, 1, 0
        %v5268 = vadd.s32 %v5258, %v5262
        %v5269 = vadd.s32 %v5261, %v5267
        %vm5270 = vc.u32 %v5268, %v5264
        %v5271 = vsel %vm5270, 1, 0
        %v5272 = vadd.s32 %v5268, %v5264
        %v5273 = vadd.s32 %v5269, %v5271
        %v5274 = vadd.s32 %v5273, %v5263
        %v5275 = vadd.s32 %v5274, %v5265
        %v5276 = vand.u32 %v5253, 65535
        %v5277 = vshrl.u32 %v5253, 16
        %v5278 = vand.u32 %v5248, 65535
        %v5279 = vshrl.u32 %v5248, 16
        %v5280 = vmul.u32 %v5276, %v5278
        %v5281 = vmul.u32 %v5276, %v5279
        %v5282 = vmul.u32 %v5277, %v5278
        %v5283 = vmul.u32 %v5277, %v5279
        %v5284 = vshll.u32 %v5281, 16
        %v5285 = vshrl.u32 %v5281, 16
        %v5286 = vshll.u32 %v5282, 16
        %v5287 = vshrl.u32 %v5282, 16
        %vm5288 = vc.u32 %v5280, %v5284
        %v5289 = vsel %vm5288, 1, 0
        %v5290 = vadd.s32 %v5280, %v5284
        %v5291 = vadd.s32 %v5283, %v5289
        %vm5292 = vc.u32 %v5290, %v5286
        %v5293 = vsel %vm5292, 1, 0
        %v5294 = vadd.s32 %v5290, %v5286
        %v5295 = vadd.s32 %v5291, %v5293
        %v5296 = vadd.s32 %v5295, %v5285
        %v5297 = vadd.s32 %v5296, %v5287
        %v5298 = vmul.u32 %v5253, %v5244
        %v5299 = vadd.s32 %v5275, %v5294
        %vm5300 = vc.u32 %v5275, %v5294
        %v5301 = vadd.s32 %v5297, 1
        %v5302 = vsel %vm5300, %v5301, %v5297
        %v5303 = vadd.s32 %v5298, %v5302
        %v5304 = vadd.s32 %v5303, 536870912
        %v5305 = vshrl.u32 %v5304, 30
        %v5306 = vshll.u32 %v5305, 30
        %v5307 = vsub.s32 %v5303, %v5306
        %vm5308 = vcmp.lt.s32.totalorder %v5307, 0
        %v5309 = vsub.s32 0, %v5307
        %v5310 = vsel %vm5308, %v5309, %v5307
        %v5311 = vclz %v5310
        %v5312 = vsub.s32 %v5311, 2
        %vm5313 = vcmp.gt.s32.totalorder 0, %v5312
        %v5314 = vsel %vm5313, 0, %v5312
        %v5315 = vsub.s32 32, %v5314
        %v5316 = vshll.u32 %v5307, %v5314
        %v5317 = vshrl.u32 %v5299, %v5315
        %v5318 = vor.u32 %v5316, %v5317
        %v5319 = vsub.s32 4294967266, %v5314
        %v5320 = vadd.s32 %v5319, 127
        %v5321 = vshll.u32 %v5320, 23
        %v5322 = vor.u32 4788187, %v5321
        %v5323 = vand.u32 2147483647, %v5322
        %v5325 = vcvt.s32.f32 %v5318
        %v5326 = vmul.f32 %v5325, %v5323
        %v5327 = vxor.u32 %v5326, 2147483648
        %v5328 = vsel %vm5207, %v5327, %v5326
        %v5329 = vsub.s32 4, %v5305
        %v5330 = vsel %vm5207, %v5329, %v5305
        %v5331 = vsel %vm5206, %v991, %v5328
        %v5332 = vsel %vm5206, 0, %v5330
        %v5333 = vmul.f32 %v5331, %v5331
        %v5334 = vmul.f32 %v5333, -0.001358992
        %v5335 = vadd.f32 %v5334, 0.041655596
        %v5336 = vmul.f32 %v5333, %v5335
        %v5337 = vadd.f32 %v5336, -0.4999988
        %v5338 = vmul.f32 %v5333, %v5337
        %v5339 = vadd.f32 1.0, %v5338
        %v5340 = vmul.f32 %v5331, %v5331
        %v5341 = vmul.f32 %v5340, -0.00019511016
        %v5342 = vadd.f32 %v5341, 0.008332121
        %v5343 = vmul.f32 %v5340, %v5342
        %v5344 = vadd.f32 %v5343, -0.16666654
        %v5345 = vmul.f32 %v5340, %v5344
        %v5346 = vadd.f32 %v5345, 1.0
        %v5347 = vmul.f32 %v5346, %v5331
        %vm5348 = vweird.f32 %v991
        %v5349 = vadd.s32 %v5332, 3
        %v5350 = vand.u32 %v5349, 3
        %vm5351 = vcmp.lt.s32.totalorder %v5350, 2
        %vm5352 = vcmp.eq.s32.totalorder %v5350, 0
        %v5353 = vxor.u32 %v5347, 2147483648
        %v5354 = vsel %vm5352, %v5339, %v5353
        %vm5355 = vcmp.eq.s32.totalorder %v5350, 2
        %v5356 = vxor.u32 %v5339, 2147483648
        %v5357 = vsel %vm5355, %v5356, %v5347
        %v5358 = vsel %vm5351, %v5354, %v5357
        %v5359 = vsel %vm5348, nan, %v5358
        %v5360 = vand.u32 2147483647, %v992
        %vm5361 = vcmp.le.f32.partialorder %v5360, 0.7853982
        %vm5362 = vcmp.lt.s32.totalorder %v992, 0
        %v5363 = vand.u32 %v992, 2139095040
        %v5364 = vshrl.u32 %v5363, 23
        %v5365 = vsub.s32 %v5364, 127
        %v5366 = vand.u32 2147483647, %v992
        %v5367 = vand.u32 %v5366, 8388607
        %v5368 = vor.u32 %v5367, 8388608
        %v5369 = vsub.s32 0, %v5368
        %v5370 = vadd.s32 %v5365, 1
        %vm5371 = vcmp.gt.s32.totalorder %v5370, 0
        %v5372 = vsel %vm5371, %v5370, 0
        %v5373 = vshrl.u32 %v5372, 5
        %v5374 = vand.u32 %v5372, 31
        %v5375 = vsub.s32 32, %v5374
        %v5376 = vshrl.u32 683565275, %v5375
        %v5377 = vshll.u32 683565275, %v5374
        %v5378 = vshrl.u32 2475754826, %v5375
        %v5379 = vor.u32 %v5377, %v5378
        %v5380 = vshll.u32 2475754826, %v5374
        %v5381 = vshrl.u32 2131351028, %v5375
        %v5382 = vor.u32 %v5380, %v5381
        %v5383 = vshll.u32 2131351028, %v5374
        %v5384 = vshrl.u32 2102212464, %v5375
        %v5385 = vor.u32 %v5383, %v5384
        %v5386 = vshll.u32 2102212464, %v5374
        %v5387 = vshrl.u32 920167782, %v5375
        %v5388 = vor.u32 %v5386, %v5387
        %v5389 = vshll.u32 920167782, %v5374
        %v5390 = vshrl.u32 1326507024, %v5375
        %v5391 = vor.u32 %v5389, %v5390
        %vm5392 = vcmp.lt.s32.totalorder %v5373, 1
        %vm5393 = vcmp.lt.s32.totalorder %v5373, 2
        %vm5394 = vcmp.lt.s32.totalorder %v5373, 3
        %vm5395 = vcmp.lt.s32.totalorder %v5373, 4
        %v5396 = vsel %vm5392, %v5376, %v5379
        %v5397 = vsel %vm5395, %v5385, 2102212464
        %v5398 = vsel %vm5394, %v5382, %v5397
        %v5399 = vsel %vm5393, %v5396, %v5398
        %v5400 = vsel %vm5392, %v5379, %v5382
        %v5401 = vsel %vm5395, %v5388, 920167782
        %v5402 = vsel %vm5394, %v5385, %v5401
        %v5403 = vsel %vm5393, %v5400, %v5402
        %v5404 = vsel %vm5392, %v5382, %v5385
        %v5405 = vsel %vm5395, %v5391, 1326507024
        %v5406 = vsel %vm5394, %v5388, %v5405
        %v5407 = vsel %vm5393, %v5404, %v5406
        %v5408 = vshll.u32 %v5368, 8
        %v5409 = vand.u32 %v5408, 65535
        %v5410 = vshrl.u32 %v5408, 16
        %v5411 = vand.u32 %v5407, 65535
        %v5412 = vshrl.u32 %v5407, 16
        %v5413 = vmul.u32 %v5409, %v5411
        %v5414 = vmul.u32 %v5409, %v5412
        %v5415 = vmul.u32 %v5410, %v5411
        %v5416 = vmul.u32 %v5410, %v5412
        %v5417 = vshll.u32 %v5414, 16
        %v5418 = vshrl.u32 %v5414, 16
        %v5419 = vshll.u32 %v5415, 16
        %v5420 = vshrl.u32 %v5415, 16
        %vm5421 = vc.u32 %v5413, %v5417
        %v5422 = vsel %vm5421, 1, 0
        %v5423 = vadd.s32 %v5413, %v5417
        %v5424 = vadd.s32 %v5416, %v5422
        %vm5425 = vc.u32 %v5423, %v5419
        %v5426 = vsel %vm5425, 1, 0
        %v5427 = vadd.s32 %v5423, %v5419
        %v5428 = vadd.s32 %v5424, %v5426
        %v5429 = vadd.s32 %v5428, %v5418
        %v5430 = vadd.s32 %v5429, %v5420
        %v5431 = vand.u32 %v5408, 65535
        %v5432 = vshrl.u32 %v5408, 16
        %v5433 = vand.u32 %v5403, 65535
        %v5434 = vshrl.u32 %v5403, 16
        %v5435 = vmul.u32 %v5431, %v5433
        %v5436 = vmul.u32 %v5431, %v5434
        %v5437 = vmul.u32 %v5432, %v5433
        %v5438 = vmul.u32 %v5432, %v5434
        %v5439 = vshll.u32 %v5436, 16
        %v5440 = vshrl.u32 %v5436, 16
        %v5441 = vshll.u32 %v5437, 16
        %v5442 = vshrl.u32 %v5437, 16
        %vm5443 = vc.u32 %v5435, %v5439
        %v5444 = vsel %vm5443, 1, 0
        %v5445 = vadd.s32 %v5435, %v5439
        %v5446 = vadd.s32 %v5438, %v5444
        %vm5447 = vc.u32 %v5445, %v5441
        %v5448 = vsel %vm5447, 1, 0
        %v5449 = vadd.s32 %v5445, %v5441
        %v5450 = vadd.s32 %v5446, %v5448
        %v5451 = vadd.s32 %v5450, %v5440
        %v5452 = vadd.s32 %v5451, %v5442
        %v5453 = vmul.u32 %v5408, %v5399
        %v5454 = vadd.s32 %v5430, %v5449
        %vm5455 = vc.u32 %v5430, %v5449
        %v5456 = vadd.s32 %v5452, 1
        %v5457 = vsel %vm5455, %v5456, %v5452
        %v5458 = vadd.s32 %v5453, %v5457
        %v5459 = vadd.s32 %v5458, 536870912
        %v5460 = vshrl.u32 %v5459, 30
        %v5461 = vshll.u32 %v5460, 30
        %v5462 = vsub.s32 %v5458, %v5461
        %vm5463 = vcmp.lt.s32.totalorder %v5462, 0
        %v5464 = vsub.s32 0, %v5462
        %v5465 = vsel %vm5463, %v5464, %v5462
        %v5466 = vclz %v5465
        %v5467 = vsub.s32 %v5466, 2
        %vm5468 = vcmp.gt.s32.totalorder 0, %v5467
        %v5469 = vsel %vm5468, 0, %v5467
        %v5470 = vsub.s32 32, %v5469
        %v5471 = vshll.u32 %v5462, %v5469
        %v5472 = vshrl.u32 %v5454, %v5470
        %v5473 = vor.u32 %v5471, %v5472
        %v5474 = vsub.s32 4294967266, %v5469
        %v5475 = vadd.s32 %v5474, 127
        %v5476 = vshll.u32 %v5475, 23
        %v5477 = vor.u32 4788187, %v5476
        %v5478 = vand.u32 2147483647, %v5477
        %v5480 = vcvt.s32.f32 %v5473
        %v5481 = vmul.f32 %v5480, %v5478
        %v5482 = vxor.u32 %v5481, 2147483648
        %v5483 = vsel %vm5362, %v5482, %v5481
        %v5484 = vsub.s32 4, %v5460
        %v5485 = vsel %vm5362, %v5484, %v5460
        %v5486 = vsel %vm5361, %v992, %v5483
        %v5487 = vsel %vm5361, 0, %v5485
        %v5488 = vmul.f32 %v5486, %v5486
        %v5489 = vmul.f32 %v5488, -0.001358992
        %v5490 = vadd.f32 %v5489, 0.041655596
        %v5491 = vmul.f32 %v5488, %v5490
        %v5492 = vadd.f32 %v5491, -0.4999988
        %v5493 = vmul.f32 %v5488, %v5492
        %v5494 = vadd.f32 1.0, %v5493
        %v5495 = vmul.f32 %v5486, %v5486
        %v5496 = vmul.f32 %v5495, -0.00019511016
        %v5497 = vadd.f32 %v5496, 0.008332121
        %v5498 = vmul.f32 %v5495, %v5497
        %v5499 = vadd.f32 %v5498, -0.16666654
        %v5500 = vmul.f32 %v5495, %v5499
        %v5501 = vadd.f32 %v5500, 1.0
        %v5502 = vmul.f32 %v5501, %v5486
        %vm5503 = vweird.f32 %v992
        %v5504 = vadd.s32 %v5487, 3
        %v5505 = vand.u32 %v5504, 3
        %vm5506 = vcmp.lt.s32.totalorder %v5505, 2
        %vm5507 = vcmp.eq.s32.totalorder %v5505, 0
        %v5508 = vxor.u32 %v5502, 2147483648
        %v5509 = vsel %vm5507, %v5494, %v5508
        %vm5510 = vcmp.eq.s32.totalorder %v5505, 2
        %v5511 = vxor.u32 %v5494, 2147483648
        %v5512 = vsel %vm5510, %v5511, %v5502
        %v5513 = vsel %vm5506, %v5509, %v5512
        %v5514 = vsel %vm5503, nan, %v5513
        %v5515 = vand.u32 2147483647, %v993
        %vm5516 = vcmp.le.f32.partialorder %v5515, 0.7853982
        %vm5517 = vcmp.lt.s32.totalorder %v993, 0
        %v5518 = vand.u32 %v993, 2139095040
        %v5519 = vshrl.u32 %v5518, 23
        %v5520 = vsub.s32 %v5519, 127
        %v5521 = vand.u32 2147483647, %v993
        %v5522 = vand.u32 %v5521, 8388607
        %v5523 = vor.u32 %v5522, 8388608
        %v5524 = vsub.s32 0, %v5523
        %v5525 = vadd.s32 %v5520, 1
        %vm5526 = vcmp.gt.s32.totalorder %v5525, 0
        %v5527 = vsel %vm5526, %v5525, 0
        %v5528 = vshrl.u32 %v5527, 5
        %v5529 = vand.u32 %v5527, 31
        %v5530 = vsub.s32 32, %v5529
        %v5531 = vshrl.u32 683565275, %v5530
        %v5532 = vshll.u32 683565275, %v5529
        %v5533 = vshrl.u32 2475754826, %v5530
        %v5534 = vor.u32 %v5532, %v5533
        %v5535 = vshll.u32 2475754826, %v5529
        %v5536 = vshrl.u32 2131351028, %v5530
        %v5537 = vor.u32 %v5535, %v5536
        %v5538 = vshll.u32 2131351028, %v5529
        %v5539 = vshrl.u32 2102212464, %v5530
        %v5540 = vor.u32 %v5538, %v5539
        %v5541 = vshll.u32 2102212464, %v5529
        %v5542 = vshrl.u32 920167782, %v5530
        %v5543 = vor.u32 %v5541, %v5542
        %v5544 = vshll.u32 920167782, %v5529
        %v5545 = vshrl.u32 1326507024, %v5530
        %v5546 = vor.u32 %v5544, %v5545
        %vm5547 = vcmp.lt.s32.totalorder %v5528, 1
        %vm5548 = vcmp.lt.s32.totalorder %v5528, 2
        %vm5549 = vcmp.lt.s32.totalorder %v5528, 3
        %vm5550 = vcmp.lt.s32.totalorder %v5528, 4
        %v5551 = vsel %vm5547, %v5531, %v5534
        %v5552 = vsel %vm5550, %v5540, 2102212464
        %v5553 = vsel %vm5549, %v5537, %v5552
        %v5554 = vsel %vm5548, %v5551, %v5553
        %v5555 = vsel %vm5547, %v5534, %v5537
        %v5556 = vsel %vm5550, %v5543, 920167782
        %v5557 = vsel %vm5549, %v5540, %v5556
        %v5558 = vsel %vm5548, %v5555, %v5557
        %v5559 = vsel %vm5547, %v5537, %v5540
        %v5560 = vsel %vm5550, %v5546, 1326507024
        %v5561 = vsel %vm5549, %v5543, %v5560
        %v5562 = vsel %vm5548, %v5559, %v5561
        %v5563 = vshll.u32 %v5523, 8
        %v5564 = vand.u32 %v5563, 65535
        %v5565 = vshrl.u32 %v5563, 16
        %v5566 = vand.u32 %v5562, 65535
        %v5567 = vshrl.u32 %v5562, 16
        %v5568 = vmul.u32 %v5564, %v5566
        %v5569 = vmul.u32 %v5564, %v5567
        %v5570 = vmul.u32 %v5565, %v5566
        %v5571 = vmul.u32 %v5565, %v5567
        %v5572 = vshll.u32 %v5569, 16
        %v5573 = vshrl.u32 %v5569, 16
        %v5574 = vshll.u32 %v5570, 16
        %v5575 = vshrl.u32 %v5570, 16
        %vm5576 = vc.u32 %v5568, %v5572
        %v5577 = vsel %vm5576, 1, 0
        %v5578 = vadd.s32 %v5568, %v5572
        %v5579 = vadd.s32 %v5571, %v5577
        %vm5580 = vc.u32 %v5578, %v5574
        %v5581 = vsel %vm5580, 1, 0
        %v5582 = vadd.s32 %v5578, %v5574
        %v5583 = vadd.s32 %v5579, %v5581
        %v5584 = vadd.s32 %v5583, %v5573
        %v5585 = vadd.s32 %v5584, %v5575
        %v5586 = vand.u32 %v5563, 65535
        %v5587 = vshrl.u32 %v5563, 16
        %v5588 = vand.u32 %v5558, 65535
        %v5589 = vshrl.u32 %v5558, 16
        %v5590 = vmul.u32 %v5586, %v5588
        %v5591 = vmul.u32 %v5586, %v5589
        %v5592 = vmul.u32 %v5587, %v5588
        %v5593 = vmul.u32 %v5587, %v5589
        %v5594 = vshll.u32 %v5591, 16
        %v5595 = vshrl.u32 %v5591, 16
        %v5596 = vshll.u32 %v5592, 16
        %v5597 = vshrl.u32 %v5592, 16
        %vm5598 = vc.u32 %v5590, %v5594
        %v5599 = vsel %vm5598, 1, 0
        %v5600 = vadd.s32 %v5590, %v5594
        %v5601 = vadd.s32 %v5593, %v5599
        %vm5602 = vc.u32 %v5600, %v5596
        %v5603 = vsel %vm5602, 1, 0
        %v5604 = vadd.s32 %v5600, %v5596
        %v5605 = vadd.s32 %v5601, %v5603
        %v5606 = vadd.s32 %v5605, %v5595
        %v5607 = vadd.s32 %v5606, %v5597
        %v5608 = vmul.u32 %v5563, %v5554
        %v5609 = vadd.s32 %v5585, %v5604
        %vm5610 = vc.u32 %v5585, %v5604
        %v5611 = vadd.s32 %v5607, 1
        %v5612 = vsel %vm5610, %v5611, %v5607
        %v5613 = vadd.s32 %v5608, %v5612
        %v5614 = vadd.s32 %v5613, 536870912
        %v5615 = vshrl.u32 %v5614, 30
        %v5616 = vshll.u32 %v5615, 30
        %v5617 = vsub.s32 %v5613, %v5616
        %vm5618 = vcmp.lt.s32.totalorder %v5617, 0
        %v5619 = vsub.s32 0, %v5617
        %v5620 = vsel %vm5618, %v5619, %v5617
        %v5621 = vclz %v5620
        %v5622 = vsub.s32 %v5621, 2
        %vm5623 = vcmp.gt.s32.totalorder 0, %v5622
        %v5624 = vsel %vm5623, 0, %v5622
        %v5625 = vsub.s32 32, %v5624
        %v5626 = vshll.u32 %v5617, %v5624
        %v5627 = vshrl.u32 %v5609, %v5625
        %v5628 = vor.u32 %v5626, %v5627
        %v5629 = vsub.s32 4294967266, %v5624
        %v5630 = vadd.s32 %v5629, 127
        %v5631 = vshll.u32 %v5630, 23
        %v5632 = vor.u32 4788187, %v5631
        %v5633 = vand.u32 2147483647, %v5632
        %v5635 = vcvt.s32.f32 %v5628
        %v5636 = vmul.f32 %v5635, %v5633
        %v5637 = vxor.u32 %v5636, 2147483648
        %v5638 = vsel %vm5517, %v5637, %v5636
        %v5639 = vsub.s32 4, %v5615
        %v5640 = vsel %vm5517, %v5639, %v5615
        %v5641 = vsel %vm5516, %v993, %v5638
        %v5642 = vsel %vm5516, 0, %v5640
        %v5643 = vmul.f32 %v5641, %v5641
        %v5644 = vmul.f32 %v5643, -0.001358992
        %v5645 = vadd.f32 %v5644, 0.041655596
        %v5646 = vmul.f32 %v5643, %v5645
        %v5647 = vadd.f32 %v5646, -0.4999988
        %v5648 = vmul.f32 %v5643, %v5647
        %v5649 = vadd.f32 1.0, %v5648
        %v5650 = vmul.f32 %v5641, %v5641
        %v5651 = vmul.f32 %v5650, -0.00019511016
        %v5652 = vadd.f32 %v5651, 0.008332121
        %v5653 = vmul.f32 %v5650, %v5652
        %v5654 = vadd.f32 %v5653, -0.16666654
        %v5655 = vmul.f32 %v5650, %v5654
        %v5656 = vadd.f32 %v5655, 1.0
        %v5657 = vmul.f32 %v5656, %v5641
        %vm5658 = vweird.f32 %v993
        %v5659 = vadd.s32 %v5642, 3
        %v5660 = vand.u32 %v5659, 3
        %vm5661 = vcmp.lt.s32.totalorder %v5660, 2
        %vm5662 = vcmp.eq.s32.totalorder %v5660, 0
        %v5663 = vxor.u32 %v5657, 2147483648
        %v5664 = vsel %vm5662, %v5649, %v5663
        %vm5665 = vcmp.eq.s32.totalorder %v5660, 2
        %v5666 = vxor.u32 %v5649, 2147483648
        %v5667 = vsel %vm5665, %v5666, %v5657
        %v5668 = vsel %vm5661, %v5664, %v5667
        %v5669 = vsel %vm5658, nan, %v5668
        %v5670 = vand.u32 2147483647, %v994
        %vm5671 = vcmp.le.f32.partialorder %v5670, 0.7853982
        %vm5672 = vcmp.lt.s32.totalorder %v994, 0
        %v5673 = vand.u32 %v994, 2139095040
        %v5674 = vshrl.u32 %v5673, 23
        %v5675 = vsub.s32 %v5674, 127
        %v5676 = vand.u32 2147483647, %v994
        %v5677 = vand.u32 %v5676, 8388607
        %v5678 = vor.u32 %v5677, 8388608
        %v5679 = vsub.s32 0, %v5678
        %v5680 = vadd.s32 %v5675, 1
        %vm5681 = vcmp.gt.s32.totalorder %v5680, 0
        %v5682 = vsel %vm5681, %v5680, 0
        %v5683 = vshrl.u32 %v5682, 5
        %v5684 = vand.u32 %v5682, 31
        %v5685 = vsub.s32 32, %v5684
        %v5686 = vshrl.u32 683565275, %v5685
        %v5687 = vshll.u32 683565275, %v5684
        %v5688 = vshrl.u32 2475754826, %v5685
        %v5689 = vor.u32 %v5687, %v5688
        %v5690 = vshll.u32 2475754826, %v5684
        %v5691 = vshrl.u32 2131351028, %v5685
        %v5692 = vor.u32 %v5690, %v5691
        %v5693 = vshll.u32 2131351028, %v5684
        %v5694 = vshrl.u32 2102212464, %v5685
        %v5695 = vor.u32 %v5693, %v5694
        %v5696 = vshll.u32 2102212464, %v5684
        %v5697 = vshrl.u32 920167782, %v5685
        %v5698 = vor.u32 %v5696, %v5697
        %v5699 = vshll.u32 920167782, %v5684
        %v5700 = vshrl.u32 1326507024, %v5685
        %v5701 = vor.u32 %v5699, %v5700
        %vm5702 = vcmp.lt.s32.totalorder %v5683, 1
        %vm5703 = vcmp.lt.s32.totalorder %v5683, 2
        %vm5704 = vcmp.lt.s32.totalorder %v5683, 3
        %vm5705 = vcmp.lt.s32.totalorder %v5683, 4
        %v5706 = vsel %vm5702, %v5686, %v5689
        %v5707 = vsel %vm5705, %v5695, 2102212464
        %v5708 = vsel %vm5704, %v5692, %v5707
        %v5709 = vsel %vm5703, %v5706, %v5708
        %v5710 = vsel %vm5702, %v5689, %v5692
        %v5711 = vsel %vm5705, %v5698, 920167782
        %v5712 = vsel %vm5704, %v5695, %v5711
        %v5713 = vsel %vm5703, %v5710, %v5712
        %v5714 = vsel %vm5702, %v5692, %v5695
        %v5715 = vsel %vm5705, %v5701, 1326507024
        %v5716 = vsel %vm5704, %v5698, %v5715
        %v5717 = vsel %vm5703, %v5714, %v5716
        %v5718 = vshll.u32 %v5678, 8
        %v5719 = vand.u32 %v5718, 65535
        %v5720 = vshrl.u32 %v5718, 16
        %v5721 = vand.u32 %v5717, 65535
        %v5722 = vshrl.u32 %v5717, 16
        %v5723 = vmul.u32 %v5719, %v5721
        %v5724 = vmul.u32 %v5719, %v5722
        %v5725 = vmul.u32 %v5720, %v5721
        %v5726 = vmul.u32 %v5720, %v5722
        %v5727 = vshll.u32 %v5724, 16
        %v5728 = vshrl.u32 %v5724, 16
        %v5729 = vshll.u32 %v5725, 16
        %v5730 = vshrl.u32 %v5725, 16
        %vm5731 = vc.u32 %v5723, %v5727
        %v5732 = vsel %vm5731, 1, 0
        %v5733 = vadd.s32 %v5723, %v5727
        %v5734 = vadd.s32 %v5726, %v5732
        %vm5735 = vc.u32 %v5733, %v5729
        %v5736 = vsel %vm5735, 1, 0
        %v5737 = vadd.s32 %v5733, %v5729
        %v5738 = vadd.s32 %v5734, %v5736
        %v5739 = vadd.s32 %v5738, %v5728
        %v5740 = vadd.s32 %v5739, %v5730
        %v5741 = vand.u32 %v5718, 65535
        %v5742 = vshrl.u32 %v5718, 16
        %v5743 = vand.u32 %v5713, 65535
        %v5744 = vshrl.u32 %v5713, 16
        %v5745 = vmul.u32 %v5741, %v5743
        %v5746 = vmul.u32 %v5741, %v5744
        %v5747 = vmul.u32 %v5742, %v5743
        %v5748 = vmul.u32 %v5742, %v5744
        %v5749 = vshll.u32 %v5746, 16
        %v5750 = vshrl.u32 %v5746, 16
        %v5751 = vshll.u32 %v5747, 16
        %v5752 = vshrl.u32 %v5747, 16
        %vm5753 = vc.u32 %v5745, %v5749
        %v5754 = vsel %vm5753, 1, 0
        %v5755 = vadd.s32 %v5745, %v5749
        %v5756 = vadd.s32 %v5748, %v5754
        %vm5757 = vc.u32 %v5755, %v5751
        %v5758 = vsel %vm5757, 1, 0
        %v5759 = vadd.s32 %v5755, %v5751
        %v5760 = vadd.s32 %v5756, %v5758
        %v5761 = vadd.s32 %v5760, %v5750
        %v5762 = vadd.s32 %v5761, %v5752
        %v5763 = vmul.u32 %v5718, %v5709
        %v5764 = vadd.s32 %v5740, %v5759
        %vm5765 = vc.u32 %v5740, %v5759
        %v5766 = vadd.s32 %v5762, 1
        %v5767 = vsel %vm5765, %v5766, %v5762
        %v5768 = vadd.s32 %v5763, %v5767
        %v5769 = vadd.s32 %v5768, 536870912
        %v5770 = vshrl.u32 %v5769, 30
        %v5771 = vshll.u32 %v5770, 30
        %v5772 = vsub.s32 %v5768, %v5771
        %vm5773 = vcmp.lt.s32.totalorder %v5772, 0
        %v5774 = vsub.s32 0, %v5772
        %v5775 = vsel %vm5773, %v5774, %v5772
        %v5776 = vclz %v5775
        %v5777 = vsub.s32 %v5776, 2
        %vm5778 = vcmp.gt.s32.totalorder 0, %v5777
        %v5779 = vsel %vm5778, 0, %v5777
        %v5780 = vsub.s32 32, %v5779
        %v5781 = vshll.u32 %v5772, %v5779
        %v5782 = vshrl.u32 %v5764, %v5780
        %v5783 = vor.u32 %v5781, %v5782
        %v5784 = vsub.s32 4294967266, %v5779
        %v5785 = vadd.s32 %v5784, 127
        %v5786 = vshll.u32 %v5785, 23
        %v5787 = vor.u32 4788187, %v5786
        %v5788 = vand.u32 2147483647, %v5787
        %v5790 = vcvt.s32.f32 %v5783
        %v5791 = vmul.f32 %v5790, %v5788
        %v5792 = vxor.u32 %v5791, 2147483648
        %v5793 = vsel %vm5672, %v5792, %v5791
        %v5794 = vsub.s32 4, %v5770
        %v5795 = vsel %vm5672, %v5794, %v5770
        %v5796 = vsel %vm5671, %v994, %v5793
        %v5797 = vsel %vm5671, 0, %v5795
        %v5798 = vmul.f32 %v5796, %v5796
        %v5799 = vmul.f32 %v5798, -0.001358992
        %v5800 = vadd.f32 %v5799, 0.041655596
        %v5801 = vmul.f32 %v5798, %v5800
        %v5802 = vadd.f32 %v5801, -0.4999988
        %v5803 = vmul.f32 %v5798, %v5802
        %v5804 = vadd.f32 1.0, %v5803
        %v5805 = vmul.f32 %v5796, %v5796
        %v5806 = vmul.f32 %v5805, -0.00019511016
        %v5807 = vadd.f32 %v5806, 0.008332121
        %v5808 = vmul.f32 %v5805, %v5807
        %v5809 = vadd.f32 %v5808, -0.16666654
        %v5810 = vmul.f32 %v5805, %v5809
        %v5811 = vadd.f32 %v5810, 1.0
        %v5812 = vmul.f32 %v5811, %v5796
        %vm5813 = vweird.f32 %v994
        %v5814 = vadd.s32 %v5797, 3
        %v5815 = vand.u32 %v5814, 3
        %vm5816 = vcmp.lt.s32.totalorder %v5815, 2
        %vm5817 = vcmp.eq.s32.totalorder %v5815, 0
        %v5818 = vxor.u32 %v5812, 2147483648
        %v5819 = vsel %vm5817, %v5804, %v5818
        %vm5820 = vcmp.eq.s32.totalorder %v5815, 2
        %v5821 = vxor.u32 %v5804, 2147483648
        %v5822 = vsel %vm5820, %v5821, %v5812
        %v5823 = vsel %vm5816, %v5819, %v5822
        %v5824 = vsel %vm5813, nan, %v5823
        %v5825 = vand.u32 2147483647, %v995
        %vm5826 = vcmp.le.f32.partialorder %v5825, 0.7853982
        %vm5827 = vcmp.lt.s32.totalorder %v995, 0
        %v5828 = vand.u32 %v995, 2139095040
        %v5829 = vshrl.u32 %v5828, 23
        %v5830 = vsub.s32 %v5829, 127
        %v5831 = vand.u32 2147483647, %v995
        %v5832 = vand.u32 %v5831, 8388607
        %v5833 = vor.u32 %v5832, 8388608
        %v5834 = vsub.s32 0, %v5833
        %v5835 = vadd.s32 %v5830, 1
        %vm5836 = vcmp.gt.s32.totalorder %v5835, 0
        %v5837 = vsel %vm5836, %v5835, 0
        %v5838 = vshrl.u32 %v5837, 5
        %v5839 = vand.u32 %v5837, 31
        %v5840 = vsub.s32 32, %v5839
        %v5841 = vshrl.u32 683565275, %v5840
        %v5842 = vshll.u32 683565275, %v5839
        %v5843 = vshrl.u32 2475754826, %v5840
        %v5844 = vor.u32 %v5842, %v5843
        %v5845 = vshll.u32 2475754826, %v5839
        %v5846 = vshrl.u32 2131351028, %v5840
        %v5847 = vor.u32 %v5845, %v5846
        %v5848 = vshll.u32 2131351028, %v5839
        %v5849 = vshrl.u32 2102212464, %v5840
        %v5850 = vor.u32 %v5848, %v5849
        %v5851 = vshll.u32 2102212464, %v5839
        %v5852 = vshrl.u32 920167782, %v5840
        %v5853 = vor.u32 %v5851, %v5852
        %v5854 = vshll.u32 920167782, %v5839
        %v5855 = vshrl.u32 1326507024, %v5840
        %v5856 = vor.u32 %v5854, %v5855
        %vm5857 = vcmp.lt.s32.totalorder %v5838, 1
        %vm5858 = vcmp.lt.s32.totalorder %v5838, 2
        %vm5859 = vcmp.lt.s32.totalorder %v5838, 3
        %vm5860 = vcmp.lt.s32.totalorder %v5838, 4
        %v5861 = vsel %vm5857, %v5841, %v5844
        %v5862 = vsel %vm5860, %v5850, 2102212464
        %v5863 = vsel %vm5859, %v5847, %v5862
        %v5864 = vsel %vm5858, %v5861, %v5863
        %v5865 = vsel %vm5857, %v5844, %v5847
        %v5866 = vsel %vm5860, %v5853, 920167782
        %v5867 = vsel %vm5859, %v5850, %v5866
        %v5868 = vsel %vm5858, %v5865, %v5867
        %v5869 = vsel %vm5857, %v5847, %v5850
        %v5870 = vsel %vm5860, %v5856, 1326507024
        %v5871 = vsel %vm5859, %v5853, %v5870
        %v5872 = vsel %vm5858, %v5869, %v5871
        %v5873 = vshll.u32 %v5833, 8
        %v5874 = vand.u32 %v5873, 65535
        %v5875 = vshrl.u32 %v5873, 16
        %v5876 = vand.u32 %v5872, 65535
        %v5877 = vshrl.u32 %v5872, 16
        %v5878 = vmul.u32 %v5874, %v5876
        %v5879 = vmul.u32 %v5874, %v5877
        %v5880 = vmul.u32 %v5875, %v5876
        %v5881 = vmul.u32 %v5875, %v5877
        %v5882 = vshll.u32 %v5879, 16
        %v5883 = vshrl.u32 %v5879, 16
        %v5884 = vshll.u32 %v5880, 16
        %v5885 = vshrl.u32 %v5880, 16
        %vm5886 = vc.u32 %v5878, %v5882
        %v5887 = vsel %vm5886, 1, 0
        %v5888 = vadd.s32 %v5878, %v5882
        %v5889 = vadd.s32 %v5881, %v5887
        %vm5890 = vc.u32 %v5888, %v5884
        %v5891 = vsel %vm5890, 1, 0
        %v5892 = vadd.s32 %v5888, %v5884
        %v5893 = vadd.s32 %v5889, %v5891
        %v5894 = vadd.s32 %v5893, %v5883
        %v5895 = vadd.s32 %v5894, %v5885
        %v5896 = vand.u32 %v5873, 65535
        %v5897 = vshrl.u32 %v5873, 16
        %v5898 = vand.u32 %v5868, 65535
        %v5899 = vshrl.u32 %v5868, 16
        %v5900 = vmul.u32 %v5896, %v5898
        %v5901 = vmul.u32 %v5896, %v5899
        %v5902 = vmul.u32 %v5897, %v5898
        %v5903 = vmul.u32 %v5897, %v5899
        %v5904 = vshll.u32 %v5901, 16
        %v5905 = vshrl.u32 %v5901, 16
        %v5906 = vshll.u32 %v5902, 16
        %v5907 = vshrl.u32 %v5902, 16
        %vm5908 = vc.u32 %v5900, %v5904
        %v5909 = vsel %vm5908, 1, 0
        %v5910 = vadd.s32 %v5900, %v5904
        %v5911 = vadd.s32 %v5903, %v5909
        %vm5912 = vc.u32 %v5910, %v5906
        %v5913 = vsel %vm5912, 1, 0
        %v5914 = vadd.s32 %v5910, %v5906
        %v5915 = vadd.s32 %v5911, %v5913
        %v5916 = vadd.s32 %v5915, %v5905
        %v5917 = vadd.s32 %v5916, %v5907
        %v5918 = vmul.u32 %v5873, %v5864
        %v5919 = vadd.s32 %v5895, %v5914
        %vm5920 = vc.u32 %v5895, %v5914
        %v5921 = vadd.s32 %v5917, 1
        %v5922 = vsel %vm5920, %v5921, %v5917
        %v5923 = vadd.s32 %v5918, %v5922
        %v5924 = vadd.s32 %v5923, 536870912
        %v5925 = vshrl.u32 %v5924, 30
        %v5926 = vshll.u32 %v5925, 30
        %v5927 = vsub.s32 %v5923, %v5926
        %vm5928 = vcmp.lt.s32.totalorder %v5927, 0
        %v5929 = vsub.s32 0, %v5927
        %v5930 = vsel %vm5928, %v5929, %v5927
        %v5931 = vclz %v5930
        %v5932 = vsub.s32 %v5931, 2
        %vm5933 = vcmp.gt.s32.totalorder 0, %v5932
        %v5934 = vsel %vm5933, 0, %v5932
        %v5935 = vsub.s32 32, %v5934
        %v5936 = vshll.u32 %v5927, %v5934
        %v5937 = vshrl.u32 %v5919, %v5935
        %v5938 = vor.u32 %v5936, %v5937
        %v5939 = vsub.s32 4294967266, %v5934
        %v5940 = vadd.s32 %v5939, 127
        %v5941 = vshll.u32 %v5940, 23
        %v5942 = vor.u32 4788187, %v5941
        %v5943 = vand.u32 2147483647, %v5942
        %v5945 = vcvt.s32.f32 %v5938
        %v5946 = vmul.f32 %v5945, %v5943
        %v5947 = vxor.u32 %v5946, 2147483648
        %v5948 = vsel %vm5827, %v5947, %v5946
        %v5949 = vsub.s32 4, %v5925
        %v5950 = vsel %vm5827, %v5949, %v5925
        %v5951 = vsel %vm5826, %v995, %v5948
        %v5952 = vsel %vm5826, 0, %v5950
        %v5953 = vmul.f32 %v5951, %v5951
        %v5954 = vmul.f32 %v5953, -0.001358992
        %v5955 = vadd.f32 %v5954, 0.041655596
        %v5956 = vmul.f32 %v5953, %v5955
        %v5957 = vadd.f32 %v5956, -0.4999988
        %v5958 = vmul.f32 %v5953, %v5957
        %v5959 = vadd.f32 1.0, %v5958
        %v5960 = vmul.f32 %v5951, %v5951
        %v5961 = vmul.f32 %v5960, -0.00019511016
        %v5962 = vadd.f32 %v5961, 0.008332121
        %v5963 = vmul.f32 %v5960, %v5962
        %v5964 = vadd.f32 %v5963, -0.16666654
        %v5965 = vmul.f32 %v5960, %v5964
        %v5966 = vadd.f32 %v5965, 1.0
        %v5967 = vmul.f32 %v5966, %v5951
        %vm5968 = vweird.f32 %v995
        %v5969 = vadd.s32 %v5952, 3
        %v5970 = vand.u32 %v5969, 3
        %vm5971 = vcmp.lt.s32.totalorder %v5970, 2
        %vm5972 = vcmp.eq.s32.totalorder %v5970, 0
        %v5973 = vxor.u32 %v5967, 2147483648
        %v5974 = vsel %vm5972, %v5959, %v5973
        %vm5975 = vcmp.eq.s32.totalorder %v5970, 2
        %v5976 = vxor.u32 %v5959, 2147483648
        %v5977 = vsel %vm5975, %v5976, %v5967
        %v5978 = vsel %vm5971, %v5974, %v5977
        %v5979 = vsel %vm5968, nan, %v5978
        %v5980 = vand.u32 2147483647, %v996
        %vm5981 = vcmp.le.f32.partialorder %v5980, 0.7853982
        %vm5982 = vcmp.lt.s32.totalorder %v996, 0
        %v5983 = vand.u32 %v996, 2139095040
        %v5984 = vshrl.u32 %v5983, 23
        %v5985 = vsub.s32 %v5984, 127
        %v5986 = vand.u32 2147483647, %v996
        %v5987 = vand.u32 %v5986, 8388607
        %v5988 = vor.u32 %v5987, 8388608
        %v5989 = vsub.s32 0, %v5988
        %v5990 = vadd.s32 %v5985, 1
        %vm5991 = vcmp.gt.s32.totalorder %v5990, 0
        %v5992 = vsel %vm5991, %v5990, 0
        %v5993 = vshrl.u32 %v5992, 5
        %v5994 = vand.u32 %v5992, 31
        %v5995 = vsub.s32 32, %v5994
        %v5996 = vshrl.u32 683565275, %v5995
        %v5997 = vshll.u32 683565275, %v5994
        %v5998 = vshrl.u32 2475754826, %v5995
        %v5999 = vor.u32 %v5997, %v5998
        %v6000 = vshll.u32 2475754826, %v5994
        %v6001 = vshrl.u32 2131351028, %v5995
        %v6002 = vor.u32 %v6000, %v6001
        %v6003 = vshll.u32 2131351028, %v5994
        %v6004 = vshrl.u32 2102212464, %v5995
        %v6005 = vor.u32 %v6003, %v6004
        %v6006 = vshll.u32 2102212464, %v5994
        %v6007 = vshrl.u32 920167782, %v5995
        %v6008 = vor.u32 %v6006, %v6007
        %v6009 = vshll.u32 920167782, %v5994
        %v6010 = vshrl.u32 1326507024, %v5995
        %v6011 = vor.u32 %v6009, %v6010
        %vm6012 = vcmp.lt.s32.totalorder %v5993, 1
        %vm6013 = vcmp.lt.s32.totalorder %v5993, 2
        %vm6014 = vcmp.lt.s32.totalorder %v5993, 3
        %vm6015 = vcmp.lt.s32.totalorder %v5993, 4
        %v6016 = vsel %vm6012, %v5996, %v5999
        %v6017 = vsel %vm6015, %v6005, 2102212464
        %v6018 = vsel %vm6014, %v6002, %v6017
        %v6019 = vsel %vm6013, %v6016, %v6018
        %v6020 = vsel %vm6012, %v5999, %v6002
        %v6021 = vsel %vm6015, %v6008, 920167782
        %v6022 = vsel %vm6014, %v6005, %v6021
        %v6023 = vsel %vm6013, %v6020, %v6022
        %v6024 = vsel %vm6012, %v6002, %v6005
        %v6025 = vsel %vm6015, %v6011, 1326507024
        %v6026 = vsel %vm6014, %v6008, %v6025
        %v6027 = vsel %vm6013, %v6024, %v6026
        %v6028 = vshll.u32 %v5988, 8
        %v6029 = vand.u32 %v6028, 65535
        %v6030 = vshrl.u32 %v6028, 16
        %v6031 = vand.u32 %v6027, 65535
        %v6032 = vshrl.u32 %v6027, 16
        %v6033 = vmul.u32 %v6029, %v6031
        %v6034 = vmul.u32 %v6029, %v6032
        %v6035 = vmul.u32 %v6030, %v6031
        %v6036 = vmul.u32 %v6030, %v6032
        %v6037 = vshll.u32 %v6034, 16
        %v6038 = vshrl.u32 %v6034, 16
        %v6039 = vshll.u32 %v6035, 16
        %v6040 = vshrl.u32 %v6035, 16
        %vm6041 = vc.u32 %v6033, %v6037
        %v6042 = vsel %vm6041, 1, 0
        %v6043 = vadd.s32 %v6033, %v6037
        %v6044 = vadd.s32 %v6036, %v6042
        %vm6045 = vc.u32 %v6043, %v6039
        %v6046 = vsel %vm6045, 1, 0
        %v6047 = vadd.s32 %v6043, %v6039
        %v6048 = vadd.s32 %v6044, %v6046
        %v6049 = vadd.s32 %v6048, %v6038
        %v6050 = vadd.s32 %v6049, %v6040
        %v6051 = vand.u32 %v6028, 65535
        %v6052 = vshrl.u32 %v6028, 16
        %v6053 = vand.u32 %v6023, 65535
        %v6054 = vshrl.u32 %v6023, 16
        %v6055 = vmul.u32 %v6051, %v6053
        %v6056 = vmul.u32 %v6051, %v6054
        %v6057 = vmul.u32 %v6052, %v6053
        %v6058 = vmul.u32 %v6052, %v6054
        %v6059 = vshll.u32 %v6056, 16
        %v6060 = vshrl.u32 %v6056, 16
        %v6061 = vshll.u32 %v6057, 16
        %v6062 = vshrl.u32 %v6057, 16
        %vm6063 = vc.u32 %v6055, %v6059
        %v6064 = vsel %vm6063, 1, 0
        %v6065 = vadd.s32 %v6055, %v6059
        %v6066 = vadd.s32 %v6058, %v6064
        %vm6067 = vc.u32 %v6065, %v6061
        %v6068 = vsel %vm6067, 1, 0
        %v6069 = vadd.s32 %v6065, %v6061
        %v6070 = vadd.s32 %v6066, %v6068
        %v6071 = vadd.s32 %v6070, %v6060
        %v6072 = vadd.s32 %v6071, %v6062
        %v6073 = vmul.u32 %v6028, %v6019
        %v6074 = vadd.s32 %v6050, %v6069
        %vm6075 = vc.u32 %v6050, %v6069
        %v6076 = vadd.s32 %v6072, 1
        %v6077 = vsel %vm6075, %v6076, %v6072
        %v6078 = vadd.s32 %v6073, %v6077
        %v6079 = vadd.s32 %v6078, 536870912
        %v6080 = vshrl.u32 %v6079, 30
        %v6081 = vshll.u32 %v6080, 30
        %v6082 = vsub.s32 %v6078, %v6081
        %vm6083 = vcmp.lt.s32.totalorder %v6082, 0
        %v6084 = vsub.s32 0, %v6082
        %v6085 = vsel %vm6083, %v6084, %v6082
        %v6086 = vclz %v6085
        %v6087 = vsub.s32 %v6086, 2
        %vm6088 = vcmp.gt.s32.totalorder 0, %v6087
        %v6089 = vsel %vm6088, 0, %v6087
        %v6090 = vsub.s32 32, %v6089
        %v6091 = vshll.u32 %v6082, %v6089
        %v6092 = vshrl.u32 %v6074, %v6090
        %v6093 = vor.u32 %v6091, %v6092
        %v6094 = vsub.s32 4294967266, %v6089
        %v6095 = vadd.s32 %v6094, 127
        %v6096 = vshll.u32 %v6095, 23
        %v6097 = vor.u32 4788187, %v6096
        %v6098 = vand.u32 2147483647, %v6097
        %v6100 = vcvt.s32.f32 %v6093
        %v6101 = vmul.f32 %v6100, %v6098
        %v6102 = vxor.u32 %v6101, 2147483648
        %v6103 = vsel %vm5982, %v6102, %v6101
        %v6104 = vsub.s32 4, %v6080
        %v6105 = vsel %vm5982, %v6104, %v6080
        %v6106 = vsel %vm5981, %v996, %v6103
        %v6107 = vsel %vm5981, 0, %v6105
        %v6108 = vmul.f32 %v6106, %v6106
        %v6109 = vmul.f32 %v6108, -0.001358992
        %v6110 = vadd.f32 %v6109, 0.041655596
        %v6111 = vmul.f32 %v6108, %v6110
        %v6112 = vadd.f32 %v6111, -0.4999988
        %v6113 = vmul.f32 %v6108, %v6112
        %v6114 = vadd.f32 1.0, %v6113
        %v6115 = vmul.f32 %v6106, %v6106
        %v6116 = vmul.f32 %v6115, -0.00019511016
        %v6117 = vadd.f32 %v6116, 0.008332121
        %v6118 = vmul.f32 %v6115, %v6117
        %v6119 = vadd.f32 %v6118, -0.16666654
        %v6120 = vmul.f32 %v6115, %v6119
        %v6121 = vadd.f32 %v6120, 1.0
        %v6122 = vmul.f32 %v6121, %v6106
        %vm6123 = vweird.f32 %v996
        %v6124 = vadd.s32 %v6107, 3
        %v6125 = vand.u32 %v6124, 3
        %vm6126 = vcmp.lt.s32.totalorder %v6125, 2
        %vm6127 = vcmp.eq.s32.totalorder %v6125, 0
        %v6128 = vxor.u32 %v6122, 2147483648
        %v6129 = vsel %vm6127, %v6114, %v6128
        %vm6130 = vcmp.eq.s32.totalorder %v6125, 2
        %v6131 = vxor.u32 %v6114, 2147483648
        %v6132 = vsel %vm6130, %v6131, %v6122
        %v6133 = vsel %vm6126, %v6129, %v6132
        %v6134 = vsel %vm6123, nan, %v6133
        %v6135 = vand.u32 2147483647, %v997
        %vm6136 = vcmp.le.f32.partialorder %v6135, 0.7853982
        %vm6137 = vcmp.lt.s32.totalorder %v997, 0
        %v6138 = vand.u32 %v997, 2139095040
        %v6139 = vshrl.u32 %v6138, 23
        %v6140 = vsub.s32 %v6139, 127
        %v6141 = vand.u32 2147483647, %v997
        %v6142 = vand.u32 %v6141, 8388607
        %v6143 = vor.u32 %v6142, 8388608
        %v6144 = vsub.s32 0, %v6143
        %v6145 = vadd.s32 %v6140, 1
        %vm6146 = vcmp.gt.s32.totalorder %v6145, 0
        %v6147 = vsel %vm6146, %v6145, 0
        %v6148 = vshrl.u32 %v6147, 5
        %v6149 = vand.u32 %v6147, 31
        %v6150 = vsub.s32 32, %v6149
        %v6151 = vshrl.u32 683565275, %v6150
        %v6152 = vshll.u32 683565275, %v6149
        %v6153 = vshrl.u32 2475754826, %v6150
        %v6154 = vor.u32 %v6152, %v6153
        %v6155 = vshll.u32 2475754826, %v6149
        %v6156 = vshrl.u32 2131351028, %v6150
        %v6157 = vor.u32 %v6155, %v6156
        %v6158 = vshll.u32 2131351028, %v6149
        %v6159 = vshrl.u32 2102212464, %v6150
        %v6160 = vor.u32 %v6158, %v6159
        %v6161 = vshll.u32 2102212464, %v6149
        %v6162 = vshrl.u32 920167782, %v6150
        %v6163 = vor.u32 %v6161, %v6162
        %v6164 = vshll.u32 920167782, %v6149
        %v6165 = vshrl.u32 1326507024, %v6150
        %v6166 = vor.u32 %v6164, %v6165
        %vm6167 = vcmp.lt.s32.totalorder %v6148, 1
        %vm6168 = vcmp.lt.s32.totalorder %v6148, 2
        %vm6169 = vcmp.lt.s32.totalorder %v6148, 3
        %vm6170 = vcmp.lt.s32.totalorder %v6148, 4
        %v6171 = vsel %vm6167, %v6151, %v6154
        %v6172 = vsel %vm6170, %v6160, 2102212464
        %v6173 = vsel %vm6169, %v6157, %v6172
        %v6174 = vsel %vm6168, %v6171, %v6173
        %v6175 = vsel %vm6167, %v6154, %v6157
        %v6176 = vsel %vm6170, %v6163, 920167782
        %v6177 = vsel %vm6169, %v6160, %v6176
        %v6178 = vsel %vm6168, %v6175, %v6177
        %v6179 = vsel %vm6167, %v6157, %v6160
        %v6180 = vsel %vm6170, %v6166, 1326507024
        %v6181 = vsel %vm6169, %v6163, %v6180
        %v6182 = vsel %vm6168, %v6179, %v6181
        %v6183 = vshll.u32 %v6143, 8
        %v6184 = vand.u32 %v6183, 65535
        %v6185 = vshrl.u32 %v6183, 16
        %v6186 = vand.u32 %v6182, 65535
        %v6187 = vshrl.u32 %v6182, 16
        %v6188 = vmul.u32 %v6184, %v6186
        %v6189 = vmul.u32 %v6184, %v6187
        %v6190 = vmul.u32 %v6185, %v6186
        %v6191 = vmul.u32 %v6185, %v6187
        %v6192 = vshll.u32 %v6189, 16
        %v6193 = vshrl.u32 %v6189, 16
        %v6194 = vshll.u32 %v6190, 16
        %v6195 = vshrl.u32 %v6190, 16
        %vm6196 = vc.u32 %v6188, %v6192
        %v6197 = vsel %vm6196, 1, 0
        %v6198 = vadd.s32 %v6188, %v6192
        %v6199 = vadd.s32 %v6191, %v6197
        %vm6200 = vc.u32 %v6198, %v6194
        %v6201 = vsel %vm6200, 1, 0
        %v6202 = vadd.s32 %v6198, %v6194
        %v6203 = vadd.s32 %v6199, %v6201
        %v6204 = vadd.s32 %v6203, %v6193
        %v6205 = vadd.s32 %v6204, %v6195
        %v6206 = vand.u32 %v6183, 65535
        %v6207 = vshrl.u32 %v6183, 16
        %v6208 = vand.u32 %v6178, 65535
        %v6209 = vshrl.u32 %v6178, 16
        %v6210 = vmul.u32 %v6206, %v6208
        %v6211 = vmul.u32 %v6206, %v6209
        %v6212 = vmul.u32 %v6207, %v6208
        %v6213 = vmul.u32 %v6207, %v6209
        %v6214 = vshll.u32 %v6211, 16
        %v6215 = vshrl.u32 %v6211, 16
        %v6216 = vshll.u32 %v6212, 16
        %v6217 = vshrl.u32 %v6212, 16
        %vm6218 = vc.u32 %v6210, %v6214
        %v6219 = vsel %vm6218, 1, 0
        %v6220 = vadd.s32 %v6210, %v6214
        %v6221 = vadd.s32 %v6213, %v6219
        %vm6222 = vc.u32 %v6220, %v6216
        %v6223 = vsel %vm6222, 1, 0
        %v6224 = vadd.s32 %v6220, %v6216
        %v6225 = vadd.s32 %v6221, %v6223
        %v6226 = vadd.s32 %v6225, %v6215
        %v6227 = vadd.s32 %v6226, %v6217
        %v6228 = vmul.u32 %v6183, %v6174
        %v6229 = vadd.s32 %v6205, %v6224
        %vm6230 = vc.u32 %v6205, %v6224
        %v6231 = vadd.s32 %v6227, 1
        %v6232 = vsel %vm6230, %v6231, %v6227
        %v6233 = vadd.s32 %v6228, %v6232
        %v6234 = vadd.s32 %v6233, 536870912
        %v6235 = vshrl.u32 %v6234, 30
        %v6236 = vshll.u32 %v6235, 30
        %v6237 = vsub.s32 %v6233, %v6236
        %vm6238 = vcmp.lt.s32.totalorder %v6237, 0
        %v6239 = vsub.s32 0, %v6237
        %v6240 = vsel %vm6238, %v6239, %v6237
        %v6241 = vclz %v6240
        %v6242 = vsub.s32 %v6241, 2
        %vm6243 = vcmp.gt.s32.totalorder 0, %v6242
        %v6244 = vsel %vm6243, 0, %v6242
        %v6245 = vsub.s32 32, %v6244
        %v6246 = vshll.u32 %v6237, %v6244
        %v6247 = vshrl.u32 %v6229, %v6245
        %v6248 = vor.u32 %v6246, %v6247
        %v6249 = vsub.s32 4294967266, %v6244
        %v6250 = vadd.s32 %v6249, 127
        %v6251 = vshll.u32 %v6250, 23
        %v6252 = vor.u32 4788187, %v6251
        %v6253 = vand.u32 2147483647, %v6252
        %v6255 = vcvt.s32.f32 %v6248
        %v6256 = vmul.f32 %v6255, %v6253
        %v6257 = vxor.u32 %v6256, 2147483648
        %v6258 = vsel %vm6137, %v6257, %v6256
        %v6259 = vsub.s32 4, %v6235
        %v6260 = vsel %vm6137, %v6259, %v6235
        %v6261 = vsel %vm6136, %v997, %v6258
        %v6262 = vsel %vm6136, 0, %v6260
        %v6263 = vmul.f32 %v6261, %v6261
        %v6264 = vmul.f32 %v6263, -0.001358992
        %v6265 = vadd.f32 %v6264, 0.041655596
        %v6266 = vmul.f32 %v6263, %v6265
        %v6267 = vadd.f32 %v6266, -0.4999988
        %v6268 = vmul.f32 %v6263, %v6267
        %v6269 = vadd.f32 1.0, %v6268
        %v6270 = vmul.f32 %v6261, %v6261
        %v6271 = vmul.f32 %v6270, -0.00019511016
        %v6272 = vadd.f32 %v6271, 0.008332121
        %v6273 = vmul.f32 %v6270, %v6272
        %v6274 = vadd.f32 %v6273, -0.16666654
        %v6275 = vmul.f32 %v6270, %v6274
        %v6276 = vadd.f32 %v6275, 1.0
        %v6277 = vmul.f32 %v6276, %v6261
        %vm6278 = vweird.f32 %v997
        %v6279 = vadd.s32 %v6262, 3
        %v6280 = vand.u32 %v6279, 3
        %vm6281 = vcmp.lt.s32.totalorder %v6280, 2
        %vm6282 = vcmp.eq.s32.totalorder %v6280, 0
        %v6283 = vxor.u32 %v6277, 2147483648
        %v6284 = vsel %vm6282, %v6269, %v6283
        %vm6285 = vcmp.eq.s32.totalorder %v6280, 2
        %v6286 = vxor.u32 %v6269, 2147483648
        %v6287 = vsel %vm6285, %v6286, %v6277
        %v6288 = vsel %vm6281, %v6284, %v6287
        %v6289 = vsel %vm6278, nan, %v6288
        %v6290 = vand.u32 2147483647, %v998
        %vm6291 = vcmp.le.f32.partialorder %v6290, 0.7853982
        %vm6292 = vcmp.lt.s32.totalorder %v998, 0
        %v6293 = vand.u32 %v998, 2139095040
        %v6294 = vshrl.u32 %v6293, 23
        %v6295 = vsub.s32 %v6294, 127
        %v6296 = vand.u32 2147483647, %v998
        %v6297 = vand.u32 %v6296, 8388607
        %v6298 = vor.u32 %v6297, 8388608
        %v6299 = vsub.s32 0, %v6298
        %v6300 = vadd.s32 %v6295, 1
        %vm6301 = vcmp.gt.s32.totalorder %v6300, 0
        %v6302 = vsel %vm6301, %v6300, 0
        %v6303 = vshrl.u32 %v6302, 5
        %v6304 = vand.u32 %v6302, 31
        %v6305 = vsub.s32 32, %v6304
        %v6306 = vshrl.u32 683565275, %v6305
        %v6307 = vshll.u32 683565275, %v6304
        %v6308 = vshrl.u32 2475754826, %v6305
        %v6309 = vor.u32 %v6307, %v6308
        %v6310 = vshll.u32 2475754826, %v6304
        %v6311 = vshrl.u32 2131351028, %v6305
        %v6312 = vor.u32 %v6310, %v6311
        %v6313 = vshll.u32 2131351028, %v6304
        %v6314 = vshrl.u32 2102212464, %v6305
        %v6315 = vor.u32 %v6313, %v6314
        %v6316 = vshll.u32 2102212464, %v6304
        %v6317 = vshrl.u32 920167782, %v6305
        %v6318 = vor.u32 %v6316, %v6317
        %v6319 = vshll.u32 920167782, %v6304
        %v6320 = vshrl.u32 1326507024, %v6305
        %v6321 = vor.u32 %v6319, %v6320
        %vm6322 = vcmp.lt.s32.totalorder %v6303, 1
        %vm6323 = vcmp.lt.s32.totalorder %v6303, 2
        %vm6324 = vcmp.lt.s32.totalorder %v6303, 3
        %vm6325 = vcmp.lt.s32.totalorder %v6303, 4
        %v6326 = vsel %vm6322, %v6306, %v6309
        %v6327 = vsel %vm6325, %v6315, 2102212464
        %v6328 = vsel %vm6324, %v6312, %v6327
        %v6329 = vsel %vm6323, %v6326, %v6328
        %v6330 = vsel %vm6322, %v6309, %v6312
        %v6331 = vsel %vm6325, %v6318, 920167782
        %v6332 = vsel %vm6324, %v6315, %v6331
        %v6333 = vsel %vm6323, %v6330, %v6332
        %v6334 = vsel %vm6322, %v6312, %v6315
        %v6335 = vsel %vm6325, %v6321, 1326507024
        %v6336 = vsel %vm6324, %v6318, %v6335
        %v6337 = vsel %vm6323, %v6334, %v6336
        %v6338 = vshll.u32 %v6298, 8
        %v6339 = vand.u32 %v6338, 65535
        %v6340 = vshrl.u32 %v6338, 16
        %v6341 = vand.u32 %v6337, 65535
        %v6342 = vshrl.u32 %v6337, 16
        %v6343 = vmul.u32 %v6339, %v6341
        %v6344 = vmul.u32 %v6339, %v6342
        %v6345 = vmul.u32 %v6340, %v6341
        %v6346 = vmul.u32 %v6340, %v6342
        %v6347 = vshll.u32 %v6344, 16
        %v6348 = vshrl.u32 %v6344, 16
        %v6349 = vshll.u32 %v6345, 16
        %v6350 = vshrl.u32 %v6345, 16
        %vm6351 = vc.u32 %v6343, %v6347
        %v6352 = vsel %vm6351, 1, 0
        %v6353 = vadd.s32 %v6343, %v6347
        %v6354 = vadd.s32 %v6346, %v6352
        %vm6355 = vc.u32 %v6353, %v6349
        %v6356 = vsel %vm6355, 1, 0
        %v6357 = vadd.s32 %v6353, %v6349
        %v6358 = vadd.s32 %v6354, %v6356
        %v6359 = vadd.s32 %v6358, %v6348
        %v6360 = vadd.s32 %v6359, %v6350
        %v6361 = vand.u32 %v6338, 65535
        %v6362 = vshrl.u32 %v6338, 16
        %v6363 = vand.u32 %v6333, 65535
        %v6364 = vshrl.u32 %v6333, 16
        %v6365 = vmul.u32 %v6361, %v6363
        %v6366 = vmul.u32 %v6361, %v6364
        %v6367 = vmul.u32 %v6362, %v6363
        %v6368 = vmul.u32 %v6362, %v6364
        %v6369 = vshll.u32 %v6366, 16
        %v6370 = vshrl.u32 %v6366, 16
        %v6371 = vshll.u32 %v6367, 16
        %v6372 = vshrl.u32 %v6367, 16
        %vm6373 = vc.u32 %v6365, %v6369
        %v6374 = vsel %vm6373, 1, 0
        %v6375 = vadd.s32 %v6365, %v6369
        %v6376 = vadd.s32 %v6368, %v6374
        %vm6377 = vc.u32 %v6375, %v6371
        %v6378 = vsel %vm6377, 1, 0
        %v6379 = vadd.s32 %v6375, %v6371
        %v6380 = vadd.s32 %v6376, %v6378
        %v6381 = vadd.s32 %v6380, %v6370
        %v6382 = vadd.s32 %v6381, %v6372
        %v6383 = vmul.u32 %v6338, %v6329
        %v6384 = vadd.s32 %v6360, %v6379
        %vm6385 = vc.u32 %v6360, %v6379
        %v6386 = vadd.s32 %v6382, 1
        %v6387 = vsel %vm6385, %v6386, %v6382
        %v6388 = vadd.s32 %v6383, %v6387
        %v6389 = vadd.s32 %v6388, 536870912
        %v6390 = vshrl.u32 %v6389, 30
        %v6391 = vshll.u32 %v6390, 30
        %v6392 = vsub.s32 %v6388, %v6391
        %vm6393 = vcmp.lt.s32.totalorder %v6392, 0
        %v6394 = vsub.s32 0, %v6392
        %v6395 = vsel %vm6393, %v6394, %v6392
        %v6396 = vclz %v6395
        %v6397 = vsub.s32 %v6396, 2
        %vm6398 = vcmp.gt.s32.totalorder 0, %v6397
        %v6399 = vsel %vm6398, 0, %v6397
        %v6400 = vsub.s32 32, %v6399
        %v6401 = vshll.u32 %v6392, %v6399
        %v6402 = vshrl.u32 %v6384, %v6400
        %v6403 = vor.u32 %v6401, %v6402
        %v6404 = vsub.s32 4294967266, %v6399
        %v6405 = vadd.s32 %v6404, 127
        %v6406 = vshll.u32 %v6405, 23
        %v6407 = vor.u32 4788187, %v6406
        %v6408 = vand.u32 2147483647, %v6407
        %v6410 = vcvt.s32.f32 %v6403
        %v6411 = vmul.f32 %v6410, %v6408
        %v6412 = vxor.u32 %v6411, 2147483648
        %v6413 = vsel %vm6292, %v6412, %v6411
        %v6414 = vsub.s32 4, %v6390
        %v6415 = vsel %vm6292, %v6414, %v6390
        %v6416 = vsel %vm6291, %v998, %v6413
        %v6417 = vsel %vm6291, 0, %v6415
        %v6418 = vmul.f32 %v6416, %v6416
        %v6419 = vmul.f32 %v6418, -0.001358992
        %v6420 = vadd.f32 %v6419, 0.041655596
        %v6421 = vmul.f32 %v6418, %v6420
        %v6422 = vadd.f32 %v6421, -0.4999988
        %v6423 = vmul.f32 %v6418, %v6422
        %v6424 = vadd.f32 1.0, %v6423
        %v6425 = vmul.f32 %v6416, %v6416
        %v6426 = vmul.f32 %v6425, -0.00019511016
        %v6427 = vadd.f32 %v6426, 0.008332121
        %v6428 = vmul.f32 %v6425, %v6427
        %v6429 = vadd.f32 %v6428, -0.16666654
        %v6430 = vmul.f32 %v6425, %v6429
        %v6431 = vadd.f32 %v6430, 1.0
        %v6432 = vmul.f32 %v6431, %v6416
        %vm6433 = vweird.f32 %v998
        %v6434 = vadd.s32 %v6417, 3
        %v6435 = vand.u32 %v6434, 3
        %vm6436 = vcmp.lt.s32.totalorder %v6435, 2
        %vm6437 = vcmp.eq.s32.totalorder %v6435, 0
        %v6438 = vxor.u32 %v6432, 2147483648
        %v6439 = vsel %vm6437, %v6424, %v6438
        %vm6440 = vcmp.eq.s32.totalorder %v6435, 2
        %v6441 = vxor.u32 %v6424, 2147483648
        %v6442 = vsel %vm6440, %v6441, %v6432
        %v6443 = vsel %vm6436, %v6439, %v6442
        %v6444 = vsel %vm6433, nan, %v6443
        %v6445 = vand.u32 2147483647, %v999
        %vm6446 = vcmp.le.f32.partialorder %v6445, 0.7853982
        %vm6447 = vcmp.lt.s32.totalorder %v999, 0
        %v6448 = vand.u32 %v999, 2139095040
        %v6449 = vshrl.u32 %v6448, 23
        %v6450 = vsub.s32 %v6449, 127
        %v6451 = vand.u32 2147483647, %v999
        %v6452 = vand.u32 %v6451, 8388607
        %v6453 = vor.u32 %v6452, 8388608
        %v6454 = vsub.s32 0, %v6453
        %v6455 = vadd.s32 %v6450, 1
        %vm6456 = vcmp.gt.s32.totalorder %v6455, 0
        %v6457 = vsel %vm6456, %v6455, 0
        %v6458 = vshrl.u32 %v6457, 5
        %v6459 = vand.u32 %v6457, 31
        %v6460 = vsub.s32 32, %v6459
        %v6461 = vshrl.u32 683565275, %v6460
        %v6462 = vshll.u32 683565275, %v6459
        %v6463 = vshrl.u32 2475754826, %v6460
        %v6464 = vor.u32 %v6462, %v6463
        %v6465 = vshll.u32 2475754826, %v6459
        %v6466 = vshrl.u32 2131351028, %v6460
        %v6467 = vor.u32 %v6465, %v6466
        %v6468 = vshll.u32 2131351028, %v6459
        %v6469 = vshrl.u32 2102212464, %v6460
        %v6470 = vor.u32 %v6468, %v6469
        %v6471 = vshll.u32 2102212464, %v6459
        %v6472 = vshrl.u32 920167782, %v6460
        %v6473 = vor.u32 %v6471, %v6472
        %v6474 = vshll.u32 920167782, %v6459
        %v6475 = vshrl.u32 1326507024, %v6460
        %v6476 = vor.u32 %v6474, %v6475
        %vm6477 = vcmp.lt.s32.totalorder %v6458, 1
        %vm6478 = vcmp.lt.s32.totalorder %v6458, 2
        %vm6479 = vcmp.lt.s32.totalorder %v6458, 3
        %vm6480 = vcmp.lt.s32.totalorder %v6458, 4
        %v6481 = vsel %vm6477, %v6461, %v6464
        %v6482 = vsel %vm6480, %v6470, 2102212464
        %v6483 = vsel %vm6479, %v6467, %v6482
        %v6484 = vsel %vm6478, %v6481, %v6483
        %v6485 = vsel %vm6477, %v6464, %v6467
        %v6486 = vsel %vm6480, %v6473, 920167782
        %v6487 = vsel %vm6479, %v6470, %v6486
        %v6488 = vsel %vm6478, %v6485, %v6487
        %v6489 = vsel %vm6477, %v6467, %v6470
        %v6490 = vsel %vm6480, %v6476, 1326507024
        %v6491 = vsel %vm6479, %v6473, %v6490
        %v6492 = vsel %vm6478, %v6489, %v6491
        %v6493 = vshll.u32 %v6453, 8
        %v6494 = vand.u32 %v6493, 65535
        %v6495 = vshrl.u32 %v6493, 16
        %v6496 = vand.u32 %v6492, 65535
        %v6497 = vshrl.u32 %v6492, 16
        %v6498 = vmul.u32 %v6494, %v6496
        %v6499 = vmul.u32 %v6494, %v6497
        %v6500 = vmul.u32 %v6495, %v6496
        %v6501 = vmul.u32 %v6495, %v6497
        %v6502 = vshll.u32 %v6499, 16
        %v6503 = vshrl.u32 %v6499, 16
        %v6504 = vshll.u32 %v6500, 16
        %v6505 = vshrl.u32 %v6500, 16
        %vm6506 = vc.u32 %v6498, %v6502
        %v6507 = vsel %vm6506, 1, 0
        %v6508 = vadd.s32 %v6498, %v6502
        %v6509 = vadd.s32 %v6501, %v6507
        %vm6510 = vc.u32 %v6508, %v6504
        %v6511 = vsel %vm6510, 1, 0
        %v6512 = vadd.s32 %v6508, %v6504
        %v6513 = vadd.s32 %v6509, %v6511
        %v6514 = vadd.s32 %v6513, %v6503
        %v6515 = vadd.s32 %v6514, %v6505
        %v6516 = vand.u32 %v6493, 65535
        %v6517 = vshrl.u32 %v6493, 16
        %v6518 = vand.u32 %v6488, 65535
        %v6519 = vshrl.u32 %v6488, 16
        %v6520 = vmul.u32 %v6516, %v6518
        %v6521 = vmul.u32 %v6516, %v6519
        %v6522 = vmul.u32 %v6517, %v6518
        %v6523 = vmul.u32 %v6517, %v6519
        %v6524 = vshll.u32 %v6521, 16
        %v6525 = vshrl.u32 %v6521, 16
        %v6526 = vshll.u32 %v6522, 16
        %v6527 = vshrl.u32 %v6522, 16
        %vm6528 = vc.u32 %v6520, %v6524
        %v6529 = vsel %vm6528, 1, 0
        %v6530 = vadd.s32 %v6520, %v6524
        %v6531 = vadd.s32 %v6523, %v6529
        %vm6532 = vc.u32 %v6530, %v6526
        %v6533 = vsel %vm6532, 1, 0
        %v6534 = vadd.s32 %v6530, %v6526
        %v6535 = vadd.s32 %v6531, %v6533
        %v6536 = vadd.s32 %v6535, %v6525
        %v6537 = vadd.s32 %v6536, %v6527
        %v6538 = vmul.u32 %v6493, %v6484
        %v6539 = vadd.s32 %v6515, %v6534
        %vm6540 = vc.u32 %v6515, %v6534
        %v6541 = vadd.s32 %v6537, 1
        %v6542 = vsel %vm6540, %v6541, %v6537
        %v6543 = vadd.s32 %v6538, %v6542
        %v6544 = vadd.s32 %v6543, 536870912
        %v6545 = vshrl.u32 %v6544, 30
        %v6546 = vshll.u32 %v6545, 30
        %v6547 = vsub.s32 %v6543, %v6546
        %vm6548 = vcmp.lt.s32.totalorder %v6547, 0
        %v6549 = vsub.s32 0, %v6547
        %v6550 = vsel %vm6548, %v6549, %v6547
        %v6551 = vclz %v6550
        %v6552 = vsub.s32 %v6551, 2
        %vm6553 = vcmp.gt.s32.totalorder 0, %v6552
        %v6554 = vsel %vm6553, 0, %v6552
        %v6555 = vsub.s32 32, %v6554
        %v6556 = vshll.u32 %v6547, %v6554
        %v6557 = vshrl.u32 %v6539, %v6555
        %v6558 = vor.u32 %v6556, %v6557
        %v6559 = vsub.s32 4294967266, %v6554
        %v6560 = vadd.s32 %v6559, 127
        %v6561 = vshll.u32 %v6560, 23
        %v6562 = vor.u32 4788187, %v6561
        %v6563 = vand.u32 2147483647, %v6562
        %v6565 = vcvt.s32.f32 %v6558
        %v6566 = vmul.f32 %v6565, %v6563
        %v6567 = vxor.u32 %v6566, 2147483648
        %v6568 = vsel %vm6447, %v6567, %v6566
        %v6569 = vsub.s32 4, %v6545
        %v6570 = vsel %vm6447, %v6569, %v6545
        %v6571 = vsel %vm6446, %v999, %v6568
        %v6572 = vsel %vm6446, 0, %v6570
        %v6573 = vmul.f32 %v6571, %v6571
        %v6574 = vmul.f32 %v6573, -0.001358992
        %v6575 = vadd.f32 %v6574, 0.041655596
        %v6576 = vmul.f32 %v6573, %v6575
        %v6577 = vadd.f32 %v6576, -0.4999988
        %v6578 = vmul.f32 %v6573, %v6577
        %v6579 = vadd.f32 1.0, %v6578
        %v6580 = vmul.f32 %v6571, %v6571
        %v6581 = vmul.f32 %v6580, -0.00019511016
        %v6582 = vadd.f32 %v6581, 0.008332121
        %v6583 = vmul.f32 %v6580, %v6582
        %v6584 = vadd.f32 %v6583, -0.16666654
        %v6585 = vmul.f32 %v6580, %v6584
        %v6586 = vadd.f32 %v6585, 1.0
        %v6587 = vmul.f32 %v6586, %v6571
        %vm6588 = vweird.f32 %v999
        %v6589 = vadd.s32 %v6572, 3
        %v6590 = vand.u32 %v6589, 3
        %vm6591 = vcmp.lt.s32.totalorder %v6590, 2
        %vm6592 = vcmp.eq.s32.totalorder %v6590, 0
        %v6593 = vxor.u32 %v6587, 2147483648
        %v6594 = vsel %vm6592, %v6579, %v6593
        %vm6595 = vcmp.eq.s32.totalorder %v6590, 2
        %v6596 = vxor.u32 %v6579, 2147483648
        %v6597 = vsel %vm6595, %v6596, %v6587
        %v6598 = vsel %vm6591, %v6594, %v6597
        %v6599 = vsel %vm6588, nan, %v6598
        %v6600 = vand.u32 2147483647, %v1000
        %vm6601 = vcmp.le.f32.partialorder %v6600, 0.7853982
        %vm6602 = vcmp.lt.s32.totalorder %v1000, 0
        %v6603 = vand.u32 %v1000, 2139095040
        %v6604 = vshrl.u32 %v6603, 23
        %v6605 = vsub.s32 %v6604, 127
        %v6606 = vand.u32 2147483647, %v1000
        %v6607 = vand.u32 %v6606, 8388607
        %v6608 = vor.u32 %v6607, 8388608
        %v6609 = vsub.s32 0, %v6608
        %v6610 = vadd.s32 %v6605, 1
        %vm6611 = vcmp.gt.s32.totalorder %v6610, 0
        %v6612 = vsel %vm6611, %v6610, 0
        %v6613 = vshrl.u32 %v6612, 5
        %v6614 = vand.u32 %v6612, 31
        %v6615 = vsub.s32 32, %v6614
        %v6616 = vshrl.u32 683565275, %v6615
        %v6617 = vshll.u32 683565275, %v6614
        %v6618 = vshrl.u32 2475754826, %v6615
        %v6619 = vor.u32 %v6617, %v6618
        %v6620 = vshll.u32 2475754826, %v6614
        %v6621 = vshrl.u32 2131351028, %v6615
        %v6622 = vor.u32 %v6620, %v6621
        %v6623 = vshll.u32 2131351028, %v6614
        %v6624 = vshrl.u32 2102212464, %v6615
        %v6625 = vor.u32 %v6623, %v6624
        %v6626 = vshll.u32 2102212464, %v6614
        %v6627 = vshrl.u32 920167782, %v6615
        %v6628 = vor.u32 %v6626, %v6627
        %v6629 = vshll.u32 920167782, %v6614
        %v6630 = vshrl.u32 1326507024, %v6615
        %v6631 = vor.u32 %v6629, %v6630
        %vm6632 = vcmp.lt.s32.totalorder %v6613, 1
        %vm6633 = vcmp.lt.s32.totalorder %v6613, 2
        %vm6634 = vcmp.lt.s32.totalorder %v6613, 3
        %vm6635 = vcmp.lt.s32.totalorder %v6613, 4
        %v6636 = vsel %vm6632, %v6616, %v6619
        %v6637 = vsel %vm6635, %v6625, 2102212464
        %v6638 = vsel %vm6634, %v6622, %v6637
        %v6639 = vsel %vm6633, %v6636, %v6638
        %v6640 = vsel %vm6632, %v6619, %v6622
        %v6641 = vsel %vm6635, %v6628, 920167782
        %v6642 = vsel %vm6634, %v6625, %v6641
        %v6643 = vsel %vm6633, %v6640, %v6642
        %v6644 = vsel %vm6632, %v6622, %v6625
        %v6645 = vsel %vm6635, %v6631, 1326507024
        %v6646 = vsel %vm6634, %v6628, %v6645
        %v6647 = vsel %vm6633, %v6644, %v6646
        %v6648 = vshll.u32 %v6608, 8
        %v6649 = vand.u32 %v6648, 65535
        %v6650 = vshrl.u32 %v6648, 16
        %v6651 = vand.u32 %v6647, 65535
        %v6652 = vshrl.u32 %v6647, 16
        %v6653 = vmul.u32 %v6649, %v6651
        %v6654 = vmul.u32 %v6649, %v6652
        %v6655 = vmul.u32 %v6650, %v6651
        %v6656 = vmul.u32 %v6650, %v6652
        %v6657 = vshll.u32 %v6654, 16
        %v6658 = vshrl.u32 %v6654, 16
        %v6659 = vshll.u32 %v6655, 16
        %v6660 = vshrl.u32 %v6655, 16
        %vm6661 = vc.u32 %v6653, %v6657
        %v6662 = vsel %vm6661, 1, 0
        %v6663 = vadd.s32 %v6653, %v6657
        %v6664 = vadd.s32 %v6656, %v6662
        %vm6665 = vc.u32 %v6663, %v6659
        %v6666 = vsel %vm6665, 1, 0
        %v6667 = vadd.s32 %v6663, %v6659
        %v6668 = vadd.s32 %v6664, %v6666
        %v6669 = vadd.s32 %v6668, %v6658
        %v6670 = vadd.s32 %v6669, %v6660
        %v6671 = vand.u32 %v6648, 65535
        %v6672 = vshrl.u32 %v6648, 16
        %v6673 = vand.u32 %v6643, 65535
        %v6674 = vshrl.u32 %v6643, 16
        %v6675 = vmul.u32 %v6671, %v6673
        %v6676 = vmul.u32 %v6671, %v6674
        %v6677 = vmul.u32 %v6672, %v6673
        %v6678 = vmul.u32 %v6672, %v6674
        %v6679 = vshll.u32 %v6676, 16
        %v6680 = vshrl.u32 %v6676, 16
        %v6681 = vshll.u32 %v6677, 16
        %v6682 = vshrl.u32 %v6677, 16
        %vm6683 = vc.u32 %v6675, %v6679
        %v6684 = vsel %vm6683, 1, 0
        %v6685 = vadd.s32 %v6675, %v6679
        %v6686 = vadd.s32 %v6678, %v6684
        %vm6687 = vc.u32 %v6685, %v6681
        %v6688 = vsel %vm6687, 1, 0
        %v6689 = vadd.s32 %v6685, %v6681
        %v6690 = vadd.s32 %v6686, %v6688
        %v6691 = vadd.s32 %v6690, %v6680
        %v6692 = vadd.s32 %v6691, %v6682
        %v6693 = vmul.u32 %v6648, %v6639
        %v6694 = vadd.s32 %v6670, %v6689
        %vm6695 = vc.u32 %v6670, %v6689
        %v6696 = vadd.s32 %v6692, 1
        %v6697 = vsel %vm6695, %v6696, %v6692
        %v6698 = vadd.s32 %v6693, %v6697
        %v6699 = vadd.s32 %v6698, 536870912
        %v6700 = vshrl.u32 %v6699, 30
        %v6701 = vshll.u32 %v6700, 30
        %v6702 = vsub.s32 %v6698, %v6701
        %vm6703 = vcmp.lt.s32.totalorder %v6702, 0
        %v6704 = vsub.s32 0, %v6702
        %v6705 = vsel %vm6703, %v6704, %v6702
        %v6706 = vclz %v6705
        %v6707 = vsub.s32 %v6706, 2
        %vm6708 = vcmp.gt.s32.totalorder 0, %v6707
        %v6709 = vsel %vm6708, 0, %v6707
        %v6710 = vsub.s32 32, %v6709
        %v6711 = vshll.u32 %v6702, %v6709
        %v6712 = vshrl.u32 %v6694, %v6710
        %v6713 = vor.u32 %v6711, %v6712
        %v6714 = vsub.s32 4294967266, %v6709
        %v6715 = vadd.s32 %v6714, 127
        %v6716 = vshll.u32 %v6715, 23
        %v6717 = vor.u32 4788187, %v6716
        %v6718 = vand.u32 2147483647, %v6717
        %v6720 = vcvt.s32.f32 %v6713
        %v6721 = vmul.f32 %v6720, %v6718
        %v6722 = vxor.u32 %v6721, 2147483648
        %v6723 = vsel %vm6602, %v6722, %v6721
        %v6724 = vsub.s32 4, %v6700
        %v6725 = vsel %vm6602, %v6724, %v6700
        %v6726 = vsel %vm6601, %v1000, %v6723
        %v6727 = vsel %vm6601, 0, %v6725
        %v6728 = vmul.f32 %v6726, %v6726
        %v6729 = vmul.f32 %v6728, -0.001358992
        %v6730 = vadd.f32 %v6729, 0.041655596
        %v6731 = vmul.f32 %v6728, %v6730
        %v6732 = vadd.f32 %v6731, -0.4999988
        %v6733 = vmul.f32 %v6728, %v6732
        %v6734 = vadd.f32 1.0, %v6733
        %v6735 = vmul.f32 %v6726, %v6726
        %v6736 = vmul.f32 %v6735, -0.00019511016
        %v6737 = vadd.f32 %v6736, 0.008332121
        %v6738 = vmul.f32 %v6735, %v6737
        %v6739 = vadd.f32 %v6738, -0.16666654
        %v6740 = vmul.f32 %v6735, %v6739
        %v6741 = vadd.f32 %v6740, 1.0
        %v6742 = vmul.f32 %v6741, %v6726
        %vm6743 = vweird.f32 %v1000
        %v6744 = vadd.s32 %v6727, 3
        %v6745 = vand.u32 %v6744, 3
        %vm6746 = vcmp.lt.s32.totalorder %v6745, 2
        %vm6747 = vcmp.eq.s32.totalorder %v6745, 0
        %v6748 = vxor.u32 %v6742, 2147483648
        %v6749 = vsel %vm6747, %v6734, %v6748
        %vm6750 = vcmp.eq.s32.totalorder %v6745, 2
        %v6751 = vxor.u32 %v6734, 2147483648
        %v6752 = vsel %vm6750, %v6751, %v6742
        %v6753 = vsel %vm6746, %v6749, %v6752
        %v6754 = vsel %vm6743, nan, %v6753
        %v6755 = vand.u32 2147483647, %v1001
        %vm6756 = vcmp.le.f32.partialorder %v6755, 0.7853982
        %vm6757 = vcmp.lt.s32.totalorder %v1001, 0
        %v6758 = vand.u32 %v1001, 2139095040
        %v6759 = vshrl.u32 %v6758, 23
        %v6760 = vsub.s32 %v6759, 127
        %v6761 = vand.u32 2147483647, %v1001
        %v6762 = vand.u32 %v6761, 8388607
        %v6763 = vor.u32 %v6762, 8388608
        %v6764 = vsub.s32 0, %v6763
        %v6765 = vadd.s32 %v6760, 1
        %vm6766 = vcmp.gt.s32.totalorder %v6765, 0
        %v6767 = vsel %vm6766, %v6765, 0
        %v6768 = vshrl.u32 %v6767, 5
        %v6769 = vand.u32 %v6767, 31
        %v6770 = vsub.s32 32, %v6769
        %v6771 = vshrl.u32 683565275, %v6770
        %v6772 = vshll.u32 683565275, %v6769
        %v6773 = vshrl.u32 2475754826, %v6770
        %v6774 = vor.u32 %v6772, %v6773
        %v6775 = vshll.u32 2475754826, %v6769
        %v6776 = vshrl.u32 2131351028, %v6770
        %v6777 = vor.u32 %v6775, %v6776
        %v6778 = vshll.u32 2131351028, %v6769
        %v6779 = vshrl.u32 2102212464, %v6770
        %v6780 = vor.u32 %v6778, %v6779
        %v6781 = vshll.u32 2102212464, %v6769
        %v6782 = vshrl.u32 920167782, %v6770
        %v6783 = vor.u32 %v6781, %v6782
        %v6784 = vshll.u32 920167782, %v6769
        %v6785 = vshrl.u32 1326507024, %v6770
        %v6786 = vor.u32 %v6784, %v6785
        %vm6787 = vcmp.lt.s32.totalorder %v6768, 1
        %vm6788 = vcmp.lt.s32.totalorder %v6768, 2
        %vm6789 = vcmp.lt.s32.totalorder %v6768, 3
        %vm6790 = vcmp.lt.s32.totalorder %v6768, 4
        %v6791 = vsel %vm6787, %v6771, %v6774
        %v6792 = vsel %vm6790, %v6780, 2102212464
        %v6793 = vsel %vm6789, %v6777, %v6792
        %v6794 = vsel %vm6788, %v6791, %v6793
        %v6795 = vsel %vm6787, %v6774, %v6777
        %v6796 = vsel %vm6790, %v6783, 920167782
        %v6797 = vsel %vm6789, %v6780, %v6796
        %v6798 = vsel %vm6788, %v6795, %v6797
        %v6799 = vsel %vm6787, %v6777, %v6780
        %v6800 = vsel %vm6790, %v6786, 1326507024
        %v6801 = vsel %vm6789, %v6783, %v6800
        %v6802 = vsel %vm6788, %v6799, %v6801
        %v6803 = vshll.u32 %v6763, 8
        %v6804 = vand.u32 %v6803, 65535
        %v6805 = vshrl.u32 %v6803, 16
        %v6806 = vand.u32 %v6802, 65535
        %v6807 = vshrl.u32 %v6802, 16
        %v6808 = vmul.u32 %v6804, %v6806
        %v6809 = vmul.u32 %v6804, %v6807
        %v6810 = vmul.u32 %v6805, %v6806
        %v6811 = vmul.u32 %v6805, %v6807
        %v6812 = vshll.u32 %v6809, 16
        %v6813 = vshrl.u32 %v6809, 16
        %v6814 = vshll.u32 %v6810, 16
        %v6815 = vshrl.u32 %v6810, 16
        %vm6816 = vc.u32 %v6808, %v6812
        %v6817 = vsel %vm6816, 1, 0
        %v6818 = vadd.s32 %v6808, %v6812
        %v6819 = vadd.s32 %v6811, %v6817
        %vm6820 = vc.u32 %v6818, %v6814
        %v6821 = vsel %vm6820, 1, 0
        %v6822 = vadd.s32 %v6818, %v6814
        %v6823 = vadd.s32 %v6819, %v6821
        %v6824 = vadd.s32 %v6823, %v6813
        %v6825 = vadd.s32 %v6824, %v6815
        %v6826 = vand.u32 %v6803, 65535
        %v6827 = vshrl.u32 %v6803, 16
        %v6828 = vand.u32 %v6798, 65535
        %v6829 = vshrl.u32 %v6798, 16
        %v6830 = vmul.u32 %v6826, %v6828
        %v6831 = vmul.u32 %v6826, %v6829
        %v6832 = vmul.u32 %v6827, %v6828
        %v6833 = vmul.u32 %v6827, %v6829
        %v6834 = vshll.u32 %v6831, 16
        %v6835 = vshrl.u32 %v6831, 16
        %v6836 = vshll.u32 %v6832, 16
        %v6837 = vshrl.u32 %v6832, 16
        %vm6838 = vc.u32 %v6830, %v6834
        %v6839 = vsel %vm6838, 1, 0
        %v6840 = vadd.s32 %v6830, %v6834
        %v6841 = vadd.s32 %v6833, %v6839
        %vm6842 = vc.u32 %v6840, %v6836
        %v6843 = vsel %vm6842, 1, 0
        %v6844 = vadd.s32 %v6840, %v6836
        %v6845 = vadd.s32 %v6841, %v6843
        %v6846 = vadd.s32 %v6845, %v6835
        %v6847 = vadd.s32 %v6846, %v6837
        %v6848 = vmul.u32 %v6803, %v6794
        %v6849 = vadd.s32 %v6825, %v6844
        %vm6850 = vc.u32 %v6825, %v6844
        %v6851 = vadd.s32 %v6847, 1
        %v6852 = vsel %vm6850, %v6851, %v6847
        %v6853 = vadd.s32 %v6848, %v6852
        %v6854 = vadd.s32 %v6853, 536870912
        %v6855 = vshrl.u32 %v6854, 30
        %v6856 = vshll.u32 %v6855, 30
        %v6857 = vsub.s32 %v6853, %v6856
        %vm6858 = vcmp.lt.s32.totalorder %v6857, 0
        %v6859 = vsub.s32 0, %v6857
        %v6860 = vsel %vm6858, %v6859, %v6857
        %v6861 = vclz %v6860
        %v6862 = vsub.s32 %v6861, 2
        %vm6863 = vcmp.gt.s32.totalorder 0, %v6862
        %v6864 = vsel %vm6863, 0, %v6862
        %v6865 = vsub.s32 32, %v6864
        %v6866 = vshll.u32 %v6857, %v6864
        %v6867 = vshrl.u32 %v6849, %v6865
        %v6868 = vor.u32 %v6866, %v6867
        %v6869 = vsub.s32 4294967266, %v6864
        %v6870 = vadd.s32 %v6869, 127
        %v6871 = vshll.u32 %v6870, 23
        %v6872 = vor.u32 4788187, %v6871
        %v6873 = vand.u32 2147483647, %v6872
        %v6875 = vcvt.s32.f32 %v6868
        %v6876 = vmul.f32 %v6875, %v6873
        %v6877 = vxor.u32 %v6876, 2147483648
        %v6878 = vsel %vm6757, %v6877, %v6876
        %v6879 = vsub.s32 4, %v6855
        %v6880 = vsel %vm6757, %v6879, %v6855
        %v6881 = vsel %vm6756, %v1001, %v6878
        %v6882 = vsel %vm6756, 0, %v6880
        %v6883 = vmul.f32 %v6881, %v6881
        %v6884 = vmul.f32 %v6883, -0.001358992
        %v6885 = vadd.f32 %v6884, 0.041655596
        %v6886 = vmul.f32 %v6883, %v6885
        %v6887 = vadd.f32 %v6886, -0.4999988
        %v6888 = vmul.f32 %v6883, %v6887
        %v6889 = vadd.f32 1.0, %v6888
        %v6890 = vmul.f32 %v6881, %v6881
        %v6891 = vmul.f32 %v6890, -0.00019511016
        %v6892 = vadd.f32 %v6891, 0.008332121
        %v6893 = vmul.f32 %v6890, %v6892
        %v6894 = vadd.f32 %v6893, -0.16666654
        %v6895 = vmul.f32 %v6890, %v6894
        %v6896 = vadd.f32 %v6895, 1.0
        %v6897 = vmul.f32 %v6896, %v6881
        %vm6898 = vweird.f32 %v1001
        %v6899 = vadd.s32 %v6882, 3
        %v6900 = vand.u32 %v6899, 3
        %vm6901 = vcmp.lt.s32.totalorder %v6900, 2
        %vm6902 = vcmp.eq.s32.totalorder %v6900, 0
        %v6903 = vxor.u32 %v6897, 2147483648
        %v6904 = vsel %vm6902, %v6889, %v6903
        %vm6905 = vcmp.eq.s32.totalorder %v6900, 2
        %v6906 = vxor.u32 %v6889, 2147483648
        %v6907 = vsel %vm6905, %v6906, %v6897
        %v6908 = vsel %vm6901, %v6904, %v6907
        %v6909 = vsel %vm6898, nan, %v6908
        %v6910 = vand.u32 2147483647, %v1002
        %vm6911 = vcmp.le.f32.partialorder %v6910, 0.7853982
        %vm6912 = vcmp.lt.s32.totalorder %v1002, 0
        %v6913 = vand.u32 %v1002, 2139095040
        %v6914 = vshrl.u32 %v6913, 23
        %v6915 = vsub.s32 %v6914, 127
        %v6916 = vand.u32 2147483647, %v1002
        %v6917 = vand.u32 %v6916, 8388607
        %v6918 = vor.u32 %v6917, 8388608
        %v6919 = vsub.s32 0, %v6918
        %v6920 = vadd.s32 %v6915, 1
        %vm6921 = vcmp.gt.s32.totalorder %v6920, 0
        %v6922 = vsel %vm6921, %v6920, 0
        %v6923 = vshrl.u32 %v6922, 5
        %v6924 = vand.u32 %v6922, 31
        %v6925 = vsub.s32 32, %v6924
        %v6926 = vshrl.u32 683565275, %v6925
        %v6927 = vshll.u32 683565275, %v6924
        %v6928 = vshrl.u32 2475754826, %v6925
        %v6929 = vor.u32 %v6927, %v6928
        %v6930 = vshll.u32 2475754826, %v6924
        %v6931 = vshrl.u32 2131351028, %v6925
        %v6932 = vor.u32 %v6930, %v6931
        %v6933 = vshll.u32 2131351028, %v6924
        %v6934 = vshrl.u32 2102212464, %v6925
        %v6935 = vor.u32 %v6933, %v6934
        %v6936 = vshll.u32 2102212464, %v6924
        %v6937 = vshrl.u32 920167782, %v6925
        %v6938 = vor.u32 %v6936, %v6937
        %v6939 = vshll.u32 920167782, %v6924
        %v6940 = vshrl.u32 1326507024, %v6925
        %v6941 = vor.u32 %v6939, %v6940
        %vm6942 = vcmp.lt.s32.totalorder %v6923, 1
        %vm6943 = vcmp.lt.s32.totalorder %v6923, 2
        %vm6944 = vcmp.lt.s32.totalorder %v6923, 3
        %vm6945 = vcmp.lt.s32.totalorder %v6923, 4
        %v6946 = vsel %vm6942, %v6926, %v6929
        %v6947 = vsel %vm6945, %v6935, 2102212464
        %v6948 = vsel %vm6944, %v6932, %v6947
        %v6949 = vsel %vm6943, %v6946, %v6948
        %v6950 = vsel %vm6942, %v6929, %v6932
        %v6951 = vsel %vm6945, %v6938, 920167782
        %v6952 = vsel %vm6944, %v6935, %v6951
        %v6953 = vsel %vm6943, %v6950, %v6952
        %v6954 = vsel %vm6942, %v6932, %v6935
        %v6955 = vsel %vm6945, %v6941, 1326507024
        %v6956 = vsel %vm6944, %v6938, %v6955
        %v6957 = vsel %vm6943, %v6954, %v6956
        %v6958 = vshll.u32 %v6918, 8
        %v6959 = vand.u32 %v6958, 65535
        %v6960 = vshrl.u32 %v6958, 16
        %v6961 = vand.u32 %v6957, 65535
        %v6962 = vshrl.u32 %v6957, 16
        %v6963 = vmul.u32 %v6959, %v6961
        %v6964 = vmul.u32 %v6959, %v6962
        %v6965 = vmul.u32 %v6960, %v6961
        %v6966 = vmul.u32 %v6960, %v6962
        %v6967 = vshll.u32 %v6964, 16
        %v6968 = vshrl.u32 %v6964, 16
        %v6969 = vshll.u32 %v6965, 16
        %v6970 = vshrl.u32 %v6965, 16
        %vm6971 = vc.u32 %v6963, %v6967
        %v6972 = vsel %vm6971, 1, 0
        %v6973 = vadd.s32 %v6963, %v6967
        %v6974 = vadd.s32 %v6966, %v6972
        %vm6975 = vc.u32 %v6973, %v6969
        %v6976 = vsel %vm6975, 1, 0
        %v6977 = vadd.s32 %v6973, %v6969
        %v6978 = vadd.s32 %v6974, %v6976
        %v6979 = vadd.s32 %v6978, %v6968
        %v6980 = vadd.s32 %v6979, %v6970
        %v6981 = vand.u32 %v6958, 65535
        %v6982 = vshrl.u32 %v6958, 16
        %v6983 = vand.u32 %v6953, 65535
        %v6984 = vshrl.u32 %v6953, 16
        %v6985 = vmul.u32 %v6981, %v6983
        %v6986 = vmul.u32 %v6981, %v6984
        %v6987 = vmul.u32 %v6982, %v6983
        %v6988 = vmul.u32 %v6982, %v6984
        %v6989 = vshll.u32 %v6986, 16
        %v6990 = vshrl.u32 %v6986, 16
        %v6991 = vshll.u32 %v6987, 16
        %v6992 = vshrl.u32 %v6987, 16
        %vm6993 = vc.u32 %v6985, %v6989
        %v6994 = vsel %vm6993, 1, 0
        %v6995 = vadd.s32 %v6985, %v6989
        %v6996 = vadd.s32 %v6988, %v6994
        %vm6997 = vc.u32 %v6995, %v6991
        %v6998 = vsel %vm6997, 1, 0
        %v6999 = vadd.s32 %v6995, %v6991
        %v7000 = vadd.s32 %v6996, %v6998
        %v7001 = vadd.s32 %v7000, %v6990
        %v7002 = vadd.s32 %v7001, %v6992
        %v7003 = vmul.u32 %v6958, %v6949
        %v7004 = vadd.s32 %v6980, %v6999
        %vm7005 = vc.u32 %v6980, %v6999
        %v7006 = vadd.s32 %v7002, 1
        %v7007 = vsel %vm7005, %v7006, %v7002
        %v7008 = vadd.s32 %v7003, %v7007
        %v7009 = vadd.s32 %v7008, 536870912
        %v7010 = vshrl.u32 %v7009, 30
        %v7011 = vshll.u32 %v7010, 30
        %v7012 = vsub.s32 %v7008, %v7011
        %vm7013 = vcmp.lt.s32.totalorder %v7012, 0
        %v7014 = vsub.s32 0, %v7012
        %v7015 = vsel %vm7013, %v7014, %v7012
        %v7016 = vclz %v7015
        %v7017 = vsub.s32 %v7016, 2
        %vm7018 = vcmp.gt.s32.totalorder 0, %v7017
        %v7019 = vsel %vm7018, 0, %v7017
        %v7020 = vsub.s32 32, %v7019
        %v7021 = vshll.u32 %v7012, %v7019
        %v7022 = vshrl.u32 %v7004, %v7020
        %v7023 = vor.u32 %v7021, %v7022
        %v7024 = vsub.s32 4294967266, %v7019
        %v7025 = vadd.s32 %v7024, 127
        %v7026 = vshll.u32 %v7025, 23
        %v7027 = vor.u32 4788187, %v7026
        %v7028 = vand.u32 2147483647, %v7027
        %v7030 = vcvt.s32.f32 %v7023
        %v7031 = vmul.f32 %v7030, %v7028
        %v7032 = vxor.u32 %v7031, 2147483648
        %v7033 = vsel %vm6912, %v7032, %v7031
        %v7034 = vsub.s32 4, %v7010
        %v7035 = vsel %vm6912, %v7034, %v7010
        %v7036 = vsel %vm6911, %v1002, %v7033
        %v7037 = vsel %vm6911, 0, %v7035
        %v7038 = vmul.f32 %v7036, %v7036
        %v7039 = vmul.f32 %v7038, -0.001358992
        %v7040 = vadd.f32 %v7039, 0.041655596
        %v7041 = vmul.f32 %v7038, %v7040
        %v7042 = vadd.f32 %v7041, -0.4999988
        %v7043 = vmul.f32 %v7038, %v7042
        %v7044 = vadd.f32 1.0, %v7043
        %v7045 = vmul.f32 %v7036, %v7036
        %v7046 = vmul.f32 %v7045, -0.00019511016
        %v7047 = vadd.f32 %v7046, 0.008332121
        %v7048 = vmul.f32 %v7045, %v7047
        %v7049 = vadd.f32 %v7048, -0.16666654
        %v7050 = vmul.f32 %v7045, %v7049
        %v7051 = vadd.f32 %v7050, 1.0
        %v7052 = vmul.f32 %v7051, %v7036
        %vm7053 = vweird.f32 %v1002
        %v7054 = vadd.s32 %v7037, 3
        %v7055 = vand.u32 %v7054, 3
        %vm7056 = vcmp.lt.s32.totalorder %v7055, 2
        %vm7057 = vcmp.eq.s32.totalorder %v7055, 0
        %v7058 = vxor.u32 %v7052, 2147483648
        %v7059 = vsel %vm7057, %v7044, %v7058
        %vm7060 = vcmp.eq.s32.totalorder %v7055, 2
        %v7061 = vxor.u32 %v7044, 2147483648
        %v7062 = vsel %vm7060, %v7061, %v7052
        %v7063 = vsel %vm7056, %v7059, %v7062
        %v7064 = vsel %vm7053, nan, %v7063
        %v7065 = vand.u32 2147483647, %v1003
        %vm7066 = vcmp.le.f32.partialorder %v7065, 0.7853982
        %vm7067 = vcmp.lt.s32.totalorder %v1003, 0
        %v7068 = vand.u32 %v1003, 2139095040
        %v7069 = vshrl.u32 %v7068, 23
        %v7070 = vsub.s32 %v7069, 127
        %v7071 = vand.u32 2147483647, %v1003
        %v7072 = vand.u32 %v7071, 8388607
        %v7073 = vor.u32 %v7072, 8388608
        %v7074 = vsub.s32 0, %v7073
        %v7075 = vadd.s32 %v7070, 1
        %vm7076 = vcmp.gt.s32.totalorder %v7075, 0
        %v7077 = vsel %vm7076, %v7075, 0
        %v7078 = vshrl.u32 %v7077, 5
        %v7079 = vand.u32 %v7077, 31
        %v7080 = vsub.s32 32, %v7079
        %v7081 = vshrl.u32 683565275, %v7080
        %v7082 = vshll.u32 683565275, %v7079
        %v7083 = vshrl.u32 2475754826, %v7080
        %v7084 = vor.u32 %v7082, %v7083
        %v7085 = vshll.u32 2475754826, %v7079
        %v7086 = vshrl.u32 2131351028, %v7080
        %v7087 = vor.u32 %v7085, %v7086
        %v7088 = vshll.u32 2131351028, %v7079
        %v7089 = vshrl.u32 2102212464, %v7080
        %v7090 = vor.u32 %v7088, %v7089
        %v7091 = vshll.u32 2102212464, %v7079
        %v7092 = vshrl.u32 920167782, %v7080
        %v7093 = vor.u32 %v7091, %v7092
        %v7094 = vshll.u32 920167782, %v7079
        %v7095 = vshrl.u32 1326507024, %v7080
        %v7096 = vor.u32 %v7094, %v7095
        %vm7097 = vcmp.lt.s32.totalorder %v7078, 1
        %vm7098 = vcmp.lt.s32.totalorder %v7078, 2
        %vm7099 = vcmp.lt.s32.totalorder %v7078, 3
        %vm7100 = vcmp.lt.s32.totalorder %v7078, 4
        %v7101 = vsel %vm7097, %v7081, %v7084
        %v7102 = vsel %vm7100, %v7090, 2102212464
        %v7103 = vsel %vm7099, %v7087, %v7102
        %v7104 = vsel %vm7098, %v7101, %v7103
        %v7105 = vsel %vm7097, %v7084, %v7087
        %v7106 = vsel %vm7100, %v7093, 920167782
        %v7107 = vsel %vm7099, %v7090, %v7106
        %v7108 = vsel %vm7098, %v7105, %v7107
        %v7109 = vsel %vm7097, %v7087, %v7090
        %v7110 = vsel %vm7100, %v7096, 1326507024
        %v7111 = vsel %vm7099, %v7093, %v7110
        %v7112 = vsel %vm7098, %v7109, %v7111
        %v7113 = vshll.u32 %v7073, 8
        %v7114 = vand.u32 %v7113, 65535
        %v7115 = vshrl.u32 %v7113, 16
        %v7116 = vand.u32 %v7112, 65535
        %v7117 = vshrl.u32 %v7112, 16
        %v7118 = vmul.u32 %v7114, %v7116
        %v7119 = vmul.u32 %v7114, %v7117
        %v7120 = vmul.u32 %v7115, %v7116
        %v7121 = vmul.u32 %v7115, %v7117
        %v7122 = vshll.u32 %v7119, 16
        %v7123 = vshrl.u32 %v7119, 16
        %v7124 = vshll.u32 %v7120, 16
        %v7125 = vshrl.u32 %v7120, 16
        %vm7126 = vc.u32 %v7118, %v7122
        %v7127 = vsel %vm7126, 1, 0
        %v7128 = vadd.s32 %v7118, %v7122
        %v7129 = vadd.s32 %v7121, %v7127
        %vm7130 = vc.u32 %v7128, %v7124
        %v7131 = vsel %vm7130, 1, 0
        %v7132 = vadd.s32 %v7128, %v7124
        %v7133 = vadd.s32 %v7129, %v7131
        %v7134 = vadd.s32 %v7133, %v7123
        %v7135 = vadd.s32 %v7134, %v7125
        %v7136 = vand.u32 %v7113, 65535
        %v7137 = vshrl.u32 %v7113, 16
        %v7138 = vand.u32 %v7108, 65535
        %v7139 = vshrl.u32 %v7108, 16
        %v7140 = vmul.u32 %v7136, %v7138
        %v7141 = vmul.u32 %v7136, %v7139
        %v7142 = vmul.u32 %v7137, %v7138
        %v7143 = vmul.u32 %v7137, %v7139
        %v7144 = vshll.u32 %v7141, 16
        %v7145 = vshrl.u32 %v7141, 16
        %v7146 = vshll.u32 %v7142, 16
        %v7147 = vshrl.u32 %v7142, 16
        %vm7148 = vc.u32 %v7140, %v7144
        %v7149 = vsel %vm7148, 1, 0
        %v7150 = vadd.s32 %v7140, %v7144
        %v7151 = vadd.s32 %v7143, %v7149
        %vm7152 = vc.u32 %v7150, %v7146
        %v7153 = vsel %vm7152, 1, 0
        %v7154 = vadd.s32 %v7150, %v7146
        %v7155 = vadd.s32 %v7151, %v7153
        %v7156 = vadd.s32 %v7155, %v7145
        %v7157 = vadd.s32 %v7156, %v7147
        %v7158 = vmul.u32 %v7113, %v7104
        %v7159 = vadd.s32 %v7135, %v7154
        %vm7160 = vc.u32 %v7135, %v7154
        %v7161 = vadd.s32 %v7157, 1
        %v7162 = vsel %vm7160, %v7161, %v7157
        %v7163 = vadd.s32 %v7158, %v7162
        %v7164 = vadd.s32 %v7163, 536870912
        %v7165 = vshrl.u32 %v7164, 30
        %v7166 = vshll.u32 %v7165, 30
        %v7167 = vsub.s32 %v7163, %v7166
        %vm7168 = vcmp.lt.s32.totalorder %v7167, 0
        %v7169 = vsub.s32 0, %v7167
        %v7170 = vsel %vm7168, %v7169, %v7167
        %v7171 = vclz %v7170
        %v7172 = vsub.s32 %v7171, 2
        %vm7173 = vcmp.gt.s32.totalorder 0, %v7172
        %v7174 = vsel %vm7173, 0, %v7172
        %v7175 = vsub.s32 32, %v7174
        %v7176 = vshll.u32 %v7167, %v7174
        %v7177 = vshrl.u32 %v7159, %v7175
        %v7178 = vor.u32 %v7176, %v7177
        %v7179 = vsub.s32 4294967266, %v7174
        %v7180 = vadd.s32 %v7179, 127
        %v7181 = vshll.u32 %v7180, 23
        %v7182 = vor.u32 4788187, %v7181
        %v7183 = vand.u32 2147483647, %v7182
        %v7185 = vcvt.s32.f32 %v7178
        %v7186 = vmul.f32 %v7185, %v7183
        %v7187 = vxor.u32 %v7186, 2147483648
        %v7188 = vsel %vm7067, %v7187, %v7186
        %v7189 = vsub.s32 4, %v7165
        %v7190 = vsel %vm7067, %v7189, %v7165
        %v7191 = vsel %vm7066, %v1003, %v7188
        %v7192 = vsel %vm7066, 0, %v7190
        %v7193 = vmul.f32 %v7191, %v7191
        %v7194 = vmul.f32 %v7193, -0.001358992
        %v7195 = vadd.f32 %v7194, 0.041655596
        %v7196 = vmul.f32 %v7193, %v7195
        %v7197 = vadd.f32 %v7196, -0.4999988
        %v7198 = vmul.f32 %v7193, %v7197
        %v7199 = vadd.f32 1.0, %v7198
        %v7200 = vmul.f32 %v7191, %v7191
        %v7201 = vmul.f32 %v7200, -0.00019511016
        %v7202 = vadd.f32 %v7201, 0.008332121
        %v7203 = vmul.f32 %v7200, %v7202
        %v7204 = vadd.f32 %v7203, -0.16666654
        %v7205 = vmul.f32 %v7200, %v7204
        %v7206 = vadd.f32 %v7205, 1.0
        %v7207 = vmul.f32 %v7206, %v7191
        %vm7208 = vweird.f32 %v1003
        %v7209 = vadd.s32 %v7192, 3
        %v7210 = vand.u32 %v7209, 3
        %vm7211 = vcmp.lt.s32.totalorder %v7210, 2
        %vm7212 = vcmp.eq.s32.totalorder %v7210, 0
        %v7213 = vxor.u32 %v7207, 2147483648
        %v7214 = vsel %vm7212, %v7199, %v7213
        %vm7215 = vcmp.eq.s32.totalorder %v7210, 2
        %v7216 = vxor.u32 %v7199, 2147483648
        %v7217 = vsel %vm7215, %v7216, %v7207
        %v7218 = vsel %vm7211, %v7214, %v7217
        %v7219 = vsel %vm7208, nan, %v7218
        %v7220 = vand.u32 2147483647, %v1004
        %vm7221 = vcmp.le.f32.partialorder %v7220, 0.7853982
        %vm7222 = vcmp.lt.s32.totalorder %v1004, 0
        %v7223 = vand.u32 %v1004, 2139095040
        %v7224 = vshrl.u32 %v7223, 23
        %v7225 = vsub.s32 %v7224, 127
        %v7226 = vand.u32 2147483647, %v1004
        %v7227 = vand.u32 %v7226, 8388607
        %v7228 = vor.u32 %v7227, 8388608
        %v7229 = vsub.s32 0, %v7228
        %v7230 = vadd.s32 %v7225, 1
        %vm7231 = vcmp.gt.s32.totalorder %v7230, 0
        %v7232 = vsel %vm7231, %v7230, 0
        %v7233 = vshrl.u32 %v7232, 5
        %v7234 = vand.u32 %v7232, 31
        %v7235 = vsub.s32 32, %v7234
        %v7236 = vshrl.u32 683565275, %v7235
        %v7237 = vshll.u32 683565275, %v7234
        %v7238 = vshrl.u32 2475754826, %v7235
        %v7239 = vor.u32 %v7237, %v7238
        %v7240 = vshll.u32 2475754826, %v7234
        %v7241 = vshrl.u32 2131351028, %v7235
        %v7242 = vor.u32 %v7240, %v7241
        %v7243 = vshll.u32 2131351028, %v7234
        %v7244 = vshrl.u32 2102212464, %v7235
        %v7245 = vor.u32 %v7243, %v7244
        %v7246 = vshll.u32 2102212464, %v7234
        %v7247 = vshrl.u32 920167782, %v7235
        %v7248 = vor.u32 %v7246, %v7247
        %v7249 = vshll.u32 920167782, %v7234
        %v7250 = vshrl.u32 1326507024, %v7235
        %v7251 = vor.u32 %v7249, %v7250
        %vm7252 = vcmp.lt.s32.totalorder %v7233, 1
        %vm7253 = vcmp.lt.s32.totalorder %v7233, 2
        %vm7254 = vcmp.lt.s32.totalorder %v7233, 3
        %vm7255 = vcmp.lt.s32.totalorder %v7233, 4
        %v7256 = vsel %vm7252, %v7236, %v7239
        %v7257 = vsel %vm7255, %v7245, 2102212464
        %v7258 = vsel %vm7254, %v7242, %v7257
        %v7259 = vsel %vm7253, %v7256, %v7258
        %v7260 = vsel %vm7252, %v7239, %v7242
        %v7261 = vsel %vm7255, %v7248, 920167782
        %v7262 = vsel %vm7254, %v7245, %v7261
        %v7263 = vsel %vm7253, %v7260, %v7262
        %v7264 = vsel %vm7252, %v7242, %v7245
        %v7265 = vsel %vm7255, %v7251, 1326507024
        %v7266 = vsel %vm7254, %v7248, %v7265
        %v7267 = vsel %vm7253, %v7264, %v7266
        %v7268 = vshll.u32 %v7228, 8
        %v7269 = vand.u32 %v7268, 65535
        %v7270 = vshrl.u32 %v7268, 16
        %v7271 = vand.u32 %v7267, 65535
        %v7272 = vshrl.u32 %v7267, 16
        %v7273 = vmul.u32 %v7269, %v7271
        %v7274 = vmul.u32 %v7269, %v7272
        %v7275 = vmul.u32 %v7270, %v7271
        %v7276 = vmul.u32 %v7270, %v7272
        %v7277 = vshll.u32 %v7274, 16
        %v7278 = vshrl.u32 %v7274, 16
        %v7279 = vshll.u32 %v7275, 16
        %v7280 = vshrl.u32 %v7275, 16
        %vm7281 = vc.u32 %v7273, %v7277
        %v7282 = vsel %vm7281, 1, 0
        %v7283 = vadd.s32 %v7273, %v7277
        %v7284 = vadd.s32 %v7276, %v7282
        %vm7285 = vc.u32 %v7283, %v7279
        %v7286 = vsel %vm7285, 1, 0
        %v7287 = vadd.s32 %v7283, %v7279
        %v7288 = vadd.s32 %v7284, %v7286
        %v7289 = vadd.s32 %v7288, %v7278
        %v7290 = vadd.s32 %v7289, %v7280
        %v7291 = vand.u32 %v7268, 65535
        %v7292 = vshrl.u32 %v7268, 16
        %v7293 = vand.u32 %v7263, 65535
        %v7294 = vshrl.u32 %v7263, 16
        %v7295 = vmul.u32 %v7291, %v7293
        %v7296 = vmul.u32 %v7291, %v7294
        %v7297 = vmul.u32 %v7292, %v7293
        %v7298 = vmul.u32 %v7292, %v7294
        %v7299 = vshll.u32 %v7296, 16
        %v7300 = vshrl.u32 %v7296, 16
        %v7301 = vshll.u32 %v7297, 16
        %v7302 = vshrl.u32 %v7297, 16
        %vm7303 = vc.u32 %v7295, %v7299
        %v7304 = vsel %vm7303, 1, 0
        %v7305 = vadd.s32 %v7295, %v7299
        %v7306 = vadd.s32 %v7298, %v7304
        %vm7307 = vc.u32 %v7305, %v7301
        %v7308 = vsel %vm7307, 1, 0
        %v7309 = vadd.s32 %v7305, %v7301
        %v7310 = vadd.s32 %v7306, %v7308
        %v7311 = vadd.s32 %v7310, %v7300
        %v7312 = vadd.s32 %v7311, %v7302
        %v7313 = vmul.u32 %v7268, %v7259
        %v7314 = vadd.s32 %v7290, %v7309
        %vm7315 = vc.u32 %v7290, %v7309
        %v7316 = vadd.s32 %v7312, 1
        %v7317 = vsel %vm7315, %v7316, %v7312
        %v7318 = vadd.s32 %v7313, %v7317
        %v7319 = vadd.s32 %v7318, 536870912
        %v7320 = vshrl.u32 %v7319, 30
        %v7321 = vshll.u32 %v7320, 30
        %v7322 = vsub.s32 %v7318, %v7321
        %vm7323 = vcmp.lt.s32.totalorder %v7322, 0
        %v7324 = vsub.s32 0, %v7322
        %v7325 = vsel %vm7323, %v7324, %v7322
        %v7326 = vclz %v7325
        %v7327 = vsub.s32 %v7326, 2
        %vm7328 = vcmp.gt.s32.totalorder 0, %v7327
        %v7329 = vsel %vm7328, 0, %v7327
        %v7330 = vsub.s32 32, %v7329
        %v7331 = vshll.u32 %v7322, %v7329
        %v7332 = vshrl.u32 %v7314, %v7330
        %v7333 = vor.u32 %v7331, %v7332
        %v7334 = vsub.s32 4294967266, %v7329
        %v7335 = vadd.s32 %v7334, 127
        %v7336 = vshll.u32 %v7335, 23
        %v7337 = vor.u32 4788187, %v7336
        %v7338 = vand.u32 2147483647, %v7337
        %v7340 = vcvt.s32.f32 %v7333
        %v7341 = vmul.f32 %v7340, %v7338
        %v7342 = vxor.u32 %v7341, 2147483648
        %v7343 = vsel %vm7222, %v7342, %v7341
        %v7344 = vsub.s32 4, %v7320
        %v7345 = vsel %vm7222, %v7344, %v7320
        %v7346 = vsel %vm7221, %v1004, %v7343
        %v7347 = vsel %vm7221, 0, %v7345
        %v7348 = vmul.f32 %v7346, %v7346
        %v7349 = vmul.f32 %v7348, -0.001358992
        %v7350 = vadd.f32 %v7349, 0.041655596
        %v7351 = vmul.f32 %v7348, %v7350
        %v7352 = vadd.f32 %v7351, -0.4999988
        %v7353 = vmul.f32 %v7348, %v7352
        %v7354 = vadd.f32 1.0, %v7353
        %v7355 = vmul.f32 %v7346, %v7346
        %v7356 = vmul.f32 %v7355, -0.00019511016
        %v7357 = vadd.f32 %v7356, 0.008332121
        %v7358 = vmul.f32 %v7355, %v7357
        %v7359 = vadd.f32 %v7358, -0.16666654
        %v7360 = vmul.f32 %v7355, %v7359
        %v7361 = vadd.f32 %v7360, 1.0
        %v7362 = vmul.f32 %v7361, %v7346
        %vm7363 = vweird.f32 %v1004
        %v7364 = vadd.s32 %v7347, 3
        %v7365 = vand.u32 %v7364, 3
        %vm7366 = vcmp.lt.s32.totalorder %v7365, 2
        %vm7367 = vcmp.eq.s32.totalorder %v7365, 0
        %v7368 = vxor.u32 %v7362, 2147483648
        %v7369 = vsel %vm7367, %v7354, %v7368
        %vm7370 = vcmp.eq.s32.totalorder %v7365, 2
        %v7371 = vxor.u32 %v7354, 2147483648
        %v7372 = vsel %vm7370, %v7371, %v7362
        %v7373 = vsel %vm7366, %v7369, %v7372
        %v7374 = vsel %vm7363, nan, %v7373
        %v7375 = vand.u32 2147483647, %v1005
        %vm7376 = vcmp.le.f32.partialorder %v7375, 0.7853982
        %vm7377 = vcmp.lt.s32.totalorder %v1005, 0
        %v7378 = vand.u32 %v1005, 2139095040
        %v7379 = vshrl.u32 %v7378, 23
        %v7380 = vsub.s32 %v7379, 127
        %v7381 = vand.u32 2147483647, %v1005
        %v7382 = vand.u32 %v7381, 8388607
        %v7383 = vor.u32 %v7382, 8388608
        %v7384 = vsub.s32 0, %v7383
        %v7385 = vadd.s32 %v7380, 1
        %vm7386 = vcmp.gt.s32.totalorder %v7385, 0
        %v7387 = vsel %vm7386, %v7385, 0
        %v7388 = vshrl.u32 %v7387, 5
        %v7389 = vand.u32 %v7387, 31
        %v7390 = vsub.s32 32, %v7389
        %v7391 = vshrl.u32 683565275, %v7390
        %v7392 = vshll.u32 683565275, %v7389
        %v7393 = vshrl.u32 2475754826, %v7390
        %v7394 = vor.u32 %v7392, %v7393
        %v7395 = vshll.u32 2475754826, %v7389
        %v7396 = vshrl.u32 2131351028, %v7390
        %v7397 = vor.u32 %v7395, %v7396
        %v7398 = vshll.u32 2131351028, %v7389
        %v7399 = vshrl.u32 2102212464, %v7390
        %v7400 = vor.u32 %v7398, %v7399
        %v7401 = vshll.u32 2102212464, %v7389
        %v7402 = vshrl.u32 920167782, %v7390
        %v7403 = vor.u32 %v7401, %v7402
        %v7404 = vshll.u32 920167782, %v7389
        %v7405 = vshrl.u32 1326507024, %v7390
        %v7406 = vor.u32 %v7404, %v7405
        %vm7407 = vcmp.lt.s32.totalorder %v7388, 1
        %vm7408 = vcmp.lt.s32.totalorder %v7388, 2
        %vm7409 = vcmp.lt.s32.totalorder %v7388, 3
        %vm7410 = vcmp.lt.s32.totalorder %v7388, 4
        %v7411 = vsel %vm7407, %v7391, %v7394
        %v7412 = vsel %vm7410, %v7400, 2102212464
        %v7413 = vsel %vm7409, %v7397, %v7412
        %v7414 = vsel %vm7408, %v7411, %v7413
        %v7415 = vsel %vm7407, %v7394, %v7397
        %v7416 = vsel %vm7410, %v7403, 920167782
        %v7417 = vsel %vm7409, %v7400, %v7416
        %v7418 = vsel %vm7408, %v7415, %v7417
        %v7419 = vsel %vm7407, %v7397, %v7400
        %v7420 = vsel %vm7410, %v7406, 1326507024
        %v7421 = vsel %vm7409, %v7403, %v7420
        %v7422 = vsel %vm7408, %v7419, %v7421
        %v7423 = vshll.u32 %v7383, 8
        %v7424 = vand.u32 %v7423, 65535
        %v7425 = vshrl.u32 %v7423, 16
        %v7426 = vand.u32 %v7422, 65535
        %v7427 = vshrl.u32 %v7422, 16
        %v7428 = vmul.u32 %v7424, %v7426
        %v7429 = vmul.u32 %v7424, %v7427
        %v7430 = vmul.u32 %v7425, %v7426
        %v7431 = vmul.u32 %v7425, %v7427
        %v7432 = vshll.u32 %v7429, 16
        %v7433 = vshrl.u32 %v7429, 16
        %v7434 = vshll.u32 %v7430, 16
        %v7435 = vshrl.u32 %v7430, 16
        %vm7436 = vc.u32 %v7428, %v7432
        %v7437 = vsel %vm7436, 1, 0
        %v7438 = vadd.s32 %v7428, %v7432
        %v7439 = vadd.s32 %v7431, %v7437
        %vm7440 = vc.u32 %v7438, %v7434
        %v7441 = vsel %vm7440, 1, 0
        %v7442 = vadd.s32 %v7438, %v7434
        %v7443 = vadd.s32 %v7439, %v7441
        %v7444 = vadd.s32 %v7443, %v7433
        %v7445 = vadd.s32 %v7444, %v7435
        %v7446 = vand.u32 %v7423, 65535
        %v7447 = vshrl.u32 %v7423, 16
        %v7448 = vand.u32 %v7418, 65535
        %v7449 = vshrl.u32 %v7418, 16
        %v7450 = vmul.u32 %v7446, %v7448
        %v7451 = vmul.u32 %v7446, %v7449
        %v7452 = vmul.u32 %v7447, %v7448
        %v7453 = vmul.u32 %v7447, %v7449
        %v7454 = vshll.u32 %v7451, 16
        %v7455 = vshrl.u32 %v7451, 16
        %v7456 = vshll.u32 %v7452, 16
        %v7457 = vshrl.u32 %v7452, 16
        %vm7458 = vc.u32 %v7450, %v7454
        %v7459 = vsel %vm7458, 1, 0
        %v7460 = vadd.s32 %v7450, %v7454
        %v7461 = vadd.s32 %v7453, %v7459
        %vm7462 = vc.u32 %v7460, %v7456
        %v7463 = vsel %vm7462, 1, 0
        %v7464 = vadd.s32 %v7460, %v7456
        %v7465 = vadd.s32 %v7461, %v7463
        %v7466 = vadd.s32 %v7465, %v7455
        %v7467 = vadd.s32 %v7466, %v7457
        %v7468 = vmul.u32 %v7423, %v7414
        %v7469 = vadd.s32 %v7445, %v7464
        %vm7470 = vc.u32 %v7445, %v7464
        %v7471 = vadd.s32 %v7467, 1
        %v7472 = vsel %vm7470, %v7471, %v7467
        %v7473 = vadd.s32 %v7468, %v7472
        %v7474 = vadd.s32 %v7473, 536870912
        %v7475 = vshrl.u32 %v7474, 30
        %v7476 = vshll.u32 %v7475, 30
        %v7477 = vsub.s32 %v7473, %v7476
        %vm7478 = vcmp.lt.s32.totalorder %v7477, 0
        %v7479 = vsub.s32 0, %v7477
        %v7480 = vsel %vm7478, %v7479, %v7477
        %v7481 = vclz %v7480
        %v7482 = vsub.s32 %v7481, 2
        %vm7483 = vcmp.gt.s32.totalorder 0, %v7482
        %v7484 = vsel %vm7483, 0, %v7482
        %v7485 = vsub.s32 32, %v7484
        %v7486 = vshll.u32 %v7477, %v7484
        %v7487 = vshrl.u32 %v7469, %v7485
        %v7488 = vor.u32 %v7486, %v7487
        %v7489 = vsub.s32 4294967266, %v7484
        %v7490 = vadd.s32 %v7489, 127
        %v7491 = vshll.u32 %v7490, 23
        %v7492 = vor.u32 4788187, %v7491
        %v7493 = vand.u32 2147483647, %v7492
        %v7495 = vcvt.s32.f32 %v7488
        %v7496 = vmul.f32 %v7495, %v7493
        %v7497 = vxor.u32 %v7496, 2147483648
        %v7498 = vsel %vm7377, %v7497, %v7496
        %v7499 = vsub.s32 4, %v7475
        %v7500 = vsel %vm7377, %v7499, %v7475
        %v7501 = vsel %vm7376, %v1005, %v7498
        %v7502 = vsel %vm7376, 0, %v7500
        %v7503 = vmul.f32 %v7501, %v7501
        %v7504 = vmul.f32 %v7503, -0.001358992
        %v7505 = vadd.f32 %v7504, 0.041655596
        %v7506 = vmul.f32 %v7503, %v7505
        %v7507 = vadd.f32 %v7506, -0.4999988
        %v7508 = vmul.f32 %v7503, %v7507
        %v7509 = vadd.f32 1.0, %v7508
        %v7510 = vmul.f32 %v7501, %v7501
        %v7511 = vmul.f32 %v7510, -0.00019511016
        %v7512 = vadd.f32 %v7511, 0.008332121
        %v7513 = vmul.f32 %v7510, %v7512
        %v7514 = vadd.f32 %v7513, -0.16666654
        %v7515 = vmul.f32 %v7510, %v7514
        %v7516 = vadd.f32 %v7515, 1.0
        %v7517 = vmul.f32 %v7516, %v7501
        %vm7518 = vweird.f32 %v1005
        %v7519 = vadd.s32 %v7502, 3
        %v7520 = vand.u32 %v7519, 3
        %vm7521 = vcmp.lt.s32.totalorder %v7520, 2
        %vm7522 = vcmp.eq.s32.totalorder %v7520, 0
        %v7523 = vxor.u32 %v7517, 2147483648
        %v7524 = vsel %vm7522, %v7509, %v7523
        %vm7525 = vcmp.eq.s32.totalorder %v7520, 2
        %v7526 = vxor.u32 %v7509, 2147483648
        %v7527 = vsel %vm7525, %v7526, %v7517
        %v7528 = vsel %vm7521, %v7524, %v7527
        %v7529 = vsel %vm7518, nan, %v7528
        %v7530 = vand.u32 2147483647, %v1006
        %vm7531 = vcmp.le.f32.partialorder %v7530, 0.7853982
        %vm7532 = vcmp.lt.s32.totalorder %v1006, 0
        %v7533 = vand.u32 %v1006, 2139095040
        %v7534 = vshrl.u32 %v7533, 23
        %v7535 = vsub.s32 %v7534, 127
        %v7536 = vand.u32 2147483647, %v1006
        %v7537 = vand.u32 %v7536, 8388607
        %v7538 = vor.u32 %v7537, 8388608
        %v7539 = vsub.s32 0, %v7538
        %v7540 = vadd.s32 %v7535, 1
        %vm7541 = vcmp.gt.s32.totalorder %v7540, 0
        %v7542 = vsel %vm7541, %v7540, 0
        %v7543 = vshrl.u32 %v7542, 5
        %v7544 = vand.u32 %v7542, 31
        %v7545 = vsub.s32 32, %v7544
        %v7546 = vshrl.u32 683565275, %v7545
        %v7547 = vshll.u32 683565275, %v7544
        %v7548 = vshrl.u32 2475754826, %v7545
        %v7549 = vor.u32 %v7547, %v7548
        %v7550 = vshll.u32 2475754826, %v7544
        %v7551 = vshrl.u32 2131351028, %v7545
        %v7552 = vor.u32 %v7550, %v7551
        %v7553 = vshll.u32 2131351028, %v7544
        %v7554 = vshrl.u32 2102212464, %v7545
        %v7555 = vor.u32 %v7553, %v7554
        %v7556 = vshll.u32 2102212464, %v7544
        %v7557 = vshrl.u32 920167782, %v7545
        %v7558 = vor.u32 %v7556, %v7557
        %v7559 = vshll.u32 920167782, %v7544
        %v7560 = vshrl.u32 1326507024, %v7545
        %v7561 = vor.u32 %v7559, %v7560
        %vm7562 = vcmp.lt.s32.totalorder %v7543, 1
        %vm7563 = vcmp.lt.s32.totalorder %v7543, 2
        %vm7564 = vcmp.lt.s32.totalorder %v7543, 3
        %vm7565 = vcmp.lt.s32.totalorder %v7543, 4
        %v7566 = vsel %vm7562, %v7546, %v7549
        %v7567 = vsel %vm7565, %v7555, 2102212464
        %v7568 = vsel %vm7564, %v7552, %v7567
        %v7569 = vsel %vm7563, %v7566, %v7568
        %v7570 = vsel %vm7562, %v7549, %v7552
        %v7571 = vsel %vm7565, %v7558, 920167782
        %v7572 = vsel %vm7564, %v7555, %v7571
        %v7573 = vsel %vm7563, %v7570, %v7572
        %v7574 = vsel %vm7562, %v7552, %v7555
        %v7575 = vsel %vm7565, %v7561, 1326507024
        %v7576 = vsel %vm7564, %v7558, %v7575
        %v7577 = vsel %vm7563, %v7574, %v7576
        %v7578 = vshll.u32 %v7538, 8
        %v7579 = vand.u32 %v7578, 65535
        %v7580 = vshrl.u32 %v7578, 16
        %v7581 = vand.u32 %v7577, 65535
        %v7582 = vshrl.u32 %v7577, 16
        %v7583 = vmul.u32 %v7579, %v7581
        %v7584 = vmul.u32 %v7579, %v7582
        %v7585 = vmul.u32 %v7580, %v7581
        %v7586 = vmul.u32 %v7580, %v7582
        %v7587 = vshll.u32 %v7584, 16
        %v7588 = vshrl.u32 %v7584, 16
        %v7589 = vshll.u32 %v7585, 16
        %v7590 = vshrl.u32 %v7585, 16
        %vm7591 = vc.u32 %v7583, %v7587
        %v7592 = vsel %vm7591, 1, 0
        %v7593 = vadd.s32 %v7583, %v7587
        %v7594 = vadd.s32 %v7586, %v7592
        %vm7595 = vc.u32 %v7593, %v7589
        %v7596 = vsel %vm7595, 1, 0
        %v7597 = vadd.s32 %v7593, %v7589
        %v7598 = vadd.s32 %v7594, %v7596
        %v7599 = vadd.s32 %v7598, %v7588
        %v7600 = vadd.s32 %v7599, %v7590
        %v7601 = vand.u32 %v7578, 65535
        %v7602 = vshrl.u32 %v7578, 16
        %v7603 = vand.u32 %v7573, 65535
        %v7604 = vshrl.u32 %v7573, 16
        %v7605 = vmul.u32 %v7601, %v7603
        %v7606 = vmul.u32 %v7601, %v7604
        %v7607 = vmul.u32 %v7602, %v7603
        %v7608 = vmul.u32 %v7602, %v7604
        %v7609 = vshll.u32 %v7606, 16
        %v7610 = vshrl.u32 %v7606, 16
        %v7611 = vshll.u32 %v7607, 16
        %v7612 = vshrl.u32 %v7607, 16
        %vm7613 = vc.u32 %v7605, %v7609
        %v7614 = vsel %vm7613, 1, 0
        %v7615 = vadd.s32 %v7605, %v7609
        %v7616 = vadd.s32 %v7608, %v7614
        %vm7617 = vc.u32 %v7615, %v7611
        %v7618 = vsel %vm7617, 1, 0
        %v7619 = vadd.s32 %v7615, %v7611
        %v7620 = vadd.s32 %v7616, %v7618
        %v7621 = vadd.s32 %v7620, %v7610
        %v7622 = vadd.s32 %v7621, %v7612
        %v7623 = vmul.u32 %v7578, %v7569
        %v7624 = vadd.s32 %v7600, %v7619
        %vm7625 = vc.u32 %v7600, %v7619
        %v7626 = vadd.s32 %v7622, 1
        %v7627 = vsel %vm7625, %v7626, %v7622
        %v7628 = vadd.s32 %v7623, %v7627
        %v7629 = vadd.s32 %v7628, 536870912
        %v7630 = vshrl.u32 %v7629, 30
        %v7631 = vshll.u32 %v7630, 30
        %v7632 = vsub.s32 %v7628, %v7631
        %vm7633 = vcmp.lt.s32.totalorder %v7632, 0
        %v7634 = vsub.s32 0, %v7632
        %v7635 = vsel %vm7633, %v7634, %v7632
        %v7636 = vclz %v7635
        %v7637 = vsub.s32 %v7636, 2
        %vm7638 = vcmp.gt.s32.totalorder 0, %v7637
        %v7639 = vsel %vm7638, 0, %v7637
        %v7640 = vsub.s32 32, %v7639
        %v7641 = vshll.u32 %v7632, %v7639
        %v7642 = vshrl.u32 %v7624, %v7640
        %v7643 = vor.u32 %v7641, %v7642
        %v7644 = vsub.s32 4294967266, %v7639
        %v7645 = vadd.s32 %v7644, 127
        %v7646 = vshll.u32 %v7645, 23
        %v7647 = vor.u32 4788187, %v7646
        %v7648 = vand.u32 2147483647, %v7647
        %v7650 = vcvt.s32.f32 %v7643
        %v7651 = vmul.f32 %v7650, %v7648
        %v7652 = vxor.u32 %v7651, 2147483648
        %v7653 = vsel %vm7532, %v7652, %v7651
        %v7654 = vsub.s32 4, %v7630
        %v7655 = vsel %vm7532, %v7654, %v7630
        %v7656 = vsel %vm7531, %v1006, %v7653
        %v7657 = vsel %vm7531, 0, %v7655
        %v7658 = vmul.f32 %v7656, %v7656
        %v7659 = vmul.f32 %v7658, -0.001358992
        %v7660 = vadd.f32 %v7659, 0.041655596
        %v7661 = vmul.f32 %v7658, %v7660
        %v7662 = vadd.f32 %v7661, -0.4999988
        %v7663 = vmul.f32 %v7658, %v7662
        %v7664 = vadd.f32 1.0, %v7663
        %v7665 = vmul.f32 %v7656, %v7656
        %v7666 = vmul.f32 %v7665, -0.00019511016
        %v7667 = vadd.f32 %v7666, 0.008332121
        %v7668 = vmul.f32 %v7665, %v7667
        %v7669 = vadd.f32 %v7668, -0.16666654
        %v7670 = vmul.f32 %v7665, %v7669
        %v7671 = vadd.f32 %v7670, 1.0
        %v7672 = vmul.f32 %v7671, %v7656
        %vm7673 = vweird.f32 %v1006
        %v7674 = vadd.s32 %v7657, 3
        %v7675 = vand.u32 %v7674, 3
        %vm7676 = vcmp.lt.s32.totalorder %v7675, 2
        %vm7677 = vcmp.eq.s32.totalorder %v7675, 0
        %v7678 = vxor.u32 %v7672, 2147483648
        %v7679 = vsel %vm7677, %v7664, %v7678
        %vm7680 = vcmp.eq.s32.totalorder %v7675, 2
        %v7681 = vxor.u32 %v7664, 2147483648
        %v7682 = vsel %vm7680, %v7681, %v7672
        %v7683 = vsel %vm7676, %v7679, %v7682
        %v7684 = vsel %vm7673, nan, %v7683
        %v7685 = vand.u32 2147483647, %v1007
        %vm7686 = vcmp.le.f32.partialorder %v7685, 0.7853982
        %vm7687 = vcmp.lt.s32.totalorder %v1007, 0
        %v7688 = vand.u32 %v1007, 2139095040
        %v7689 = vshrl.u32 %v7688, 23
        %v7690 = vsub.s32 %v7689, 127
        %v7691 = vand.u32 2147483647, %v1007
        %v7692 = vand.u32 %v7691, 8388607
        %v7693 = vor.u32 %v7692, 8388608
        %v7694 = vsub.s32 0, %v7693
        %v7695 = vadd.s32 %v7690, 1
        %vm7696 = vcmp.gt.s32.totalorder %v7695, 0
        %v7697 = vsel %vm7696, %v7695, 0
        %v7698 = vshrl.u32 %v7697, 5
        %v7699 = vand.u32 %v7697, 31
        %v7700 = vsub.s32 32, %v7699
        %v7701 = vshrl.u32 683565275, %v7700
        %v7702 = vshll.u32 683565275, %v7699
        %v7703 = vshrl.u32 2475754826, %v7700
        %v7704 = vor.u32 %v7702, %v7703
        %v7705 = vshll.u32 2475754826, %v7699
        %v7706 = vshrl.u32 2131351028, %v7700
        %v7707 = vor.u32 %v7705, %v7706
        %v7708 = vshll.u32 2131351028, %v7699
        %v7709 = vshrl.u32 2102212464, %v7700
        %v7710 = vor.u32 %v7708, %v7709
        %v7711 = vshll.u32 2102212464, %v7699
        %v7712 = vshrl.u32 920167782, %v7700
        %v7713 = vor.u32 %v7711, %v7712
        %v7714 = vshll.u32 920167782, %v7699
        %v7715 = vshrl.u32 1326507024, %v7700
        %v7716 = vor.u32 %v7714, %v7715
        %vm7717 = vcmp.lt.s32.totalorder %v7698, 1
        %vm7718 = vcmp.lt.s32.totalorder %v7698, 2
        %vm7719 = vcmp.lt.s32.totalorder %v7698, 3
        %vm7720 = vcmp.lt.s32.totalorder %v7698, 4
        %v7721 = vsel %vm7717, %v7701, %v7704
        %v7722 = vsel %vm7720, %v7710, 2102212464
        %v7723 = vsel %vm7719, %v7707, %v7722
        %v7724 = vsel %vm7718, %v7721, %v7723
        %v7725 = vsel %vm7717, %v7704, %v7707
        %v7726 = vsel %vm7720, %v7713, 920167782
        %v7727 = vsel %vm7719, %v7710, %v7726
        %v7728 = vsel %vm7718, %v7725, %v7727
        %v7729 = vsel %vm7717, %v7707, %v7710
        %v7730 = vsel %vm7720, %v7716, 1326507024
        %v7731 = vsel %vm7719, %v7713, %v7730
        %v7732 = vsel %vm7718, %v7729, %v7731
        %v7733 = vshll.u32 %v7693, 8
        %v7734 = vand.u32 %v7733, 65535
        %v7735 = vshrl.u32 %v7733, 16
        %v7736 = vand.u32 %v7732, 65535
        %v7737 = vshrl.u32 %v7732, 16
        %v7738 = vmul.u32 %v7734, %v7736
        %v7739 = vmul.u32 %v7734, %v7737
        %v7740 = vmul.u32 %v7735, %v7736
        %v7741 = vmul.u32 %v7735, %v7737
        %v7742 = vshll.u32 %v7739, 16
        %v7743 = vshrl.u32 %v7739, 16
        %v7744 = vshll.u32 %v7740, 16
        %v7745 = vshrl.u32 %v7740, 16
        %vm7746 = vc.u32 %v7738, %v7742
        %v7747 = vsel %vm7746, 1, 0
        %v7748 = vadd.s32 %v7738, %v7742
        %v7749 = vadd.s32 %v7741, %v7747
        %vm7750 = vc.u32 %v7748, %v7744
        %v7751 = vsel %vm7750, 1, 0
        %v7752 = vadd.s32 %v7748, %v7744
        %v7753 = vadd.s32 %v7749, %v7751
        %v7754 = vadd.s32 %v7753, %v7743
        %v7755 = vadd.s32 %v7754, %v7745
        %v7756 = vand.u32 %v7733, 65535
        %v7757 = vshrl.u32 %v7733, 16
        %v7758 = vand.u32 %v7728, 65535
        %v7759 = vshrl.u32 %v7728, 16
        %v7760 = vmul.u32 %v7756, %v7758
        %v7761 = vmul.u32 %v7756, %v7759
        %v7762 = vmul.u32 %v7757, %v7758
        %v7763 = vmul.u32 %v7757, %v7759
        %v7764 = vshll.u32 %v7761, 16
        %v7765 = vshrl.u32 %v7761, 16
        %v7766 = vshll.u32 %v7762, 16
        %v7767 = vshrl.u32 %v7762, 16
        %vm7768 = vc.u32 %v7760, %v7764
        %v7769 = vsel %vm7768, 1, 0
        %v7770 = vadd.s32 %v7760, %v7764
        %v7771 = vadd.s32 %v7763, %v7769
        %vm7772 = vc.u32 %v7770, %v7766
        %v7773 = vsel %vm7772, 1, 0
        %v7774 = vadd.s32 %v7770, %v7766
        %v7775 = vadd.s32 %v7771, %v7773
        %v7776 = vadd.s32 %v7775, %v7765
        %v7777 = vadd.s32 %v7776, %v7767
        %v7778 = vmul.u32 %v7733, %v7724
        %v7779 = vadd.s32 %v7755, %v7774
        %vm7780 = vc.u32 %v7755, %v7774
        %v7781 = vadd.s32 %v7777, 1
        %v7782 = vsel %vm7780, %v7781, %v7777
        %v7783 = vadd.s32 %v7778, %v7782
        %v7784 = vadd.s32 %v7783, 536870912
        %v7785 = vshrl.u32 %v7784, 30
        %v7786 = vshll.u32 %v7785, 30
        %v7787 = vsub.s32 %v7783, %v7786
        %vm7788 = vcmp.lt.s32.totalorder %v7787, 0
        %v7789 = vsub.s32 0, %v7787
        %v7790 = vsel %vm7788, %v7789, %v7787
        %v7791 = vclz %v7790
        %v7792 = vsub.s32 %v7791, 2
        %vm7793 = vcmp.gt.s32.totalorder 0, %v7792
        %v7794 = vsel %vm7793, 0, %v7792
        %v7795 = vsub.s32 32, %v7794
        %v7796 = vshll.u32 %v7787, %v7794
        %v7797 = vshrl.u32 %v7779, %v7795
        %v7798 = vor.u32 %v7796, %v7797
        %v7799 = vsub.s32 4294967266, %v7794
        %v7800 = vadd.s32 %v7799, 127
        %v7801 = vshll.u32 %v7800, 23
        %v7802 = vor.u32 4788187, %v7801
        %v7803 = vand.u32 2147483647, %v7802
        %v7805 = vcvt.s32.f32 %v7798
        %v7806 = vmul.f32 %v7805, %v7803
        %v7807 = vxor.u32 %v7806, 2147483648
        %v7808 = vsel %vm7687, %v7807, %v7806
        %v7809 = vsub.s32 4, %v7785
        %v7810 = vsel %vm7687, %v7809, %v7785
        %v7811 = vsel %vm7686, %v1007, %v7808
        %v7812 = vsel %vm7686, 0, %v7810
        %v7813 = vmul.f32 %v7811, %v7811
        %v7814 = vmul.f32 %v7813, -0.001358992
        %v7815 = vadd.f32 %v7814, 0.041655596
        %v7816 = vmul.f32 %v7813, %v7815
        %v7817 = vadd.f32 %v7816, -0.4999988
        %v7818 = vmul.f32 %v7813, %v7817
        %v7819 = vadd.f32 1.0, %v7818
        %v7820 = vmul.f32 %v7811, %v7811
        %v7821 = vmul.f32 %v7820, -0.00019511016
        %v7822 = vadd.f32 %v7821, 0.008332121
        %v7823 = vmul.f32 %v7820, %v7822
        %v7824 = vadd.f32 %v7823, -0.16666654
        %v7825 = vmul.f32 %v7820, %v7824
        %v7826 = vadd.f32 %v7825, 1.0
        %v7827 = vmul.f32 %v7826, %v7811
        %vm7828 = vweird.f32 %v1007
        %v7829 = vadd.s32 %v7812, 3
        %v7830 = vand.u32 %v7829, 3
        %vm7831 = vcmp.lt.s32.totalorder %v7830, 2
        %vm7832 = vcmp.eq.s32.totalorder %v7830, 0
        %v7833 = vxor.u32 %v7827, 2147483648
        %v7834 = vsel %vm7832, %v7819, %v7833
        %vm7835 = vcmp.eq.s32.totalorder %v7830, 2
        %v7836 = vxor.u32 %v7819, 2147483648
        %v7837 = vsel %vm7835, %v7836, %v7827
        %v7838 = vsel %vm7831, %v7834, %v7837
        %v7839 = vsel %vm7828, nan, %v7838
        %v7840 = vand.u32 2147483647, %v1008
        %vm7841 = vcmp.le.f32.partialorder %v7840, 0.7853982
        %vm7842 = vcmp.lt.s32.totalorder %v1008, 0
        %v7843 = vand.u32 %v1008, 2139095040
        %v7844 = vshrl.u32 %v7843, 23
        %v7845 = vsub.s32 %v7844, 127
        %v7846 = vand.u32 2147483647, %v1008
        %v7847 = vand.u32 %v7846, 8388607
        %v7848 = vor.u32 %v7847, 8388608
        %v7849 = vsub.s32 0, %v7848
        %v7850 = vadd.s32 %v7845, 1
        %vm7851 = vcmp.gt.s32.totalorder %v7850, 0
        %v7852 = vsel %vm7851, %v7850, 0
        %v7853 = vshrl.u32 %v7852, 5
        %v7854 = vand.u32 %v7852, 31
        %v7855 = vsub.s32 32, %v7854
        %v7856 = vshrl.u32 683565275, %v7855
        %v7857 = vshll.u32 683565275, %v7854
        %v7858 = vshrl.u32 2475754826, %v7855
        %v7859 = vor.u32 %v7857, %v7858
        %v7860 = vshll.u32 2475754826, %v7854
        %v7861 = vshrl.u32 2131351028, %v7855
        %v7862 = vor.u32 %v7860, %v7861
        %v7863 = vshll.u32 2131351028, %v7854
        %v7864 = vshrl.u32 2102212464, %v7855
        %v7865 = vor.u32 %v7863, %v7864
        %v7866 = vshll.u32 2102212464, %v7854
        %v7867 = vshrl.u32 920167782, %v7855
        %v7868 = vor.u32 %v7866, %v7867
        %v7869 = vshll.u32 920167782, %v7854
        %v7870 = vshrl.u32 1326507024, %v7855
        %v7871 = vor.u32 %v7869, %v7870
        %vm7872 = vcmp.lt.s32.totalorder %v7853, 1
        %vm7873 = vcmp.lt.s32.totalorder %v7853, 2
        %vm7874 = vcmp.lt.s32.totalorder %v7853, 3
        %vm7875 = vcmp.lt.s32.totalorder %v7853, 4
        %v7876 = vsel %vm7872, %v7856, %v7859
        %v7877 = vsel %vm7875, %v7865, 2102212464
        %v7878 = vsel %vm7874, %v7862, %v7877
        %v7879 = vsel %vm7873, %v7876, %v7878
        %v7880 = vsel %vm7872, %v7859, %v7862
        %v7881 = vsel %vm7875, %v7868, 920167782
        %v7882 = vsel %vm7874, %v7865, %v7881
        %v7883 = vsel %vm7873, %v7880, %v7882
        %v7884 = vsel %vm7872, %v7862, %v7865
        %v7885 = vsel %vm7875, %v7871, 1326507024
        %v7886 = vsel %vm7874, %v7868, %v7885
        %v7887 = vsel %vm7873, %v7884, %v7886
        %v7888 = vshll.u32 %v7848, 8
        %v7889 = vand.u32 %v7888, 65535
        %v7890 = vshrl.u32 %v7888, 16
        %v7891 = vand.u32 %v7887, 65535
        %v7892 = vshrl.u32 %v7887, 16
        %v7893 = vmul.u32 %v7889, %v7891
        %v7894 = vmul.u32 %v7889, %v7892
        %v7895 = vmul.u32 %v7890, %v7891
        %v7896 = vmul.u32 %v7890, %v7892
        %v7897 = vshll.u32 %v7894, 16
        %v7898 = vshrl.u32 %v7894, 16
        %v7899 = vshll.u32 %v7895, 16
        %v7900 = vshrl.u32 %v7895, 16
        %vm7901 = vc.u32 %v7893, %v7897
        %v7902 = vsel %vm7901, 1, 0
        %v7903 = vadd.s32 %v7893, %v7897
        %v7904 = vadd.s32 %v7896, %v7902
        %vm7905 = vc.u32 %v7903, %v7899
        %v7906 = vsel %vm7905, 1, 0
        %v7907 = vadd.s32 %v7903, %v7899
        %v7908 = vadd.s32 %v7904, %v7906
        %v7909 = vadd.s32 %v7908, %v7898
        %v7910 = vadd.s32 %v7909, %v7900
        %v7911 = vand.u32 %v7888, 65535
        %v7912 = vshrl.u32 %v7888, 16
        %v7913 = vand.u32 %v7883, 65535
        %v7914 = vshrl.u32 %v7883, 16
        %v7915 = vmul.u32 %v7911, %v7913
        %v7916 = vmul.u32 %v7911, %v7914
        %v7917 = vmul.u32 %v7912, %v7913
        %v7918 = vmul.u32 %v7912, %v7914
        %v7919 = vshll.u32 %v7916, 16
        %v7920 = vshrl.u32 %v7916, 16
        %v7921 = vshll.u32 %v7917, 16
        %v7922 = vshrl.u32 %v7917, 16
        %vm7923 = vc.u32 %v7915, %v7919
        %v7924 = vsel %vm7923, 1, 0
        %v7925 = vadd.s32 %v7915, %v7919
        %v7926 = vadd.s32 %v7918, %v7924
        %vm7927 = vc.u32 %v7925, %v7921
        %v7928 = vsel %vm7927, 1, 0
        %v7929 = vadd.s32 %v7925, %v7921
        %v7930 = vadd.s32 %v7926, %v7928
        %v7931 = vadd.s32 %v7930, %v7920
        %v7932 = vadd.s32 %v7931, %v7922
        %v7933 = vmul.u32 %v7888, %v7879
        %v7934 = vadd.s32 %v7910, %v7929
        %vm7935 = vc.u32 %v7910, %v7929
        %v7936 = vadd.s32 %v7932, 1
        %v7937 = vsel %vm7935, %v7936, %v7932
        %v7938 = vadd.s32 %v7933, %v7937
        %v7939 = vadd.s32 %v7938, 536870912
        %v7940 = vshrl.u32 %v7939, 30
        %v7941 = vshll.u32 %v7940, 30
        %v7942 = vsub.s32 %v7938, %v7941
        %vm7943 = vcmp.lt.s32.totalorder %v7942, 0
        %v7944 = vsub.s32 0, %v7942
        %v7945 = vsel %vm7943, %v7944, %v7942
        %v7946 = vclz %v7945
        %v7947 = vsub.s32 %v7946, 2
        %vm7948 = vcmp.gt.s32.totalorder 0, %v7947
        %v7949 = vsel %vm7948, 0, %v7947
        %v7950 = vsub.s32 32, %v7949
        %v7951 = vshll.u32 %v7942, %v7949
        %v7952 = vshrl.u32 %v7934, %v7950
        %v7953 = vor.u32 %v7951, %v7952
        %v7954 = vsub.s32 4294967266, %v7949
        %v7955 = vadd.s32 %v7954, 127
        %v7956 = vshll.u32 %v7955, 23
        %v7957 = vor.u32 4788187, %v7956
        %v7958 = vand.u32 2147483647, %v7957
        %v7960 = vcvt.s32.f32 %v7953
        %v7961 = vmul.f32 %v7960, %v7958
        %v7962 = vxor.u32 %v7961, 2147483648
        %v7963 = vsel %vm7842, %v7962, %v7961
        %v7964 = vsub.s32 4, %v7940
        %v7965 = vsel %vm7842, %v7964, %v7940
        %v7966 = vsel %vm7841, %v1008, %v7963
        %v7967 = vsel %vm7841, 0, %v7965
        %v7968 = vmul.f32 %v7966, %v7966
        %v7969 = vmul.f32 %v7968, -0.001358992
        %v7970 = vadd.f32 %v7969, 0.041655596
        %v7971 = vmul.f32 %v7968, %v7970
        %v7972 = vadd.f32 %v7971, -0.4999988
        %v7973 = vmul.f32 %v7968, %v7972
        %v7974 = vadd.f32 1.0, %v7973
        %v7975 = vmul.f32 %v7966, %v7966
        %v7976 = vmul.f32 %v7975, -0.00019511016
        %v7977 = vadd.f32 %v7976, 0.008332121
        %v7978 = vmul.f32 %v7975, %v7977
        %v7979 = vadd.f32 %v7978, -0.16666654
        %v7980 = vmul.f32 %v7975, %v7979
        %v7981 = vadd.f32 %v7980, 1.0
        %v7982 = vmul.f32 %v7981, %v7966
        %vm7983 = vweird.f32 %v1008
        %v7984 = vadd.s32 %v7967, 3
        %v7985 = vand.u32 %v7984, 3
        %vm7986 = vcmp.lt.s32.totalorder %v7985, 2
        %vm7987 = vcmp.eq.s32.totalorder %v7985, 0
        %v7988 = vxor.u32 %v7982, 2147483648
        %v7989 = vsel %vm7987, %v7974, %v7988
        %vm7990 = vcmp.eq.s32.totalorder %v7985, 2
        %v7991 = vxor.u32 %v7974, 2147483648
        %v7992 = vsel %vm7990, %v7991, %v7982
        %v7993 = vsel %vm7986, %v7989, %v7992
        %v7994 = vsel %vm7983, nan, %v7993
        %v7995 = vand.u32 2147483647, %v1009
        %vm7996 = vcmp.le.f32.partialorder %v7995, 0.7853982
        %vm7997 = vcmp.lt.s32.totalorder %v1009, 0
        %v7998 = vand.u32 %v1009, 2139095040
        %v7999 = vshrl.u32 %v7998, 23
        %v8000 = vsub.s32 %v7999, 127
        %v8001 = vand.u32 2147483647, %v1009
        %v8002 = vand.u32 %v8001, 8388607
        %v8003 = vor.u32 %v8002, 8388608
        %v8004 = vsub.s32 0, %v8003
        %v8005 = vadd.s32 %v8000, 1
        %vm8006 = vcmp.gt.s32.totalorder %v8005, 0
        %v8007 = vsel %vm8006, %v8005, 0
        %v8008 = vshrl.u32 %v8007, 5
        %v8009 = vand.u32 %v8007, 31
        %v8010 = vsub.s32 32, %v8009
        %v8011 = vshrl.u32 683565275, %v8010
        %v8012 = vshll.u32 683565275, %v8009
        %v8013 = vshrl.u32 2475754826, %v8010
        %v8014 = vor.u32 %v8012, %v8013
        %v8015 = vshll.u32 2475754826, %v8009
        %v8016 = vshrl.u32 2131351028, %v8010
        %v8017 = vor.u32 %v8015, %v8016
        %v8018 = vshll.u32 2131351028, %v8009
        %v8019 = vshrl.u32 2102212464, %v8010
        %v8020 = vor.u32 %v8018, %v8019
        %v8021 = vshll.u32 2102212464, %v8009
        %v8022 = vshrl.u32 920167782, %v8010
        %v8023 = vor.u32 %v8021, %v8022
        %v8024 = vshll.u32 920167782, %v8009
        %v8025 = vshrl.u32 1326507024, %v8010
        %v8026 = vor.u32 %v8024, %v8025
        %vm8027 = vcmp.lt.s32.totalorder %v8008, 1
        %vm8028 = vcmp.lt.s32.totalorder %v8008, 2
        %vm8029 = vcmp.lt.s32.totalorder %v8008, 3
        %vm8030 = vcmp.lt.s32.totalorder %v8008, 4
        %v8031 = vsel %vm8027, %v8011, %v8014
        %v8032 = vsel %vm8030, %v8020, 2102212464
        %v8033 = vsel %vm8029, %v8017, %v8032
        %v8034 = vsel %vm8028, %v8031, %v8033
        %v8035 = vsel %vm8027, %v8014, %v8017
        %v8036 = vsel %vm8030, %v8023, 920167782
        %v8037 = vsel %vm8029, %v8020, %v8036
        %v8038 = vsel %vm8028, %v8035, %v8037
        %v8039 = vsel %vm8027, %v8017, %v8020
        %v8040 = vsel %vm8030, %v8026, 1326507024
        %v8041 = vsel %vm8029, %v8023, %v8040
        %v8042 = vsel %vm8028, %v8039, %v8041
        %v8043 = vshll.u32 %v8003, 8
        %v8044 = vand.u32 %v8043, 65535
        %v8045 = vshrl.u32 %v8043, 16
        %v8046 = vand.u32 %v8042, 65535
        %v8047 = vshrl.u32 %v8042, 16
        %v8048 = vmul.u32 %v8044, %v8046
        %v8049 = vmul.u32 %v8044, %v8047
        %v8050 = vmul.u32 %v8045, %v8046
        %v8051 = vmul.u32 %v8045, %v8047
        %v8052 = vshll.u32 %v8049, 16
        %v8053 = vshrl.u32 %v8049, 16
        %v8054 = vshll.u32 %v8050, 16
        %v8055 = vshrl.u32 %v8050, 16
        %vm8056 = vc.u32 %v8048, %v8052
        %v8057 = vsel %vm8056, 1, 0
        %v8058 = vadd.s32 %v8048, %v8052
        %v8059 = vadd.s32 %v8051, %v8057
        %vm8060 = vc.u32 %v8058, %v8054
        %v8061 = vsel %vm8060, 1, 0
        %v8062 = vadd.s32 %v8058, %v8054
        %v8063 = vadd.s32 %v8059, %v8061
        %v8064 = vadd.s32 %v8063, %v8053
        %v8065 = vadd.s32 %v8064, %v8055
        %v8066 = vand.u32 %v8043, 65535
        %v8067 = vshrl.u32 %v8043, 16
        %v8068 = vand.u32 %v8038, 65535
        %v8069 = vshrl.u32 %v8038, 16
        %v8070 = vmul.u32 %v8066, %v8068
        %v8071 = vmul.u32 %v8066, %v8069
        %v8072 = vmul.u32 %v8067, %v8068
        %v8073 = vmul.u32 %v8067, %v8069
        %v8074 = vshll.u32 %v8071, 16
        %v8075 = vshrl.u32 %v8071, 16
        %v8076 = vshll.u32 %v8072, 16
        %v8077 = vshrl.u32 %v8072, 16
        %vm8078 = vc.u32 %v8070, %v8074
        %v8079 = vsel %vm8078, 1, 0
        %v8080 = vadd.s32 %v8070, %v8074
        %v8081 = vadd.s32 %v8073, %v8079
        %vm8082 = vc.u32 %v8080, %v8076
        %v8083 = vsel %vm8082, 1, 0
        %v8084 = vadd.s32 %v8080, %v8076
        %v8085 = vadd.s32 %v8081, %v8083
        %v8086 = vadd.s32 %v8085, %v8075
        %v8087 = vadd.s32 %v8086, %v8077
        %v8088 = vmul.u32 %v8043, %v8034
        %v8089 = vadd.s32 %v8065, %v8084
        %vm8090 = vc.u32 %v8065, %v8084
        %v8091 = vadd.s32 %v8087, 1
        %v8092 = vsel %vm8090, %v8091, %v8087
        %v8093 = vadd.s32 %v8088, %v8092
        %v8094 = vadd.s32 %v8093, 536870912
        %v8095 = vshrl.u32 %v8094, 30
        %v8096 = vshll.u32 %v8095, 30
        %v8097 = vsub.s32 %v8093, %v8096
        %vm8098 = vcmp.lt.s32.totalorder %v8097, 0
        %v8099 = vsub.s32 0, %v8097
        %v8100 = vsel %vm8098, %v8099, %v8097
        %v8101 = vclz %v8100
        %v8102 = vsub.s32 %v8101, 2
        %vm8103 = vcmp.gt.s32.totalorder 0, %v8102
        %v8104 = vsel %vm8103, 0, %v8102
        %v8105 = vsub.s32 32, %v8104
        %v8106 = vshll.u32 %v8097, %v8104
        %v8107 = vshrl.u32 %v8089, %v8105
        %v8108 = vor.u32 %v8106, %v8107
        %v8109 = vsub.s32 4294967266, %v8104
        %v8110 = vadd.s32 %v8109, 127
        %v8111 = vshll.u32 %v8110, 23
        %v8112 = vor.u32 4788187, %v8111
        %v8113 = vand.u32 2147483647, %v8112
        %v8115 = vcvt.s32.f32 %v8108
        %v8116 = vmul.f32 %v8115, %v8113
        %v8117 = vxor.u32 %v8116, 2147483648
        %v8118 = vsel %vm7997, %v8117, %v8116
        %v8119 = vsub.s32 4, %v8095
        %v8120 = vsel %vm7997, %v8119, %v8095
        %v8121 = vsel %vm7996, %v1009, %v8118
        %v8122 = vsel %vm7996, 0, %v8120
        %v8123 = vmul.f32 %v8121, %v8121
        %v8124 = vmul.f32 %v8123, -0.001358992
        %v8125 = vadd.f32 %v8124, 0.041655596
        %v8126 = vmul.f32 %v8123, %v8125
        %v8127 = vadd.f32 %v8126, -0.4999988
        %v8128 = vmul.f32 %v8123, %v8127
        %v8129 = vadd.f32 1.0, %v8128
        %v8130 = vmul.f32 %v8121, %v8121
        %v8131 = vmul.f32 %v8130, -0.00019511016
        %v8132 = vadd.f32 %v8131, 0.008332121
        %v8133 = vmul.f32 %v8130, %v8132
        %v8134 = vadd.f32 %v8133, -0.16666654
        %v8135 = vmul.f32 %v8130, %v8134
        %v8136 = vadd.f32 %v8135, 1.0
        %v8137 = vmul.f32 %v8136, %v8121
        %vm8138 = vweird.f32 %v1009
        %v8139 = vadd.s32 %v8122, 3
        %v8140 = vand.u32 %v8139, 3
        %vm8141 = vcmp.lt.s32.totalorder %v8140, 2
        %vm8142 = vcmp.eq.s32.totalorder %v8140, 0
        %v8143 = vxor.u32 %v8137, 2147483648
        %v8144 = vsel %vm8142, %v8129, %v8143
        %vm8145 = vcmp.eq.s32.totalorder %v8140, 2
        %v8146 = vxor.u32 %v8129, 2147483648
        %v8147 = vsel %vm8145, %v8146, %v8137
        %v8148 = vsel %vm8141, %v8144, %v8147
        %v8149 = vsel %vm8138, nan, %v8148
        %v8150 = vand.u32 2147483647, %v1010
        %vm8151 = vcmp.le.f32.partialorder %v8150, 0.7853982
        %vm8152 = vcmp.lt.s32.totalorder %v1010, 0
        %v8153 = vand.u32 %v1010, 2139095040
        %v8154 = vshrl.u32 %v8153, 23
        %v8155 = vsub.s32 %v8154, 127
        %v8156 = vand.u32 2147483647, %v1010
        %v8157 = vand.u32 %v8156, 8388607
        %v8158 = vor.u32 %v8157, 8388608
        %v8159 = vsub.s32 0, %v8158
        %v8160 = vadd.s32 %v8155, 1
        %vm8161 = vcmp.gt.s32.totalorder %v8160, 0
        %v8162 = vsel %vm8161, %v8160, 0
        %v8163 = vshrl.u32 %v8162, 5
        %v8164 = vand.u32 %v8162, 31
        %v8165 = vsub.s32 32, %v8164
        %v8166 = vshrl.u32 683565275, %v8165
        %v8167 = vshll.u32 683565275, %v8164
        %v8168 = vshrl.u32 2475754826, %v8165
        %v8169 = vor.u32 %v8167, %v8168
        %v8170 = vshll.u32 2475754826, %v8164
        %v8171 = vshrl.u32 2131351028, %v8165
        %v8172 = vor.u32 %v8170, %v8171
        %v8173 = vshll.u32 2131351028, %v8164
        %v8174 = vshrl.u32 2102212464, %v8165
        %v8175 = vor.u32 %v8173, %v8174
        %v8176 = vshll.u32 2102212464, %v8164
        %v8177 = vshrl.u32 920167782, %v8165
        %v8178 = vor.u32 %v8176, %v8177
        %v8179 = vshll.u32 920167782, %v8164
        %v8180 = vshrl.u32 1326507024, %v8165
        %v8181 = vor.u32 %v8179, %v8180
        %vm8182 = vcmp.lt.s32.totalorder %v8163, 1
        %vm8183 = vcmp.lt.s32.totalorder %v8163, 2
        %vm8184 = vcmp.lt.s32.totalorder %v8163, 3
        %vm8185 = vcmp.lt.s32.totalorder %v8163, 4
        %v8186 = vsel %vm8182, %v8166, %v8169
        %v8187 = vsel %vm8185, %v8175, 2102212464
        %v8188 = vsel %vm8184, %v8172, %v8187
        %v8189 = vsel %vm8183, %v8186, %v8188
        %v8190 = vsel %vm8182, %v8169, %v8172
        %v8191 = vsel %vm8185, %v8178, 920167782
        %v8192 = vsel %vm8184, %v8175, %v8191
        %v8193 = vsel %vm8183, %v8190, %v8192
        %v8194 = vsel %vm8182, %v8172, %v8175
        %v8195 = vsel %vm8185, %v8181, 1326507024
        %v8196 = vsel %vm8184, %v8178, %v8195
        %v8197 = vsel %vm8183, %v8194, %v8196
        %v8198 = vshll.u32 %v8158, 8
        %v8199 = vand.u32 %v8198, 65535
        %v8200 = vshrl.u32 %v8198, 16
        %v8201 = vand.u32 %v8197, 65535
        %v8202 = vshrl.u32 %v8197, 16
        %v8203 = vmul.u32 %v8199, %v8201
        %v8204 = vmul.u32 %v8199, %v8202
        %v8205 = vmul.u32 %v8200, %v8201
        %v8206 = vmul.u32 %v8200, %v8202
        %v8207 = vshll.u32 %v8204, 16
        %v8208 = vshrl.u32 %v8204, 16
        %v8209 = vshll.u32 %v8205, 16
        %v8210 = vshrl.u32 %v8205, 16
        %vm8211 = vc.u32 %v8203, %v8207
        %v8212 = vsel %vm8211, 1, 0
        %v8213 = vadd.s32 %v8203, %v8207
        %v8214 = vadd.s32 %v8206, %v8212
        %vm8215 = vc.u32 %v8213, %v8209
        %v8216 = vsel %vm8215, 1, 0
        %v8217 = vadd.s32 %v8213, %v8209
        %v8218 = vadd.s32 %v8214, %v8216
        %v8219 = vadd.s32 %v8218, %v8208
        %v8220 = vadd.s32 %v8219, %v8210
        %v8221 = vand.u32 %v8198, 65535
        %v8222 = vshrl.u32 %v8198, 16
        %v8223 = vand.u32 %v8193, 65535
        %v8224 = vshrl.u32 %v8193, 16
        %v8225 = vmul.u32 %v8221, %v8223
        %v8226 = vmul.u32 %v8221, %v8224
        %v8227 = vmul.u32 %v8222, %v8223
        %v8228 = vmul.u32 %v8222, %v8224
        %v8229 = vshll.u32 %v8226, 16
        %v8230 = vshrl.u32 %v8226, 16
        %v8231 = vshll.u32 %v8227, 16
        %v8232 = vshrl.u32 %v8227, 16
        %vm8233 = vc.u32 %v8225, %v8229
        %v8234 = vsel %vm8233, 1, 0
        %v8235 = vadd.s32 %v8225, %v8229
        %v8236 = vadd.s32 %v8228, %v8234
        %vm8237 = vc.u32 %v8235, %v8231
        %v8238 = vsel %vm8237, 1, 0
        %v8239 = vadd.s32 %v8235, %v8231
        %v8240 = vadd.s32 %v8236, %v8238
        %v8241 = vadd.s32 %v8240, %v8230
        %v8242 = vadd.s32 %v8241, %v8232
        %v8243 = vmul.u32 %v8198, %v8189
        %v8244 = vadd.s32 %v8220, %v8239
        %vm8245 = vc.u32 %v8220, %v8239
        %v8246 = vadd.s32 %v8242, 1
        %v8247 = vsel %vm8245, %v8246, %v8242
        %v8248 = vadd.s32 %v8243, %v8247
        %v8249 = vadd.s32 %v8248, 536870912
        %v8250 = vshrl.u32 %v8249, 30
        %v8251 = vshll.u32 %v8250, 30
        %v8252 = vsub.s32 %v8248, %v8251
        %vm8253 = vcmp.lt.s32.totalorder %v8252, 0
        %v8254 = vsub.s32 0, %v8252
        %v8255 = vsel %vm8253, %v8254, %v8252
        %v8256 = vclz %v8255
        %v8257 = vsub.s32 %v8256, 2
        %vm8258 = vcmp.gt.s32.totalorder 0, %v8257
        %v8259 = vsel %vm8258, 0, %v8257
        %v8260 = vsub.s32 32, %v8259
        %v8261 = vshll.u32 %v8252, %v8259
        %v8262 = vshrl.u32 %v8244, %v8260
        %v8263 = vor.u32 %v8261, %v8262
        %v8264 = vsub.s32 4294967266, %v8259
        %v8265 = vadd.s32 %v8264, 127
        %v8266 = vshll.u32 %v8265, 23
        %v8267 = vor.u32 4788187, %v8266
        %v8268 = vand.u32 2147483647, %v8267
        %v8270 = vcvt.s32.f32 %v8263
        %v8271 = vmul.f32 %v8270, %v8268
        %v8272 = vxor.u32 %v8271, 2147483648
        %v8273 = vsel %vm8152, %v8272, %v8271
        %v8274 = vsub.s32 4, %v8250
        %v8275 = vsel %vm8152, %v8274, %v8250
        %v8276 = vsel %vm8151, %v1010, %v8273
        %v8277 = vsel %vm8151, 0, %v8275
        %v8278 = vmul.f32 %v8276, %v8276
        %v8279 = vmul.f32 %v8278, -0.001358992
        %v8280 = vadd.f32 %v8279, 0.041655596
        %v8281 = vmul.f32 %v8278, %v8280
        %v8282 = vadd.f32 %v8281, -0.4999988
        %v8283 = vmul.f32 %v8278, %v8282
        %v8284 = vadd.f32 1.0, %v8283
        %v8285 = vmul.f32 %v8276, %v8276
        %v8286 = vmul.f32 %v8285, -0.00019511016
        %v8287 = vadd.f32 %v8286, 0.008332121
        %v8288 = vmul.f32 %v8285, %v8287
        %v8289 = vadd.f32 %v8288, -0.16666654
        %v8290 = vmul.f32 %v8285, %v8289
        %v8291 = vadd.f32 %v8290, 1.0
        %v8292 = vmul.f32 %v8291, %v8276
        %vm8293 = vweird.f32 %v1010
        %v8294 = vadd.s32 %v8277, 3
        %v8295 = vand.u32 %v8294, 3
        %vm8296 = vcmp.lt.s32.totalorder %v8295, 2
        %vm8297 = vcmp.eq.s32.totalorder %v8295, 0
        %v8298 = vxor.u32 %v8292, 2147483648
        %v8299 = vsel %vm8297, %v8284, %v8298
        %vm8300 = vcmp.eq.s32.totalorder %v8295, 2
        %v8301 = vxor.u32 %v8284, 2147483648
        %v8302 = vsel %vm8300, %v8301, %v8292
        %v8303 = vsel %vm8296, %v8299, %v8302
        %v8304 = vsel %vm8293, nan, %v8303
        %v8305 = vand.u32 2147483647, %v1011
        %vm8306 = vcmp.le.f32.partialorder %v8305, 0.7853982
        %vm8307 = vcmp.lt.s32.totalorder %v1011, 0
        %v8308 = vand.u32 %v1011, 2139095040
        %v8309 = vshrl.u32 %v8308, 23
        %v8310 = vsub.s32 %v8309, 127
        %v8311 = vand.u32 2147483647, %v1011
        %v8312 = vand.u32 %v8311, 8388607
        %v8313 = vor.u32 %v8312, 8388608
        %v8314 = vsub.s32 0, %v8313
        %v8315 = vadd.s32 %v8310, 1
        %vm8316 = vcmp.gt.s32.totalorder %v8315, 0
        %v8317 = vsel %vm8316, %v8315, 0
        %v8318 = vshrl.u32 %v8317, 5
        %v8319 = vand.u32 %v8317, 31
        %v8320 = vsub.s32 32, %v8319
        %v8321 = vshrl.u32 683565275, %v8320
        %v8322 = vshll.u32 683565275, %v8319
        %v8323 = vshrl.u32 2475754826, %v8320
        %v8324 = vor.u32 %v8322, %v8323
        %v8325 = vshll.u32 2475754826, %v8319
        %v8326 = vshrl.u32 2131351028, %v8320
        %v8327 = vor.u32 %v8325, %v8326
        %v8328 = vshll.u32 2131351028, %v8319
        %v8329 = vshrl.u32 2102212464, %v8320
        %v8330 = vor.u32 %v8328, %v8329
        %v8331 = vshll.u32 2102212464, %v8319
        %v8332 = vshrl.u32 920167782, %v8320
        %v8333 = vor.u32 %v8331, %v8332
        %v8334 = vshll.u32 920167782, %v8319
        %v8335 = vshrl.u32 1326507024, %v8320
        %v8336 = vor.u32 %v8334, %v8335
        %vm8337 = vcmp.lt.s32.totalorder %v8318, 1
        %vm8338 = vcmp.lt.s32.totalorder %v8318, 2
        %vm8339 = vcmp.lt.s32.totalorder %v8318, 3
        %vm8340 = vcmp.lt.s32.totalorder %v8318, 4
        %v8341 = vsel %vm8337, %v8321, %v8324
        %v8342 = vsel %vm8340, %v8330, 2102212464
        %v8343 = vsel %vm8339, %v8327, %v8342
        %v8344 = vsel %vm8338, %v8341, %v8343
        %v8345 = vsel %vm8337, %v8324, %v8327
        %v8346 = vsel %vm8340, %v8333, 920167782
        %v8347 = vsel %vm8339, %v8330, %v8346
        %v8348 = vsel %vm8338, %v8345, %v8347
        %v8349 = vsel %vm8337, %v8327, %v8330
        %v8350 = vsel %vm8340, %v8336, 1326507024
        %v8351 = vsel %vm8339, %v8333, %v8350
        %v8352 = vsel %vm8338, %v8349, %v8351
        %v8353 = vshll.u32 %v8313, 8
        %v8354 = vand.u32 %v8353, 65535
        %v8355 = vshrl.u32 %v8353, 16
        %v8356 = vand.u32 %v8352, 65535
        %v8357 = vshrl.u32 %v8352, 16
        %v8358 = vmul.u32 %v8354, %v8356
        %v8359 = vmul.u32 %v8354, %v8357
        %v8360 = vmul.u32 %v8355, %v8356
        %v8361 = vmul.u32 %v8355, %v8357
        %v8362 = vshll.u32 %v8359, 16
        %v8363 = vshrl.u32 %v8359, 16
        %v8364 = vshll.u32 %v8360, 16
        %v8365 = vshrl.u32 %v8360, 16
        %vm8366 = vc.u32 %v8358, %v8362
        %v8367 = vsel %vm8366, 1, 0
        %v8368 = vadd.s32 %v8358, %v8362
        %v8369 = vadd.s32 %v8361, %v8367
        %vm8370 = vc.u32 %v8368, %v8364
        %v8371 = vsel %vm8370, 1, 0
        %v8372 = vadd.s32 %v8368, %v8364
        %v8373 = vadd.s32 %v8369, %v8371
        %v8374 = vadd.s32 %v8373, %v8363
        %v8375 = vadd.s32 %v8374, %v8365
        %v8376 = vand.u32 %v8353, 65535
        %v8377 = vshrl.u32 %v8353, 16
        %v8378 = vand.u32 %v8348, 65535
        %v8379 = vshrl.u32 %v8348, 16
        %v8380 = vmul.u32 %v8376, %v8378
        %v8381 = vmul.u32 %v8376, %v8379
        %v8382 = vmul.u32 %v8377, %v8378
        %v8383 = vmul.u32 %v8377, %v8379
        %v8384 = vshll.u32 %v8381, 16
        %v8385 = vshrl.u32 %v8381, 16
        %v8386 = vshll.u32 %v8382, 16
        %v8387 = vshrl.u32 %v8382, 16
        %vm8388 = vc.u32 %v8380, %v8384
        %v8389 = vsel %vm8388, 1, 0
        %v8390 = vadd.s32 %v8380, %v8384
        %v8391 = vadd.s32 %v8383, %v8389
        %vm8392 = vc.u32 %v8390, %v8386
        %v8393 = vsel %vm8392, 1, 0
        %v8394 = vadd.s32 %v8390, %v8386
        %v8395 = vadd.s32 %v8391, %v8393
        %v8396 = vadd.s32 %v8395, %v8385
        %v8397 = vadd.s32 %v8396, %v8387
        %v8398 = vmul.u32 %v8353, %v8344
        %v8399 = vadd.s32 %v8375, %v8394
        %vm8400 = vc.u32 %v8375, %v8394
        %v8401 = vadd.s32 %v8397, 1
        %v8402 = vsel %vm8400, %v8401, %v8397
        %v8403 = vadd.s32 %v8398, %v8402
        %v8404 = vadd.s32 %v8403, 536870912
        %v8405 = vshrl.u32 %v8404, 30
        %v8406 = vshll.u32 %v8405, 30
        %v8407 = vsub.s32 %v8403, %v8406
        %vm8408 = vcmp.lt.s32.totalorder %v8407, 0
        %v8409 = vsub.s32 0, %v8407
        %v8410 = vsel %vm8408, %v8409, %v8407
        %v8411 = vclz %v8410
        %v8412 = vsub.s32 %v8411, 2
        %vm8413 = vcmp.gt.s32.totalorder 0, %v8412
        %v8414 = vsel %vm8413, 0, %v8412
        %v8415 = vsub.s32 32, %v8414
        %v8416 = vshll.u32 %v8407, %v8414
        %v8417 = vshrl.u32 %v8399, %v8415
        %v8418 = vor.u32 %v8416, %v8417
        %v8419 = vsub.s32 4294967266, %v8414
        %v8420 = vadd.s32 %v8419, 127
        %v8421 = vshll.u32 %v8420, 23
        %v8422 = vor.u32 4788187, %v8421
        %v8423 = vand.u32 2147483647, %v8422
        %v8425 = vcvt.s32.f32 %v8418
        %v8426 = vmul.f32 %v8425, %v8423
        %v8427 = vxor.u32 %v8426, 2147483648
        %v8428 = vsel %vm8307, %v8427, %v8426
        %v8429 = vsub.s32 4, %v8405
        %v8430 = vsel %vm8307, %v8429, %v8405
        %v8431 = vsel %vm8306, %v1011, %v8428
        %v8432 = vsel %vm8306, 0, %v8430
        %v8433 = vmul.f32 %v8431, %v8431
        %v8434 = vmul.f32 %v8433, -0.001358992
        %v8435 = vadd.f32 %v8434, 0.041655596
        %v8436 = vmul.f32 %v8433, %v8435
        %v8437 = vadd.f32 %v8436, -0.4999988
        %v8438 = vmul.f32 %v8433, %v8437
        %v8439 = vadd.f32 1.0, %v8438
        %v8440 = vmul.f32 %v8431, %v8431
        %v8441 = vmul.f32 %v8440, -0.00019511016
        %v8442 = vadd.f32 %v8441, 0.008332121
        %v8443 = vmul.f32 %v8440, %v8442
        %v8444 = vadd.f32 %v8443, -0.16666654
        %v8445 = vmul.f32 %v8440, %v8444
        %v8446 = vadd.f32 %v8445, 1.0
        %v8447 = vmul.f32 %v8446, %v8431
        %vm8448 = vweird.f32 %v1011
        %v8449 = vadd.s32 %v8432, 3
        %v8450 = vand.u32 %v8449, 3
        %vm8451 = vcmp.lt.s32.totalorder %v8450, 2
        %vm8452 = vcmp.eq.s32.totalorder %v8450, 0
        %v8453 = vxor.u32 %v8447, 2147483648
        %v8454 = vsel %vm8452, %v8439, %v8453
        %vm8455 = vcmp.eq.s32.totalorder %v8450, 2
        %v8456 = vxor.u32 %v8439, 2147483648
        %v8457 = vsel %vm8455, %v8456, %v8447
        %v8458 = vsel %vm8451, %v8454, %v8457
        %v8459 = vsel %vm8448, nan, %v8458
        %v8460 = vand.u32 2147483647, %v1012
        %vm8461 = vcmp.le.f32.partialorder %v8460, 0.7853982
        %vm8462 = vcmp.lt.s32.totalorder %v1012, 0
        %v8463 = vand.u32 %v1012, 2139095040
        %v8464 = vshrl.u32 %v8463, 23
        %v8465 = vsub.s32 %v8464, 127
        %v8466 = vand.u32 2147483647, %v1012
        %v8467 = vand.u32 %v8466, 8388607
        %v8468 = vor.u32 %v8467, 8388608
        %v8469 = vsub.s32 0, %v8468
        %v8470 = vadd.s32 %v8465, 1
        %vm8471 = vcmp.gt.s32.totalorder %v8470, 0
        %v8472 = vsel %vm8471, %v8470, 0
        %v8473 = vshrl.u32 %v8472, 5
        %v8474 = vand.u32 %v8472, 31
        %v8475 = vsub.s32 32, %v8474
        %v8476 = vshrl.u32 683565275, %v8475
        %v8477 = vshll.u32 683565275, %v8474
        %v8478 = vshrl.u32 2475754826, %v8475
        %v8479 = vor.u32 %v8477, %v8478
        %v8480 = vshll.u32 2475754826, %v8474
        %v8481 = vshrl.u32 2131351028, %v8475
        %v8482 = vor.u32 %v8480, %v8481
        %v8483 = vshll.u32 2131351028, %v8474
        %v8484 = vshrl.u32 2102212464, %v8475
        %v8485 = vor.u32 %v8483, %v8484
        %v8486 = vshll.u32 2102212464, %v8474
        %v8487 = vshrl.u32 920167782, %v8475
        %v8488 = vor.u32 %v8486, %v8487
        %v8489 = vshll.u32 920167782, %v8474
        %v8490 = vshrl.u32 1326507024, %v8475
        %v8491 = vor.u32 %v8489, %v8490
        %vm8492 = vcmp.lt.s32.totalorder %v8473, 1
        %vm8493 = vcmp.lt.s32.totalorder %v8473, 2
        %vm8494 = vcmp.lt.s32.totalorder %v8473, 3
        %vm8495 = vcmp.lt.s32.totalorder %v8473, 4
        %v8496 = vsel %vm8492, %v8476, %v8479
        %v8497 = vsel %vm8495, %v8485, 2102212464
        %v8498 = vsel %vm8494, %v8482, %v8497
        %v8499 = vsel %vm8493, %v8496, %v8498
        %v8500 = vsel %vm8492, %v8479, %v8482
        %v8501 = vsel %vm8495, %v8488, 920167782
        %v8502 = vsel %vm8494, %v8485, %v8501
        %v8503 = vsel %vm8493, %v8500, %v8502
        %v8504 = vsel %vm8492, %v8482, %v8485
        %v8505 = vsel %vm8495, %v8491, 1326507024
        %v8506 = vsel %vm8494, %v8488, %v8505
        %v8507 = vsel %vm8493, %v8504, %v8506
        %v8508 = vshll.u32 %v8468, 8
        %v8509 = vand.u32 %v8508, 65535
        %v8510 = vshrl.u32 %v8508, 16
        %v8511 = vand.u32 %v8507, 65535
        %v8512 = vshrl.u32 %v8507, 16
        %v8513 = vmul.u32 %v8509, %v8511
        %v8514 = vmul.u32 %v8509, %v8512
        %v8515 = vmul.u32 %v8510, %v8511
        %v8516 = vmul.u32 %v8510, %v8512
        %v8517 = vshll.u32 %v8514, 16
        %v8518 = vshrl.u32 %v8514, 16
        %v8519 = vshll.u32 %v8515, 16
        %v8520 = vshrl.u32 %v8515, 16
        %vm8521 = vc.u32 %v8513, %v8517
        %v8522 = vsel %vm8521, 1, 0
        %v8523 = vadd.s32 %v8513, %v8517
        %v8524 = vadd.s32 %v8516, %v8522
        %vm8525 = vc.u32 %v8523, %v8519
        %v8526 = vsel %vm8525, 1, 0
        %v8527 = vadd.s32 %v8523, %v8519
        %v8528 = vadd.s32 %v8524, %v8526
        %v8529 = vadd.s32 %v8528, %v8518
        %v8530 = vadd.s32 %v8529, %v8520
        %v8531 = vand.u32 %v8508, 65535
        %v8532 = vshrl.u32 %v8508, 16
        %v8533 = vand.u32 %v8503, 65535
        %v8534 = vshrl.u32 %v8503, 16
        %v8535 = vmul.u32 %v8531, %v8533
        %v8536 = vmul.u32 %v8531, %v8534
        %v8537 = vmul.u32 %v8532, %v8533
        %v8538 = vmul.u32 %v8532, %v8534
        %v8539 = vshll.u32 %v8536, 16
        %v8540 = vshrl.u32 %v8536, 16
        %v8541 = vshll.u32 %v8537, 16
        %v8542 = vshrl.u32 %v8537, 16
        %vm8543 = vc.u32 %v8535, %v8539
        %v8544 = vsel %vm8543, 1, 0
        %v8545 = vadd.s32 %v8535, %v8539
        %v8546 = vadd.s32 %v8538, %v8544
        %vm8547 = vc.u32 %v8545, %v8541
        %v8548 = vsel %vm8547, 1, 0
        %v8549 = vadd.s32 %v8545, %v8541
        %v8550 = vadd.s32 %v8546, %v8548
        %v8551 = vadd.s32 %v8550, %v8540
        %v8552 = vadd.s32 %v8551, %v8542
        %v8553 = vmul.u32 %v8508, %v8499
        %v8554 = vadd.s32 %v8530, %v8549
        %vm8555 = vc.u32 %v8530, %v8549
        %v8556 = vadd.s32 %v8552, 1
        %v8557 = vsel %vm8555, %v8556, %v8552
        %v8558 = vadd.s32 %v8553, %v8557
        %v8559 = vadd.s32 %v8558, 536870912
        %v8560 = vshrl.u32 %v8559, 30
        %v8561 = vshll.u32 %v8560, 30
        %v8562 = vsub.s32 %v8558, %v8561
        %vm8563 = vcmp.lt.s32.totalorder %v8562, 0
        %v8564 = vsub.s32 0, %v8562
        %v8565 = vsel %vm8563, %v8564, %v8562
        %v8566 = vclz %v8565
        %v8567 = vsub.s32 %v8566, 2
        %vm8568 = vcmp.gt.s32.totalorder 0, %v8567
        %v8569 = vsel %vm8568, 0, %v8567
        %v8570 = vsub.s32 32, %v8569
        %v8571 = vshll.u32 %v8562, %v8569
        %v8572 = vshrl.u32 %v8554, %v8570
        %v8573 = vor.u32 %v8571, %v8572
        %v8574 = vsub.s32 4294967266, %v8569
        %v8575 = vadd.s32 %v8574, 127
        %v8576 = vshll.u32 %v8575, 23
        %v8577 = vor.u32 4788187, %v8576
        %v8578 = vand.u32 2147483647, %v8577
        %v8580 = vcvt.s32.f32 %v8573
        %v8581 = vmul.f32 %v8580, %v8578
        %v8582 = vxor.u32 %v8581, 2147483648
        %v8583 = vsel %vm8462, %v8582, %v8581
        %v8584 = vsub.s32 4, %v8560
        %v8585 = vsel %vm8462, %v8584, %v8560
        %v8586 = vsel %vm8461, %v1012, %v8583
        %v8587 = vsel %vm8461, 0, %v8585
        %v8588 = vmul.f32 %v8586, %v8586
        %v8589 = vmul.f32 %v8588, -0.001358992
        %v8590 = vadd.f32 %v8589, 0.041655596
        %v8591 = vmul.f32 %v8588, %v8590
        %v8592 = vadd.f32 %v8591, -0.4999988
        %v8593 = vmul.f32 %v8588, %v8592
        %v8594 = vadd.f32 1.0, %v8593
        %v8595 = vmul.f32 %v8586, %v8586
        %v8596 = vmul.f32 %v8595, -0.00019511016
        %v8597 = vadd.f32 %v8596, 0.008332121
        %v8598 = vmul.f32 %v8595, %v8597
        %v8599 = vadd.f32 %v8598, -0.16666654
        %v8600 = vmul.f32 %v8595, %v8599
        %v8601 = vadd.f32 %v8600, 1.0
        %v8602 = vmul.f32 %v8601, %v8586
        %vm8603 = vweird.f32 %v1012
        %v8604 = vadd.s32 %v8587, 3
        %v8605 = vand.u32 %v8604, 3
        %vm8606 = vcmp.lt.s32.totalorder %v8605, 2
        %vm8607 = vcmp.eq.s32.totalorder %v8605, 0
        %v8608 = vxor.u32 %v8602, 2147483648
        %v8609 = vsel %vm8607, %v8594, %v8608
        %vm8610 = vcmp.eq.s32.totalorder %v8605, 2
        %v8611 = vxor.u32 %v8594, 2147483648
        %v8612 = vsel %vm8610, %v8611, %v8602
        %v8613 = vsel %vm8606, %v8609, %v8612
        %v8614 = vsel %vm8603, nan, %v8613
        %v8615 = vand.u32 2147483647, %v1013
        %vm8616 = vcmp.le.f32.partialorder %v8615, 0.7853982
        %vm8617 = vcmp.lt.s32.totalorder %v1013, 0
        %v8618 = vand.u32 %v1013, 2139095040
        %v8619 = vshrl.u32 %v8618, 23
        %v8620 = vsub.s32 %v8619, 127
        %v8621 = vand.u32 2147483647, %v1013
        %v8622 = vand.u32 %v8621, 8388607
        %v8623 = vor.u32 %v8622, 8388608
        %v8624 = vsub.s32 0, %v8623
        %v8625 = vadd.s32 %v8620, 1
        %vm8626 = vcmp.gt.s32.totalorder %v8625, 0
        %v8627 = vsel %vm8626, %v8625, 0
        %v8628 = vshrl.u32 %v8627, 5
        %v8629 = vand.u32 %v8627, 31
        %v8630 = vsub.s32 32, %v8629
        %v8631 = vshrl.u32 683565275, %v8630
        %v8632 = vshll.u32 683565275, %v8629
        %v8633 = vshrl.u32 2475754826, %v8630
        %v8634 = vor.u32 %v8632, %v8633
        %v8635 = vshll.u32 2475754826, %v8629
        %v8636 = vshrl.u32 2131351028, %v8630
        %v8637 = vor.u32 %v8635, %v8636
        %v8638 = vshll.u32 2131351028, %v8629
        %v8639 = vshrl.u32 2102212464, %v8630
        %v8640 = vor.u32 %v8638, %v8639
        %v8641 = vshll.u32 2102212464, %v8629
        %v8642 = vshrl.u32 920167782, %v8630
        %v8643 = vor.u32 %v8641, %v8642
        %v8644 = vshll.u32 920167782, %v8629
        %v8645 = vshrl.u32 1326507024, %v8630
        %v8646 = vor.u32 %v8644, %v8645
        %vm8647 = vcmp.lt.s32.totalorder %v8628, 1
        %vm8648 = vcmp.lt.s32.totalorder %v8628, 2
        %vm8649 = vcmp.lt.s32.totalorder %v8628, 3
        %vm8650 = vcmp.lt.s32.totalorder %v8628, 4
        %v8651 = vsel %vm8647, %v8631, %v8634
        %v8652 = vsel %vm8650, %v8640, 2102212464
        %v8653 = vsel %vm8649, %v8637, %v8652
        %v8654 = vsel %vm8648, %v8651, %v8653
        %v8655 = vsel %vm8647, %v8634, %v8637
        %v8656 = vsel %vm8650, %v8643, 920167782
        %v8657 = vsel %vm8649, %v8640, %v8656
        %v8658 = vsel %vm8648, %v8655, %v8657
        %v8659 = vsel %vm8647, %v8637, %v8640
        %v8660 = vsel %vm8650, %v8646, 1326507024
        %v8661 = vsel %vm8649, %v8643, %v8660
        %v8662 = vsel %vm8648, %v8659, %v8661
        %v8663 = vshll.u32 %v8623, 8
        %v8664 = vand.u32 %v8663, 65535
        %v8665 = vshrl.u32 %v8663, 16
        %v8666 = vand.u32 %v8662, 65535
        %v8667 = vshrl.u32 %v8662, 16
        %v8668 = vmul.u32 %v8664, %v8666
        %v8669 = vmul.u32 %v8664, %v8667
        %v8670 = vmul.u32 %v8665, %v8666
        %v8671 = vmul.u32 %v8665, %v8667
        %v8672 = vshll.u32 %v8669, 16
        %v8673 = vshrl.u32 %v8669, 16
        %v8674 = vshll.u32 %v8670, 16
        %v8675 = vshrl.u32 %v8670, 16
        %vm8676 = vc.u32 %v8668, %v8672
        %v8677 = vsel %vm8676, 1, 0
        %v8678 = vadd.s32 %v8668, %v8672
        %v8679 = vadd.s32 %v8671, %v8677
        %vm8680 = vc.u32 %v8678, %v8674
        %v8681 = vsel %vm8680, 1, 0
        %v8682 = vadd.s32 %v8678, %v8674
        %v8683 = vadd.s32 %v8679, %v8681
        %v8684 = vadd.s32 %v8683, %v8673
        %v8685 = vadd.s32 %v8684, %v8675
        %v8686 = vand.u32 %v8663, 65535
        %v8687 = vshrl.u32 %v8663, 16
        %v8688 = vand.u32 %v8658, 65535
        %v8689 = vshrl.u32 %v8658, 16
        %v8690 = vmul.u32 %v8686, %v8688
        %v8691 = vmul.u32 %v8686, %v8689
        %v8692 = vmul.u32 %v8687, %v8688
        %v8693 = vmul.u32 %v8687, %v8689
        %v8694 = vshll.u32 %v8691, 16
        %v8695 = vshrl.u32 %v8691, 16
        %v8696 = vshll.u32 %v8692, 16
        %v8697 = vshrl.u32 %v8692, 16
        %vm8698 = vc.u32 %v8690, %v8694
        %v8699 = vsel %vm8698, 1, 0
        %v8700 = vadd.s32 %v8690, %v8694
        %v8701 = vadd.s32 %v8693, %v8699
        %vm8702 = vc.u32 %v8700, %v8696
        %v8703 = vsel %vm8702, 1, 0
        %v8704 = vadd.s32 %v8700, %v8696
        %v8705 = vadd.s32 %v8701, %v8703
        %v8706 = vadd.s32 %v8705, %v8695
        %v8707 = vadd.s32 %v8706, %v8697
        %v8708 = vmul.u32 %v8663, %v8654
        %v8709 = vadd.s32 %v8685, %v8704
        %vm8710 = vc.u32 %v8685, %v8704
        %v8711 = vadd.s32 %v8707, 1
        %v8712 = vsel %vm8710, %v8711, %v8707
        %v8713 = vadd.s32 %v8708, %v8712
        %v8714 = vadd.s32 %v8713, 536870912
        %v8715 = vshrl.u32 %v8714, 30
        %v8716 = vshll.u32 %v8715, 30
        %v8717 = vsub.s32 %v8713, %v8716
        %vm8718 = vcmp.lt.s32.totalorder %v8717, 0
        %v8719 = vsub.s32 0, %v8717
        %v8720 = vsel %vm8718, %v8719, %v8717
        %v8721 = vclz %v8720
        %v8722 = vsub.s32 %v8721, 2
        %vm8723 = vcmp.gt.s32.totalorder 0, %v8722
        %v8724 = vsel %vm8723, 0, %v8722
        %v8725 = vsub.s32 32, %v8724
        %v8726 = vshll.u32 %v8717, %v8724
        %v8727 = vshrl.u32 %v8709, %v8725
        %v8728 = vor.u32 %v8726, %v8727
        %v8729 = vsub.s32 4294967266, %v8724
        %v8730 = vadd.s32 %v8729, 127
        %v8731 = vshll.u32 %v8730, 23
        %v8732 = vor.u32 4788187, %v8731
        %v8733 = vand.u32 2147483647, %v8732
        %v8735 = vcvt.s32.f32 %v8728
        %v8736 = vmul.f32 %v8735, %v8733
        %v8737 = vxor.u32 %v8736, 2147483648
        %v8738 = vsel %vm8617, %v8737, %v8736
        %v8739 = vsub.s32 4, %v8715
        %v8740 = vsel %vm8617, %v8739, %v8715
        %v8741 = vsel %vm8616, %v1013, %v8738
        %v8742 = vsel %vm8616, 0, %v8740
        %v8743 = vmul.f32 %v8741, %v8741
        %v8744 = vmul.f32 %v8743, -0.001358992
        %v8745 = vadd.f32 %v8744, 0.041655596
        %v8746 = vmul.f32 %v8743, %v8745
        %v8747 = vadd.f32 %v8746, -0.4999988
        %v8748 = vmul.f32 %v8743, %v8747
        %v8749 = vadd.f32 1.0, %v8748
        %v8750 = vmul.f32 %v8741, %v8741
        %v8751 = vmul.f32 %v8750, -0.00019511016
        %v8752 = vadd.f32 %v8751, 0.008332121
        %v8753 = vmul.f32 %v8750, %v8752
        %v8754 = vadd.f32 %v8753, -0.16666654
        %v8755 = vmul.f32 %v8750, %v8754
        %v8756 = vadd.f32 %v8755, 1.0
        %v8757 = vmul.f32 %v8756, %v8741
        %vm8758 = vweird.f32 %v1013
        %v8759 = vadd.s32 %v8742, 3
        %v8760 = vand.u32 %v8759, 3
        %vm8761 = vcmp.lt.s32.totalorder %v8760, 2
        %vm8762 = vcmp.eq.s32.totalorder %v8760, 0
        %v8763 = vxor.u32 %v8757, 2147483648
        %v8764 = vsel %vm8762, %v8749, %v8763
        %vm8765 = vcmp.eq.s32.totalorder %v8760, 2
        %v8766 = vxor.u32 %v8749, 2147483648
        %v8767 = vsel %vm8765, %v8766, %v8757
        %v8768 = vsel %vm8761, %v8764, %v8767
        %v8769 = vsel %vm8758, nan, %v8768
        %v8770 = vand.u32 2147483647, %v1014
        %vm8771 = vcmp.le.f32.partialorder %v8770, 0.7853982
        %vm8772 = vcmp.lt.s32.totalorder %v1014, 0
        %v8773 = vand.u32 %v1014, 2139095040
        %v8774 = vshrl.u32 %v8773, 23
        %v8775 = vsub.s32 %v8774, 127
        %v8776 = vand.u32 2147483647, %v1014
        %v8777 = vand.u32 %v8776, 8388607
        %v8778 = vor.u32 %v8777, 8388608
        %v8779 = vsub.s32 0, %v8778
        %v8780 = vadd.s32 %v8775, 1
        %vm8781 = vcmp.gt.s32.totalorder %v8780, 0
        %v8782 = vsel %vm8781, %v8780, 0
        %v8783 = vshrl.u32 %v8782, 5
        %v8784 = vand.u32 %v8782, 31
        %v8785 = vsub.s32 32, %v8784
        %v8786 = vshrl.u32 683565275, %v8785
        %v8787 = vshll.u32 683565275, %v8784
        %v8788 = vshrl.u32 2475754826, %v8785
        %v8789 = vor.u32 %v8787, %v8788
        %v8790 = vshll.u32 2475754826, %v8784
        %v8791 = vshrl.u32 2131351028, %v8785
        %v8792 = vor.u32 %v8790, %v8791
        %v8793 = vshll.u32 2131351028, %v8784
        %v8794 = vshrl.u32 2102212464, %v8785
        %v8795 = vor.u32 %v8793, %v8794
        %v8796 = vshll.u32 2102212464, %v8784
        %v8797 = vshrl.u32 920167782, %v8785
        %v8798 = vor.u32 %v8796, %v8797
        %v8799 = vshll.u32 920167782, %v8784
        %v8800 = vshrl.u32 1326507024, %v8785
        %v8801 = vor.u32 %v8799, %v8800
        %vm8802 = vcmp.lt.s32.totalorder %v8783, 1
        %vm8803 = vcmp.lt.s32.totalorder %v8783, 2
        %vm8804 = vcmp.lt.s32.totalorder %v8783, 3
        %vm8805 = vcmp.lt.s32.totalorder %v8783, 4
        %v8806 = vsel %vm8802, %v8786, %v8789
        %v8807 = vsel %vm8805, %v8795, 2102212464
        %v8808 = vsel %vm8804, %v8792, %v8807
        %v8809 = vsel %vm8803, %v8806, %v8808
        %v8810 = vsel %vm8802, %v8789, %v8792
        %v8811 = vsel %vm8805, %v8798, 920167782
        %v8812 = vsel %vm8804, %v8795, %v8811
        %v8813 = vsel %vm8803, %v8810, %v8812
        %v8814 = vsel %vm8802, %v8792, %v8795
        %v8815 = vsel %vm8805, %v8801, 1326507024
        %v8816 = vsel %vm8804, %v8798, %v8815
        %v8817 = vsel %vm8803, %v8814, %v8816
        %v8818 = vshll.u32 %v8778, 8
        %v8819 = vand.u32 %v8818, 65535
        %v8820 = vshrl.u32 %v8818, 16
        %v8821 = vand.u32 %v8817, 65535
        %v8822 = vshrl.u32 %v8817, 16
        %v8823 = vmul.u32 %v8819, %v8821
        %v8824 = vmul.u32 %v8819, %v8822
        %v8825 = vmul.u32 %v8820, %v8821
        %v8826 = vmul.u32 %v8820, %v8822
        %v8827 = vshll.u32 %v8824, 16
        %v8828 = vshrl.u32 %v8824, 16
        %v8829 = vshll.u32 %v8825, 16
        %v8830 = vshrl.u32 %v8825, 16
        %vm8831 = vc.u32 %v8823, %v8827
        %v8832 = vsel %vm8831, 1, 0
        %v8833 = vadd.s32 %v8823, %v8827
        %v8834 = vadd.s32 %v8826, %v8832
        %vm8835 = vc.u32 %v8833, %v8829
        %v8836 = vsel %vm8835, 1, 0
        %v8837 = vadd.s32 %v8833, %v8829
        %v8838 = vadd.s32 %v8834, %v8836
        %v8839 = vadd.s32 %v8838, %v8828
        %v8840 = vadd.s32 %v8839, %v8830
        %v8841 = vand.u32 %v8818, 65535
        %v8842 = vshrl.u32 %v8818, 16
        %v8843 = vand.u32 %v8813, 65535
        %v8844 = vshrl.u32 %v8813, 16
        %v8845 = vmul.u32 %v8841, %v8843
        %v8846 = vmul.u32 %v8841, %v8844
        %v8847 = vmul.u32 %v8842, %v8843
        %v8848 = vmul.u32 %v8842, %v8844
        %v8849 = vshll.u32 %v8846, 16
        %v8850 = vshrl.u32 %v8846, 16
        %v8851 = vshll.u32 %v8847, 16
        %v8852 = vshrl.u32 %v8847, 16
        %vm8853 = vc.u32 %v8845, %v8849
        %v8854 = vsel %vm8853, 1, 0
        %v8855 = vadd.s32 %v8845, %v8849
        %v8856 = vadd.s32 %v8848, %v8854
        %vm8857 = vc.u32 %v8855, %v8851
        %v8858 = vsel %vm8857, 1, 0
        %v8859 = vadd.s32 %v8855, %v8851
        %v8860 = vadd.s32 %v8856, %v8858
        %v8861 = vadd.s32 %v8860, %v8850
        %v8862 = vadd.s32 %v8861, %v8852
        %v8863 = vmul.u32 %v8818, %v8809
        %v8864 = vadd.s32 %v8840, %v8859
        %vm8865 = vc.u32 %v8840, %v8859
        %v8866 = vadd.s32 %v8862, 1
        %v8867 = vsel %vm8865, %v8866, %v8862
        %v8868 = vadd.s32 %v8863, %v8867
        %v8869 = vadd.s32 %v8868, 536870912
        %v8870 = vshrl.u32 %v8869, 30
        %v8871 = vshll.u32 %v8870, 30
        %v8872 = vsub.s32 %v8868, %v8871
        %vm8873 = vcmp.lt.s32.totalorder %v8872, 0
        %v8874 = vsub.s32 0, %v8872
        %v8875 = vsel %vm8873, %v8874, %v8872
        %v8876 = vclz %v8875
        %v8877 = vsub.s32 %v8876, 2
        %vm8878 = vcmp.gt.s32.totalorder 0, %v8877
        %v8879 = vsel %vm8878, 0, %v8877
        %v8880 = vsub.s32 32, %v8879
        %v8881 = vshll.u32 %v8872, %v8879
        %v8882 = vshrl.u32 %v8864, %v8880
        %v8883 = vor.u32 %v8881, %v8882
        %v8884 = vsub.s32 4294967266, %v8879
        %v8885 = vadd.s32 %v8884, 127
        %v8886 = vshll.u32 %v8885, 23
        %v8887 = vor.u32 4788187, %v8886
        %v8888 = vand.u32 2147483647, %v8887
        %v8890 = vcvt.s32.f32 %v8883
        %v8891 = vmul.f32 %v8890, %v8888
        %v8892 = vxor.u32 %v8891, 2147483648
        %v8893 = vsel %vm8772, %v8892, %v8891
        %v8894 = vsub.s32 4, %v8870
        %v8895 = vsel %vm8772, %v8894, %v8870
        %v8896 = vsel %vm8771, %v1014, %v8893
        %v8897 = vsel %vm8771, 0, %v8895
        %v8898 = vmul.f32 %v8896, %v8896
        %v8899 = vmul.f32 %v8898, -0.001358992
        %v8900 = vadd.f32 %v8899, 0.041655596
        %v8901 = vmul.f32 %v8898, %v8900
        %v8902 = vadd.f32 %v8901, -0.4999988
        %v8903 = vmul.f32 %v8898, %v8902
        %v8904 = vadd.f32 1.0, %v8903
        %v8905 = vmul.f32 %v8896, %v8896
        %v8906 = vmul.f32 %v8905, -0.00019511016
        %v8907 = vadd.f32 %v8906, 0.008332121
        %v8908 = vmul.f32 %v8905, %v8907
        %v8909 = vadd.f32 %v8908, -0.16666654
        %v8910 = vmul.f32 %v8905, %v8909
        %v8911 = vadd.f32 %v8910, 1.0
        %v8912 = vmul.f32 %v8911, %v8896
        %vm8913 = vweird.f32 %v1014
        %v8914 = vadd.s32 %v8897, 3
        %v8915 = vand.u32 %v8914, 3
        %vm8916 = vcmp.lt.s32.totalorder %v8915, 2
        %vm8917 = vcmp.eq.s32.totalorder %v8915, 0
        %v8918 = vxor.u32 %v8912, 2147483648
        %v8919 = vsel %vm8917, %v8904, %v8918
        %vm8920 = vcmp.eq.s32.totalorder %v8915, 2
        %v8921 = vxor.u32 %v8904, 2147483648
        %v8922 = vsel %vm8920, %v8921, %v8912
        %v8923 = vsel %vm8916, %v8919, %v8922
        %v8924 = vsel %vm8913, nan, %v8923
        %v8925 = vand.u32 2147483647, %v1015
        %vm8926 = vcmp.le.f32.partialorder %v8925, 0.7853982
        %vm8927 = vcmp.lt.s32.totalorder %v1015, 0
        %v8928 = vand.u32 %v1015, 2139095040
        %v8929 = vshrl.u32 %v8928, 23
        %v8930 = vsub.s32 %v8929, 127
        %v8931 = vand.u32 2147483647, %v1015
        %v8932 = vand.u32 %v8931, 8388607
        %v8933 = vor.u32 %v8932, 8388608
        %v8934 = vsub.s32 0, %v8933
        %v8935 = vadd.s32 %v8930, 1
        %vm8936 = vcmp.gt.s32.totalorder %v8935, 0
        %v8937 = vsel %vm8936, %v8935, 0
        %v8938 = vshrl.u32 %v8937, 5
        %v8939 = vand.u32 %v8937, 31
        %v8940 = vsub.s32 32, %v8939
        %v8941 = vshrl.u32 683565275, %v8940
        %v8942 = vshll.u32 683565275, %v8939
        %v8943 = vshrl.u32 2475754826, %v8940
        %v8944 = vor.u32 %v8942, %v8943
        %v8945 = vshll.u32 2475754826, %v8939
        %v8946 = vshrl.u32 2131351028, %v8940
        %v8947 = vor.u32 %v8945, %v8946
        %v8948 = vshll.u32 2131351028, %v8939
        %v8949 = vshrl.u32 2102212464, %v8940
        %v8950 = vor.u32 %v8948, %v8949
        %v8951 = vshll.u32 2102212464, %v8939
        %v8952 = vshrl.u32 920167782, %v8940
        %v8953 = vor.u32 %v8951, %v8952
        %v8954 = vshll.u32 920167782, %v8939
        %v8955 = vshrl.u32 1326507024, %v8940
        %v8956 = vor.u32 %v8954, %v8955
        %vm8957 = vcmp.lt.s32.totalorder %v8938, 1
        %vm8958 = vcmp.lt.s32.totalorder %v8938, 2
        %vm8959 = vcmp.lt.s32.totalorder %v8938, 3
        %vm8960 = vcmp.lt.s32.totalorder %v8938, 4
        %v8961 = vsel %vm8957, %v8941, %v8944
        %v8962 = vsel %vm8960, %v8950, 2102212464
        %v8963 = vsel %vm8959, %v8947, %v8962
        %v8964 = vsel %vm8958, %v8961, %v8963
        %v8965 = vsel %vm8957, %v8944, %v8947
        %v8966 = vsel %vm8960, %v8953, 920167782
        %v8967 = vsel %vm8959, %v8950, %v8966
        %v8968 = vsel %vm8958, %v8965, %v8967
        %v8969 = vsel %vm8957, %v8947, %v8950
        %v8970 = vsel %vm8960, %v8956, 1326507024
        %v8971 = vsel %vm8959, %v8953, %v8970
        %v8972 = vsel %vm8958, %v8969, %v8971
        %v8973 = vshll.u32 %v8933, 8
        %v8974 = vand.u32 %v8973, 65535
        %v8975 = vshrl.u32 %v8973, 16
        %v8976 = vand.u32 %v8972, 65535
        %v8977 = vshrl.u32 %v8972, 16
        %v8978 = vmul.u32 %v8974, %v8976
        %v8979 = vmul.u32 %v8974, %v8977
        %v8980 = vmul.u32 %v8975, %v8976
        %v8981 = vmul.u32 %v8975, %v8977
        %v8982 = vshll.u32 %v8979, 16
        %v8983 = vshrl.u32 %v8979, 16
        %v8984 = vshll.u32 %v8980, 16
        %v8985 = vshrl.u32 %v8980, 16
        %vm8986 = vc.u32 %v8978, %v8982
        %v8987 = vsel %vm8986, 1, 0
        %v8988 = vadd.s32 %v8978, %v8982
        %v8989 = vadd.s32 %v8981, %v8987
        %vm8990 = vc.u32 %v8988, %v8984
        %v8991 = vsel %vm8990, 1, 0
        %v8992 = vadd.s32 %v8988, %v8984
        %v8993 = vadd.s32 %v8989, %v8991
        %v8994 = vadd.s32 %v8993, %v8983
        %v8995 = vadd.s32 %v8994, %v8985
        %v8996 = vand.u32 %v8973, 65535
        %v8997 = vshrl.u32 %v8973, 16
        %v8998 = vand.u32 %v8968, 65535
        %v8999 = vshrl.u32 %v8968, 16
        %v9000 = vmul.u32 %v8996, %v8998
        %v9001 = vmul.u32 %v8996, %v8999
        %v9002 = vmul.u32 %v8997, %v8998
        %v9003 = vmul.u32 %v8997, %v8999
        %v9004 = vshll.u32 %v9001, 16
        %v9005 = vshrl.u32 %v9001, 16
        %v9006 = vshll.u32 %v9002, 16
        %v9007 = vshrl.u32 %v9002, 16
        %vm9008 = vc.u32 %v9000, %v9004
        %v9009 = vsel %vm9008, 1, 0
        %v9010 = vadd.s32 %v9000, %v9004
        %v9011 = vadd.s32 %v9003, %v9009
        %vm9012 = vc.u32 %v9010, %v9006
        %v9013 = vsel %vm9012, 1, 0
        %v9014 = vadd.s32 %v9010, %v9006
        %v9015 = vadd.s32 %v9011, %v9013
        %v9016 = vadd.s32 %v9015, %v9005
        %v9017 = vadd.s32 %v9016, %v9007
        %v9018 = vmul.u32 %v8973, %v8964
        %v9019 = vadd.s32 %v8995, %v9014
        %vm9020 = vc.u32 %v8995, %v9014
        %v9021 = vadd.s32 %v9017, 1
        %v9022 = vsel %vm9020, %v9021, %v9017
        %v9023 = vadd.s32 %v9018, %v9022
        %v9024 = vadd.s32 %v9023, 536870912
        %v9025 = vshrl.u32 %v9024, 30
        %v9026 = vshll.u32 %v9025, 30
        %v9027 = vsub.s32 %v9023, %v9026
        %vm9028 = vcmp.lt.s32.totalorder %v9027, 0
        %v9029 = vsub.s32 0, %v9027
        %v9030 = vsel %vm9028, %v9029, %v9027
        %v9031 = vclz %v9030
        %v9032 = vsub.s32 %v9031, 2
        %vm9033 = vcmp.gt.s32.totalorder 0, %v9032
        %v9034 = vsel %vm9033, 0, %v9032
        %v9035 = vsub.s32 32, %v9034
        %v9036 = vshll.u32 %v9027, %v9034
        %v9037 = vshrl.u32 %v9019, %v9035
        %v9038 = vor.u32 %v9036, %v9037
        %v9039 = vsub.s32 4294967266, %v9034
        %v9040 = vadd.s32 %v9039, 127
        %v9041 = vshll.u32 %v9040, 23
        %v9042 = vor.u32 4788187, %v9041
        %v9043 = vand.u32 2147483647, %v9042
        %v9045 = vcvt.s32.f32 %v9038
        %v9046 = vmul.f32 %v9045, %v9043
        %v9047 = vxor.u32 %v9046, 2147483648
        %v9048 = vsel %vm8927, %v9047, %v9046
        %v9049 = vsub.s32 4, %v9025
        %v9050 = vsel %vm8927, %v9049, %v9025
        %v9051 = vsel %vm8926, %v1015, %v9048
        %v9052 = vsel %vm8926, 0, %v9050
        %v9053 = vmul.f32 %v9051, %v9051
        %v9054 = vmul.f32 %v9053, -0.001358992
        %v9055 = vadd.f32 %v9054, 0.041655596
        %v9056 = vmul.f32 %v9053, %v9055
        %v9057 = vadd.f32 %v9056, -0.4999988
        %v9058 = vmul.f32 %v9053, %v9057
        %v9059 = vadd.f32 1.0, %v9058
        %v9060 = vmul.f32 %v9051, %v9051
        %v9061 = vmul.f32 %v9060, -0.00019511016
        %v9062 = vadd.f32 %v9061, 0.008332121
        %v9063 = vmul.f32 %v9060, %v9062
        %v9064 = vadd.f32 %v9063, -0.16666654
        %v9065 = vmul.f32 %v9060, %v9064
        %v9066 = vadd.f32 %v9065, 1.0
        %v9067 = vmul.f32 %v9066, %v9051
        %vm9068 = vweird.f32 %v1015
        %v9069 = vadd.s32 %v9052, 3
        %v9070 = vand.u32 %v9069, 3
        %vm9071 = vcmp.lt.s32.totalorder %v9070, 2
        %vm9072 = vcmp.eq.s32.totalorder %v9070, 0
        %v9073 = vxor.u32 %v9067, 2147483648
        %v9074 = vsel %vm9072, %v9059, %v9073
        %vm9075 = vcmp.eq.s32.totalorder %v9070, 2
        %v9076 = vxor.u32 %v9059, 2147483648
        %v9077 = vsel %vm9075, %v9076, %v9067
        %v9078 = vsel %vm9071, %v9074, %v9077
        %v9079 = vsel %vm9068, nan, %v9078
        %v9080 = vand.u32 2147483647, %v1016
        %vm9081 = vcmp.le.f32.partialorder %v9080, 0.7853982
        %vm9082 = vcmp.lt.s32.totalorder %v1016, 0
        %v9083 = vand.u32 %v1016, 2139095040
        %v9084 = vshrl.u32 %v9083, 23
        %v9085 = vsub.s32 %v9084, 127
        %v9086 = vand.u32 2147483647, %v1016
        %v9087 = vand.u32 %v9086, 8388607
        %v9088 = vor.u32 %v9087, 8388608
        %v9089 = vsub.s32 0, %v9088
        %v9090 = vadd.s32 %v9085, 1
        %vm9091 = vcmp.gt.s32.totalorder %v9090, 0
        %v9092 = vsel %vm9091, %v9090, 0
        %v9093 = vshrl.u32 %v9092, 5
        %v9094 = vand.u32 %v9092, 31
        %v9095 = vsub.s32 32, %v9094
        %v9096 = vshrl.u32 683565275, %v9095
        %v9097 = vshll.u32 683565275, %v9094
        %v9098 = vshrl.u32 2475754826, %v9095
        %v9099 = vor.u32 %v9097, %v9098
        %v9100 = vshll.u32 2475754826, %v9094
        %v9101 = vshrl.u32 2131351028, %v9095
        %v9102 = vor.u32 %v9100, %v9101
        %v9103 = vshll.u32 2131351028, %v9094
        %v9104 = vshrl.u32 2102212464, %v9095
        %v9105 = vor.u32 %v9103, %v9104
        %v9106 = vshll.u32 2102212464, %v9094
        %v9107 = vshrl.u32 920167782, %v9095
        %v9108 = vor.u32 %v9106, %v9107
        %v9109 = vshll.u32 920167782, %v9094
        %v9110 = vshrl.u32 1326507024, %v9095
        %v9111 = vor.u32 %v9109, %v9110
        %vm9112 = vcmp.lt.s32.totalorder %v9093, 1
        %vm9113 = vcmp.lt.s32.totalorder %v9093, 2
        %vm9114 = vcmp.lt.s32.totalorder %v9093, 3
        %vm9115 = vcmp.lt.s32.totalorder %v9093, 4
        %v9116 = vsel %vm9112, %v9096, %v9099
        %v9117 = vsel %vm9115, %v9105, 2102212464
        %v9118 = vsel %vm9114, %v9102, %v9117
        %v9119 = vsel %vm9113, %v9116, %v9118
        %v9120 = vsel %vm9112, %v9099, %v9102
        %v9121 = vsel %vm9115, %v9108, 920167782
        %v9122 = vsel %vm9114, %v9105, %v9121
        %v9123 = vsel %vm9113, %v9120, %v9122
        %v9124 = vsel %vm9112, %v9102, %v9105
        %v9125 = vsel %vm9115, %v9111, 1326507024
        %v9126 = vsel %vm9114, %v9108, %v9125
        %v9127 = vsel %vm9113, %v9124, %v9126
        %v9128 = vshll.u32 %v9088, 8
        %v9129 = vand.u32 %v9128, 65535
        %v9130 = vshrl.u32 %v9128, 16
        %v9131 = vand.u32 %v9127, 65535
        %v9132 = vshrl.u32 %v9127, 16
        %v9133 = vmul.u32 %v9129, %v9131
        %v9134 = vmul.u32 %v9129, %v9132
        %v9135 = vmul.u32 %v9130, %v9131
        %v9136 = vmul.u32 %v9130, %v9132
        %v9137 = vshll.u32 %v9134, 16
        %v9138 = vshrl.u32 %v9134, 16
        %v9139 = vshll.u32 %v9135, 16
        %v9140 = vshrl.u32 %v9135, 16
        %vm9141 = vc.u32 %v9133, %v9137
        %v9142 = vsel %vm9141, 1, 0
        %v9143 = vadd.s32 %v9133, %v9137
        %v9144 = vadd.s32 %v9136, %v9142
        %vm9145 = vc.u32 %v9143, %v9139
        %v9146 = vsel %vm9145, 1, 0
        %v9147 = vadd.s32 %v9143, %v9139
        %v9148 = vadd.s32 %v9144, %v9146
        %v9149 = vadd.s32 %v9148, %v9138
        %v9150 = vadd.s32 %v9149, %v9140
        %v9151 = vand.u32 %v9128, 65535
        %v9152 = vshrl.u32 %v9128, 16
        %v9153 = vand.u32 %v9123, 65535
        %v9154 = vshrl.u32 %v9123, 16
        %v9155 = vmul.u32 %v9151, %v9153
        %v9156 = vmul.u32 %v9151, %v9154
        %v9157 = vmul.u32 %v9152, %v9153
        %v9158 = vmul.u32 %v9152, %v9154
        %v9159 = vshll.u32 %v9156, 16
        %v9160 = vshrl.u32 %v9156, 16
        %v9161 = vshll.u32 %v9157, 16
        %v9162 = vshrl.u32 %v9157, 16
        %vm9163 = vc.u32 %v9155, %v9159
        %v9164 = vsel %vm9163, 1, 0
        %v9165 = vadd.s32 %v9155, %v9159
        %v9166 = vadd.s32 %v9158, %v9164
        %vm9167 = vc.u32 %v9165, %v9161
        %v9168 = vsel %vm9167, 1, 0
        %v9169 = vadd.s32 %v9165, %v9161
        %v9170 = vadd.s32 %v9166, %v9168
        %v9171 = vadd.s32 %v9170, %v9160
        %v9172 = vadd.s32 %v9171, %v9162
        %v9173 = vmul.u32 %v9128, %v9119
        %v9174 = vadd.s32 %v9150, %v9169
        %vm9175 = vc.u32 %v9150, %v9169
        %v9176 = vadd.s32 %v9172, 1
        %v9177 = vsel %vm9175, %v9176, %v9172
        %v9178 = vadd.s32 %v9173, %v9177
        %v9179 = vadd.s32 %v9178, 536870912
        %v9180 = vshrl.u32 %v9179, 30
        %v9181 = vshll.u32 %v9180, 30
        %v9182 = vsub.s32 %v9178, %v9181
        %vm9183 = vcmp.lt.s32.totalorder %v9182, 0
        %v9184 = vsub.s32 0, %v9182
        %v9185 = vsel %vm9183, %v9184, %v9182
        %v9186 = vclz %v9185
        %v9187 = vsub.s32 %v9186, 2
        %vm9188 = vcmp.gt.s32.totalorder 0, %v9187
        %v9189 = vsel %vm9188, 0, %v9187
        %v9190 = vsub.s32 32, %v9189
        %v9191 = vshll.u32 %v9182, %v9189
        %v9192 = vshrl.u32 %v9174, %v9190
        %v9193 = vor.u32 %v9191, %v9192
        %v9194 = vsub.s32 4294967266, %v9189
        %v9195 = vadd.s32 %v9194, 127
        %v9196 = vshll.u32 %v9195, 23
        %v9197 = vor.u32 4788187, %v9196
        %v9198 = vand.u32 2147483647, %v9197
        %v9200 = vcvt.s32.f32 %v9193
        %v9201 = vmul.f32 %v9200, %v9198
        %v9202 = vxor.u32 %v9201, 2147483648
        %v9203 = vsel %vm9082, %v9202, %v9201
        %v9204 = vsub.s32 4, %v9180
        %v9205 = vsel %vm9082, %v9204, %v9180
        %v9206 = vsel %vm9081, %v1016, %v9203
        %v9207 = vsel %vm9081, 0, %v9205
        %v9208 = vmul.f32 %v9206, %v9206
        %v9209 = vmul.f32 %v9208, -0.001358992
        %v9210 = vadd.f32 %v9209, 0.041655596
        %v9211 = vmul.f32 %v9208, %v9210
        %v9212 = vadd.f32 %v9211, -0.4999988
        %v9213 = vmul.f32 %v9208, %v9212
        %v9214 = vadd.f32 1.0, %v9213
        %v9215 = vmul.f32 %v9206, %v9206
        %v9216 = vmul.f32 %v9215, -0.00019511016
        %v9217 = vadd.f32 %v9216, 0.008332121
        %v9218 = vmul.f32 %v9215, %v9217
        %v9219 = vadd.f32 %v9218, -0.16666654
        %v9220 = vmul.f32 %v9215, %v9219
        %v9221 = vadd.f32 %v9220, 1.0
        %v9222 = vmul.f32 %v9221, %v9206
        %vm9223 = vweird.f32 %v1016
        %v9224 = vadd.s32 %v9207, 3
        %v9225 = vand.u32 %v9224, 3
        %vm9226 = vcmp.lt.s32.totalorder %v9225, 2
        %vm9227 = vcmp.eq.s32.totalorder %v9225, 0
        %v9228 = vxor.u32 %v9222, 2147483648
        %v9229 = vsel %vm9227, %v9214, %v9228
        %vm9230 = vcmp.eq.s32.totalorder %v9225, 2
        %v9231 = vxor.u32 %v9214, 2147483648
        %v9232 = vsel %vm9230, %v9231, %v9222
        %v9233 = vsel %vm9226, %v9229, %v9232
        %v9234 = vsel %vm9223, nan, %v9233
        %v9235 = vand.u32 2147483647, %v1017
        %vm9236 = vcmp.le.f32.partialorder %v9235, 0.7853982
        %vm9237 = vcmp.lt.s32.totalorder %v1017, 0
        %v9238 = vand.u32 %v1017, 2139095040
        %v9239 = vshrl.u32 %v9238, 23
        %v9240 = vsub.s32 %v9239, 127
        %v9241 = vand.u32 2147483647, %v1017
        %v9242 = vand.u32 %v9241, 8388607
        %v9243 = vor.u32 %v9242, 8388608
        %v9244 = vsub.s32 0, %v9243
        %v9245 = vadd.s32 %v9240, 1
        %vm9246 = vcmp.gt.s32.totalorder %v9245, 0
        %v9247 = vsel %vm9246, %v9245, 0
        %v9248 = vshrl.u32 %v9247, 5
        %v9249 = vand.u32 %v9247, 31
        %v9250 = vsub.s32 32, %v9249
        %v9251 = vshrl.u32 683565275, %v9250
        %v9252 = vshll.u32 683565275, %v9249
        %v9253 = vshrl.u32 2475754826, %v9250
        %v9254 = vor.u32 %v9252, %v9253
        %v9255 = vshll.u32 2475754826, %v9249
        %v9256 = vshrl.u32 2131351028, %v9250
        %v9257 = vor.u32 %v9255, %v9256
        %v9258 = vshll.u32 2131351028, %v9249
        %v9259 = vshrl.u32 2102212464, %v9250
        %v9260 = vor.u32 %v9258, %v9259
        %v9261 = vshll.u32 2102212464, %v9249
        %v9262 = vshrl.u32 920167782, %v9250
        %v9263 = vor.u32 %v9261, %v9262
        %v9264 = vshll.u32 920167782, %v9249
        %v9265 = vshrl.u32 1326507024, %v9250
        %v9266 = vor.u32 %v9264, %v9265
        %vm9267 = vcmp.lt.s32.totalorder %v9248, 1
        %vm9268 = vcmp.lt.s32.totalorder %v9248, 2
        %vm9269 = vcmp.lt.s32.totalorder %v9248, 3
        %vm9270 = vcmp.lt.s32.totalorder %v9248, 4
        %v9271 = vsel %vm9267, %v9251, %v9254
        %v9272 = vsel %vm9270, %v9260, 2102212464
        %v9273 = vsel %vm9269, %v9257, %v9272
        %v9274 = vsel %vm9268, %v9271, %v9273
        %v9275 = vsel %vm9267, %v9254, %v9257
        %v9276 = vsel %vm9270, %v9263, 920167782
        %v9277 = vsel %vm9269, %v9260, %v9276
        %v9278 = vsel %vm9268, %v9275, %v9277
        %v9279 = vsel %vm9267, %v9257, %v9260
        %v9280 = vsel %vm9270, %v9266, 1326507024
        %v9281 = vsel %vm9269, %v9263, %v9280
        %v9282 = vsel %vm9268, %v9279, %v9281
        %v9283 = vshll.u32 %v9243, 8
        %v9284 = vand.u32 %v9283, 65535
        %v9285 = vshrl.u32 %v9283, 16
        %v9286 = vand.u32 %v9282, 65535
        %v9287 = vshrl.u32 %v9282, 16
        %v9288 = vmul.u32 %v9284, %v9286
        %v9289 = vmul.u32 %v9284, %v9287
        %v9290 = vmul.u32 %v9285, %v9286
        %v9291 = vmul.u32 %v9285, %v9287
        %v9292 = vshll.u32 %v9289, 16
        %v9293 = vshrl.u32 %v9289, 16
        %v9294 = vshll.u32 %v9290, 16
        %v9295 = vshrl.u32 %v9290, 16
        %vm9296 = vc.u32 %v9288, %v9292
        %v9297 = vsel %vm9296, 1, 0
        %v9298 = vadd.s32 %v9288, %v9292
        %v9299 = vadd.s32 %v9291, %v9297
        %vm9300 = vc.u32 %v9298, %v9294
        %v9301 = vsel %vm9300, 1, 0
        %v9302 = vadd.s32 %v9298, %v9294
        %v9303 = vadd.s32 %v9299, %v9301
        %v9304 = vadd.s32 %v9303, %v9293
        %v9305 = vadd.s32 %v9304, %v9295
        %v9306 = vand.u32 %v9283, 65535
        %v9307 = vshrl.u32 %v9283, 16
        %v9308 = vand.u32 %v9278, 65535
        %v9309 = vshrl.u32 %v9278, 16
        %v9310 = vmul.u32 %v9306, %v9308
        %v9311 = vmul.u32 %v9306, %v9309
        %v9312 = vmul.u32 %v9307, %v9308
        %v9313 = vmul.u32 %v9307, %v9309
        %v9314 = vshll.u32 %v9311, 16
        %v9315 = vshrl.u32 %v9311, 16
        %v9316 = vshll.u32 %v9312, 16
        %v9317 = vshrl.u32 %v9312, 16
        %vm9318 = vc.u32 %v9310, %v9314
        %v9319 = vsel %vm9318, 1, 0
        %v9320 = vadd.s32 %v9310, %v9314
        %v9321 = vadd.s32 %v9313, %v9319
        %vm9322 = vc.u32 %v9320, %v9316
        %v9323 = vsel %vm9322, 1, 0
        %v9324 = vadd.s32 %v9320, %v9316
        %v9325 = vadd.s32 %v9321, %v9323
        %v9326 = vadd.s32 %v9325, %v9315
        %v9327 = vadd.s32 %v9326, %v9317
        %v9328 = vmul.u32 %v9283, %v9274
        %v9329 = vadd.s32 %v9305, %v9324
        %vm9330 = vc.u32 %v9305, %v9324
        %v9331 = vadd.s32 %v9327, 1
        %v9332 = vsel %vm9330, %v9331, %v9327
        %v9333 = vadd.s32 %v9328, %v9332
        %v9334 = vadd.s32 %v9333, 536870912
        %v9335 = vshrl.u32 %v9334, 30
        %v9336 = vshll.u32 %v9335, 30
        %v9337 = vsub.s32 %v9333, %v9336
        %vm9338 = vcmp.lt.s32.totalorder %v9337, 0
        %v9339 = vsub.s32 0, %v9337
        %v9340 = vsel %vm9338, %v9339, %v9337
        %v9341 = vclz %v9340
        %v9342 = vsub.s32 %v9341, 2
        %vm9343 = vcmp.gt.s32.totalorder 0, %v9342
        %v9344 = vsel %vm9343, 0, %v9342
        %v9345 = vsub.s32 32, %v9344
        %v9346 = vshll.u32 %v9337, %v9344
        %v9347 = vshrl.u32 %v9329, %v9345
        %v9348 = vor.u32 %v9346, %v9347
        %v9349 = vsub.s32 4294967266, %v9344
        %v9350 = vadd.s32 %v9349, 127
        %v9351 = vshll.u32 %v9350, 23
        %v9352 = vor.u32 4788187, %v9351
        %v9353 = vand.u32 2147483647, %v9352
        %v9355 = vcvt.s32.f32 %v9348
        %v9356 = vmul.f32 %v9355, %v9353
        %v9357 = vxor.u32 %v9356, 2147483648
        %v9358 = vsel %vm9237, %v9357, %v9356
        %v9359 = vsub.s32 4, %v9335
        %v9360 = vsel %vm9237, %v9359, %v9335
        %v9361 = vsel %vm9236, %v1017, %v9358
        %v9362 = vsel %vm9236, 0, %v9360
        %v9363 = vmul.f32 %v9361, %v9361
        %v9364 = vmul.f32 %v9363, -0.001358992
        %v9365 = vadd.f32 %v9364, 0.041655596
        %v9366 = vmul.f32 %v9363, %v9365
        %v9367 = vadd.f32 %v9366, -0.4999988
        %v9368 = vmul.f32 %v9363, %v9367
        %v9369 = vadd.f32 1.0, %v9368
        %v9370 = vmul.f32 %v9361, %v9361
        %v9371 = vmul.f32 %v9370, -0.00019511016
        %v9372 = vadd.f32 %v9371, 0.008332121
        %v9373 = vmul.f32 %v9370, %v9372
        %v9374 = vadd.f32 %v9373, -0.16666654
        %v9375 = vmul.f32 %v9370, %v9374
        %v9376 = vadd.f32 %v9375, 1.0
        %v9377 = vmul.f32 %v9376, %v9361
        %vm9378 = vweird.f32 %v1017
        %v9379 = vadd.s32 %v9362, 3
        %v9380 = vand.u32 %v9379, 3
        %vm9381 = vcmp.lt.s32.totalorder %v9380, 2
        %vm9382 = vcmp.eq.s32.totalorder %v9380, 0
        %v9383 = vxor.u32 %v9377, 2147483648
        %v9384 = vsel %vm9382, %v9369, %v9383
        %vm9385 = vcmp.eq.s32.totalorder %v9380, 2
        %v9386 = vxor.u32 %v9369, 2147483648
        %v9387 = vsel %vm9385, %v9386, %v9377
        %v9388 = vsel %vm9381, %v9384, %v9387
        %v9389 = vsel %vm9378, nan, %v9388
        %v9390 = vand.u32 2147483647, %v1018
        %vm9391 = vcmp.le.f32.partialorder %v9390, 0.7853982
        %vm9392 = vcmp.lt.s32.totalorder %v1018, 0
        %v9393 = vand.u32 %v1018, 2139095040
        %v9394 = vshrl.u32 %v9393, 23
        %v9395 = vsub.s32 %v9394, 127
        %v9396 = vand.u32 2147483647, %v1018
        %v9397 = vand.u32 %v9396, 8388607
        %v9398 = vor.u32 %v9397, 8388608
        %v9399 = vsub.s32 0, %v9398
        %v9400 = vadd.s32 %v9395, 1
        %vm9401 = vcmp.gt.s32.totalorder %v9400, 0
        %v9402 = vsel %vm9401, %v9400, 0
        %v9403 = vshrl.u32 %v9402, 5
        %v9404 = vand.u32 %v9402, 31
        %v9405 = vsub.s32 32, %v9404
        %v9406 = vshrl.u32 683565275, %v9405
        %v9407 = vshll.u32 683565275, %v9404
        %v9408 = vshrl.u32 2475754826, %v9405
        %v9409 = vor.u32 %v9407, %v9408
        %v9410 = vshll.u32 2475754826, %v9404
        %v9411 = vshrl.u32 2131351028, %v9405
        %v9412 = vor.u32 %v9410, %v9411
        %v9413 = vshll.u32 2131351028, %v9404
        %v9414 = vshrl.u32 2102212464, %v9405
        %v9415 = vor.u32 %v9413, %v9414
        %v9416 = vshll.u32 2102212464, %v9404
        %v9417 = vshrl.u32 920167782, %v9405
        %v9418 = vor.u32 %v9416, %v9417
        %v9419 = vshll.u32 920167782, %v9404
        %v9420 = vshrl.u32 1326507024, %v9405
        %v9421 = vor.u32 %v9419, %v9420
        %vm9422 = vcmp.lt.s32.totalorder %v9403, 1
        %vm9423 = vcmp.lt.s32.totalorder %v9403, 2
        %vm9424 = vcmp.lt.s32.totalorder %v9403, 3
        %vm9425 = vcmp.lt.s32.totalorder %v9403, 4
        %v9426 = vsel %vm9422, %v9406, %v9409
        %v9427 = vsel %vm9425, %v9415, 2102212464
        %v9428 = vsel %vm9424, %v9412, %v9427
        %v9429 = vsel %vm9423, %v9426, %v9428
        %v9430 = vsel %vm9422, %v9409, %v9412
        %v9431 = vsel %vm9425, %v9418, 920167782
        %v9432 = vsel %vm9424, %v9415, %v9431
        %v9433 = vsel %vm9423, %v9430, %v9432
        %v9434 = vsel %vm9422, %v9412, %v9415
        %v9435 = vsel %vm9425, %v9421, 1326507024
        %v9436 = vsel %vm9424, %v9418, %v9435
        %v9437 = vsel %vm9423, %v9434, %v9436
        %v9438 = vshll.u32 %v9398, 8
        %v9439 = vand.u32 %v9438, 65535
        %v9440 = vshrl.u32 %v9438, 16
        %v9441 = vand.u32 %v9437, 65535
        %v9442 = vshrl.u32 %v9437, 16
        %v9443 = vmul.u32 %v9439, %v9441
        %v9444 = vmul.u32 %v9439, %v9442
        %v9445 = vmul.u32 %v9440, %v9441
        %v9446 = vmul.u32 %v9440, %v9442
        %v9447 = vshll.u32 %v9444, 16
        %v9448 = vshrl.u32 %v9444, 16
        %v9449 = vshll.u32 %v9445, 16
        %v9450 = vshrl.u32 %v9445, 16
        %vm9451 = vc.u32 %v9443, %v9447
        %v9452 = vsel %vm9451, 1, 0
        %v9453 = vadd.s32 %v9443, %v9447
        %v9454 = vadd.s32 %v9446, %v9452
        %vm9455 = vc.u32 %v9453, %v9449
        %v9456 = vsel %vm9455, 1, 0
        %v9457 = vadd.s32 %v9453, %v9449
        %v9458 = vadd.s32 %v9454, %v9456
        %v9459 = vadd.s32 %v9458, %v9448
        %v9460 = vadd.s32 %v9459, %v9450
        %v9461 = vand.u32 %v9438, 65535
        %v9462 = vshrl.u32 %v9438, 16
        %v9463 = vand.u32 %v9433, 65535
        %v9464 = vshrl.u32 %v9433, 16
        %v9465 = vmul.u32 %v9461, %v9463
        %v9466 = vmul.u32 %v9461, %v9464
        %v9467 = vmul.u32 %v9462, %v9463
        %v9468 = vmul.u32 %v9462, %v9464
        %v9469 = vshll.u32 %v9466, 16
        %v9470 = vshrl.u32 %v9466, 16
        %v9471 = vshll.u32 %v9467, 16
        %v9472 = vshrl.u32 %v9467, 16
        %vm9473 = vc.u32 %v9465, %v9469
        %v9474 = vsel %vm9473, 1, 0
        %v9475 = vadd.s32 %v9465, %v9469
        %v9476 = vadd.s32 %v9468, %v9474
        %vm9477 = vc.u32 %v9475, %v9471
        %v9478 = vsel %vm9477, 1, 0
        %v9479 = vadd.s32 %v9475, %v9471
        %v9480 = vadd.s32 %v9476, %v9478
        %v9481 = vadd.s32 %v9480, %v9470
        %v9482 = vadd.s32 %v9481, %v9472
        %v9483 = vmul.u32 %v9438, %v9429
        %v9484 = vadd.s32 %v9460, %v9479
        %vm9485 = vc.u32 %v9460, %v9479
        %v9486 = vadd.s32 %v9482, 1
        %v9487 = vsel %vm9485, %v9486, %v9482
        %v9488 = vadd.s32 %v9483, %v9487
        %v9489 = vadd.s32 %v9488, 536870912
        %v9490 = vshrl.u32 %v9489, 30
        %v9491 = vshll.u32 %v9490, 30
        %v9492 = vsub.s32 %v9488, %v9491
        %vm9493 = vcmp.lt.s32.totalorder %v9492, 0
        %v9494 = vsub.s32 0, %v9492
        %v9495 = vsel %vm9493, %v9494, %v9492
        %v9496 = vclz %v9495
        %v9497 = vsub.s32 %v9496, 2
        %vm9498 = vcmp.gt.s32.totalorder 0, %v9497
        %v9499 = vsel %vm9498, 0, %v9497
        %v9500 = vsub.s32 32, %v9499
        %v9501 = vshll.u32 %v9492, %v9499
        %v9502 = vshrl.u32 %v9484, %v9500
        %v9503 = vor.u32 %v9501, %v9502
        %v9504 = vsub.s32 4294967266, %v9499
        %v9505 = vadd.s32 %v9504, 127
        %v9506 = vshll.u32 %v9505, 23
        %v9507 = vor.u32 4788187, %v9506
        %v9508 = vand.u32 2147483647, %v9507
        %v9510 = vcvt.s32.f32 %v9503
        %v9511 = vmul.f32 %v9510, %v9508
        %v9512 = vxor.u32 %v9511, 2147483648
        %v9513 = vsel %vm9392, %v9512, %v9511
        %v9514 = vsub.s32 4, %v9490
        %v9515 = vsel %vm9392, %v9514, %v9490
        %v9516 = vsel %vm9391, %v1018, %v9513
        %v9517 = vsel %vm9391, 0, %v9515
        %v9518 = vmul.f32 %v9516, %v9516
        %v9519 = vmul.f32 %v9518, -0.001358992
        %v9520 = vadd.f32 %v9519, 0.041655596
        %v9521 = vmul.f32 %v9518, %v9520
        %v9522 = vadd.f32 %v9521, -0.4999988
        %v9523 = vmul.f32 %v9518, %v9522
        %v9524 = vadd.f32 1.0, %v9523
        %v9525 = vmul.f32 %v9516, %v9516
        %v9526 = vmul.f32 %v9525, -0.00019511016
        %v9527 = vadd.f32 %v9526, 0.008332121
        %v9528 = vmul.f32 %v9525, %v9527
        %v9529 = vadd.f32 %v9528, -0.16666654
        %v9530 = vmul.f32 %v9525, %v9529
        %v9531 = vadd.f32 %v9530, 1.0
        %v9532 = vmul.f32 %v9531, %v9516
        %vm9533 = vweird.f32 %v1018
        %v9534 = vadd.s32 %v9517, 3
        %v9535 = vand.u32 %v9534, 3
        %vm9536 = vcmp.lt.s32.totalorder %v9535, 2
        %vm9537 = vcmp.eq.s32.totalorder %v9535, 0
        %v9538 = vxor.u32 %v9532, 2147483648
        %v9539 = vsel %vm9537, %v9524, %v9538
        %vm9540 = vcmp.eq.s32.totalorder %v9535, 2
        %v9541 = vxor.u32 %v9524, 2147483648
        %v9542 = vsel %vm9540, %v9541, %v9532
        %v9543 = vsel %vm9536, %v9539, %v9542
        %v9544 = vsel %vm9533, nan, %v9543
        %v9545 = vand.u32 2147483647, %v1019
        %vm9546 = vcmp.le.f32.partialorder %v9545, 0.7853982
        %vm9547 = vcmp.lt.s32.totalorder %v1019, 0
        %v9548 = vand.u32 %v1019, 2139095040
        %v9549 = vshrl.u32 %v9548, 23
        %v9550 = vsub.s32 %v9549, 127
        %v9551 = vand.u32 2147483647, %v1019
        %v9552 = vand.u32 %v9551, 8388607
        %v9553 = vor.u32 %v9552, 8388608
        %v9554 = vsub.s32 0, %v9553
        %v9555 = vadd.s32 %v9550, 1
        %vm9556 = vcmp.gt.s32.totalorder %v9555, 0
        %v9557 = vsel %vm9556, %v9555, 0
        %v9558 = vshrl.u32 %v9557, 5
        %v9559 = vand.u32 %v9557, 31
        %v9560 = vsub.s32 32, %v9559
        %v9561 = vshrl.u32 683565275, %v9560
        %v9562 = vshll.u32 683565275, %v9559
        %v9563 = vshrl.u32 2475754826, %v9560
        %v9564 = vor.u32 %v9562, %v9563
        %v9565 = vshll.u32 2475754826, %v9559
        %v9566 = vshrl.u32 2131351028, %v9560
        %v9567 = vor.u32 %v9565, %v9566
        %v9568 = vshll.u32 2131351028, %v9559
        %v9569 = vshrl.u32 2102212464, %v9560
        %v9570 = vor.u32 %v9568, %v9569
        %v9571 = vshll.u32 2102212464, %v9559
        %v9572 = vshrl.u32 920167782, %v9560
        %v9573 = vor.u32 %v9571, %v9572
        %v9574 = vshll.u32 920167782, %v9559
        %v9575 = vshrl.u32 1326507024, %v9560
        %v9576 = vor.u32 %v9574, %v9575
        %vm9577 = vcmp.lt.s32.totalorder %v9558, 1
        %vm9578 = vcmp.lt.s32.totalorder %v9558, 2
        %vm9579 = vcmp.lt.s32.totalorder %v9558, 3
        %vm9580 = vcmp.lt.s32.totalorder %v9558, 4
        %v9581 = vsel %vm9577, %v9561, %v9564
        %v9582 = vsel %vm9580, %v9570, 2102212464
        %v9583 = vsel %vm9579, %v9567, %v9582
        %v9584 = vsel %vm9578, %v9581, %v9583
        %v9585 = vsel %vm9577, %v9564, %v9567
        %v9586 = vsel %vm9580, %v9573, 920167782
        %v9587 = vsel %vm9579, %v9570, %v9586
        %v9588 = vsel %vm9578, %v9585, %v9587
        %v9589 = vsel %vm9577, %v9567, %v9570
        %v9590 = vsel %vm9580, %v9576, 1326507024
        %v9591 = vsel %vm9579, %v9573, %v9590
        %v9592 = vsel %vm9578, %v9589, %v9591
        %v9593 = vshll.u32 %v9553, 8
        %v9594 = vand.u32 %v9593, 65535
        %v9595 = vshrl.u32 %v9593, 16
        %v9596 = vand.u32 %v9592, 65535
        %v9597 = vshrl.u32 %v9592, 16
        %v9598 = vmul.u32 %v9594, %v9596
        %v9599 = vmul.u32 %v9594, %v9597
        %v9600 = vmul.u32 %v9595, %v9596
        %v9601 = vmul.u32 %v9595, %v9597
        %v9602 = vshll.u32 %v9599, 16
        %v9603 = vshrl.u32 %v9599, 16
        %v9604 = vshll.u32 %v9600, 16
        %v9605 = vshrl.u32 %v9600, 16
        %vm9606 = vc.u32 %v9598, %v9602
        %v9607 = vsel %vm9606, 1, 0
        %v9608 = vadd.s32 %v9598, %v9602
        %v9609 = vadd.s32 %v9601, %v9607
        %vm9610 = vc.u32 %v9608, %v9604
        %v9611 = vsel %vm9610, 1, 0
        %v9612 = vadd.s32 %v9608, %v9604
        %v9613 = vadd.s32 %v9609, %v9611
        %v9614 = vadd.s32 %v9613, %v9603
        %v9615 = vadd.s32 %v9614, %v9605
        %v9616 = vand.u32 %v9593, 65535
        %v9617 = vshrl.u32 %v9593, 16
        %v9618 = vand.u32 %v9588, 65535
        %v9619 = vshrl.u32 %v9588, 16
        %v9620 = vmul.u32 %v9616, %v9618
        %v9621 = vmul.u32 %v9616, %v9619
        %v9622 = vmul.u32 %v9617, %v9618
        %v9623 = vmul.u32 %v9617, %v9619
        %v9624 = vshll.u32 %v9621, 16
        %v9625 = vshrl.u32 %v9621, 16
        %v9626 = vshll.u32 %v9622, 16
        %v9627 = vshrl.u32 %v9622, 16
        %vm9628 = vc.u32 %v9620, %v9624
        %v9629 = vsel %vm9628, 1, 0
        %v9630 = vadd.s32 %v9620, %v9624
        %v9631 = vadd.s32 %v9623, %v9629
        %vm9632 = vc.u32 %v9630, %v9626
        %v9633 = vsel %vm9632, 1, 0
        %v9634 = vadd.s32 %v9630, %v9626
        %v9635 = vadd.s32 %v9631, %v9633
        %v9636 = vadd.s32 %v9635, %v9625
        %v9637 = vadd.s32 %v9636, %v9627
        %v9638 = vmul.u32 %v9593, %v9584
        %v9639 = vadd.s32 %v9615, %v9634
        %vm9640 = vc.u32 %v9615, %v9634
        %v9641 = vadd.s32 %v9637, 1
        %v9642 = vsel %vm9640, %v9641, %v9637
        %v9643 = vadd.s32 %v9638, %v9642
        %v9644 = vadd.s32 %v9643, 536870912
        %v9645 = vshrl.u32 %v9644, 30
        %v9646 = vshll.u32 %v9645, 30
        %v9647 = vsub.s32 %v9643, %v9646
        %vm9648 = vcmp.lt.s32.totalorder %v9647, 0
        %v9649 = vsub.s32 0, %v9647
        %v9650 = vsel %vm9648, %v9649, %v9647
        %v9651 = vclz %v9650
        %v9652 = vsub.s32 %v9651, 2
        %vm9653 = vcmp.gt.s32.totalorder 0, %v9652
        %v9654 = vsel %vm9653, 0, %v9652
        %v9655 = vsub.s32 32, %v9654
        %v9656 = vshll.u32 %v9647, %v9654
        %v9657 = vshrl.u32 %v9639, %v9655
        %v9658 = vor.u32 %v9656, %v9657
        %v9659 = vsub.s32 4294967266, %v9654
        %v9660 = vadd.s32 %v9659, 127
        %v9661 = vshll.u32 %v9660, 23
        %v9662 = vor.u32 4788187, %v9661
        %v9663 = vand.u32 2147483647, %v9662
        %v9665 = vcvt.s32.f32 %v9658
        %v9666 = vmul.f32 %v9665, %v9663
        %v9667 = vxor.u32 %v9666, 2147483648
        %v9668 = vsel %vm9547, %v9667, %v9666
        %v9669 = vsub.s32 4, %v9645
        %v9670 = vsel %vm9547, %v9669, %v9645
        %v9671 = vsel %vm9546, %v1019, %v9668
        %v9672 = vsel %vm9546, 0, %v9670
        %v9673 = vmul.f32 %v9671, %v9671
        %v9674 = vmul.f32 %v9673, -0.001358992
        %v9675 = vadd.f32 %v9674, 0.041655596
        %v9676 = vmul.f32 %v9673, %v9675
        %v9677 = vadd.f32 %v9676, -0.4999988
        %v9678 = vmul.f32 %v9673, %v9677
        %v9679 = vadd.f32 1.0, %v9678
        %v9680 = vmul.f32 %v9671, %v9671
        %v9681 = vmul.f32 %v9680, -0.00019511016
        %v9682 = vadd.f32 %v9681, 0.008332121
        %v9683 = vmul.f32 %v9680, %v9682
        %v9684 = vadd.f32 %v9683, -0.16666654
        %v9685 = vmul.f32 %v9680, %v9684
        %v9686 = vadd.f32 %v9685, 1.0
        %v9687 = vmul.f32 %v9686, %v9671
        %vm9688 = vweird.f32 %v1019
        %v9689 = vadd.s32 %v9672, 3
        %v9690 = vand.u32 %v9689, 3
        %vm9691 = vcmp.lt.s32.totalorder %v9690, 2
        %vm9692 = vcmp.eq.s32.totalorder %v9690, 0
        %v9693 = vxor.u32 %v9687, 2147483648
        %v9694 = vsel %vm9692, %v9679, %v9693
        %vm9695 = vcmp.eq.s32.totalorder %v9690, 2
        %v9696 = vxor.u32 %v9679, 2147483648
        %v9697 = vsel %vm9695, %v9696, %v9687
        %v9698 = vsel %vm9691, %v9694, %v9697
        %v9699 = vsel %vm9688, nan, %v9698
        %v9700 = vld [vmem:[%s3] sm:$0xff]
        %v9701 = vld [vmem:[%s3 + $0x8] sm:$0xff]
        %v9702 = vld [vmem:[%s3 + $0x10] sm:$0xff]
        %v9703 = vld [vmem:[%s3 + $0x18] sm:$0xff]
        %v9704 = vld [vmem:[%s4] sm:$0xff]
        %v9705 = vld [vmem:[%s4 + $0x8] sm:$0xff]
        %v9706 = vld [vmem:[%s4 + $0x10] sm:$0xff]
        %v9707 = vld [vmem:[%s4 + $0x18] sm:$0xff]
        %9709 = vset.pattern.permute.xlu0 0
        %9710 = vperm.xlu0 %9709, %v9704
        %v9711 = vpop.permute.xlu0 %9710
        %9714 = vset.pattern.permute.xlu0 0
        %9715 = vperm.xlu0 %9714, %v9705
        %v9716 = vpop.permute.xlu0 %9715
        %9719 = vset.pattern.permute.xlu0 0
        %9720 = vperm.xlu0 %9719, %v9706
        %v9721 = vpop.permute.xlu0 %9720
        %9724 = vset.pattern.permute.xlu0 0
        %9725 = vperm.xlu0 %9724, %v9707
        %v9726 = vpop.permute.xlu0 %9725
        %vm9728 = vcmask 261120
        %v9730 = vsel %vm9728, %v9700, 0
        %v9733 = vsel %vm9728, %v9701, 0
        %v9736 = vsel %vm9728, %v9702, 0
        %v9739 = vsel %vm9728, %v9703, 0
        %9741 = vmatpush.msra.mxu0 0.0
        %9742 = vmatpush.msra.mxu0 0.0
        %9743 = vmatpush.msra.mxu0 0.0
        %9744 = vmatpush.msra.mxu0 0.0
        %9745 = vmatpush.msra.mxu0 0.0
        %9746 = vmatpush.msra.mxu0 0.0
        %9747 = vmatpush.msra.mxu0 0.0
        %9748 = vmatpush.msra.mxu0 0.0
        %9749 = vmatpush.msra.mxu0 0.0
        %9750 = vmatpush.msra.mxu0 0.0
        %9751 = vmatpush.msra.mxu0 0.0
        %9752 = vmatpush.msra.mxu0 0.0
        %9753 = vmatpush.msra.mxu0 %v2104
        %9754 = vmatpush.msra.mxu0 %v1794
        %9755 = vmatpush.msra.mxu0 %v1484
        %9756 = vmatpush.msra.mxu0 %v1174
        %9757 = vmatmul.f32.gmra.mxu0 %v9730
        %v9758 = vpop.f32.mrf.mxu0
        %v9759 = vadd.f32 %v9711, %v9758
        %9760 = vmatmul.f32.gmra.mxu0 %v9733
        %v9761 = vpop.f32.mrf.mxu0
        %v9762 = vadd.f32 %v9716, %v9761
        %9763 = vmatmul.f32.gmra.mxu0 %v9736
        %v9764 = vpop.f32.mrf.mxu0
        %v9765 = vadd.f32 %v9721, %v9764
        %9766 = vmatmul.f32.gmra.mxu0 %v9739
        %v9767 = vpop.f32.mrf.mxu0
        %v9768 = vadd.f32 %v9726, %v9767
        %9769 = vdwg.mxu0
        %9770 = vmatpush.msra.mxu0 0.0
        %9771 = vmatpush.msra.mxu0 0.0
        %9772 = vmatpush.msra.mxu0 0.0
        %9773 = vmatpush.msra.mxu0 0.0
        %9774 = vmatpush.msra.mxu0 0.0
        %9775 = vmatpush.msra.mxu0 0.0
        %9776 = vmatpush.msra.mxu0 0.0
        %9777 = vmatpush.msra.mxu0 0.0
        %9778 = vmatpush.msra.mxu0 0.0
        %9779 = vmatpush.msra.mxu0 0.0
        %9780 = vmatpush.msra.mxu0 0.0
        %9781 = vmatpush.msra.mxu0 0.0
        %9782 = vmatpush.msra.mxu0 %v2259
        %9783 = vmatpush.msra.mxu0 %v1949
        %9784 = vmatpush.msra.mxu0 %v1639
        %9785 = vmatpush.msra.mxu0 %v1329
        %9786 = vmatmul.f32.gmra.mxu0 %v9730
        %v9787 = vpop.f32.mrf.mxu0
        %v9788 = vadd.f32 %v9711, %v9787
        %9789 = vmatmul.f32.gmra.mxu0 %v9733
        %v9790 = vpop.f32.mrf.mxu0
        %v9791 = vadd.f32 %v9716, %v9790
        %9792 = vmatmul.f32.gmra.mxu0 %v9736
        %v9793 = vpop.f32.mrf.mxu0
        %v9794 = vadd.f32 %v9721, %v9793
        %9795 = vmatmul.f32.gmra.mxu0 %v9739
        %v9796 = vpop.f32.mrf.mxu0
        %v9797 = vadd.f32 %v9726, %v9796
        %9798 = vdwg.mxu0
        %v9799 = vmul.f32 %v9759, %v2414
        %v9800 = vmul.f32 %v9788, %v2569
        %v9801 = vmul.f32 %v9762, %v2724
        %v9802 = vmul.f32 %v9791, %v2879
        %v9803 = vmul.f32 %v9765, %v3034
        %v9804 = vmul.f32 %v9794, %v3189
        %v9805 = vmul.f32 %v9768, %v3344
        %v9806 = vmul.f32 %v9797, %v3499
        %v9807 = vld [vmem:[%s5] sm:$0xff]
        %v9808 = vld [vmem:[%s5 + $0x8] sm:$0xff]
        %v9809 = vld [vmem:[%s5 + $0x10] sm:$0xff]
        %v9810 = vld [vmem:[%s5 + $0x18] sm:$0xff]
        %v9811 = vld [vmem:[%s6] sm:$0xff]
        %v9812 = vld [vmem:[%s6 + $0x8] sm:$0xff]
        %v9813 = vld [vmem:[%s6 + $0x10] sm:$0xff]
        %v9814 = vld [vmem:[%s6 + $0x18] sm:$0xff]
        %9816 = vset.pattern.permute.xlu0 0
        %9817 = vperm.xlu0 %9816, %v9811
        %v9818 = vpop.permute.xlu0 %9817
        %9821 = vset.pattern.permute.xlu0 0
        %9822 = vperm.xlu0 %9821, %v9812
        %v9823 = vpop.permute.xlu0 %9822
        %9826 = vset.pattern.permute.xlu0 0
        %9827 = vperm.xlu0 %9826, %v9813
        %v9828 = vpop.permute.xlu0 %9827
        %9831 = vset.pattern.permute.xlu0 0
        %9832 = vperm.xlu0 %9831, %v9814
        %v9833 = vpop.permute.xlu0 %9832
        %v9836 = vsel %vm9728, %v9807, 0
        %v9839 = vsel %vm9728, %v9808, 0
        %v9842 = vsel %vm9728, %v9809, 0
        %v9845 = vsel %vm9728, %v9810, 0
        %9847 = vmatpush.msra.mxu0 0.0
        %9848 = vmatpush.msra.mxu0 0.0
        %9849 = vmatpush.msra.mxu0 0.0
        %9850 = vmatpush.msra.mxu0 0.0
        %9851 = vmatpush.msra.mxu0 0.0
        %9852 = vmatpush.msra.mxu0 0.0
        %9853 = vmatpush.msra.mxu0 0.0
        %9854 = vmatpush.msra.mxu0 0.0
        %9855 = vmatpush.msra.mxu0 0.0
        %9856 = vmatpush.msra.mxu0 0.0
        %9857 = vmatpush.msra.mxu0 0.0
        %9858 = vmatpush.msra.mxu0 0.0
        %9859 = vmatpush.msra.mxu0 %v9805
        %9860 = vmatpush.msra.mxu0 %v9803
        %9861 = vmatpush.msra.mxu0 %v9801
        %9862 = vmatpush.msra.mxu0 %v9799
        %9863 = vmatmul.f32.gmra.mxu0 %v9836
        %v9864 = vpop.f32.mrf.mxu0
        %v9865 = vadd.f32 %v9818, %v9864
        %9866 = vmatmul.f32.gmra.mxu0 %v9839
        %v9867 = vpop.f32.mrf.mxu0
        %v9868 = vadd.f32 %v9823, %v9867
        %9869 = vmatmul.f32.gmra.mxu0 %v9842
        %v9870 = vpop.f32.mrf.mxu0
        %v9871 = vadd.f32 %v9828, %v9870
        %9872 = vmatmul.f32.gmra.mxu0 %v9845
        %v9873 = vpop.f32.mrf.mxu0
        %v9874 = vadd.f32 %v9833, %v9873
        %9875 = vdwg.mxu0
        %9876 = vmatpush.msra.mxu0 0.0
        %9877 = vmatpush.msra.mxu0 0.0
        %9878 = vmatpush.msra.mxu0 0.0
        %9879 = vmatpush.msra.mxu0 0.0
        %9880 = vmatpush.msra.mxu0 0.0
        %9881 = vmatpush.msra.mxu0 0.0
        %9882 = vmatpush.msra.mxu0 0.0
        %9883 = vmatpush.msra.mxu0 0.0
        %9884 = vmatpush.msra.mxu0 0.0
        %9885 = vmatpush.msra.mxu0 0.0
        %9886 = vmatpush.msra.mxu0 0.0
        %9887 = vmatpush.msra.mxu0 0.0
        %9888 = vmatpush.msra.mxu0 %v9806
        %9889 = vmatpush.msra.mxu0 %v9804
        %9890 = vmatpush.msra.mxu0 %v9802
        %9891 = vmatpush.msra.mxu0 %v9800
        %9892 = vmatmul.f32.gmra.mxu0 %v9836
        %v9893 = vpop.f32.mrf.mxu0
        %v9894 = vadd.f32 %v9818, %v9893
        %9895 = vmatmul.f32.gmra.mxu0 %v9839
        %v9896 = vpop.f32.mrf.mxu0
        %v9897 = vadd.f32 %v9823, %v9896
        %9898 = vmatmul.f32.gmra.mxu0 %v9842
        %v9899 = vpop.f32.mrf.mxu0
        %v9900 = vadd.f32 %v9828, %v9899
        %9901 = vmatmul.f32.gmra.mxu0 %v9845
        %v9902 = vpop.f32.mrf.mxu0
        %v9903 = vadd.f32 %v9833, %v9902
        %9904 = vdwg.mxu0
        %v9905 = vmul.f32 %v9865, %v6134
        %v9906 = vmul.f32 %v9894, %v6289
        %v9907 = vmul.f32 %v9868, %v6444
        %v9908 = vmul.f32 %v9897, %v6599
        %v9909 = vmul.f32 %v9871, %v6754
        %v9910 = vmul.f32 %v9900, %v6909
        %v9911 = vmul.f32 %v9874, %v7064
        %v9912 = vmul.f32 %v9903, %v7219
        %v9913 = vld [vmem:[%s7] sm:$0xf]
        %v9914 = vld [vmem:[%s8] sm:$0xf]
        %9916 = vset.pattern.permute.xlu0 0
        %9917 = vperm.xlu0 %9916, %v9914
        %v9918 = vpop.permute.xlu0 %9917
        %v9921 = vsel %vm9728, %v9913, 0
        %9923 = vmatpush.msra.mxu0 0.0
        %9924 = vmatpush.msra.mxu0 0.0
        %9925 = vmatpush.msra.mxu0 0.0
        %9926 = vmatpush.msra.mxu0 0.0
        %9927 = vmatpush.msra.mxu0 0.0
        %9928 = vmatpush.msra.mxu0 0.0
        %9929 = vmatpush.msra.mxu0 0.0
        %9930 = vmatpush.msra.mxu0 0.0
        %9931 = vmatpush.msra.mxu0 0.0
        %9932 = vmatpush.msra.mxu0 0.0
        %9933 = vmatpush.msra.mxu0 0.0
        %9934 = vmatpush.msra.mxu0 0.0
        %9935 = vmatpush.msra.mxu0 %v9911
        %9936 = vmatpush.msra.mxu0 %v9909
        %9937 = vmatpush.msra.mxu0 %v9907
        %9938 = vmatpush.msra.mxu0 %v9905
        %9939 = vmatmul.f32.gmra.mxu0 %v9921
        %v9940 = vpop.f32.mrf.mxu0
        %v9941 = vadd.f32 %v9918, %v9940
        %9942 = vdwg.mxu0
        %9943 = vmatpush.msra.mxu0 0.0
        %9944 = vmatpush.msra.mxu0 0.0
        %9945 = vmatpush.msra.mxu0 0.0
        %9946 = vmatpush.msra.mxu0 0.0
        %9947 = vmatpush.msra.mxu0 0.0
        %9948 = vmatpush.msra.mxu0 0.0
        %9949 = vmatpush.msra.mxu0 0.0
        %9950 = vmatpush.msra.mxu0 0.0
        %9951 = vmatpush.msra.mxu0 0.0
        %9952 = vmatpush.msra.mxu0 0.0
        %9953 = vmatpush.msra.mxu0 0.0
        %9954 = vmatpush.msra.mxu0 0.0
        %9955 = vmatpush.msra.mxu0 %v9912
        %9956 = vmatpush.msra.mxu0 %v9910
        %9957 = vmatpush.msra.mxu0 %v9908
        %9958 = vmatpush.msra.mxu0 %v9906
        %9959 = vmatmul.f32.gmra.mxu0 %v9921
        %v9960 = vpop.f32.mrf.mxu0
        %v9961 = vadd.f32 %v9918, %v9960
        %9962 = vdwg.mxu0
        %s9963 = scalar_lea.vmem %s3, 32
        %v9964 = vld [vmem:[%s9963] sm:$0xff]
        %v9965 = vld [vmem:[%s9963 + $0x8] sm:$0xff]
        %v9966 = vld [vmem:[%s9963 + $0x10] sm:$0xff]
        %v9967 = vld [vmem:[%s9963 + $0x18] sm:$0xff]
        %s9968 = scalar_lea.vmem %s4, 32
        %v9969 = vld [vmem:[%s9968] sm:$0xff]
        %v9970 = vld [vmem:[%s9968 + $0x8] sm:$0xff]
        %v9971 = vld [vmem:[%s9968 + $0x10] sm:$0xff]
        %v9972 = vld [vmem:[%s9968 + $0x18] sm:$0xff]
        %9974 = vset.pattern.permute.xlu0 0
        %9975 = vperm.xlu0 %9974, %v9969
        %v9976 = vpop.permute.xlu0 %9975
        %9979 = vset.pattern.permute.xlu0 0
        %9980 = vperm.xlu0 %9979, %v9970
        %v9981 = vpop.permute.xlu0 %9980
        %9984 = vset.pattern.permute.xlu0 0
        %9985 = vperm.xlu0 %9984, %v9971
        %v9986 = vpop.permute.xlu0 %9985
        %9989 = vset.pattern.permute.xlu0 0
        %9990 = vperm.xlu0 %9989, %v9972
        %v9991 = vpop.permute.xlu0 %9990
        %v9994 = vsel %vm9728, %v9964, 0
        %v9997 = vsel %vm9728, %v9965, 0
        %v10000 = vsel %vm9728, %v9966, 0
        %v10003 = vsel %vm9728, %v9967, 0
        %10005 = vmatpush.msra.mxu0 0.0
        %10006 = vmatpush.msra.mxu0 0.0
        %10007 = vmatpush.msra.mxu0 0.0
        %10008 = vmatpush.msra.mxu0 0.0
        %10009 = vmatpush.msra.mxu0 0.0
        %10010 = vmatpush.msra.mxu0 0.0
        %10011 = vmatpush.msra.mxu0 0.0
        %10012 = vmatpush.msra.mxu0 0.0
        %10013 = vmatpush.msra.mxu0 0.0
        %10014 = vmatpush.msra.mxu0 0.0
        %10015 = vmatpush.msra.mxu0 0.0
        %10016 = vmatpush.msra.mxu0 0.0
        %10017 = vmatpush.msra.mxu0 %v9805
        %10018 = vmatpush.msra.mxu0 %v9803
        %10019 = vmatpush.msra.mxu0 %v9801
        %10020 = vmatpush.msra.mxu0 %v9799
        %10021 = vmatmul.f32.gmra.mxu0 %v9994
        %v10022 = vpop.f32.mrf.mxu0
        %v10023 = vadd.f32 %v9976, %v10022
        %10024 = vmatmul.f32.gmra.mxu0 %v9997
        %v10025 = vpop.f32.mrf.mxu0
        %v10026 = vadd.f32 %v9981, %v10025
        %10027 = vmatmul.f32.gmra.mxu0 %v10000
        %v10028 = vpop.f32.mrf.mxu0
        %v10029 = vadd.f32 %v9986, %v10028
        %10030 = vmatmul.f32.gmra.mxu0 %v10003
        %v10031 = vpop.f32.mrf.mxu0
        %v10032 = vadd.f32 %v9991, %v10031
        %10033 = vdwg.mxu0
        %10034 = vmatpush.msra.mxu0 0.0
        %10035 = vmatpush.msra.mxu0 0.0
        %10036 = vmatpush.msra.mxu0 0.0
        %10037 = vmatpush.msra.mxu0 0.0
        %10038 = vmatpush.msra.mxu0 0.0
        %10039 = vmatpush.msra.mxu0 0.0
        %10040 = vmatpush.msra.mxu0 0.0
        %10041 = vmatpush.msra.mxu0 0.0
        %10042 = vmatpush.msra.mxu0 0.0
        %10043 = vmatpush.msra.mxu0 0.0
        %10044 = vmatpush.msra.mxu0 0.0
        %10045 = vmatpush.msra.mxu0 0.0
        %10046 = vmatpush.msra.mxu0 %v9806
        %10047 = vmatpush.msra.mxu0 %v9804
        %10048 = vmatpush.msra.mxu0 %v9802
        %10049 = vmatpush.msra.mxu0 %v9800
        %10050 = vmatmul.f32.gmra.mxu0 %v9994
        %v10051 = vpop.f32.mrf.mxu0
        %v10052 = vadd.f32 %v9976, %v10051
        %10053 = vmatmul.f32.gmra.mxu0 %v9997
        %v10054 = vpop.f32.mrf.mxu0
        %v10055 = vadd.f32 %v9981, %v10054
        %10056 = vmatmul.f32.gmra.mxu0 %v10000
        %v10057 = vpop.f32.mrf.mxu0
        %v10058 = vadd.f32 %v9986, %v10057
        %10059 = vmatmul.f32.gmra.mxu0 %v10003
        %v10060 = vpop.f32.mrf.mxu0
        %v10061 = vadd.f32 %v9991, %v10060
        %10062 = vdwg.mxu0
        %v10063 = vmul.f32 %v10023, %v3654
        %v10064 = vmul.f32 %v10052, %v3809
        %v10065 = vmul.f32 %v10026, %v3964
        %v10066 = vmul.f32 %v10055, %v4119
        %v10067 = vmul.f32 %v10029, %v4274
        %v10068 = vmul.f32 %v10058, %v4429
        %v10069 = vmul.f32 %v10032, %v4584
        %v10070 = vmul.f32 %v10061, %v4739
        %s10071 = scalar_lea.vmem %s5, 32
        %v10072 = vld [vmem:[%s10071] sm:$0xff]
        %v10073 = vld [vmem:[%s10071 + $0x8] sm:$0xff]
        %v10074 = vld [vmem:[%s10071 + $0x10] sm:$0xff]
        %v10075 = vld [vmem:[%s10071 + $0x18] sm:$0xff]
        %s10076 = scalar_lea.vmem %s6, 32
        %v10077 = vld [vmem:[%s10076] sm:$0xff]
        %v10078 = vld [vmem:[%s10076 + $0x8] sm:$0xff]
        %v10079 = vld [vmem:[%s10076 + $0x10] sm:$0xff]
        %v10080 = vld [vmem:[%s10076 + $0x18] sm:$0xff]
        %10082 = vset.pattern.permute.xlu0 0
        %10083 = vperm.xlu0 %10082, %v10077
        %v10084 = vpop.permute.xlu0 %10083
        %10087 = vset.pattern.permute.xlu0 0
        %10088 = vperm.xlu0 %10087, %v10078
        %v10089 = vpop.permute.xlu0 %10088
        %10092 = vset.pattern.permute.xlu0 0
        %10093 = vperm.xlu0 %10092, %v10079
        %v10094 = vpop.permute.xlu0 %10093
        %10097 = vset.pattern.permute.xlu0 0
        %10098 = vperm.xlu0 %10097, %v10080
        %v10099 = vpop.permute.xlu0 %10098
        %v10102 = vsel %vm9728, %v10072, 0
        %v10105 = vsel %vm9728, %v10073, 0
        %v10108 = vsel %vm9728, %v10074, 0
        %v10111 = vsel %vm9728, %v10075, 0
        %10113 = vmatpush.msra.mxu0 0.0
        %10114 = vmatpush.msra.mxu0 0.0
        %10115 = vmatpush.msra.mxu0 0.0
        %10116 = vmatpush.msra.mxu0 0.0
        %10117 = vmatpush.msra.mxu0 0.0
        %10118 = vmatpush.msra.mxu0 0.0
        %10119 = vmatpush.msra.mxu0 0.0
        %10120 = vmatpush.msra.mxu0 0.0
        %10121 = vmatpush.msra.mxu0 0.0
        %10122 = vmatpush.msra.mxu0 0.0
        %10123 = vmatpush.msra.mxu0 0.0
        %10124 = vmatpush.msra.mxu0 0.0
        %10125 = vmatpush.msra.mxu0 %v10069
        %10126 = vmatpush.msra.mxu0 %v10067
        %10127 = vmatpush.msra.mxu0 %v10065
        %10128 = vmatpush.msra.mxu0 %v10063
        %10129 = vmatmul.f32.gmra.mxu0 %v10102
        %v10130 = vpop.f32.mrf.mxu0
        %v10131 = vadd.f32 %v10084, %v10130
        %10132 = vmatmul.f32.gmra.mxu0 %v10105
        %v10133 = vpop.f32.mrf.mxu0
        %v10134 = vadd.f32 %v10089, %v10133
        %10135 = vmatmul.f32.gmra.mxu0 %v10108
        %v10136 = vpop.f32.mrf.mxu0
        %v10137 = vadd.f32 %v10094, %v10136
        %10138 = vmatmul.f32.gmra.mxu0 %v10111
        %v10139 = vpop.f32.mrf.mxu0
        %v10140 = vadd.f32 %v10099, %v10139
        %10141 = vdwg.mxu0
        %10142 = vmatpush.msra.mxu0 0.0
        %10143 = vmatpush.msra.mxu0 0.0
        %10144 = vmatpush.msra.mxu0 0.0
        %10145 = vmatpush.msra.mxu0 0.0
        %10146 = vmatpush.msra.mxu0 0.0
        %10147 = vmatpush.msra.mxu0 0.0
        %10148 = vmatpush.msra.mxu0 0.0
        %10149 = vmatpush.msra.mxu0 0.0
        %10150 = vmatpush.msra.mxu0 0.0
        %10151 = vmatpush.msra.mxu0 0.0
        %10152 = vmatpush.msra.mxu0 0.0
        %10153 = vmatpush.msra.mxu0 0.0
        %10154 = vmatpush.msra.mxu0 %v10070
        %10155 = vmatpush.msra.mxu0 %v10068
        %10156 = vmatpush.msra.mxu0 %v10066
        %10157 = vmatpush.msra.mxu0 %v10064
        %10158 = vmatmul.f32.gmra.mxu0 %v10102
        %v10159 = vpop.f32.mrf.mxu0
        %v10160 = vadd.f32 %v10084, %v10159
        %10161 = vmatmul.f32.gmra.mxu0 %v10105
        %v10162 = vpop.f32.mrf.mxu0
        %v10163 = vadd.f32 %v10089, %v10162
        %10164 = vmatmul.f32.gmra.mxu0 %v10108
        %v10165 = vpop.f32.mrf.mxu0
        %v10166 = vadd.f32 %v10094, %v10165
        %10167 = vmatmul.f32.gmra.mxu0 %v10111
        %v10168 = vpop.f32.mrf.mxu0
        %v10169 = vadd.f32 %v10099, %v10168
        %10170 = vdwg.mxu0
        %v10171 = vmul.f32 %v10131, %v7374
        %v10172 = vmul.f32 %v10160, %v7529
        %v10173 = vmul.f32 %v10134, %v7684
        %v10174 = vmul.f32 %v10163, %v7839
        %v10175 = vmul.f32 %v10137, %v7994
        %v10176 = vmul.f32 %v10166, %v8149
        %v10177 = vmul.f32 %v10140, %v8304
        %v10178 = vmul.f32 %v10169, %v8459
        %s10179 = scalar_lea.vmem %s7, 4
        %v10180 = vld [vmem:[%s10179] sm:$0xf]
        %s10181 = scalar_lea.vmem %s8, 4
        %v10182 = vld [vmem:[%s10181] sm:$0xf]
        %10184 = vset.pattern.permute.xlu0 0
        %10185 = vperm.xlu0 %10184, %v10182
        %v10186 = vpop.permute.xlu0 %10185
        %v10189 = vsel %vm9728, %v10180, 0
        %10191 = vmatpush.msra.mxu0 0.0
        %10192 = vmatpush.msra.mxu0 0.0
        %10193 = vmatpush.msra.mxu0 0.0
        %10194 = vmatpush.msra.mxu0 0.0
        %10195 = vmatpush.msra.mxu0 0.0
        %10196 = vmatpush.msra.mxu0 0.0
        %10197 = vmatpush.msra.mxu0 0.0
        %10198 = vmatpush.msra.mxu0 0.0
        %10199 = vmatpush.msra.mxu0 0.0
        %10200 = vmatpush.msra.mxu0 0.0
        %10201 = vmatpush.msra.mxu0 0.0
        %10202 = vmatpush.msra.mxu0 0.0
        %10203 = vmatpush.msra.mxu0 %v10177
        %10204 = vmatpush.msra.mxu0 %v10175
        %10205 = vmatpush.msra.mxu0 %v10173
        %10206 = vmatpush.msra.mxu0 %v10171
        %10207 = vmatmul.f32.gmra.mxu0 %v10189
        %v10208 = vpop.f32.mrf.mxu0
        %v10209 = vadd.f32 %v10186, %v10208
        %10210 = vdwg.mxu0
        %10211 = vmatpush.msra.mxu0 0.0
        %10212 = vmatpush.msra.mxu0 0.0
        %10213 = vmatpush.msra.mxu0 0.0
        %10214 = vmatpush.msra.mxu0 0.0
        %10215 = vmatpush.msra.mxu0 0.0
        %10216 = vmatpush.msra.mxu0 0.0
        %10217 = vmatpush.msra.mxu0 0.0
        %10218 = vmatpush.msra.mxu0 0.0
        %10219 = vmatpush.msra.mxu0 0.0
        %10220 = vmatpush.msra.mxu0 0.0
        %10221 = vmatpush.msra.mxu0 0.0
        %10222 = vmatpush.msra.mxu0 0.0
        %10223 = vmatpush.msra.mxu0 %v10178
        %10224 = vmatpush.msra.mxu0 %v10176
        %10225 = vmatpush.msra.mxu0 %v10174
        %10226 = vmatpush.msra.mxu0 %v10172
        %10227 = vmatmul.f32.gmra.mxu0 %v10189
        %v10228 = vpop.f32.mrf.mxu0
        %v10229 = vadd.f32 %v10186, %v10228
        %10230 = vdwg.mxu0
        %s10231 = scalar_lea.vmem %s3, 64
        %v10232 = vld [vmem:[%s10231] sm:$0xff]
        %v10233 = vld [vmem:[%s10231 + $0x8] sm:$0xff]
        %v10234 = vld [vmem:[%s10231 + $0x10] sm:$0xff]
        %v10235 = vld [vmem:[%s10231 + $0x18] sm:$0xff]
        %s10236 = scalar_lea.vmem %s4, 64
        %v10237 = vld [vmem:[%s10236] sm:$0xff]
        %v10238 = vld [vmem:[%s10236 + $0x8] sm:$0xff]
        %v10239 = vld [vmem:[%s10236 + $0x10] sm:$0xff]
        %v10240 = vld [vmem:[%s10236 + $0x18] sm:$0xff]
        %10242 = vset.pattern.permute.xlu0 0
        %10243 = vperm.xlu0 %10242, %v10237
        %v10244 = vpop.permute.xlu0 %10243
        %10247 = vset.pattern.permute.xlu0 0
        %10248 = vperm.xlu0 %10247, %v10238
        %v10249 = vpop.permute.xlu0 %10248
        %10252 = vset.pattern.permute.xlu0 0
        %10253 = vperm.xlu0 %10252, %v10239
        %v10254 = vpop.permute.xlu0 %10253
        %10257 = vset.pattern.permute.xlu0 0
        %10258 = vperm.xlu0 %10257, %v10240
        %v10259 = vpop.permute.xlu0 %10258
        %v10262 = vsel %vm9728, %v10232, 0
        %v10265 = vsel %vm9728, %v10233, 0
        %v10268 = vsel %vm9728, %v10234, 0
        %v10271 = vsel %vm9728, %v10235, 0
        %10273 = vmatpush.msra.mxu0 0.0
        %10274 = vmatpush.msra.mxu0 0.0
        %10275 = vmatpush.msra.mxu0 0.0
        %10276 = vmatpush.msra.mxu0 0.0
        %10277 = vmatpush.msra.mxu0 0.0
        %10278 = vmatpush.msra.mxu0 0.0
        %10279 = vmatpush.msra.mxu0 0.0
        %10280 = vmatpush.msra.mxu0 0.0
        %10281 = vmatpush.msra.mxu0 0.0
        %10282 = vmatpush.msra.mxu0 0.0
        %10283 = vmatpush.msra.mxu0 0.0
        %10284 = vmatpush.msra.mxu0 0.0
        %10285 = vmatpush.msra.mxu0 %v10069
        %10286 = vmatpush.msra.mxu0 %v10067
        %10287 = vmatpush.msra.mxu0 %v10065
        %10288 = vmatpush.msra.mxu0 %v10063
        %10289 = vmatmul.f32.gmra.mxu0 %v10262
        %v10290 = vpop.f32.mrf.mxu0
        %v10291 = vadd.f32 %v10244, %v10290
        %10292 = vmatmul.f32.gmra.mxu0 %v10265
        %v10293 = vpop.f32.mrf.mxu0
        %v10294 = vadd.f32 %v10249, %v10293
        %10295 = vmatmul.f32.gmra.mxu0 %v10268
        %v10296 = vpop.f32.mrf.mxu0
        %v10297 = vadd.f32 %v10254, %v10296
        %10298 = vmatmul.f32.gmra.mxu0 %v10271
        %v10299 = vpop.f32.mrf.mxu0
        %v10300 = vadd.f32 %v10259, %v10299
        %10301 = vdwg.mxu0
        %10302 = vmatpush.msra.mxu0 0.0
        %10303 = vmatpush.msra.mxu0 0.0
        %10304 = vmatpush.msra.mxu0 0.0
        %10305 = vmatpush.msra.mxu0 0.0
        %10306 = vmatpush.msra.mxu0 0.0
        %10307 = vmatpush.msra.mxu0 0.0
        %10308 = vmatpush.msra.mxu0 0.0
        %10309 = vmatpush.msra.mxu0 0.0
        %10310 = vmatpush.msra.mxu0 0.0
        %10311 = vmatpush.msra.mxu0 0.0
        %10312 = vmatpush.msra.mxu0 0.0
        %10313 = vmatpush.msra.mxu0 0.0
        %10314 = vmatpush.msra.mxu0 %v10070
        %10315 = vmatpush.msra.mxu0 %v10068
        %10316 = vmatpush.msra.mxu0 %v10066
        %10317 = vmatpush.msra.mxu0 %v10064
        %10318 = vmatmul.f32.gmra.mxu0 %v10262
        %v10319 = vpop.f32.mrf.mxu0
        %v10320 = vadd.f32 %v10244, %v10319
        %10321 = vmatmul.f32.gmra.mxu0 %v10265
        %v10322 = vpop.f32.mrf.mxu0
        %v10323 = vadd.f32 %v10249, %v10322
        %10324 = vmatmul.f32.gmra.mxu0 %v10268
        %v10325 = vpop.f32.mrf.mxu0
        %v10326 = vadd.f32 %v10254, %v10325
        %10327 = vmatmul.f32.gmra.mxu0 %v10271
        %v10328 = vpop.f32.mrf.mxu0
        %v10329 = vadd.f32 %v10259, %v10328
        %10330 = vdwg.mxu0
        %v10331 = vmul.f32 %v10291, %v4894
        %v10332 = vmul.f32 %v10320, %v5049
        %v10333 = vmul.f32 %v10294, %v5204
        %v10334 = vmul.f32 %v10323, %v5359
        %v10335 = vmul.f32 %v10297, %v5514
        %v10336 = vmul.f32 %v10326, %v5669
        %v10337 = vmul.f32 %v10300, %v5824
        %v10338 = vmul.f32 %v10329, %v5979
        %s10339 = scalar_lea.vmem %s5, 64
        %v10340 = vld [vmem:[%s10339] sm:$0xff]
        %v10341 = vld [vmem:[%s10339 + $0x8] sm:$0xff]
        %v10342 = vld [vmem:[%s10339 + $0x10] sm:$0xff]
        %v10343 = vld [vmem:[%s10339 + $0x18] sm:$0xff]
        %s10344 = scalar_lea.vmem %s6, 64
        %v10345 = vld [vmem:[%s10344] sm:$0xff]
        %v10346 = vld [vmem:[%s10344 + $0x8] sm:$0xff]
        %v10347 = vld [vmem:[%s10344 + $0x10] sm:$0xff]
        %v10348 = vld [vmem:[%s10344 + $0x18] sm:$0xff]
        %10350 = vset.pattern.permute.xlu0 0
        %10351 = vperm.xlu0 %10350, %v10345
        %v10352 = vpop.permute.xlu0 %10351
        %10355 = vset.pattern.permute.xlu0 0
        %10356 = vperm.xlu0 %10355, %v10346
        %v10357 = vpop.permute.xlu0 %10356
        %10360 = vset.pattern.permute.xlu0 0
        %10361 = vperm.xlu0 %10360, %v10347
        %v10362 = vpop.permute.xlu0 %10361
        %10365 = vset.pattern.permute.xlu0 0
        %10366 = vperm.xlu0 %10365, %v10348
        %v10367 = vpop.permute.xlu0 %10366
        %v10370 = vsel %vm9728, %v10340, 0
        %v10373 = vsel %vm9728, %v10341, 0
        %v10376 = vsel %vm9728, %v10342, 0
        %v10379 = vsel %vm9728, %v10343, 0
        %10381 = vmatpush.msra.mxu0 0.0
        %10382 = vmatpush.msra.mxu0 0.0
        %10383 = vmatpush.msra.mxu0 0.0
        %10384 = vmatpush.msra.mxu0 0.0
        %10385 = vmatpush.msra.mxu0 0.0
        %10386 = vmatpush.msra.mxu0 0.0
        %10387 = vmatpush.msra.mxu0 0.0
        %10388 = vmatpush.msra.mxu0 0.0
        %10389 = vmatpush.msra.mxu0 0.0
        %10390 = vmatpush.msra.mxu0 0.0
        %10391 = vmatpush.msra.mxu0 0.0
        %10392 = vmatpush.msra.mxu0 0.0
        %10393 = vmatpush.msra.mxu0 %v10337
        %10394 = vmatpush.msra.mxu0 %v10335
        %10395 = vmatpush.msra.mxu0 %v10333
        %10396 = vmatpush.msra.mxu0 %v10331
        %10397 = vmatmul.f32.gmra.mxu0 %v10370
        %v10398 = vpop.f32.mrf.mxu0
        %v10399 = vadd.f32 %v10352, %v10398
        %10400 = vmatmul.f32.gmra.mxu0 %v10373
        %v10401 = vpop.f32.mrf.mxu0
        %v10402 = vadd.f32 %v10357, %v10401
        %10403 = vmatmul.f32.gmra.mxu0 %v10376
        %v10404 = vpop.f32.mrf.mxu0
        %v10405 = vadd.f32 %v10362, %v10404
        %10406 = vmatmul.f32.gmra.mxu0 %v10379
        %v10407 = vpop.f32.mrf.mxu0
        %v10408 = vadd.f32 %v10367, %v10407
        %10409 = vdwg.mxu0
        %10410 = vmatpush.msra.mxu0 0.0
        %10411 = vmatpush.msra.mxu0 0.0
        %10412 = vmatpush.msra.mxu0 0.0
        %10413 = vmatpush.msra.mxu0 0.0
        %10414 = vmatpush.msra.mxu0 0.0
        %10415 = vmatpush.msra.mxu0 0.0
        %10416 = vmatpush.msra.mxu0 0.0
        %10417 = vmatpush.msra.mxu0 0.0
        %10418 = vmatpush.msra.mxu0 0.0
        %10419 = vmatpush.msra.mxu0 0.0
        %10420 = vmatpush.msra.mxu0 0.0
        %10421 = vmatpush.msra.mxu0 0.0
        %10422 = vmatpush.msra.mxu0 %v10338
        %10423 = vmatpush.msra.mxu0 %v10336
        %10424 = vmatpush.msra.mxu0 %v10334
        %10425 = vmatpush.msra.mxu0 %v10332
        %10426 = vmatmul.f32.gmra.mxu0 %v10370
        %v10427 = vpop.f32.mrf.mxu0
        %v10428 = vadd.f32 %v10352, %v10427
        %10429 = vmatmul.f32.gmra.mxu0 %v10373
        %v10430 = vpop.f32.mrf.mxu0
        %v10431 = vadd.f32 %v10357, %v10430
        %10432 = vmatmul.f32.gmra.mxu0 %v10376
        %v10433 = vpop.f32.mrf.mxu0
        %v10434 = vadd.f32 %v10362, %v10433
        %10435 = vmatmul.f32.gmra.mxu0 %v10379
        %v10436 = vpop.f32.mrf.mxu0
        %v10437 = vadd.f32 %v10367, %v10436
        %10438 = vdwg.mxu0
        %v10439 = vmul.f32 %v10399, %v8614
        %v10440 = vmul.f32 %v10428, %v8769
        %v10441 = vmul.f32 %v10402, %v8924
        %v10442 = vmul.f32 %v10431, %v9079
        %v10443 = vmul.f32 %v10405, %v9234
        %v10444 = vmul.f32 %v10434, %v9389
        %v10445 = vmul.f32 %v10408, %v9544
        %v10446 = vmul.f32 %v10437, %v9699
        %s10447 = scalar_lea.vmem %s7, 8
        %v10448 = vld [vmem:[%s10447] sm:$0xf]
        %s10449 = scalar_lea.vmem %s8, 8
        %v10450 = vld [vmem:[%s10449] sm:$0xf]
        %10452 = vset.pattern.permute.xlu0 0
        %10453 = vperm.xlu0 %10452, %v10450
        %v10454 = vpop.permute.xlu0 %10453
        %v10457 = vsel %vm9728, %v10448, 0
        %10459 = vmatpush.msra.mxu0 0.0
        %10460 = vmatpush.msra.mxu0 0.0
        %10461 = vmatpush.msra.mxu0 0.0
        %10462 = vmatpush.msra.mxu0 0.0
        %10463 = vmatpush.msra.mxu0 0.0
        %10464 = vmatpush.msra.mxu0 0.0
        %10465 = vmatpush.msra.mxu0 0.0
        %10466 = vmatpush.msra.mxu0 0.0
        %10467 = vmatpush.msra.mxu0 0.0
        %10468 = vmatpush.msra.mxu0 0.0
        %10469 = vmatpush.msra.mxu0 0.0
        %10470 = vmatpush.msra.mxu0 0.0
        %10471 = vmatpush.msra.mxu0 %v10445
        %10472 = vmatpush.msra.mxu0 %v10443
        %10473 = vmatpush.msra.mxu0 %v10441
        %10474 = vmatpush.msra.mxu0 %v10439
        %10475 = vmatmul.f32.gmra.mxu0 %v10457
        %v10476 = vpop.f32.mrf.mxu0
        %v10477 = vadd.f32 %v10454, %v10476
        %10478 = vdwg.mxu0
        %10479 = vmatpush.msra.mxu0 0.0
        %10480 = vmatpush.msra.mxu0 0.0
        %10481 = vmatpush.msra.mxu0 0.0
        %10482 = vmatpush.msra.mxu0 0.0
        %10483 = vmatpush.msra.mxu0 0.0
        %10484 = vmatpush.msra.mxu0 0.0
        %10485 = vmatpush.msra.mxu0 0.0
        %10486 = vmatpush.msra.mxu0 0.0
        %10487 = vmatpush.msra.mxu0 0.0
        %10488 = vmatpush.msra.mxu0 0.0
        %10489 = vmatpush.msra.mxu0 0.0
        %10490 = vmatpush.msra.mxu0 0.0
        %10491 = vmatpush.msra.mxu0 %v10446
        %10492 = vmatpush.msra.mxu0 %v10444
        %10493 = vmatpush.msra.mxu0 %v10442
        %10494 = vmatpush.msra.mxu0 %v10440
        %10495 = vmatmul.f32.gmra.mxu0 %v10457
        %v10496 = vpop.f32.mrf.mxu0
        %v10497 = vadd.f32 %v10454, %v10496
        %10498 = vdwg.mxu0
        %v10501 = vrot.slane %v10209, 4
        %v10502 = vrot.slane %v10229, 4
        %vm10505 = vcmask 1043456
        %v10506 = vsel %vm10505, %v9941, %v10501
        %v10507 = vsel %vm10505, %v9961, %v10502
        %10508 = vst [vmem:[%s326] sm:$0xff] %v10506
        %10509 = vst [vmem:[%s326 + $0x8] sm:$0xff] %v10507
        %10510 = vst [vmem:[%s326 + $0x10] sm:$0xf] %v10477
        %10511 = vst [vmem:[%s326 + $0x18] sm:$0xf] %v10497
        %s10512 = sand.u32 %s225, 1
        %s10513 = scalar_lea.sflag [#allocation3], %s10512
        %s10514 = sand.u32 %s225, 1
        %s10515 = smul.addr %s10514, 32
        %s10516 = scalar_lea.vmem [#allocation2], %s10515
        // Predicated region
        $region57: #{tpu_custom_call.1} parent=55 // pred_check
          %p10517 = pneg %p235
        $region58: #{tpu_custom_call.1} parent=55 // pred_check_branch
          %10519 = sbr.rel (%p10517) target = $region60
        $region59: #{tpu_custom_call.1} parent=55 // pred_region
          %s10520 = smul.u32 2, %s23
          %10522 = vsyncadd %s10513, 0
          %s10523 = smul.addr %s10520, 8
          %s10524 = scalar_lea.hbm %s9, %s10523
          %s10525 = sshll.u32 %s10516, 4
          %s10526 = int_to_ptr.vmem [resolvable:$true] %s10525
          %s10527 = sshll.u32 %s10524, 4
          %s10528 = int_to_ptr.hbm [resolvable:$true] %s10527
          %10533 = dma.vmem_to_hbm [thread:$0]  %s10526, 512, %s10528, %s10513, 256, 512, 16
        $region60: #{tpu_custom_call.1} parent=55 // pred_fallthru
          _
      $region56: #{tpu_custom_call.1} parent=5 // pred_fallthru
        _
      %p10534 = scmp.le.s32.totalorder 2, %s18
      // Predicated region
      $region61: #{tpu_custom_call.1} parent=5 // pred_check
        %p10535 = pneg %p10534
      $region62: #{tpu_custom_call.1} parent=5 // pred_check_branch
        %10537 = sbr.rel (%p10535) target = $region64
      $region63: #{tpu_custom_call.1} parent=5 // pred_region
        %s10538 = ssub.s32 %s18, 2
        // Predicated region
        $region65: #{tpu_custom_call.1} parent=63 // pred_check
          %p10539 = pneg %p241
        $region66: #{tpu_custom_call.1} parent=63 // pred_check_branch
          %10541 = sbr.rel (%p10539) target = $region68
        $region67: #{tpu_custom_call.1} parent=63 // pred_region
          %s10542 = sand.u32 %s226, 1
          %s10543 = scalar_lea.sflag [#allocation3], %s10542
          %s10544 = sand.u32 %s226, 1
          %s10545 = smul.addr %s10544, 32
          %s10546 = scalar_lea.vmem [#allocation2], %s10545
          %10548 = dma.done %s10543, 512
        $region68: #{tpu_custom_call.1} parent=63 // pred_fallthru
          _
      $region64: #{tpu_custom_call.1} parent=5 // pred_fallthru
        _
    $region6: #{tpu_custom_call.1} parent=1 // loop_footer
      %s22 = sadd.s32 1, %s18
    $region7: #{tpu_custom_call.1} parent=1 // loop_footer_branch
      %17 = sbr.rel target = $region3
    $region8: #{tpu_custom_call.1} parent=1 // loop_exit
      _
    %10549 = vsyncpa [#allocation3], 1
    %s10550 = scalar_lea.sflag [#allocation3], 1
    %10551 = vsyncpa %s10550, 1

</llo_original>
